<compile_context>
chip_gen: v7x
topology: tpu7x:2x2x1
jax: 0.10.0
libtpu: 0.0.40
codegen_flags: <defaults>
</compile_context>

<pallas_src>
import math

import jax
import jax.numpy as jnp
from jax.experimental import pallas as pl
from jax.experimental.pallas import tpu as pltpu

D_MODEL = 64      # d_model
NUM_HEAD = 4      # num_head

_N_LAYER_W = 18   # number of per-layer weight tensors fed to the kernels


# ----------------------------- in-kernel helpers -----------------------------

def _layer_norm(x, g, b, eps=1e-5):
    mu = jnp.mean(x, axis=-1, keepdims=True)
    var = jnp.mean(jnp.square(x - mu), axis=-1, keepdims=True)
    return (x - mu) * jax.lax.rsqrt(var + eps) * g + b


def _onehot_rows(idx, n):
    """(R, K) int32 indices -> (R*K, n) bf16 one-hot rows (in-kernel gather matrix)."""
    R, K = idx.shape
    col = jax.lax.broadcasted_iota(jnp.int32, (R, K, n), 2)
    return (col == idx[:, :, None]).astype(jnp.bfloat16).reshape(R * K, n)


def _rpe_layer(xq, mem2, pos2, mask, M, lw):
    """RPETransformerLayer forward (query length 1 per node), eval mode.

    xq:   (R, C)   f32  query features
    mem2: (R*M, C)      gathered neighbor features (flattened)
    pos2: (R*M, C) f32  relative positional embeddings (flattened)
    mask: (R, M)   f32  1.0 == masked, or None
    Returns (out (R, C) f32, attn (R, M, H) f32 post-softmax scores).
    """
    (wq, bq, wkv, bkv, wp, bp, sel, selT,
     wo, bo, g1, be1, w1, b1, w2, b2, g2, be2) = lw
    R, C = xq.shape
    H = NUM_HEAD
    Dh = C // H
    scale = 1.0 / math.sqrt(Dh)
    f32, bf16 = jnp.float32, jnp.bfloat16

    # ---- projections: bf16 operands, f32 accumulation on the MXU ----
    q = jnp.dot(xq.astype(bf16), wq, preferred_element_type=f32) + bq          # (R, C)
    kvp = jnp.dot(mem2.astype(bf16), wkv, preferred_element_type=f32) + bkv    # (R*M, 2C)
    p = jnp.dot(pos2.astype(bf16), wp, preferred_element_type=f32) + bp        # (R*M, C)

    # query length is 1 per node -> score_e + score_p = q . (k + p); bf16 temps
    kp_bf = (kvp[:, :C] + p).astype(bf16)                                      # (R*M, C)
    v_bf = kvp[:, C:].astype(bf16)                                             # (R*M, C)

    # per-head score reduction via a 0/1 head-selector matmul (bf16 MXU path)
    prod_bf = (q.astype(bf16)[:, None, :] * kp_bf.reshape(R, M, C)).reshape(R * M, C)
    s3 = (jnp.dot(prod_bf, sel, preferred_element_type=f32) * scale).reshape(R, M, H)

    if mask is not None:                        # masked_fill(-inf) stand-in
        s3 = jnp.where(mask[:, :, None] > 0.5, jnp.float32(-1e30), s3)
    s3 = s3 - jnp.max(s3, axis=1, keepdims=True)
    e3 = jnp.exp(s3)
    a3 = e3 / jnp.sum(e3, axis=1, keepdims=True)                               # (R, M, H)

    # broadcast head weights back to channels, weight the values, reduce over M
    a_exp = jnp.dot(a3.reshape(R * M, H).astype(bf16), selT,
                    preferred_element_type=f32)                                # (R*M, C)
    hid = jnp.sum(a_exp.reshape(R, M, C) * v_bf.reshape(R, M, C), axis=1)      # (R, C)

    hs = jnp.dot(hid.astype(bf16), wo, preferred_element_type=f32) + bo
    # RPEAttentionLayer: linear + residual LayerNorm
    y1 = _layer_norm(hs + xq, g1, be1)
    # AttentionOutput: expand -> GELU -> project -> residual LayerNorm
    # TODO(synk): reference uses erf-GELU; tanh-approx GELU used here (EUP-friendly).
    f1 = jax.nn.gelu(jnp.dot(y1.astype(bf16), w1, preferred_element_type=f32) + b1,
                     approximate=True)
    f2 = jnp.dot(f1.astype(bf16), w2, preferred_element_type=f32) + b2
    out = _layer_norm(y1 + f2, g2, be2)
    return out, a3


# ------------------------------ Pallas kernels -------------------------------

def _make_self_kernel(has_mask, K):
    """'self' block: both point clouds stacked on a leading pair axis (grid=(2,))."""
    def kernel(*refs):
        it = iter(refs)
        feats_ref = next(it)                    # (1, B, C)
        knn_ref = next(it)                      # (1, B, K) int32
        emb_ref = next(it)                      # (1, B*K, C)
        mask_ref = next(it) if has_mask else None
        lw = tuple(next(it)[...] for _ in range(_N_LAYER_W))
        out_ref = next(it)                      # (1, B, C)

        feats = feats_ref[0]                    # (B, C)
        nB = feats.shape[0]
        # in-kernel kNN gather: one-hot (B*K, B) @ (B, C) on the MXU
        onehot = _onehot_rows(knn_ref[0], nB)
        mem2 = jnp.dot(onehot, feats.astype(jnp.bfloat16),
                       preferred_element_type=jnp.float32)                     # (B*K, C)
        mask = mask_ref[0] if has_mask else None
        out, _ = _rpe_layer(feats, mem2, emb_ref[0], mask, K, lw)
        out_ref[0] = out
    return kernel


def _make_mask_kernel(has_mask, K):
    """'mask' block: RPE layer + fused prediction head, whole batch (grid-less)."""
    def kernel(*refs):
        it = iter(refs)
        feats_ref = next(it)                    # (B, C)
        knn_ref = next(it)                      # (B, K) int32
        cpe_ref = next(it)                      # (B*K, C)
        mask_ref = next(it) if has_mask else None
        lw = tuple(next(it)[...] for _ in range(_N_LAYER_W))
        wop, bop, gop, beop = (next(it)[...] for _ in range(4))
        w1a, w1b, b1m, gm, bmm, w2row, b2m = (next(it)[...] for _ in range(7))
        attn_ref = next(it)                     # (B, K, H)
        pred_ref = next(it)                     # (B, K)

        f32, bf16 = jnp.float32, jnp.bfloat16
        feats = feats_ref[...]
        nB, C = feats.shape
        cpe2 = cpe_ref[...]
        mask = mask_ref[...] if has_mask else None

        onehot = _onehot_rows(knn_ref[...], nB)                                # (B*K, B)
        mem2 = jnp.dot(onehot, feats.astype(bf16), preferred_element_type=f32)
        ref_support, a3 = _rpe_layer(feats, mem2, cpe2, mask, K, lw)
        attn_ref[...] = a3

        # ---- fused prediction head (ref_support never leaves VMEM) ----
        query = _layer_norm(
            jnp.dot(ref_support.astype(bf16), wop, preferred_element_type=f32) + bop,
            gop, beop)                                                         # (B, C)
        rs_knn = jnp.dot(onehot, ref_support.astype(bf16),
                         preferred_element_type=f32)                           # (B*K, C)
        diff2 = (rs_knn.reshape(nB, K, C) - query[:, None, :]).reshape(nB * K, C)
        # Linear(2C->C) on concat([diff, cpe]) == diff @ W[:C] + cpe @ W[C:]
        h = (jnp.dot(diff2.astype(bf16), w1a, preferred_element_type=f32)
             + jnp.dot(cpe2.astype(bf16), w1b, preferred_element_type=f32) + b1m)
        h = jnp.maximum(_layer_norm(h, gm, bmm), 0.0)                          # LN + ReLU
        # final Linear(C->1) as a lane reduction -> lane-packed (B, K)
        logits = jnp.sum(h.reshape(nB, K, C) * w2row, axis=-1) + b2m
        pred_ref[...] = jax.nn.sigmoid(logits)
    return kernel


# ------------------------------- JAX wrappers --------------------------------

def _rep_spec(shape):
    nd = len(shape)
    return pl.BlockSpec(shape, lambda i, _nd=nd: (0,) * _nd)


def _layer_weights(params, lp):
    return (lp['wq'], lp['bq'], lp['wkv'], lp['bkv'], lp['wp'], lp['bp'],
            params['sel'], params['selT'],
            lp['wo'], lp['bo'], lp['g1'], lp['be1'],
            lp['w1'], lp['b1'], lp['w2'], lp['b2'], lp['g2'], lp['be2'])


def self_block_pair(params, lp, feats0, feats1, knn0, knn1, emb0, emb1,
                    masks0, masks1):
    """One pallas_call handles BOTH clouds of a 'self' block (pair axis = grid)."""
    B, C = feats0.shape
    K = knn0.shape[1]
    feats = jnp.stack([feats0, feats1])                    # (2, B, C)
    knn = jnp.stack([knn0, knn1])                          # (2, B, K)
    emb = jnp.stack([emb0, emb1]).reshape(2, B * K, C)     # (2, B*K, C)
    has_mask = (masks0 is not None) or (masks1 is not None)

    data = [feats, knn, emb]
    in_specs = [pl.BlockSpec((1, B, C), lambda i: (i, 0, 0)),
                pl.BlockSpec((1, B, K), lambda i: (i, 0, 0)),
                pl.BlockSpec((1, B * K, C), lambda i: (i, 0, 0))]
    if has_mask:
        zero = jnp.zeros((B, K), jnp.float32)
        m0 = zero if masks0 is None else masks0.astype(jnp.float32)
        m1 = zero if masks1 is None else masks1.astype(jnp.float32)
        data.append(jnp.stack([m0, m1]))
        in_specs.append(pl.BlockSpec((1, B, K), lambda i: (i, 0, 0)))
    weights = _layer_weights(params, lp)
    in_specs += [_rep_spec(w.shape) for w in weights]

    out = pl.pallas_call(
        _make_self_kernel(has_mask, K),
        grid=(2,),
        in_specs=in_specs,
        out_specs=pl.BlockSpec((1, B, C), lambda i: (i, 0, 0)),
        out_shape=jax.ShapeDtypeStruct((2, B, C), jnp.float32),
        compiler_params=pltpu.CompilerParams(dimension_semantics=("parallel",)),
    )(*data, *weights)
    return out[0], out[1]


def mask_block(params, lp, feats0, knn, cpe, masks0):
    """'mask' block: RPE layer + prediction head fused in ONE grid-less pallas_call."""
    B, C = feats0.shape
    K = knn.shape[1]
    H = NUM_HEAD
    has_mask = masks0 is not None
    data = [feats0, knn, cpe.reshape(B * K, C)]
    if has_mask:
        data.append(masks0.astype(jnp.float32))
    weights = _layer_weights(params, lp)
    op, mp = params['out_proj'], params['mask_proj']
    head_w = (op['w'], op['b'], op['g'], op['be'],
              mp['w1a'], mp['w1b'], mp['b1'], mp['g'], mp['be'],
              mp['w2row'], mp['b2'])
    out_shape = (jax.ShapeDtypeStruct((B, K, H), jnp.float32),
                 jax.ShapeDtypeStruct((B, K), jnp.float32))
    attn3, pred_masks = pl.pallas_call(
        _make_mask_kernel(has_mask, K),
        out_shape=out_shape,
    )(*data, *weights, *head_w)

    # (B, K, H) -> (B, H, 1, K) to match PyTorch endpoints['attention_scores']
    attn_scores = jnp.transpose(attn3, (0, 2, 1))[:, :, None, :]
    attn_mask = pred_masks < 0.5
    all_masked = jnp.sum(attn_mask, axis=-1) == K
    attn_mask = jnp.where(all_masked[:, None], False, attn_mask)  # un-mask fully-masked rows
    return attn_scores, pred_masks, attn_mask


def mask_rpe_transformer_forward(params, feats0, feats1, embeddings0, embeddings1,
                                 cross_position_embeddings, ref_node_knn_indices,
                                 src_node_knn_indices, masks0=None, masks1=None):
    blocks = params['blocks']
    pred_masks_list, attn_masks_list, mask_attention_score_list = [], [], []
    cpe = jnp.squeeze(cross_position_embeddings, axis=1)    # (B, K, C)
    emb0 = jnp.squeeze(embeddings0, axis=1)
    emb1 = jnp.squeeze(embeddings1, axis=1)
    for i, block in enumerate(blocks):
        lp = params['layers'][i]
        if block == 'self':
            feats0, feats1 = self_block_pair(
                params, lp, feats0, feats1,
                ref_node_knn_indices, src_node_knn_indices,
                emb0, emb1, masks0, masks1)
        elif block == 'mask':
            # feats0 is NOT updated by a 'mask' block (matches the reference).
            attn_scores, pred_masks, attn_masks = mask_block(
                params, lp, feats0, ref_node_knn_indices, cpe, masks0)
            mask_attention_score_list.append(attn_scores)
            masks0 = attn_masks
            pred_masks_list.append(pred_masks)
            attn_masks_list.append(attn_masks)
        else:
            # TODO(synk): 'cross' block needs TransformerLayer (not provided in the reference).
            raise NotImplementedError(block)
    return feats0, feats1, pred_masks_list, attn_masks_list, mask_attention_score_list


# ------------------------------ parameter init -------------------------------

def init_params(key, blocks, C):
    keys = iter(jax.random.split(key, 256))
    bf16 = jnp.bfloat16
    H = NUM_HEAD
    Dh = C // H

    def lin(nin, nout):
        w = jax.random.normal(next(keys), (nin, nout), jnp.float32) / math.sqrt(nin)
        b = jax.random.normal(next(keys), (1, nout), jnp.float32) * 0.02
        return w, b

    def ln(n):
        return jnp.ones((1, n), jnp.float32), jnp.zeros((1, n), jnp.float32)

    layers = []
    for _ in blocks:
        wq, bq = lin(C, C); wk, bk = lin(C, C); wv, bv = lin(C, C); wp, bp = lin(C, C)
        wo, bo = lin(C, C); g1, be1 = ln(C)
        w1, b1 = lin(C, 2 * C); w2, b2 = lin(2 * C, C); g2, be2 = ln(C)
        layers.append(dict(
            wq=wq.astype(bf16), bq=bq,
            wkv=jnp.concatenate([wk, wv], axis=1).astype(bf16),   # fused K/V weight (C, 2C)
            bkv=jnp.concatenate([bk, bv], axis=1),
            wp=wp.astype(bf16), bp=bp,
            wo=wo.astype(bf16), bo=bo, g1=g1, be1=be1,
            w1=w1.astype(bf16), b1=b1, w2=w2.astype(bf16), b2=b2,
            g2=g2, be2=be2))

    wm1, bm1 = lin(2 * C, C)
    gm, bm = ln(C)
    wm2, bm2 = lin(C, 1)
    mask_proj = dict(w1a=wm1[:C].astype(bf16), w1b=wm1[C:].astype(bf16), b1=bm1,
                     g=gm, be=bm,
                     w2row=jnp.transpose(wm2), b2=bm2.reshape(1, 1))
    wop, bop = lin(C, C)
    gop, beop = ln(C)
    out_proj = dict(w=wop.astype(bf16), b=bop, g=gop, be=beop)

    # hoisted 0/1 head selectors (exact in bf16), shared by every layer kernel
    cidx = jnp.arange(C)
    sel = (cidx[:, None] // Dh == jnp.arange(H)[None, :]).astype(bf16)   # (C, H)
    return dict(blocks=tuple(blocks), layers=layers,
                mask_proj=mask_proj, out_proj=out_proj,
                sel=sel, selT=jnp.transpose(sel))


# ----------------------------------- main -------------------------------------

if __name__ == "__main__":
    B = 64          # number of superpoint nodes (both clouds)
    K = 16          # kNN neighbors per node
    C = D_MODEL     # d_model = 64, num_head = 4
    blocks = ("self", "mask", "self")

    key = jax.random.PRNGKey(0)
    kp, k0, k1, ke0, ke1, kc, ki0, ki1 = jax.random.split(key, 8)
    params = init_params(kp, blocks, C)

    feats0 = jax.random.normal(k0, (B, C), jnp.float32)
    feats1 = jax.random.normal(k1, (B, C), jnp.float32)
    embeddings0 = jax.random.normal(ke0, (B, 1, K, C), jnp.float32)
    embeddings1 = jax.random.normal(ke1, (B, 1, K, C), jnp.float32)
    cross_position_embeddings = jax.random.normal(kc, (B, 1, K, C), jnp.float32)
    ref_node_knn_indices = jax.random.randint(ki0, (B, K), 0, B, jnp.int32)
    src_node_knn_indices = jax.random.randint(ki1, (B, K), 0, B, jnp.int32)

    outs = mask_rpe_transformer_forward(
        params, feats0, feats1, embeddings0, embeddings1,
        cross_position_embeddings, ref_node_knn_indices, src_node_knn_indices,
        masks0=None, masks1=None)

    jax.block_until_ready(outs)
    f0, f1, pred_list, attn_list, score_list = outs
    assert f0.shape == (B, C) and f1.shape == (B, C)
    assert pred_list[0].shape == (B, K) and attn_list[0].shape == (B, K)
    assert score_list[0].shape == (B, NUM_HEAD, 1, K)
    assert bool(jnp.all(jnp.isfinite(f0))) and bool(jnp.all(jnp.isfinite(f1)))
    assert bool(jnp.all(jnp.isfinite(pred_list[0])))
    print("KERNEL_OK")
</pallas_src>

<mosaic_0001>
module attributes {stable_mosaic.version = 11 : i64} {
  func.func @kernel(%arg0: i32, %arg1: memref<1x64x64xf32, #tpu.memory_space<vmem>>, %arg2: memref<1x64x16xi32, #tpu.memory_space<vmem>>, %arg3: memref<1x1024x64xf32, #tpu.memory_space<vmem>>, %arg4: memref<64x64xbf16, #tpu.memory_space<vmem>>, %arg5: memref<1x64xf32, #tpu.memory_space<vmem>>, %arg6: memref<64x128xbf16, #tpu.memory_space<vmem>>, %arg7: memref<1x128xf32, #tpu.memory_space<vmem>>, %arg8: memref<64x64xbf16, #tpu.memory_space<vmem>>, %arg9: memref<1x64xf32, #tpu.memory_space<vmem>>, %arg10: memref<64x4xbf16, #tpu.memory_space<vmem>>, %arg11: memref<4x64xbf16, #tpu.memory_space<vmem>>, %arg12: memref<64x64xbf16, #tpu.memory_space<vmem>>, %arg13: memref<1x64xf32, #tpu.memory_space<vmem>>, %arg14: memref<1x64xf32, #tpu.memory_space<vmem>>, %arg15: memref<1x64xf32, #tpu.memory_space<vmem>>, %arg16: memref<64x128xbf16, #tpu.memory_space<vmem>>, %arg17: memref<1x128xf32, #tpu.memory_space<vmem>>, %arg18: memref<128x64xbf16, #tpu.memory_space<vmem>>, %arg19: memref<1x64xf32, #tpu.memory_space<vmem>>, %arg20: memref<1x64xf32, #tpu.memory_space<vmem>>, %arg21: memref<1x64xf32, #tpu.memory_space<vmem>>, %arg22: memref<1x64x64xf32, #tpu.memory_space<vmem>>) attributes {dimension_semantics = [#tpu.dimension_semantics<parallel>], iteration_bounds = array<i64: 2>, scalar_prefetch = 0 : i64, scratch_operands = 0 : i64, tpu.core_type = #tpu.core_type<tc>, window_params = [{transform_indices = @transform_0, window_bounds = array<i64: 1, 64, 64>}, {transform_indices = @transform_1, window_bounds = array<i64: 1, 64, 16>}, {transform_indices = @transform_2, window_bounds = array<i64: 1, 1024, 64>}, {pipeline_mode = #tpu.pipeline_mode<synchronous>, transform_indices = @transform_3, window_bounds = array<i64: 64, 64>}, {pipeline_mode = #tpu.pipeline_mode<synchronous>, transform_indices = @transform_4, window_bounds = array<i64: 1, 64>}, {pipeline_mode = #tpu.pipeline_mode<synchronous>, transform_indices = @transform_5, window_bounds = array<i64: 64, 128>}, {pipeline_mode = #tpu.pipeline_mode<synchronous>, transform_indices = @transform_6, window_bounds = array<i64: 1, 128>}, {pipeline_mode = #tpu.pipeline_mode<synchronous>, transform_indices = @transform_7, window_bounds = array<i64: 64, 64>}, {pipeline_mode = #tpu.pipeline_mode<synchronous>, transform_indices = @transform_8, window_bounds = array<i64: 1, 64>}, {pipeline_mode = #tpu.pipeline_mode<synchronous>, transform_indices = @transform_9, window_bounds = array<i64: 64, 4>}, {pipeline_mode = #tpu.pipeline_mode<synchronous>, transform_indices = @transform_10, window_bounds = array<i64: 4, 64>}, {pipeline_mode = #tpu.pipeline_mode<synchronous>, transform_indices = @transform_11, window_bounds = array<i64: 64, 64>}, {pipeline_mode = #tpu.pipeline_mode<synchronous>, transform_indices = @transform_12, window_bounds = array<i64: 1, 64>}, {pipeline_mode = #tpu.pipeline_mode<synchronous>, transform_indices = @transform_13, window_bounds = array<i64: 1, 64>}, {pipeline_mode = #tpu.pipeline_mode<synchronous>, transform_indices = @transform_14, window_bounds = array<i64: 1, 64>}, {pipeline_mode = #tpu.pipeline_mode<synchronous>, transform_indices = @transform_15, window_bounds = array<i64: 64, 128>}, {pipeline_mode = #tpu.pipeline_mode<synchronous>, transform_indices = @transform_16, window_bounds = array<i64: 1, 128>}, {pipeline_mode = #tpu.pipeline_mode<synchronous>, transform_indices = @transform_17, window_bounds = array<i64: 128, 64>}, {pipeline_mode = #tpu.pipeline_mode<synchronous>, transform_indices = @transform_18, window_bounds = array<i64: 1, 64>}, {pipeline_mode = #tpu.pipeline_mode<synchronous>, transform_indices = @transform_19, window_bounds = array<i64: 1, 64>}, {pipeline_mode = #tpu.pipeline_mode<synchronous>, transform_indices = @transform_20, window_bounds = array<i64: 1, 64>}, {transform_indices = @transform_21, window_bounds = array<i64: 1, 64, 64>}]} {
    %c0 = arith.constant 0 : index
    %c0_0 = arith.constant 0 : index
    %0 = vector.load %arg4[%c0, %c0_0] : memref<64x64xbf16, #tpu.memory_space<vmem>>, vector<64x64xbf16>
    %c0_1 = arith.constant 0 : index
    %c0_2 = arith.constant 0 : index
    %1 = vector.load %arg5[%c0_1, %c0_2] : memref<1x64xf32, #tpu.memory_space<vmem>>, vector<1x64xf32>
    %c0_3 = arith.constant 0 : index
    %c0_4 = arith.constant 0 : index
    %2 = vector.load %arg6[%c0_3, %c0_4] : memref<64x128xbf16, #tpu.memory_space<vmem>>, vector<64x128xbf16>
    %c0_5 = arith.constant 0 : index
    %c0_6 = arith.constant 0 : index
    %3 = vector.load %arg7[%c0_5, %c0_6] : memref<1x128xf32, #tpu.memory_space<vmem>>, vector<1x128xf32>
    %c0_7 = arith.constant 0 : index
    %c0_8 = arith.constant 0 : index
    %4 = vector.load %arg8[%c0_7, %c0_8] : memref<64x64xbf16, #tpu.memory_space<vmem>>, vector<64x64xbf16>
    %c0_9 = arith.constant 0 : index
    %c0_10 = arith.constant 0 : index
    %5 = vector.load %arg9[%c0_9, %c0_10] : memref<1x64xf32, #tpu.memory_space<vmem>>, vector<1x64xf32>
    %c0_11 = arith.constant 0 : index
    %c0_12 = arith.constant 0 : index
    %6 = vector.load %arg10[%c0_11, %c0_12] : memref<64x4xbf16, #tpu.memory_space<vmem>>, vector<64x4xbf16>
    %c0_13 = arith.constant 0 : index
    %c0_14 = arith.constant 0 : index
    %7 = vector.load %arg11[%c0_13, %c0_14] : memref<4x64xbf16, #tpu.memory_space<vmem>>, vector<4x64xbf16>
    %c0_15 = arith.constant 0 : index
    %c0_16 = arith.constant 0 : index
    %8 = vector.load %arg12[%c0_15, %c0_16] : memref<64x64xbf16, #tpu.memory_space<vmem>>, vector<64x64xbf16>
    %c0_17 = arith.constant 0 : index
    %c0_18 = arith.constant 0 : index
    %9 = vector.load %arg13[%c0_17, %c0_18] : memref<1x64xf32, #tpu.memory_space<vmem>>, vector<1x64xf32>
    %c0_19 = arith.constant 0 : index
    %c0_20 = arith.constant 0 : index
    %10 = vector.load %arg14[%c0_19, %c0_20] : memref<1x64xf32, #tpu.memory_space<vmem>>, vector<1x64xf32>
    %c0_21 = arith.constant 0 : index
    %c0_22 = arith.constant 0 : index
    %11 = vector.load %arg15[%c0_21, %c0_22] : memref<1x64xf32, #tpu.memory_space<vmem>>, vector<1x64xf32>
    %c0_23 = arith.constant 0 : index
    %c0_24 = arith.constant 0 : index
    %12 = vector.load %arg16[%c0_23, %c0_24] : memref<64x128xbf16, #tpu.memory_space<vmem>>, vector<64x128xbf16>
    %c0_25 = arith.constant 0 : index
    %c0_26 = arith.constant 0 : index
    %13 = vector.load %arg17[%c0_25, %c0_26] : memref<1x128xf32, #tpu.memory_space<vmem>>, vector<1x128xf32>
    %c0_27 = arith.constant 0 : index
    %c0_28 = arith.constant 0 : index
    %14 = vector.load %arg18[%c0_27, %c0_28] : memref<128x64xbf16, #tpu.memory_space<vmem>>, vector<128x64xbf16>
    %c0_29 = arith.constant 0 : index
    %c0_30 = arith.constant 0 : index
    %15 = vector.load %arg19[%c0_29, %c0_30] : memref<1x64xf32, #tpu.memory_space<vmem>>, vector<1x64xf32>
    %c0_31 = arith.constant 0 : index
    %c0_32 = arith.constant 0 : index
    %16 = vector.load %arg20[%c0_31, %c0_32] : memref<1x64xf32, #tpu.memory_space<vmem>>, vector<1x64xf32>
    %c0_33 = arith.constant 0 : index
    %c0_34 = arith.constant 0 : index
    %17 = vector.load %arg21[%c0_33, %c0_34] : memref<1x64xf32, #tpu.memory_space<vmem>>, vector<1x64xf32>
    %c0_35 = arith.constant 0 : index
    %c0_36 = arith.constant 0 : index
    %c0_37 = arith.constant 0 : index
    %18 = vector.load %arg1[%c0_35, %c0_36, %c0_37] : memref<1x64x64xf32, #tpu.memory_space<vmem>>, vector<1x64x64xf32>
    %19 = vector.shape_cast %18 : vector<1x64x64xf32> to vector<64x64xf32>
    %c0_38 = arith.constant 0 : index
    %c0_39 = arith.constant 0 : index
    %c0_40 = arith.constant 0 : index
    %20 = vector.load %arg2[%c0_38, %c0_39, %c0_40] : memref<1x64x16xi32, #tpu.memory_space<vmem>>, vector<1x64x16xi32>
    %21 = vector.shape_cast %20 : vector<1x64x16xi32> to vector<64x16xi32>
    %22 = tpu.iota {dimensions = array<i32: 2>} : vector<64x16x64xi32>
    %23 = vector.shape_cast %21 : vector<64x16xi32> to vector<64x16x1xi32>
    %24 = vector.broadcast %23 : vector<64x16x1xi32> to vector<64x16x64xi32>
    %25 = arith.cmpi eq, %22, %24 : vector<64x16x64xi32>
    %26 = arith.extui %25 : vector<64x16x64xi1> to vector<64x16x64xi32>
    %27 = arith.sitofp %26 : vector<64x16x64xi32> to vector<64x16x64xf32>
    %28 = arith.truncf %27 : vector<64x16x64xf32> to vector<64x16x64xbf16>
    %29 = vector.shape_cast %28 : vector<64x16x64xbf16> to vector<1024x64xbf16>
    %30 = arith.truncf %19 : vector<64x64xf32> to vector<64x64xbf16>
    %cst = arith.constant dense<0.000000e+00> : vector<1024x64xf32>
    %31 = tpu.matmul %29, %30, %cst {dimension_numbers = #tpu.dot_dimension_numbers<[1], [0], [0], [1], [0, 0, 1, 1], [], []>} : vector<1024x64xbf16>, vector<64x64xbf16>, vector<1024x64xf32> -> vector<1024x64xf32>
    %c0_41 = arith.constant 0 : index
    %c0_42 = arith.constant 0 : index
    %c0_43 = arith.constant 0 : index
    %32 = vector.load %arg3[%c0_41, %c0_42, %c0_43] : memref<1x1024x64xf32, #tpu.memory_space<vmem>>, vector<1x1024x64xf32>
    %33 = vector.shape_cast %32 : vector<1x1024x64xf32> to vector<1024x64xf32>
    %34 = arith.truncf %19 : vector<64x64xf32> to vector<64x64xbf16>
    %cst_44 = arith.constant dense<0.000000e+00> : vector<64x64xf32>
    %35 = tpu.matmul %34, %0, %cst_44 {dimension_numbers = #tpu.dot_dimension_numbers<[1], [0], [0], [1], [0, 0, 1, 1], [], []>} : vector<64x64xbf16>, vector<64x64xbf16>, vector<64x64xf32> -> vector<64x64xf32>
    %36 = vector.broadcast %1 : vector<1x64xf32> to vector<64x64xf32>
    %37 = arith.addf %35, %36 : vector<64x64xf32>
    %38 = arith.truncf %31 : vector<1024x64xf32> to vector<1024x64xbf16>
    %cst_45 = arith.constant dense<0.000000e+00> : vector<1024x128xf32>
    %39 = tpu.matmul %38, %2, %cst_45 {dimension_numbers = #tpu.dot_dimension_numbers<[1], [0], [0], [1], [0, 0, 1, 1], [], []>} : vector<1024x64xbf16>, vector<64x128xbf16>, vector<1024x128xf32> -> vector<1024x128xf32>
    %40 = vector.broadcast %3 : vector<1x128xf32> to vector<1024x128xf32>
    %41 = arith.addf %39, %40 : vector<1024x128xf32>
    %42 = arith.truncf %33 : vector<1024x64xf32> to vector<1024x64xbf16>
    %cst_46 = arith.constant dense<0.000000e+00> : vector<1024x64xf32>
    %43 = tpu.matmul %42, %4, %cst_46 {dimension_numbers = #tpu.dot_dimension_numbers<[1], [0], [0], [1], [0, 0, 1, 1], [], []>} : vector<1024x64xbf16>, vector<64x64xbf16>, vector<1024x64xf32> -> vector<1024x64xf32>
    %44 = vector.broadcast %5 : vector<1x64xf32> to vector<1024x64xf32>
    %45 = arith.addf %43, %44 : vector<1024x64xf32>
    %46 = vector.extract_strided_slice %41 {offsets = [0, 0], sizes = [1024, 64], strides = [1, 1]} : vector<1024x128xf32> to vector<1024x64xf32>
    %47 = arith.addf %46, %45 : vector<1024x64xf32>
    %48 = arith.truncf %47 : vector<1024x64xf32> to vector<1024x64xbf16>
    %49 = vector.extract_strided_slice %41 {offsets = [0, 64], sizes = [1024, 64], strides = [1, 1]} : vector<1024x128xf32> to vector<1024x64xf32>
    %50 = arith.truncf %49 : vector<1024x64xf32> to vector<1024x64xbf16>
    %51 = arith.truncf %37 : vector<64x64xf32> to vector<64x64xbf16>
    %52 = vector.shape_cast %51 : vector<64x64xbf16> to vector<64x1x64xbf16>
    %53 = vector.shape_cast %48 : vector<1024x64xbf16> to vector<64x16x64xbf16>
    %54 = vector.broadcast %52 : vector<64x1x64xbf16> to vector<64x16x64xbf16>
    %55 = arith.mulf %54, %53 : vector<64x16x64xbf16>
    %56 = vector.shape_cast %55 : vector<64x16x64xbf16> to vector<1024x64xbf16>
    %cst_47 = arith.constant dense<0.000000e+00> : vector<1024x4xf32>
    %57 = tpu.matmul %56, %6, %cst_47 {dimension_numbers = #tpu.dot_dimension_numbers<[1], [0], [0], [1], [0, 0, 1, 1], [], []>} : vector<1024x64xbf16>, vector<64x4xbf16>, vector<1024x4xf32> -> vector<1024x4xf32>
    %cst_48 = arith.constant 2.500000e-01 : f32
    %58 = vector.broadcast %cst_48 : f32 to vector<1024x4xf32>
    %59 = arith.mulf %57, %58 : vector<1024x4xf32>
    %60 = vector.shape_cast %59 : vector<1024x4xf32> to vector<64x16x4xf32>
    %cst_49 = arith.constant dense<0xFF800000> : vector<64x4xf32>
    %61 = vector.multi_reduction <maximumf>, %60, %cst_49 [1] : vector<64x16x4xf32> to vector<64x4xf32>
    %62 = vector.shape_cast %61 : vector<64x4xf32> to vector<64x1x4xf32>
    %63 = vector.broadcast %62 : vector<64x1x4xf32> to vector<64x16x4xf32>
    %64 = arith.subf %60, %63 : vector<64x16x4xf32>
    %65 = math.exp %64 : vector<64x16x4xf32>
    %cst_50 = arith.constant dense<0.000000e+00> : vector<64x4xf32>
    %66 = vector.multi_reduction <add>, %65, %cst_50 [1] : vector<64x16x4xf32> to vector<64x4xf32>
    %67 = vector.shape_cast %66 : vector<64x4xf32> to vector<64x1x4xf32>
    %68 = vector.broadcast %67 : vector<64x1x4xf32> to vector<64x16x4xf32>
    %69 = arith.divf %65, %68 : vector<64x16x4xf32>
    %70 = vector.shape_cast %69 : vector<64x16x4xf32> to vector<1024x4xf32>
    %71 = arith.truncf %70 : vector<1024x4xf32> to vector<1024x4xbf16>
    %cst_51 = arith.constant dense<0.000000e+00> : vector<1024x64xf32>
    %72 = tpu.matmul %71, %7, %cst_51 {dimension_numbers = #tpu.dot_dimension_numbers<[1], [0], [0], [1], [0, 0, 1, 1], [], []>} : vector<1024x4xbf16>, vector<4x64xbf16>, vector<1024x64xf32> -> vector<1024x64xf32>
    %73 = vector.shape_cast %72 : vector<1024x64xf32> to vector<64x16x64xf32>
    %74 = vector.shape_cast %50 : vector<1024x64xbf16> to vector<64x16x64xbf16>
    %75 = arith.extf %74 : vector<64x16x64xbf16> to vector<64x16x64xf32>
    %76 = arith.mulf %73, %75 : vector<64x16x64xf32>
    %cst_52 = arith.constant dense<0.000000e+00> : vector<64x64xf32>
    %77 = vector.multi_reduction <add>, %76, %cst_52 [1] : vector<64x16x64xf32> to vector<64x64xf32>
    %78 = arith.truncf %77 : vector<64x64xf32> to vector<64x64xbf16>
    %cst_53 = arith.constant dense<0.000000e+00> : vector<64x64xf32>
    %79 = tpu.matmul %78, %8, %cst_53 {dimension_numbers = #tpu.dot_dimension_numbers<[1], [0], [0], [1], [0, 0, 1, 1], [], []>} : vector<64x64xbf16>, vector<64x64xbf16>, vector<64x64xf32> -> vector<64x64xf32>
    %80 = vector.broadcast %9 : vector<1x64xf32> to vector<64x64xf32>
    %81 = arith.addf %79, %80 : vector<64x64xf32>
    %82 = arith.addf %81, %19 : vector<64x64xf32>
    %cst_54 = arith.constant dense<0.000000e+00> : vector<64xf32>
    %83 = vector.multi_reduction <add>, %82, %cst_54 [1] : vector<64x64xf32> to vector<64xf32>
    %84 = vector.shape_cast %83 : vector<64xf32> to vector<64x1xf32>
    %cst_55 = arith.constant 6.400000e+01 : f32
    %85 = vector.broadcast %cst_55 : f32 to vector<64x1xf32>
    %86 = arith.divf %84, %85 : vector<64x1xf32>
    %87 = vector.broadcast %86 : vector<64x1xf32> to vector<64x64xf32>
    %88 = arith.subf %82, %87 : vector<64x64xf32>
    %89 = arith.mulf %88, %88 : vector<64x64xf32>
    %cst_56 = arith.constant dense<0.000000e+00> : vector<64xf32>
    %90 = vector.multi_reduction <add>, %89, %cst_56 [1] : vector<64x64xf32> to vector<64xf32>
    %91 = vector.shape_cast %90 : vector<64xf32> to vector<64x1xf32>
    %cst_57 = arith.constant 6.400000e+01 : f32
    %92 = vector.broadcast %cst_57 : f32 to vector<64x1xf32>
    %93 = arith.divf %91, %92 : vector<64x1xf32>
    %94 = vector.broadcast %86 : vector<64x1xf32> to vector<64x64xf32>
    %95 = arith.subf %82, %94 : vector<64x64xf32>
    %cst_58 = arith.constant 9.99999974E-6 : f32
    %96 = vector.broadcast %cst_58 : f32 to vector<64x1xf32>
    %97 = arith.addf %93, %96 : vector<64x1xf32>
    %98 = math.rsqrt %97 : vector<64x1xf32>
    %99 = vector.broadcast %98 : vector<64x1xf32> to vector<64x64xf32>
    %100 = arith.mulf %95, %99 : vector<64x64xf32>
    %101 = vector.broadcast %10 : vector<1x64xf32> to vector<64x64xf32>
    %102 = arith.mulf %100, %101 : vector<64x64xf32>
    %103 = vector.broadcast %11 : vector<1x64xf32> to vector<64x64xf32>
    %104 = arith.addf %102, %103 : vector<64x64xf32>
    %105 = arith.truncf %104 : vector<64x64xf32> to vector<64x64xbf16>
    %cst_59 = arith.constant dense<0.000000e+00> : vector<64x128xf32>
    %106 = tpu.matmul %105, %12, %cst_59 {dimension_numbers = #tpu.dot_dimension_numbers<[1], [0], [0], [1], [0, 0, 1, 1], [], []>} : vector<64x64xbf16>, vector<64x128xbf16>, vector<64x128xf32> -> vector<64x128xf32>
    %107 = vector.broadcast %13 : vector<1x128xf32> to vector<64x128xf32>
    %108 = arith.addf %106, %107 : vector<64x128xf32>
    %109 = arith.mulf %108, %108 : vector<64x128xf32>
    %110 = arith.mulf %108, %109 : vector<64x128xf32>
    %cst_60 = arith.constant 4.471500e-02 : f32
    %111 = vector.broadcast %cst_60 : f32 to vector<64x128xf32>
    %112 = arith.mulf %111, %110 : vector<64x128xf32>
    %113 = arith.addf %108, %112 : vector<64x128xf32>
    %cst_61 = arith.constant 0.797884583 : f32
    %114 = vector.broadcast %cst_61 : f32 to vector<64x128xf32>
    %115 = arith.mulf %114, %113 : vector<64x128xf32>
    %116 = math.tanh %115 : vector<64x128xf32>
    %cst_62 = arith.constant 1.000000e+00 : f32
    %117 = vector.broadcast %cst_62 : f32 to vector<64x128xf32>
    %118 = arith.addf %117, %116 : vector<64x128xf32>
    %cst_63 = arith.constant 5.000000e-01 : f32
    %119 = vector.broadcast %cst_63 : f32 to vector<64x128xf32>
    %120 = arith.mulf %119, %118 : vector<64x128xf32>
    %121 = arith.mulf %108, %120 : vector<64x128xf32>
    %122 = arith.truncf %121 : vector<64x128xf32> to vector<64x128xbf16>
    %cst_64 = arith.constant dense<0.000000e+00> : vector<64x64xf32>
    %123 = tpu.matmul %122, %14, %cst_64 {dimension_numbers = #tpu.dot_dimension_numbers<[1], [0], [0], [1], [0, 0, 1, 1], [], []>} : vector<64x128xbf16>, vector<128x64xbf16>, vector<64x64xf32> -> vector<64x64xf32>
    %124 = vector.broadcast %15 : vector<1x64xf32> to vector<64x64xf32>
    %125 = arith.addf %123, %124 : vector<64x64xf32>
    %126 = arith.addf %104, %125 : vector<64x64xf32>
    %cst_65 = arith.constant dense<0.000000e+00> : vector<64xf32>
    %127 = vector.multi_reduction <add>, %126, %cst_65 [1] : vector<64x64xf32> to vector<64xf32>
    %128 = vector.shape_cast %127 : vector<64xf32> to vector<64x1xf32>
    %cst_66 = arith.constant 6.400000e+01 : f32
    %129 = vector.broadcast %cst_66 : f32 to vector<64x1xf32>
    %130 = arith.divf %128, %129 : vector<64x1xf32>
    %131 = vector.broadcast %130 : vector<64x1xf32> to vector<64x64xf32>
    %132 = arith.subf %126, %131 : vector<64x64xf32>
    %133 = arith.mulf %132, %132 : vector<64x64xf32>
    %cst_67 = arith.constant dense<0.000000e+00> : vector<64xf32>
    %134 = vector.multi_reduction <add>, %133, %cst_67 [1] : vector<64x64xf32> to vector<64xf32>
    %135 = vector.shape_cast %134 : vector<64xf32> to vector<64x1xf32>
    %cst_68 = arith.constant 6.400000e+01 : f32
    %136 = vector.broadcast %cst_68 : f32 to vector<64x1xf32>
    %137 = arith.divf %135, %136 : vector<64x1xf32>
    %138 = vector.broadcast %130 : vector<64x1xf32> to vector<64x64xf32>
    %139 = arith.subf %126, %138 : vector<64x64xf32>
    %cst_69 = arith.constant 9.99999974E-6 : f32
    %140 = vector.broadcast %cst_69 : f32 to vector<64x1xf32>
    %141 = arith.addf %137, %140 : vector<64x1xf32>
    %142 = math.rsqrt %141 : vector<64x1xf32>
    %143 = vector.broadcast %142 : vector<64x1xf32> to vector<64x64xf32>
    %144 = arith.mulf %139, %143 : vector<64x64xf32>
    %145 = vector.broadcast %16 : vector<1x64xf32> to vector<64x64xf32>
    %146 = arith.mulf %144, %145 : vector<64x64xf32>
    %147 = vector.broadcast %17 : vector<1x64xf32> to vector<64x64xf32>
    %148 = arith.addf %146, %147 : vector<64x64xf32>
    %c0_70 = arith.constant 0 : index
    %c0_71 = arith.constant 0 : index
    %c0_72 = arith.constant 0 : index
    %149 = vector.load %arg22[%c0_70, %c0_71, %c0_72] : memref<1x64x64xf32, #tpu.memory_space<vmem>>, vector<1x64x64xf32>
    %150 = vector.shape_cast %149 : vector<1x64x64xf32> to vector<64x64xf32>
    %151 = vector.shape_cast %148 : vector<64x64xf32> to vector<1x64x64xf32>
    tpu.vector_store %arg22[%c0_70, %c0_71, %c0_72], %151 {strides = array<i32>} : memref<1x64x64xf32, #tpu.memory_space<vmem>>, vector<1x64x64xf32>,
    return
  }
  func.func @transform_0(%arg0: i32) -> (i32, i32, i32) {
    %c0_i32 = arith.constant 0 : i32
    %c0_i32_0 = arith.constant 0 : i32
    %c0_i32_1 = arith.constant 0 : i32
    return %arg0, %c0_i32, %c0_i32_0 : i32, i32, i32
  }
  func.func @transform_1(%arg0: i32) -> (i32, i32, i32) {
    %c0_i32 = arith.constant 0 : i32
    %c0_i32_0 = arith.constant 0 : i32
    %c0_i32_1 = arith.constant 0 : i32
    return %arg0, %c0_i32, %c0_i32_0 : i32, i32, i32
  }
  func.func @transform_2(%arg0: i32) -> (i32, i32, i32) {
    %c0_i32 = arith.constant 0 : i32
    %c0_i32_0 = arith.constant 0 : i32
    %c0_i32_1 = arith.constant 0 : i32
    return %arg0, %c0_i32, %c0_i32_0 : i32, i32, i32
  }
  func.func @transform_3(%arg0: i32) -> (i32, i32) {
    %c0_i32 = arith.constant 0 : i32
    %c0_i32_0 = arith.constant 0 : i32
    %c0_i32_1 = arith.constant 0 : i32
    return %c0_i32, %c0_i32_0 : i32, i32
  }
  func.func @transform_4(%arg0: i32) -> (i32, i32) {
    %c0_i32 = arith.constant 0 : i32
    %c0_i32_0 = arith.constant 0 : i32
    %c0_i32_1 = arith.constant 0 : i32
    return %c0_i32, %c0_i32_0 : i32, i32
  }
  func.func @transform_5(%arg0: i32) -> (i32, i32) {
    %c0_i32 = arith.constant 0 : i32
    %c0_i32_0 = arith.constant 0 : i32
    %c0_i32_1 = arith.constant 0 : i32
    return %c0_i32, %c0_i32_0 : i32, i32
  }
  func.func @transform_6(%arg0: i32) -> (i32, i32) {
    %c0_i32 = arith.constant 0 : i32
    %c0_i32_0 = arith.constant 0 : i32
    %c0_i32_1 = arith.constant 0 : i32
    return %c0_i32, %c0_i32_0 : i32, i32
  }
  func.func @transform_7(%arg0: i32) -> (i32, i32) {
    %c0_i32 = arith.constant 0 : i32
    %c0_i32_0 = arith.constant 0 : i32
    %c0_i32_1 = arith.constant 0 : i32
    return %c0_i32, %c0_i32_0 : i32, i32
  }
  func.func @transform_8(%arg0: i32) -> (i32, i32) {
    %c0_i32 = arith.constant 0 : i32
    %c0_i32_0 = arith.constant 0 : i32
    %c0_i32_1 = arith.constant 0 : i32
    return %c0_i32, %c0_i32_0 : i32, i32
  }
  func.func @transform_9(%arg0: i32) -> (i32, i32) {
    %c0_i32 = arith.constant 0 : i32
    %c0_i32_0 = arith.constant 0 : i32
    %c0_i32_1 = arith.constant 0 : i32
    return %c0_i32, %c0_i32_0 : i32, i32
  }
  func.func @transform_10(%arg0: i32) -> (i32, i32) {
    %c0_i32 = arith.constant 0 : i32
    %c0_i32_0 = arith.constant 0 : i32
    %c0_i32_1 = arith.constant 0 : i32
    return %c0_i32, %c0_i32_0 : i32, i32
  }
  func.func @transform_11(%arg0: i32) -> (i32, i32) {
    %c0_i32 = arith.constant 0 : i32
    %c0_i32_0 = arith.constant 0 : i32
    %c0_i32_1 = arith.constant 0 : i32
    return %c0_i32, %c0_i32_0 : i32, i32
  }
  func.func @transform_12(%arg0: i32) -> (i32, i32) {
    %c0_i32 = arith.constant 0 : i32
    %c0_i32_0 = arith.constant 0 : i32
    %c0_i32_1 = arith.constant 0 : i32
    return %c0_i32, %c0_i32_0 : i32, i32
  }
  func.func @transform_13(%arg0: i32) -> (i32, i32) {
    %c0_i32 = arith.constant 0 : i32
    %c0_i32_0 = arith.constant 0 : i32
    %c0_i32_1 = arith.constant 0 : i32
    return %c0_i32, %c0_i32_0 : i32, i32
  }
  func.func @transform_14(%arg0: i32) -> (i32, i32) {
    %c0_i32 = arith.constant 0 : i32
    %c0_i32_0 = arith.constant 0 : i32
    %c0_i32_1 = arith.constant 0 : i32
    return %c0_i32, %c0_i32_0 : i32, i32
  }
  func.func @transform_15(%arg0: i32) -> (i32, i32) {
    %c0_i32 = arith.constant 0 : i32
    %c0_i32_0 = arith.constant 0 : i32
    %c0_i32_1 = arith.constant 0 : i32
    return %c0_i32, %c0_i32_0 : i32, i32
  }
  func.func @transform_16(%arg0: i32) -> (i32, i32) {
    %c0_i32 = arith.constant 0 : i32
    %c0_i32_0 = arith.constant 0 : i32
    %c0_i32_1 = arith.constant 0 : i32
    return %c0_i32, %c0_i32_0 : i32, i32
  }
  func.func @transform_17(%arg0: i32) -> (i32, i32) {
    %c0_i32 = arith.constant 0 : i32
    %c0_i32_0 = arith.constant 0 : i32
    %c0_i32_1 = arith.constant 0 : i32
    return %c0_i32, %c0_i32_0 : i32, i32
  }
  func.func @transform_18(%arg0: i32) -> (i32, i32) {
    %c0_i32 = arith.constant 0 : i32
    %c0_i32_0 = arith.constant 0 : i32
    %c0_i32_1 = arith.constant 0 : i32
    return %c0_i32, %c0_i32_0 : i32, i32
  }
  func.func @transform_19(%arg0: i32) -> (i32, i32) {
    %c0_i32 = arith.constant 0 : i32
    %c0_i32_0 = arith.constant 0 : i32
    %c0_i32_1 = arith.constant 0 : i32
    return %c0_i32, %c0_i32_0 : i32, i32
  }
  func.func @transform_20(%arg0: i32) -> (i32, i32) {
    %c0_i32 = arith.constant 0 : i32
    %c0_i32_0 = arith.constant 0 : i32
    %c0_i32_1 = arith.constant 0 : i32
    return %c0_i32, %c0_i32_0 : i32, i32
  }
  func.func @transform_21(%arg0: i32) -> (i32, i32, i32) {
    %c0_i32 = arith.constant 0 : i32
    %c0_i32_0 = arith.constant 0 : i32
    %c0_i32_1 = arith.constant 0 : i32
    return %arg0, %c0_i32, %c0_i32_0 : i32, i32, i32
  }
}

</mosaic_0001>

<llo_original>
// kernel: tpu_custom_call.1
$region0: #{tpu_custom_call.1}
  #allocation0 [shape = 'u32[]', space=smem, size = 0x4, offset = 0x4, fixed_abs, tag = 'smem constant byte address 0x4 - core index']
  #allocation1 [shape = 'u32[144,128]{1,0:T(1,128)}', space=vmem, size = 0x12000, scoped, tag = 'internal scratch']
  %s0 = inlined_call_operand.vmem [shape: f32[2,64,64], index: 0, kind: input, shape index: {}]
  %s1 = inlined_call_operand.vmem [shape: s32[2,64,16], index: 1, kind: input, shape index: {}]
  %s2 = inlined_call_operand.vmem [shape: f32[2,1024,64], index: 2, kind: input, shape index: {}]
  %s3 = inlined_call_operand.vmem [shape: bf16[64,64], index: 3, kind: input, shape index: {}]
  %s4 = inlined_call_operand.vmem [shape: f32[1,64], index: 4, kind: input, shape index: {}]
  %s5 = inlined_call_operand.vmem [shape: bf16[64,128], index: 5, kind: input, shape index: {}]
  %s6 = inlined_call_operand.vmem [shape: f32[1,128], index: 6, kind: input, shape index: {}]
  %s7 = inlined_call_operand.vmem [shape: bf16[64,64], index: 7, kind: input, shape index: {}]
  %s8 = inlined_call_operand.vmem [shape: f32[1,64], index: 8, kind: input, shape index: {}]
  %s9 = inlined_call_operand.vmem [shape: bf16[64,4], index: 9, kind: input, shape index: {}]
  %s10 = inlined_call_operand.vmem [shape: bf16[4,64], index: 10, kind: input, shape index: {}]
  %s11 = inlined_call_operand.vmem [shape: bf16[64,64], index: 11, kind: input, shape index: {}]
  %s12 = inlined_call_operand.vmem [shape: f32[1,64], index: 12, kind: input, shape index: {}]
  %s13 = inlined_call_operand.vmem [shape: f32[1,64], index: 13, kind: input, shape index: {}]
  %s14 = inlined_call_operand.vmem [shape: f32[1,64], index: 14, kind: input, shape index: {}]
  %s15 = inlined_call_operand.vmem [shape: bf16[64,128], index: 15, kind: input, shape index: {}]
  %s16 = inlined_call_operand.vmem [shape: f32[1,128], index: 16, kind: input, shape index: {}]
  %s17 = inlined_call_operand.vmem [shape: bf16[128,64], index: 17, kind: input, shape index: {}]
  %s18 = inlined_call_operand.vmem [shape: f32[1,64], index: 18, kind: input, shape index: {}]
  %s19 = inlined_call_operand.vmem [shape: f32[1,64], index: 19, kind: input, shape index: {}]
  %s20 = inlined_call_operand.vmem [shape: f32[1,64], index: 20, kind: input, shape index: {}]
  %s21 = inlined_call_operand.hbm [shape: f32[2,64,64], index: 21, kind: output, shape index: {}]
  %s22 = sld [smem:[#allocation0]]
  $region117: #{tpu_custom_call.1} parent=0
    _
  %s24 = ssub.s32 1, %s22
  %s25 = scalar_select 0, %s24, %s22
  $region1: #{tpu_custom_call.1} parent=0
    #allocation2 [shape = 'u8[65536]{0}', space=vmem, size = 0x10000, scoped, tag = 'output window, operand 0']
    #allocation3 [shape = 's32[2]{0}', space=sflag, size = 0x8, scoped, tag = 'scoped memory for tpu_custom_call.1']
    %26 = vsyncpa [#allocation3], 0
    %s27 = scalar_lea.sflag [#allocation3], 1
    %28 = vsyncpa %s27, 0
    loop: start=0, step=1, limit=4
    $region2: #{tpu_custom_call.1} parent=1 // loop_pre_header
      _
    $region3: #{tpu_custom_call.1} parent=1 // loop_header
      %s30 = sphi 0, %s34
      %p31 = scmp.ge.s32.totalorder %s30, 4
      %s40 = sphi 0, %s42
      %s43 = sphi 0, %s40
      %s44 = sphi 0, %s43
      %s60 = sphi 0, %s44
      %s66 = sphi 0, %s68
      %s69 = sphi 0, %s66
      %s70 = sphi 0, %s69
      %s86 = sphi 0, %s70
      %s92 = sphi 0, %s94
      %s95 = sphi 0, %s92
      %s96 = sphi 0, %s95
      %s112 = sphi 0, %s96
      %s116 = sphi 0, %s116
      %s118 = sphi 0, %s116
      %s119 = sphi 0, %s118
      %s133 = sphi 0, %s119
      %s137 = sphi 0, %s137
      %s139 = sphi 0, %s137
      %s140 = sphi 0, %s139
      %s154 = sphi 0, %s140
      %s158 = sphi 0, %s158
      %s160 = sphi 0, %s158
      %s161 = sphi 0, %s160
      %s175 = sphi 0, %s161
      %s179 = sphi 0, %s179
      %s181 = sphi 0, %s179
      %s182 = sphi 0, %s181
      %s196 = sphi 0, %s182
      %s200 = sphi 0, %s200
      %s202 = sphi 0, %s200
      %s203 = sphi 0, %s202
      %s217 = sphi 0, %s203
      %s221 = sphi 0, %s221
      %s223 = sphi 0, %s221
      %s224 = sphi 0, %s223
      %s238 = sphi 0, %s224
      %s242 = sphi 0, %s242
      %s244 = sphi 0, %s242
      %s245 = sphi 0, %s244
      %s259 = sphi 0, %s245
      %s263 = sphi 0, %s263
      %s265 = sphi 0, %s263
      %s266 = sphi 0, %s265
      %s280 = sphi 0, %s266
      %s284 = sphi 0, %s284
      %s286 = sphi 0, %s284
      %s287 = sphi 0, %s286
      %s301 = sphi 0, %s287
      %s305 = sphi 0, %s305
      %s307 = sphi 0, %s305
      %s308 = sphi 0, %s307
      %s322 = sphi 0, %s308
      %s326 = sphi 0, %s326
      %s328 = sphi 0, %s326
      %s329 = sphi 0, %s328
      %s343 = sphi 0, %s329
      %s347 = sphi 0, %s347
      %s349 = sphi 0, %s347
      %s350 = sphi 0, %s349
      %s364 = sphi 0, %s350
      %s368 = sphi 0, %s368
      %s370 = sphi 0, %s368
      %s371 = sphi 0, %s370
      %s385 = sphi 0, %s371
      %s389 = sphi 0, %s389
      %s391 = sphi 0, %s389
      %s392 = sphi 0, %s391
      %s406 = sphi 0, %s392
      %s410 = sphi 0, %s410
      %s412 = sphi 0, %s410
      %s413 = sphi 0, %s412
      %s427 = sphi 0, %s413
      %s431 = sphi 0, %s431
      %s433 = sphi 0, %s431
      %s434 = sphi 0, %s433
      %s448 = sphi 0, %s434
      %s452 = sphi 0, %s452
      %s454 = sphi 0, %s452
      %s455 = sphi 0, %s454
      %s469 = sphi 0, %s455
      %s473 = sphi 0, %s473
      %s475 = sphi 0, %s473
      %s476 = sphi 0, %s475
      %s490 = sphi 0, %s476
      %s496 = sphi 0, %s498
      %s499 = sphi 0, %s496
      %s500 = sphi 0, %s499
      %s516 = sphi 0, %s500
    $region4: #{tpu_custom_call.1} parent=1 // loop_header_branch
      %33 = sbr.rel (%p31) target = $region8
    $region5: #{tpu_custom_call.1} parent=1 // loop_body
      %s35 = ssub.s32 %s30, 1
      %s36 = ssub.s32 %s30, 2
      %s37 = sadd.s32 %s30, 1
      %s38 = ssub.s32 %s30, %s37
      %p39 = scmp.eq.s32.totalorder %s38, 0
      %s41 = sadd.s32 %s40, 1
      %s42 = scalar_select %p39, %s40, %s41
      %p45 = pneg %p39
      %p46 = scmp.eq.s32.totalorder %s30, 1
      %p47 = por %p45, %p46
      %p48 = scmp.ne.s32.totalorder %s40, %s43
      %p49 = scmp.eq.s32.totalorder %s30, 0
      %p50 = por %p48, %p49
      %p51 = scmp.ne.s32.totalorder %s40, %s43
      %p52 = scmp.eq.s32.totalorder %s35, 1
      %p53 = por %p51, %p52
      %p54 = scmp.ne.s32.totalorder %s43, %s44
      %p55 = scmp.eq.s32.totalorder %s35, 0
      %p56 = por %p54, %p55
      %p57 = scmp.ne.s32.totalorder %s43, %s44
      %p58 = scmp.eq.s32.totalorder %s36, 1
      %p59 = por %p57, %p58
      %p61 = scmp.ne.s32.totalorder %s44, %s60
      %p62 = scmp.eq.s32.totalorder %s36, 0
      %p63 = por %p61, %p62
      %s64 = ssub.s32 %s30, %s37
      %p65 = scmp.eq.s32.totalorder %s64, 0
      %s67 = sadd.s32 %s66, 1
      %s68 = scalar_select %p65, %s66, %s67
      %p71 = pneg %p65
      %p72 = scmp.eq.s32.totalorder %s30, 1
      %p73 = por %p71, %p72
      %p74 = scmp.ne.s32.totalorder %s66, %s69
      %p75 = scmp.eq.s32.totalorder %s30, 0
      %p76 = por %p74, %p75
      %p77 = scmp.ne.s32.totalorder %s66, %s69
      %p78 = scmp.eq.s32.totalorder %s35, 1
      %p79 = por %p77, %p78
      %p80 = scmp.ne.s32.totalorder %s69, %s70
      %p81 = scmp.eq.s32.totalorder %s35, 0
      %p82 = por %p80, %p81
      %p83 = scmp.ne.s32.totalorder %s69, %s70
      %p84 = scmp.eq.s32.totalorder %s36, 1
      %p85 = por %p83, %p84
      %p87 = scmp.ne.s32.totalorder %s70, %s86
      %p88 = scmp.eq.s32.totalorder %s36, 0
      %p89 = por %p87, %p88
      %s90 = ssub.s32 %s30, %s37
      %p91 = scmp.eq.s32.totalorder %s90, 0
      %s93 = sadd.s32 %s92, 1
      %s94 = scalar_select %p91, %s92, %s93
      %p97 = pneg %p91
      %p98 = scmp.eq.s32.totalorder %s30, 1
      %p99 = por %p97, %p98
      %p100 = scmp.ne.s32.totalorder %s92, %s95
      %p101 = scmp.eq.s32.totalorder %s30, 0
      %p102 = por %p100, %p101
      %p103 = scmp.ne.s32.totalorder %s92, %s95
      %p104 = scmp.eq.s32.totalorder %s35, 1
      %p105 = por %p103, %p104
      %p106 = scmp.ne.s32.totalorder %s95, %s96
      %p107 = scmp.eq.s32.totalorder %s35, 0
      %p108 = por %p106, %p107
      %p109 = scmp.ne.s32.totalorder %s95, %s96
      %p110 = scmp.eq.s32.totalorder %s36, 1
      %p111 = por %p109, %p110
      %p113 = scmp.ne.s32.totalorder %s96, %s112
      %p114 = scmp.eq.s32.totalorder %s36, 0
      %p115 = por %p113, %p114
      %s117 = sadd.s32 %s116, 1
      %p120 = scmp.eq.s32.totalorder %s30, 1
      %p121 = scmp.ne.s32.totalorder %s116, %s118
      %p122 = scmp.eq.s32.totalorder %s30, 0
      %p123 = por %p121, %p122
      %p124 = scmp.ne.s32.totalorder %s116, %s118
      %p125 = scmp.eq.s32.totalorder %s35, 1
      %p126 = por %p124, %p125
      %p127 = scmp.ne.s32.totalorder %s118, %s119
      %p128 = scmp.eq.s32.totalorder %s35, 0
      %p129 = por %p127, %p128
      %p130 = scmp.ne.s32.totalorder %s118, %s119
      %p131 = scmp.eq.s32.totalorder %s36, 1
      %p132 = por %p130, %p131
      %p134 = scmp.ne.s32.totalorder %s119, %s133
      %p135 = scmp.eq.s32.totalorder %s36, 0
      %p136 = por %p134, %p135
      %s138 = sadd.s32 %s137, 1
      %p141 = scmp.eq.s32.totalorder %s30, 1
      %p142 = scmp.ne.s32.totalorder %s137, %s139
      %p143 = scmp.eq.s32.totalorder %s30, 0
      %p144 = por %p142, %p143
      %p145 = scmp.ne.s32.totalorder %s137, %s139
      %p146 = scmp.eq.s32.totalorder %s35, 1
      %p147 = por %p145, %p146
      %p148 = scmp.ne.s32.totalorder %s139, %s140
      %p149 = scmp.eq.s32.totalorder %s35, 0
      %p150 = por %p148, %p149
      %p151 = scmp.ne.s32.totalorder %s139, %s140
      %p152 = scmp.eq.s32.totalorder %s36, 1
      %p153 = por %p151, %p152
      %p155 = scmp.ne.s32.totalorder %s140, %s154
      %p156 = scmp.eq.s32.totalorder %s36, 0
      %p157 = por %p155, %p156
      %s159 = sadd.s32 %s158, 1
      %p162 = scmp.eq.s32.totalorder %s30, 1
      %p163 = scmp.ne.s32.totalorder %s158, %s160
      %p164 = scmp.eq.s32.totalorder %s30, 0
      %p165 = por %p163, %p164
      %p166 = scmp.ne.s32.totalorder %s158, %s160
      %p167 = scmp.eq.s32.totalorder %s35, 1
      %p168 = por %p166, %p167
      %p169 = scmp.ne.s32.totalorder %s160, %s161
      %p170 = scmp.eq.s32.totalorder %s35, 0
      %p171 = por %p169, %p170
      %p172 = scmp.ne.s32.totalorder %s160, %s161
      %p173 = scmp.eq.s32.totalorder %s36, 1
      %p174 = por %p172, %p173
      %p176 = scmp.ne.s32.totalorder %s161, %s175
      %p177 = scmp.eq.s32.totalorder %s36, 0
      %p178 = por %p176, %p177
      %s180 = sadd.s32 %s179, 1
      %p183 = scmp.eq.s32.totalorder %s30, 1
      %p184 = scmp.ne.s32.totalorder %s179, %s181
      %p185 = scmp.eq.s32.totalorder %s30, 0
      %p186 = por %p184, %p185
      %p187 = scmp.ne.s32.totalorder %s179, %s181
      %p188 = scmp.eq.s32.totalorder %s35, 1
      %p189 = por %p187, %p188
      %p190 = scmp.ne.s32.totalorder %s181, %s182
      %p191 = scmp.eq.s32.totalorder %s35, 0
      %p192 = por %p190, %p191
      %p193 = scmp.ne.s32.totalorder %s181, %s182
      %p194 = scmp.eq.s32.totalorder %s36, 1
      %p195 = por %p193, %p194
      %p197 = scmp.ne.s32.totalorder %s182, %s196
      %p198 = scmp.eq.s32.totalorder %s36, 0
      %p199 = por %p197, %p198
      %s201 = sadd.s32 %s200, 1
      %p204 = scmp.eq.s32.totalorder %s30, 1
      %p205 = scmp.ne.s32.totalorder %s200, %s202
      %p206 = scmp.eq.s32.totalorder %s30, 0
      %p207 = por %p205, %p206
      %p208 = scmp.ne.s32.totalorder %s200, %s202
      %p209 = scmp.eq.s32.totalorder %s35, 1
      %p210 = por %p208, %p209
      %p211 = scmp.ne.s32.totalorder %s202, %s203
      %p212 = scmp.eq.s32.totalorder %s35, 0
      %p213 = por %p211, %p212
      %p214 = scmp.ne.s32.totalorder %s202, %s203
      %p215 = scmp.eq.s32.totalorder %s36, 1
      %p216 = por %p214, %p215
      %p218 = scmp.ne.s32.totalorder %s203, %s217
      %p219 = scmp.eq.s32.totalorder %s36, 0
      %p220 = por %p218, %p219
      %s222 = sadd.s32 %s221, 1
      %p225 = scmp.eq.s32.totalorder %s30, 1
      %p226 = scmp.ne.s32.totalorder %s221, %s223
      %p227 = scmp.eq.s32.totalorder %s30, 0
      %p228 = por %p226, %p227
      %p229 = scmp.ne.s32.totalorder %s221, %s223
      %p230 = scmp.eq.s32.totalorder %s35, 1
      %p231 = por %p229, %p230
      %p232 = scmp.ne.s32.totalorder %s223, %s224
      %p233 = scmp.eq.s32.totalorder %s35, 0
      %p234 = por %p232, %p233
      %p235 = scmp.ne.s32.totalorder %s223, %s224
      %p236 = scmp.eq.s32.totalorder %s36, 1
      %p237 = por %p235, %p236
      %p239 = scmp.ne.s32.totalorder %s224, %s238
      %p240 = scmp.eq.s32.totalorder %s36, 0
      %p241 = por %p239, %p240
      %s243 = sadd.s32 %s242, 1
      %p246 = scmp.eq.s32.totalorder %s30, 1
      %p247 = scmp.ne.s32.totalorder %s242, %s244
      %p248 = scmp.eq.s32.totalorder %s30, 0
      %p249 = por %p247, %p248
      %p250 = scmp.ne.s32.totalorder %s242, %s244
      %p251 = scmp.eq.s32.totalorder %s35, 1
      %p252 = por %p250, %p251
      %p253 = scmp.ne.s32.totalorder %s244, %s245
      %p254 = scmp.eq.s32.totalorder %s35, 0
      %p255 = por %p253, %p254
      %p256 = scmp.ne.s32.totalorder %s244, %s245
      %p257 = scmp.eq.s32.totalorder %s36, 1
      %p258 = por %p256, %p257
      %p260 = scmp.ne.s32.totalorder %s245, %s259
      %p261 = scmp.eq.s32.totalorder %s36, 0
      %p262 = por %p260, %p261
      %s264 = sadd.s32 %s263, 1
      %p267 = scmp.eq.s32.totalorder %s30, 1
      %p268 = scmp.ne.s32.totalorder %s263, %s265
      %p269 = scmp.eq.s32.totalorder %s30, 0
      %p270 = por %p268, %p269
      %p271 = scmp.ne.s32.totalorder %s263, %s265
      %p272 = scmp.eq.s32.totalorder %s35, 1
      %p273 = por %p271, %p272
      %p274 = scmp.ne.s32.totalorder %s265, %s266
      %p275 = scmp.eq.s32.totalorder %s35, 0
      %p276 = por %p274, %p275
      %p277 = scmp.ne.s32.totalorder %s265, %s266
      %p278 = scmp.eq.s32.totalorder %s36, 1
      %p279 = por %p277, %p278
      %p281 = scmp.ne.s32.totalorder %s266, %s280
      %p282 = scmp.eq.s32.totalorder %s36, 0
      %p283 = por %p281, %p282
      %s285 = sadd.s32 %s284, 1
      %p288 = scmp.eq.s32.totalorder %s30, 1
      %p289 = scmp.ne.s32.totalorder %s284, %s286
      %p290 = scmp.eq.s32.totalorder %s30, 0
      %p291 = por %p289, %p290
      %p292 = scmp.ne.s32.totalorder %s284, %s286
      %p293 = scmp.eq.s32.totalorder %s35, 1
      %p294 = por %p292, %p293
      %p295 = scmp.ne.s32.totalorder %s286, %s287
      %p296 = scmp.eq.s32.totalorder %s35, 0
      %p297 = por %p295, %p296
      %p298 = scmp.ne.s32.totalorder %s286, %s287
      %p299 = scmp.eq.s32.totalorder %s36, 1
      %p300 = por %p298, %p299
      %p302 = scmp.ne.s32.totalorder %s287, %s301
      %p303 = scmp.eq.s32.totalorder %s36, 0
      %p304 = por %p302, %p303
      %s306 = sadd.s32 %s305, 1
      %p309 = scmp.eq.s32.totalorder %s30, 1
      %p310 = scmp.ne.s32.totalorder %s305, %s307
      %p311 = scmp.eq.s32.totalorder %s30, 0
      %p312 = por %p310, %p311
      %p313 = scmp.ne.s32.totalorder %s305, %s307
      %p314 = scmp.eq.s32.totalorder %s35, 1
      %p315 = por %p313, %p314
      %p316 = scmp.ne.s32.totalorder %s307, %s308
      %p317 = scmp.eq.s32.totalorder %s35, 0
      %p318 = por %p316, %p317
      %p319 = scmp.ne.s32.totalorder %s307, %s308
      %p320 = scmp.eq.s32.totalorder %s36, 1
      %p321 = por %p319, %p320
      %p323 = scmp.ne.s32.totalorder %s308, %s322
      %p324 = scmp.eq.s32.totalorder %s36, 0
      %p325 = por %p323, %p324
      %s327 = sadd.s32 %s326, 1
      %p330 = scmp.eq.s32.totalorder %s30, 1
      %p331 = scmp.ne.s32.totalorder %s326, %s328
      %p332 = scmp.eq.s32.totalorder %s30, 0
      %p333 = por %p331, %p332
      %p334 = scmp.ne.s32.totalorder %s326, %s328
      %p335 = scmp.eq.s32.totalorder %s35, 1
      %p336 = por %p334, %p335
      %p337 = scmp.ne.s32.totalorder %s328, %s329
      %p338 = scmp.eq.s32.totalorder %s35, 0
      %p339 = por %p337, %p338
      %p340 = scmp.ne.s32.totalorder %s328, %s329
      %p341 = scmp.eq.s32.totalorder %s36, 1
      %p342 = por %p340, %p341
      %p344 = scmp.ne.s32.totalorder %s329, %s343
      %p345 = scmp.eq.s32.totalorder %s36, 0
      %p346 = por %p344, %p345
      %s348 = sadd.s32 %s347, 1
      %p351 = scmp.eq.s32.totalorder %s30, 1
      %p352 = scmp.ne.s32.totalorder %s347, %s349
      %p353 = scmp.eq.s32.totalorder %s30, 0
      %p354 = por %p352, %p353
      %p355 = scmp.ne.s32.totalorder %s347, %s349
      %p356 = scmp.eq.s32.totalorder %s35, 1
      %p357 = por %p355, %p356
      %p358 = scmp.ne.s32.totalorder %s349, %s350
      %p359 = scmp.eq.s32.totalorder %s35, 0
      %p360 = por %p358, %p359
      %p361 = scmp.ne.s32.totalorder %s349, %s350
      %p362 = scmp.eq.s32.totalorder %s36, 1
      %p363 = por %p361, %p362
      %p365 = scmp.ne.s32.totalorder %s350, %s364
      %p366 = scmp.eq.s32.totalorder %s36, 0
      %p367 = por %p365, %p366
      %s369 = sadd.s32 %s368, 1
      %p372 = scmp.eq.s32.totalorder %s30, 1
      %p373 = scmp.ne.s32.totalorder %s368, %s370
      %p374 = scmp.eq.s32.totalorder %s30, 0
      %p375 = por %p373, %p374
      %p376 = scmp.ne.s32.totalorder %s368, %s370
      %p377 = scmp.eq.s32.totalorder %s35, 1
      %p378 = por %p376, %p377
      %p379 = scmp.ne.s32.totalorder %s370, %s371
      %p380 = scmp.eq.s32.totalorder %s35, 0
      %p381 = por %p379, %p380
      %p382 = scmp.ne.s32.totalorder %s370, %s371
      %p383 = scmp.eq.s32.totalorder %s36, 1
      %p384 = por %p382, %p383
      %p386 = scmp.ne.s32.totalorder %s371, %s385
      %p387 = scmp.eq.s32.totalorder %s36, 0
      %p388 = por %p386, %p387
      %s390 = sadd.s32 %s389, 1
      %p393 = scmp.eq.s32.totalorder %s30, 1
      %p394 = scmp.ne.s32.totalorder %s389, %s391
      %p395 = scmp.eq.s32.totalorder %s30, 0
      %p396 = por %p394, %p395
      %p397 = scmp.ne.s32.totalorder %s389, %s391
      %p398 = scmp.eq.s32.totalorder %s35, 1
      %p399 = por %p397, %p398
      %p400 = scmp.ne.s32.totalorder %s391, %s392
      %p401 = scmp.eq.s32.totalorder %s35, 0
      %p402 = por %p400, %p401
      %p403 = scmp.ne.s32.totalorder %s391, %s392
      %p404 = scmp.eq.s32.totalorder %s36, 1
      %p405 = por %p403, %p404
      %p407 = scmp.ne.s32.totalorder %s392, %s406
      %p408 = scmp.eq.s32.totalorder %s36, 0
      %p409 = por %p407, %p408
      %s411 = sadd.s32 %s410, 1
      %p414 = scmp.eq.s32.totalorder %s30, 1
      %p415 = scmp.ne.s32.totalorder %s410, %s412
      %p416 = scmp.eq.s32.totalorder %s30, 0
      %p417 = por %p415, %p416
      %p418 = scmp.ne.s32.totalorder %s410, %s412
      %p419 = scmp.eq.s32.totalorder %s35, 1
      %p420 = por %p418, %p419
      %p421 = scmp.ne.s32.totalorder %s412, %s413
      %p422 = scmp.eq.s32.totalorder %s35, 0
      %p423 = por %p421, %p422
      %p424 = scmp.ne.s32.totalorder %s412, %s413
      %p425 = scmp.eq.s32.totalorder %s36, 1
      %p426 = por %p424, %p425
      %p428 = scmp.ne.s32.totalorder %s413, %s427
      %p429 = scmp.eq.s32.totalorder %s36, 0
      %p430 = por %p428, %p429
      %s432 = sadd.s32 %s431, 1
      %p435 = scmp.eq.s32.totalorder %s30, 1
      %p436 = scmp.ne.s32.totalorder %s431, %s433
      %p437 = scmp.eq.s32.totalorder %s30, 0
      %p438 = por %p436, %p437
      %p439 = scmp.ne.s32.totalorder %s431, %s433
      %p440 = scmp.eq.s32.totalorder %s35, 1
      %p441 = por %p439, %p440
      %p442 = scmp.ne.s32.totalorder %s433, %s434
      %p443 = scmp.eq.s32.totalorder %s35, 0
      %p444 = por %p442, %p443
      %p445 = scmp.ne.s32.totalorder %s433, %s434
      %p446 = scmp.eq.s32.totalorder %s36, 1
      %p447 = por %p445, %p446
      %p449 = scmp.ne.s32.totalorder %s434, %s448
      %p450 = scmp.eq.s32.totalorder %s36, 0
      %p451 = por %p449, %p450
      %s453 = sadd.s32 %s452, 1
      %p456 = scmp.eq.s32.totalorder %s30, 1
      %p457 = scmp.ne.s32.totalorder %s452, %s454
      %p458 = scmp.eq.s32.totalorder %s30, 0
      %p459 = por %p457, %p458
      %p460 = scmp.ne.s32.totalorder %s452, %s454
      %p461 = scmp.eq.s32.totalorder %s35, 1
      %p462 = por %p460, %p461
      %p463 = scmp.ne.s32.totalorder %s454, %s455
      %p464 = scmp.eq.s32.totalorder %s35, 0
      %p465 = por %p463, %p464
      %p466 = scmp.ne.s32.totalorder %s454, %s455
      %p467 = scmp.eq.s32.totalorder %s36, 1
      %p468 = por %p466, %p467
      %p470 = scmp.ne.s32.totalorder %s455, %s469
      %p471 = scmp.eq.s32.totalorder %s36, 0
      %p472 = por %p470, %p471
      %s474 = sadd.s32 %s473, 1
      %p477 = scmp.eq.s32.totalorder %s30, 1
      %p478 = scmp.ne.s32.totalorder %s473, %s475
      %p479 = scmp.eq.s32.totalorder %s30, 0
      %p480 = por %p478, %p479
      %p481 = scmp.ne.s32.totalorder %s473, %s475
      %p482 = scmp.eq.s32.totalorder %s35, 1
      %p483 = por %p481, %p482
      %p484 = scmp.ne.s32.totalorder %s475, %s476
      %p485 = scmp.eq.s32.totalorder %s35, 0
      %p486 = por %p484, %p485
      %p487 = scmp.ne.s32.totalorder %s475, %s476
      %p488 = scmp.eq.s32.totalorder %s36, 1
      %p489 = por %p487, %p488
      %p491 = scmp.ne.s32.totalorder %s476, %s490
      %p492 = scmp.eq.s32.totalorder %s36, 0
      %p493 = por %p491, %p492
      %s494 = ssub.s32 %s30, %s37
      %p495 = scmp.eq.s32.totalorder %s494, 0
      %s497 = sadd.s32 %s496, 1
      %s498 = scalar_select %p495, %s496, %s497
      %p501 = pneg %p495
      %p502 = scmp.eq.s32.totalorder %s30, 1
      %p503 = por %p501, %p502
      %p504 = scmp.ne.s32.totalorder %s496, %s499
      %p505 = scmp.eq.s32.totalorder %s30, 0
      %p506 = por %p504, %p505
      %p507 = scmp.ne.s32.totalorder %s496, %s499
      %p508 = scmp.eq.s32.totalorder %s35, 1
      %p509 = por %p507, %p508
      %p510 = scmp.ne.s32.totalorder %s499, %s500
      %p511 = scmp.eq.s32.totalorder %s35, 0
      %p512 = por %p510, %p511
      %p513 = scmp.ne.s32.totalorder %s499, %s500
      %p514 = scmp.eq.s32.totalorder %s36, 1
      %p515 = por %p513, %p514
      %p517 = scmp.ne.s32.totalorder %s500, %s516
      %p518 = scmp.eq.s32.totalorder %s36, 0
      %p519 = por %p517, %p518
      %p520 = scmp.le.s32.totalorder 1, %s30
      %p521 = scmp.lt.s32.totalorder %s30, 3
      %p522 = pnand %p520, %p521
      %p523 = pneg %p522
      // Predicated region
      $region9: #{tpu_custom_call.1} parent=5 // pred_check
        _
      $region10: #{tpu_custom_call.1} parent=5 // pred_check_branch
        %525 = sbr.rel (%p522) target = $region12
      $region11: #{tpu_custom_call.1} parent=5 // pred_region
        %s526 = ssub.s32 %s30, 1
        // Predicated region
        $region13: #{tpu_custom_call.1} parent=11 // pred_check
          %p527 = pneg %p129
        $region14: #{tpu_custom_call.1} parent=11 // pred_check_branch
          %529 = sbr.rel (%p527) target = $region16
        $region15: #{tpu_custom_call.1} parent=11 // pred_region
          _
        $region16: #{tpu_custom_call.1} parent=11 // pred_fallthru
          _
        // Predicated region
        $region17: #{tpu_custom_call.1} parent=11 // pred_check
          %p530 = pneg %p150
        $region18: #{tpu_custom_call.1} parent=11 // pred_check_branch
          %532 = sbr.rel (%p530) target = $region20
        $region19: #{tpu_custom_call.1} parent=11 // pred_region
          _
        $region20: #{tpu_custom_call.1} parent=11 // pred_fallthru
          _
        // Predicated region
        $region21: #{tpu_custom_call.1} parent=11 // pred_check
          %p533 = pneg %p171
        $region22: #{tpu_custom_call.1} parent=11 // pred_check_branch
          %535 = sbr.rel (%p533) target = $region24
        $region23: #{tpu_custom_call.1} parent=11 // pred_region
          _
        $region24: #{tpu_custom_call.1} parent=11 // pred_fallthru
          _
        // Predicated region
        $region25: #{tpu_custom_call.1} parent=11 // pred_check
          %p536 = pneg %p192
        $region26: #{tpu_custom_call.1} parent=11 // pred_check_branch
          %538 = sbr.rel (%p536) target = $region28
        $region27: #{tpu_custom_call.1} parent=11 // pred_region
          _
        $region28: #{tpu_custom_call.1} parent=11 // pred_fallthru
          _
        // Predicated region
        $region29: #{tpu_custom_call.1} parent=11 // pred_check
          %p539 = pneg %p213
        $region30: #{tpu_custom_call.1} parent=11 // pred_check_branch
          %541 = sbr.rel (%p539) target = $region32
        $region31: #{tpu_custom_call.1} parent=11 // pred_region
          _
        $region32: #{tpu_custom_call.1} parent=11 // pred_fallthru
          _
        // Predicated region
        $region33: #{tpu_custom_call.1} parent=11 // pred_check
          %p542 = pneg %p234
        $region34: #{tpu_custom_call.1} parent=11 // pred_check_branch
          %544 = sbr.rel (%p542) target = $region36
        $region35: #{tpu_custom_call.1} parent=11 // pred_region
          _
        $region36: #{tpu_custom_call.1} parent=11 // pred_fallthru
          _
        // Predicated region
        $region37: #{tpu_custom_call.1} parent=11 // pred_check
          %p545 = pneg %p255
        $region38: #{tpu_custom_call.1} parent=11 // pred_check_branch
          %547 = sbr.rel (%p545) target = $region40
        $region39: #{tpu_custom_call.1} parent=11 // pred_region
          _
        $region40: #{tpu_custom_call.1} parent=11 // pred_fallthru
          _
        // Predicated region
        $region41: #{tpu_custom_call.1} parent=11 // pred_check
          %p548 = pneg %p276
        $region42: #{tpu_custom_call.1} parent=11 // pred_check_branch
          %550 = sbr.rel (%p548) target = $region44
        $region43: #{tpu_custom_call.1} parent=11 // pred_region
          _
        $region44: #{tpu_custom_call.1} parent=11 // pred_fallthru
          _
        // Predicated region
        $region45: #{tpu_custom_call.1} parent=11 // pred_check
          %p551 = pneg %p297
        $region46: #{tpu_custom_call.1} parent=11 // pred_check_branch
          %553 = sbr.rel (%p551) target = $region48
        $region47: #{tpu_custom_call.1} parent=11 // pred_region
          _
        $region48: #{tpu_custom_call.1} parent=11 // pred_fallthru
          _
        // Predicated region
        $region49: #{tpu_custom_call.1} parent=11 // pred_check
          %p554 = pneg %p318
        $region50: #{tpu_custom_call.1} parent=11 // pred_check_branch
          %556 = sbr.rel (%p554) target = $region52
        $region51: #{tpu_custom_call.1} parent=11 // pred_region
          _
        $region52: #{tpu_custom_call.1} parent=11 // pred_fallthru
          _
        // Predicated region
        $region53: #{tpu_custom_call.1} parent=11 // pred_check
          %p557 = pneg %p339
        $region54: #{tpu_custom_call.1} parent=11 // pred_check_branch
          %559 = sbr.rel (%p557) target = $region56
        $region55: #{tpu_custom_call.1} parent=11 // pred_region
          _
        $region56: #{tpu_custom_call.1} parent=11 // pred_fallthru
          _
        // Predicated region
        $region57: #{tpu_custom_call.1} parent=11 // pred_check
          %p560 = pneg %p360
        $region58: #{tpu_custom_call.1} parent=11 // pred_check_branch
          %562 = sbr.rel (%p560) target = $region60
        $region59: #{tpu_custom_call.1} parent=11 // pred_region
          _
        $region60: #{tpu_custom_call.1} parent=11 // pred_fallthru
          _
        // Predicated region
        $region61: #{tpu_custom_call.1} parent=11 // pred_check
          %p563 = pneg %p381
        $region62: #{tpu_custom_call.1} parent=11 // pred_check_branch
          %565 = sbr.rel (%p563) target = $region64
        $region63: #{tpu_custom_call.1} parent=11 // pred_region
          _
        $region64: #{tpu_custom_call.1} parent=11 // pred_fallthru
          _
        // Predicated region
        $region65: #{tpu_custom_call.1} parent=11 // pred_check
          %p566 = pneg %p402
        $region66: #{tpu_custom_call.1} parent=11 // pred_check_branch
          %568 = sbr.rel (%p566) target = $region68
        $region67: #{tpu_custom_call.1} parent=11 // pred_region
          _
        $region68: #{tpu_custom_call.1} parent=11 // pred_fallthru
          _
        // Predicated region
        $region69: #{tpu_custom_call.1} parent=11 // pred_check
          %p569 = pneg %p423
        $region70: #{tpu_custom_call.1} parent=11 // pred_check_branch
          %571 = sbr.rel (%p569) target = $region72
        $region71: #{tpu_custom_call.1} parent=11 // pred_region
          _
        $region72: #{tpu_custom_call.1} parent=11 // pred_fallthru
          _
        // Predicated region
        $region73: #{tpu_custom_call.1} parent=11 // pred_check
          %p572 = pneg %p444
        $region74: #{tpu_custom_call.1} parent=11 // pred_check_branch
          %574 = sbr.rel (%p572) target = $region76
        $region75: #{tpu_custom_call.1} parent=11 // pred_region
          _
        $region76: #{tpu_custom_call.1} parent=11 // pred_fallthru
          _
        // Predicated region
        $region77: #{tpu_custom_call.1} parent=11 // pred_check
          %p575 = pneg %p465
        $region78: #{tpu_custom_call.1} parent=11 // pred_check_branch
          %577 = sbr.rel (%p575) target = $region80
        $region79: #{tpu_custom_call.1} parent=11 // pred_region
          _
        $region80: #{tpu_custom_call.1} parent=11 // pred_fallthru
          _
        // Predicated region
        $region81: #{tpu_custom_call.1} parent=11 // pred_check
          %p578 = pneg %p486
        $region82: #{tpu_custom_call.1} parent=11 // pred_check_branch
          %580 = sbr.rel (%p578) target = $region84
        $region83: #{tpu_custom_call.1} parent=11 // pred_region
          _
        $region84: #{tpu_custom_call.1} parent=11 // pred_fallthru
          _
      $region12: #{tpu_custom_call.1} parent=5 // pred_fallthru
        _
      %p581 = scmp.lt.s32.totalorder %s30, 2
      // Predicated region
      $region85: #{tpu_custom_call.1} parent=5 // pred_check
        %p582 = pneg %p581
      $region86: #{tpu_custom_call.1} parent=5 // pred_check_branch
        %584 = sbr.rel (%p582) target = $region88
      $region87: #{tpu_custom_call.1} parent=5 // pred_region
        // Predicated region
        $region89: #{tpu_custom_call.1} parent=87 // pred_check
          %p585 = pneg %p50
        $region90: #{tpu_custom_call.1} parent=87 // pred_check_branch
          %587 = sbr.rel (%p585) target = $region92
        $region91: #{tpu_custom_call.1} parent=87 // pred_region
          %p588 = scmp.lt.s32.totalorder %s30, 1
          %s589 = scalar_select %p588, %s30, 1
          %s590 = smul.addr %s589, 8
          %s591 = smul.addr %s590, 8
          %s592 = scalar_lea.vmem %s0, %s591
        $region92: #{tpu_custom_call.1} parent=87 // pred_fallthru
          _
        // Predicated region
        $region93: #{tpu_custom_call.1} parent=87 // pred_check
          %p593 = pneg %p76
        $region94: #{tpu_custom_call.1} parent=87 // pred_check_branch
          %595 = sbr.rel (%p593) target = $region96
        $region95: #{tpu_custom_call.1} parent=87 // pred_region
          %p596 = scmp.lt.s32.totalorder %s30, 1
          %s597 = scalar_select %p596, %s30, 1
          %s598 = smul.addr %s597, 8
          %s599 = smul.addr %s598, 8
          %s600 = scalar_lea.vmem %s1, %s599
        $region96: #{tpu_custom_call.1} parent=87 // pred_fallthru
          _
        // Predicated region
        $region97: #{tpu_custom_call.1} parent=87 // pred_check
          %p601 = pneg %p102
        $region98: #{tpu_custom_call.1} parent=87 // pred_check_branch
          %603 = sbr.rel (%p601) target = $region100
        $region99: #{tpu_custom_call.1} parent=87 // pred_region
          %p604 = scmp.lt.s32.totalorder %s30, 1
          %s605 = scalar_select %p604, %s30, 1
          %s606 = smul.addr %s605, 128
          %s607 = smul.addr %s606, 8
          %s608 = scalar_lea.vmem %s2, %s607
        $region100: #{tpu_custom_call.1} parent=87 // pred_fallthru
          _
      $region88: #{tpu_custom_call.1} parent=5 // pred_fallthru
        _
      %p609 = scmp.le.s32.totalorder 1, %s30
      %p610 = scmp.lt.s32.totalorder %s30, 3
      %p611 = pnand %p609, %p610
      %p612 = pneg %p611
      // Predicated region
      $region101: #{tpu_custom_call.1} parent=5 // pred_check
        _
      $region102: #{tpu_custom_call.1} parent=5 // pred_check_branch
        %614 = sbr.rel (%p611) target = $region104
      $region103: #{tpu_custom_call.1} parent=5 // pred_region
        %s615 = ssub.s32 %s30, 1
        %p616 = scmp.lt.s32.totalorder %s35, 1
        %s617 = scalar_select %p616, %s35, 1
        %s618 = smul.addr %s617, 8
        %s619 = smul.addr %s618, 8
        %s620 = scalar_lea.vmem %s0, %s619
        %p621 = pneg %p56
        %p622 = pneg %p53
        %p623 = scmp.lt.s32.totalorder %s35, 1
        %s624 = scalar_select %p623, %s35, 1
        %s625 = smul.addr %s624, 8
        %s626 = smul.addr %s625, 8
        %s627 = scalar_lea.vmem %s1, %s626
        %p628 = pneg %p82
        %p629 = pneg %p79
        %p630 = scmp.lt.s32.totalorder %s35, 1
        %s631 = scalar_select %p630, %s35, 1
        %s632 = smul.addr %s631, 128
        %s633 = smul.addr %s632, 8
        %s634 = scalar_lea.vmem %s2, %s633
        %p635 = pneg %p108
        %p636 = pneg %p105
        %p637 = pneg %p129
        %p638 = pneg %p126
        %p639 = pneg %p150
        %p640 = pneg %p147
        %p641 = pneg %p171
        %p642 = pneg %p168
        %p643 = pneg %p192
        %p644 = pneg %p189
        %p645 = pneg %p213
        %p646 = pneg %p210
        %p647 = pneg %p234
        %p648 = pneg %p231
        %p649 = pneg %p255
        %p650 = pneg %p252
        %p651 = pneg %p276
        %p652 = pneg %p273
        %p653 = pneg %p297
        %p654 = pneg %p294
        %p655 = pneg %p318
        %p656 = pneg %p315
        %p657 = pneg %p339
        %p658 = pneg %p336
        %p659 = pneg %p360
        %p660 = pneg %p357
        %p661 = pneg %p381
        %p662 = pneg %p378
        %p663 = pneg %p402
        %p664 = pneg %p399
        %p665 = pneg %p423
        %p666 = pneg %p420
        %p667 = pneg %p444
        %p668 = pneg %p441
        %p669 = pneg %p465
        %p670 = pneg %p462
        %p671 = pneg %p486
        %p672 = pneg %p483
        %p673 = pneg %p512
        %p674 = pneg %p509
        %s675 = sand.u32 %s499, 1
        %s676 = scalar_lea.sflag [#allocation3], %s675
        %s677 = sand.u32 %s499, 1
        %s678 = smul.addr %s677, 64
        %s679 = scalar_lea.vmem [#allocation2], %s678
        %p680 = scmp.lt.s32.totalorder %s35, 1
        %s681 = scalar_select %p680, %s35, 1
        %s682 = smul.addr %s681, 8
        %s683 = smul.addr %s682, 8
        %s684 = scalar_lea.vmem %s0, %s683
        %p685 = scmp.lt.s32.totalorder %s35, 1
        %s686 = scalar_select %p685, %s35, 1
        %s687 = smul.addr %s686, 8
        %s688 = smul.addr %s687, 8
        %s689 = scalar_lea.vmem %s1, %s688
        %p690 = scmp.lt.s32.totalorder %s35, 1
        %s691 = scalar_select %p690, %s35, 1
        %s692 = smul.addr %s691, 128
        %s693 = smul.addr %s692, 8
        %s694 = scalar_lea.vmem %s2, %s693
        %v696 = vld [vmem:[%s3] sm:$0xf]
        %v697 = vld [vmem:[%s3 + $0x4] sm:$0xf]
        %v698 = vld [vmem:[%s3 + $0x8] sm:$0xf]
        %v699 = vld [vmem:[%s3 + $0xc] sm:$0xf]
        %v700 = vld [vmem:[%s3 + $0x10] sm:$0xf]
        %v701 = vld [vmem:[%s3 + $0x14] sm:$0xf]
        %v702 = vld [vmem:[%s3 + $0x18] sm:$0xf]
        %v703 = vld [vmem:[%s3 + $0x1c] sm:$0xf]
        %v704 = vld [vmem:[%s4] sm:$0x1]
        %v705 = vld [vmem:[%s5] sm:$0xf]
        %v706 = vld [vmem:[%s5 + $0x4] sm:$0xf]
        %v707 = vld [vmem:[%s5 + $0x8] sm:$0xf]
        %v708 = vld [vmem:[%s5 + $0xc] sm:$0xf]
        %v709 = vld [vmem:[%s5 + $0x10] sm:$0xf]
        %v710 = vld [vmem:[%s5 + $0x14] sm:$0xf]
        %v711 = vld [vmem:[%s5 + $0x18] sm:$0xf]
        %v712 = vld [vmem:[%s5 + $0x1c] sm:$0xf]
        %v713 = vld [vmem:[%s6] sm:$0x1]
        %v714 = vld [vmem:[%s7] sm:$0xf]
        %v715 = vld [vmem:[%s7 + $0x4] sm:$0xf]
        %v716 = vld [vmem:[%s7 + $0x8] sm:$0xf]
        %v717 = vld [vmem:[%s7 + $0xc] sm:$0xf]
        %v718 = vld [vmem:[%s7 + $0x10] sm:$0xf]
        %v719 = vld [vmem:[%s7 + $0x14] sm:$0xf]
        %v720 = vld [vmem:[%s7 + $0x18] sm:$0xf]
        %v721 = vld [vmem:[%s7 + $0x1c] sm:$0xf]
        %v722 = vld [vmem:[%s8] sm:$0x1]
        %v723 = vld [vmem:[%s9] sm:$0xf]
        %v724 = vld [vmem:[%s9 + $0x4] sm:$0xf]
        %v725 = vld [vmem:[%s9 + $0x8] sm:$0xf]
        %v726 = vld [vmem:[%s9 + $0xc] sm:$0xf]
        %v727 = vld [vmem:[%s9 + $0x10] sm:$0xf]
        %v728 = vld [vmem:[%s9 + $0x14] sm:$0xf]
        %v729 = vld [vmem:[%s9 + $0x18] sm:$0xf]
        %v730 = vld [vmem:[%s9 + $0x1c] sm:$0xf]
        %v731 = vld [vmem:[%s10] sm:$0x3]
        %v732 = vld [vmem:[%s11] sm:$0xf]
        %v733 = vld [vmem:[%s11 + $0x4] sm:$0xf]
        %v734 = vld [vmem:[%s11 + $0x8] sm:$0xf]
        %v735 = vld [vmem:[%s11 + $0xc] sm:$0xf]
        %v736 = vld [vmem:[%s11 + $0x10] sm:$0xf]
        %v737 = vld [vmem:[%s11 + $0x14] sm:$0xf]
        %v738 = vld [vmem:[%s11 + $0x18] sm:$0xf]
        %v739 = vld [vmem:[%s11 + $0x1c] sm:$0xf]
        %v740 = vld [vmem:[%s12] sm:$0x1]
        %v741 = vld [vmem:[%s13] sm:$0x1]
        %v742 = vld [vmem:[%s14] sm:$0x1]
        %v743 = vld [vmem:[%s15] sm:$0xf]
        %v744 = vld [vmem:[%s15 + $0x4] sm:$0xf]
        %v745 = vld [vmem:[%s15 + $0x8] sm:$0xf]
        %v746 = vld [vmem:[%s15 + $0xc] sm:$0xf]
        %v747 = vld [vmem:[%s15 + $0x10] sm:$0xf]
        %v748 = vld [vmem:[%s15 + $0x14] sm:$0xf]
        %v749 = vld [vmem:[%s15 + $0x18] sm:$0xf]
        %v750 = vld [vmem:[%s15 + $0x1c] sm:$0xf]
        %v751 = vld [vmem:[%s16] sm:$0x1]
        %v752 = vld [vmem:[%s17] sm:$0xf]
        %v753 = vld [vmem:[%s17 + $0x4] sm:$0xf]
        %v754 = vld [vmem:[%s17 + $0x8] sm:$0xf]
        %v755 = vld [vmem:[%s17 + $0xc] sm:$0xf]
        %v756 = vld [vmem:[%s17 + $0x10] sm:$0xf]
        %v757 = vld [vmem:[%s17 + $0x14] sm:$0xf]
        %v758 = vld [vmem:[%s17 + $0x18] sm:$0xf]
        %v759 = vld [vmem:[%s17 + $0x1c] sm:$0xf]
        %v760 = vld [vmem:[%s17 + $0x20] sm:$0xf]
        %v761 = vld [vmem:[%s17 + $0x24] sm:$0xf]
        %v762 = vld [vmem:[%s17 + $0x28] sm:$0xf]
        %v763 = vld [vmem:[%s17 + $0x2c] sm:$0xf]
        %v764 = vld [vmem:[%s17 + $0x30] sm:$0xf]
        %v765 = vld [vmem:[%s17 + $0x34] sm:$0xf]
        %v766 = vld [vmem:[%s17 + $0x38] sm:$0xf]
        %v767 = vld [vmem:[%s17 + $0x3c] sm:$0xf]
        %v768 = vld [vmem:[%s18] sm:$0x1]
        %v769 = vld [vmem:[%s19] sm:$0x1]
        %v770 = vld [vmem:[%s20] sm:$0x1]
        %v771 = vld [vmem:[%s684] sm:$0xff]
        %v772 = vld [vmem:[%s684 + $0x8] sm:$0xff]
        %v773 = vld [vmem:[%s684 + $0x10] sm:$0xff]
        %v774 = vld [vmem:[%s684 + $0x18] sm:$0xff]
        %v775 = vld [vmem:[%s684 + $0x20] sm:$0xff]
        %v776 = vld [vmem:[%s684 + $0x28] sm:$0xff]
        %v777 = vld [vmem:[%s684 + $0x30] sm:$0xff]
        %v778 = vld [vmem:[%s684 + $0x38] sm:$0xff]
        %v779 = vld [vmem:[%s689] sm:$0xff]
        %v780 = vld [vmem:[%s689 + $0x8] sm:$0xff]
        %v781 = vld [vmem:[%s689 + $0x10] sm:$0xff]
        %v782 = vld [vmem:[%s689 + $0x18] sm:$0xff]
        %v783 = vld [vmem:[%s689 + $0x20] sm:$0xff]
        %v784 = vld [vmem:[%s689 + $0x28] sm:$0xff]
        %v785 = vld [vmem:[%s689 + $0x30] sm:$0xff]
        %v786 = vld [vmem:[%s689 + $0x38] sm:$0xff]
        %v787 = vlaneseq
        %v788 = vand.u32 %v787, 127
        %v789 = vlaneseq
        %v790 = vshrl.u32 %v789, 7
        %v791 = vsub.s32 0, %v790
        %v792 = vrot.slane %v779, %v791
        %794 = vbcast.lane.b32.xlu0 %v792, 256
        %v795 = vpop.permute.xlu0 %794
        %s797 = sor.u32 256, 8
        %798 = vbcast.lane.b32.xlu0 %v792, %s797
        %v799 = vpop.permute.xlu0 %798
        %v800 = vlaneseq
        %v801 = vshrl.u32 %v800, 7
        %v802 = vsub.s32 1, %v801
        %v803 = vrot.slane %v779, %v802
        %805 = vbcast.lane.b32.xlu0 %v803, 256
        %v806 = vpop.permute.xlu0 %805
        %s808 = sor.u32 256, 8
        %809 = vbcast.lane.b32.xlu0 %v803, %s808
        %v810 = vpop.permute.xlu0 %809
        %v811 = vlaneseq
        %v812 = vshrl.u32 %v811, 7
        %v813 = vsub.s32 2, %v812
        %v814 = vrot.slane %v779, %v813
        %816 = vbcast.lane.b32.xlu0 %v814, 256
        %v817 = vpop.permute.xlu0 %816
        %s819 = sor.u32 256, 8
        %820 = vbcast.lane.b32.xlu0 %v814, %s819
        %v821 = vpop.permute.xlu0 %820
        %v822 = vlaneseq
        %v823 = vshrl.u32 %v822, 7
        %v824 = vsub.s32 3, %v823
        %v825 = vrot.slane %v779, %v824
        %827 = vbcast.lane.b32.xlu0 %v825, 256
        %v828 = vpop.permute.xlu0 %827
        %s830 = sor.u32 256, 8
        %831 = vbcast.lane.b32.xlu0 %v825, %s830
        %v832 = vpop.permute.xlu0 %831
        %v833 = vlaneseq
        %v834 = vshrl.u32 %v833, 7
        %v835 = vsub.s32 4, %v834
        %v836 = vrot.slane %v779, %v835
        %838 = vbcast.lane.b32.xlu0 %v836, 256
        %v839 = vpop.permute.xlu0 %838
        %s841 = sor.u32 256, 8
        %842 = vbcast.lane.b32.xlu0 %v836, %s841
        %v843 = vpop.permute.xlu0 %842
        %v844 = vlaneseq
        %v845 = vshrl.u32 %v844, 7
        %v846 = vsub.s32 5, %v845
        %v847 = vrot.slane %v779, %v846
        %849 = vbcast.lane.b32.xlu0 %v847, 256
        %v850 = vpop.permute.xlu0 %849
        %s852 = sor.u32 256, 8
        %853 = vbcast.lane.b32.xlu0 %v847, %s852
        %v854 = vpop.permute.xlu0 %853
        %v855 = vlaneseq
        %v856 = vshrl.u32 %v855, 7
        %v857 = vsub.s32 6, %v856
        %v858 = vrot.slane %v779, %v857
        %860 = vbcast.lane.b32.xlu0 %v858, 256
        %v861 = vpop.permute.xlu0 %860
        %s863 = sor.u32 256, 8
        %864 = vbcast.lane.b32.xlu0 %v858, %s863
        %v865 = vpop.permute.xlu0 %864
        %v866 = vlaneseq
        %v867 = vshrl.u32 %v866, 7
        %v868 = vsub.s32 7, %v867
        %v869 = vrot.slane %v779, %v868
        %871 = vbcast.lane.b32.xlu0 %v869, 256
        %v872 = vpop.permute.xlu0 %871
        %s874 = sor.u32 256, 8
        %875 = vbcast.lane.b32.xlu0 %v869, %s874
        %v876 = vpop.permute.xlu0 %875
        %v877 = vlaneseq
        %v878 = vshrl.u32 %v877, 7
        %v879 = vsub.s32 0, %v878
        %v880 = vrot.slane %v780, %v879
        %882 = vbcast.lane.b32.xlu0 %v880, 256
        %v883 = vpop.permute.xlu0 %882
        %s885 = sor.u32 256, 8
        %886 = vbcast.lane.b32.xlu0 %v880, %s885
        %v887 = vpop.permute.xlu0 %886
        %v888 = vlaneseq
        %v889 = vshrl.u32 %v888, 7
        %v890 = vsub.s32 1, %v889
        %v891 = vrot.slane %v780, %v890
        %893 = vbcast.lane.b32.xlu0 %v891, 256
        %v894 = vpop.permute.xlu0 %893
        %s896 = sor.u32 256, 8
        %897 = vbcast.lane.b32.xlu0 %v891, %s896
        %v898 = vpop.permute.xlu0 %897
        %v899 = vlaneseq
        %v900 = vshrl.u32 %v899, 7
        %v901 = vsub.s32 2, %v900
        %v902 = vrot.slane %v780, %v901
        %904 = vbcast.lane.b32.xlu0 %v902, 256
        %v905 = vpop.permute.xlu0 %904
        %s907 = sor.u32 256, 8
        %908 = vbcast.lane.b32.xlu0 %v902, %s907
        %v909 = vpop.permute.xlu0 %908
        %v910 = vlaneseq
        %v911 = vshrl.u32 %v910, 7
        %v912 = vsub.s32 3, %v911
        %v913 = vrot.slane %v780, %v912
        %915 = vbcast.lane.b32.xlu0 %v913, 256
        %v916 = vpop.permute.xlu0 %915
        %s918 = sor.u32 256, 8
        %919 = vbcast.lane.b32.xlu0 %v913, %s918
        %v920 = vpop.permute.xlu0 %919
        %v921 = vlaneseq
        %v922 = vshrl.u32 %v921, 7
        %v923 = vsub.s32 4, %v922
        %v924 = vrot.slane %v780, %v923
        %926 = vbcast.lane.b32.xlu0 %v924, 256
        %v927 = vpop.permute.xlu0 %926
        %s929 = sor.u32 256, 8
        %930 = vbcast.lane.b32.xlu0 %v924, %s929
        %v931 = vpop.permute.xlu0 %930
        %v932 = vlaneseq
        %v933 = vshrl.u32 %v932, 7
        %v934 = vsub.s32 5, %v933
        %v935 = vrot.slane %v780, %v934
        %937 = vbcast.lane.b32.xlu0 %v935, 256
        %v938 = vpop.permute.xlu0 %937
        %s940 = sor.u32 256, 8
        %941 = vbcast.lane.b32.xlu0 %v935, %s940
        %v942 = vpop.permute.xlu0 %941
        %v943 = vlaneseq
        %v944 = vshrl.u32 %v943, 7
        %v945 = vsub.s32 6, %v944
        %v946 = vrot.slane %v780, %v945
        %948 = vbcast.lane.b32.xlu0 %v946, 256
        %v949 = vpop.permute.xlu0 %948
        %s951 = sor.u32 256, 8
        %952 = vbcast.lane.b32.xlu0 %v946, %s951
        %v953 = vpop.permute.xlu0 %952
        %v954 = vlaneseq
        %v955 = vshrl.u32 %v954, 7
        %v956 = vsub.s32 7, %v955
        %v957 = vrot.slane %v780, %v956
        %959 = vbcast.lane.b32.xlu0 %v957, 256
        %v960 = vpop.permute.xlu0 %959
        %s962 = sor.u32 256, 8
        %963 = vbcast.lane.b32.xlu0 %v957, %s962
        %v964 = vpop.permute.xlu0 %963
        %v965 = vlaneseq
        %v966 = vshrl.u32 %v965, 7
        %v967 = vsub.s32 0, %v966
        %v968 = vrot.slane %v781, %v967
        %970 = vbcast.lane.b32.xlu0 %v968, 256
        %v971 = vpop.permute.xlu0 %970
        %s973 = sor.u32 256, 8
        %974 = vbcast.lane.b32.xlu0 %v968, %s973
        %v975 = vpop.permute.xlu0 %974
        %v976 = vlaneseq
        %v977 = vshrl.u32 %v976, 7
        %v978 = vsub.s32 1, %v977
        %v979 = vrot.slane %v781, %v978
        %981 = vbcast.lane.b32.xlu0 %v979, 256
        %v982 = vpop.permute.xlu0 %981
        %s984 = sor.u32 256, 8
        %985 = vbcast.lane.b32.xlu0 %v979, %s984
        %v986 = vpop.permute.xlu0 %985
        %v987 = vlaneseq
        %v988 = vshrl.u32 %v987, 7
        %v989 = vsub.s32 2, %v988
        %v990 = vrot.slane %v781, %v989
        %992 = vbcast.lane.b32.xlu0 %v990, 256
        %v993 = vpop.permute.xlu0 %992
        %s995 = sor.u32 256, 8
        %996 = vbcast.lane.b32.xlu0 %v990, %s995
        %v997 = vpop.permute.xlu0 %996
        %v998 = vlaneseq
        %v999 = vshrl.u32 %v998, 7
        %v1000 = vsub.s32 3, %v999
        %v1001 = vrot.slane %v781, %v1000
        %1003 = vbcast.lane.b32.xlu0 %v1001, 256
        %v1004 = vpop.permute.xlu0 %1003
        %s1006 = sor.u32 256, 8
        %1007 = vbcast.lane.b32.xlu0 %v1001, %s1006
        %v1008 = vpop.permute.xlu0 %1007
        %v1009 = vlaneseq
        %v1010 = vshrl.u32 %v1009, 7
        %v1011 = vsub.s32 4, %v1010
        %v1012 = vrot.slane %v781, %v1011
        %1014 = vbcast.lane.b32.xlu0 %v1012, 256
        %v1015 = vpop.permute.xlu0 %1014
        %s1017 = sor.u32 256, 8
        %1018 = vbcast.lane.b32.xlu0 %v1012, %s1017
        %v1019 = vpop.permute.xlu0 %1018
        %v1020 = vlaneseq
        %v1021 = vshrl.u32 %v1020, 7
        %v1022 = vsub.s32 5, %v1021
        %v1023 = vrot.slane %v781, %v1022
        %1025 = vbcast.lane.b32.xlu0 %v1023, 256
        %v1026 = vpop.permute.xlu0 %1025
        %s1028 = sor.u32 256, 8
        %1029 = vbcast.lane.b32.xlu0 %v1023, %s1028
        %v1030 = vpop.permute.xlu0 %1029
        %v1031 = vlaneseq
        %v1032 = vshrl.u32 %v1031, 7
        %v1033 = vsub.s32 6, %v1032
        %v1034 = vrot.slane %v781, %v1033
        %1036 = vbcast.lane.b32.xlu0 %v1034, 256
        %v1037 = vpop.permute.xlu0 %1036
        %s1039 = sor.u32 256, 8
        %1040 = vbcast.lane.b32.xlu0 %v1034, %s1039
        %v1041 = vpop.permute.xlu0 %1040
        %v1042 = vlaneseq
        %v1043 = vshrl.u32 %v1042, 7
        %v1044 = vsub.s32 7, %v1043
        %v1045 = vrot.slane %v781, %v1044
        %1047 = vbcast.lane.b32.xlu0 %v1045, 256
        %v1048 = vpop.permute.xlu0 %1047
        %s1050 = sor.u32 256, 8
        %1051 = vbcast.lane.b32.xlu0 %v1045, %s1050
        %v1052 = vpop.permute.xlu0 %1051
        %v1053 = vlaneseq
        %v1054 = vshrl.u32 %v1053, 7
        %v1055 = vsub.s32 0, %v1054
        %v1056 = vrot.slane %v782, %v1055
        %1058 = vbcast.lane.b32.xlu0 %v1056, 256
        %v1059 = vpop.permute.xlu0 %1058
        %s1061 = sor.u32 256, 8
        %1062 = vbcast.lane.b32.xlu0 %v1056, %s1061
        %v1063 = vpop.permute.xlu0 %1062
        %v1064 = vlaneseq
        %v1065 = vshrl.u32 %v1064, 7
        %v1066 = vsub.s32 1, %v1065
        %v1067 = vrot.slane %v782, %v1066
        %1069 = vbcast.lane.b32.xlu0 %v1067, 256
        %v1070 = vpop.permute.xlu0 %1069
        %s1072 = sor.u32 256, 8
        %1073 = vbcast.lane.b32.xlu0 %v1067, %s1072
        %v1074 = vpop.permute.xlu0 %1073
        %v1075 = vlaneseq
        %v1076 = vshrl.u32 %v1075, 7
        %v1077 = vsub.s32 2, %v1076
        %v1078 = vrot.slane %v782, %v1077
        %1080 = vbcast.lane.b32.xlu0 %v1078, 256
        %v1081 = vpop.permute.xlu0 %1080
        %s1083 = sor.u32 256, 8
        %1084 = vbcast.lane.b32.xlu0 %v1078, %s1083
        %v1085 = vpop.permute.xlu0 %1084
        %v1086 = vlaneseq
        %v1087 = vshrl.u32 %v1086, 7
        %v1088 = vsub.s32 3, %v1087
        %v1089 = vrot.slane %v782, %v1088
        %1091 = vbcast.lane.b32.xlu0 %v1089, 256
        %v1092 = vpop.permute.xlu0 %1091
        %s1094 = sor.u32 256, 8
        %1095 = vbcast.lane.b32.xlu0 %v1089, %s1094
        %v1096 = vpop.permute.xlu0 %1095
        %v1097 = vlaneseq
        %v1098 = vshrl.u32 %v1097, 7
        %v1099 = vsub.s32 4, %v1098
        %v1100 = vrot.slane %v782, %v1099
        %1102 = vbcast.lane.b32.xlu0 %v1100, 256
        %v1103 = vpop.permute.xlu0 %1102
        %s1105 = sor.u32 256, 8
        %1106 = vbcast.lane.b32.xlu0 %v1100, %s1105
        %v1107 = vpop.permute.xlu0 %1106
        %v1108 = vlaneseq
        %v1109 = vshrl.u32 %v1108, 7
        %v1110 = vsub.s32 5, %v1109
        %v1111 = vrot.slane %v782, %v1110
        %1113 = vbcast.lane.b32.xlu0 %v1111, 256
        %v1114 = vpop.permute.xlu0 %1113
        %s1116 = sor.u32 256, 8
        %1117 = vbcast.lane.b32.xlu0 %v1111, %s1116
        %v1118 = vpop.permute.xlu0 %1117
        %v1119 = vlaneseq
        %v1120 = vshrl.u32 %v1119, 7
        %v1121 = vsub.s32 6, %v1120
        %v1122 = vrot.slane %v782, %v1121
        %1124 = vbcast.lane.b32.xlu0 %v1122, 256
        %v1125 = vpop.permute.xlu0 %1124
        %s1127 = sor.u32 256, 8
        %1128 = vbcast.lane.b32.xlu0 %v1122, %s1127
        %v1129 = vpop.permute.xlu0 %1128
        %v1130 = vlaneseq
        %v1131 = vshrl.u32 %v1130, 7
        %v1132 = vsub.s32 7, %v1131
        %v1133 = vrot.slane %v782, %v1132
        %1135 = vbcast.lane.b32.xlu0 %v1133, 256
        %v1136 = vpop.permute.xlu0 %1135
        %s1138 = sor.u32 256, 8
        %1139 = vbcast.lane.b32.xlu0 %v1133, %s1138
        %v1140 = vpop.permute.xlu0 %1139
        %v1141 = vlaneseq
        %v1142 = vshrl.u32 %v1141, 7
        %v1143 = vsub.s32 0, %v1142
        %v1144 = vrot.slane %v783, %v1143
        %1146 = vbcast.lane.b32.xlu0 %v1144, 256
        %v1147 = vpop.permute.xlu0 %1146
        %s1149 = sor.u32 256, 8
        %1150 = vbcast.lane.b32.xlu0 %v1144, %s1149
        %v1151 = vpop.permute.xlu0 %1150
        %v1152 = vlaneseq
        %v1153 = vshrl.u32 %v1152, 7
        %v1154 = vsub.s32 1, %v1153
        %v1155 = vrot.slane %v783, %v1154
        %1157 = vbcast.lane.b32.xlu0 %v1155, 256
        %v1158 = vpop.permute.xlu0 %1157
        %s1160 = sor.u32 256, 8
        %1161 = vbcast.lane.b32.xlu0 %v1155, %s1160
        %v1162 = vpop.permute.xlu0 %1161
        %v1163 = vlaneseq
        %v1164 = vshrl.u32 %v1163, 7
        %v1165 = vsub.s32 2, %v1164
        %v1166 = vrot.slane %v783, %v1165
        %1168 = vbcast.lane.b32.xlu0 %v1166, 256
        %v1169 = vpop.permute.xlu0 %1168
        %s1171 = sor.u32 256, 8
        %1172 = vbcast.lane.b32.xlu0 %v1166, %s1171
        %v1173 = vpop.permute.xlu0 %1172
        %v1174 = vlaneseq
        %v1175 = vshrl.u32 %v1174, 7
        %v1176 = vsub.s32 3, %v1175
        %v1177 = vrot.slane %v783, %v1176
        %1179 = vbcast.lane.b32.xlu0 %v1177, 256
        %v1180 = vpop.permute.xlu0 %1179
        %s1182 = sor.u32 256, 8
        %1183 = vbcast.lane.b32.xlu0 %v1177, %s1182
        %v1184 = vpop.permute.xlu0 %1183
        %v1185 = vlaneseq
        %v1186 = vshrl.u32 %v1185, 7
        %v1187 = vsub.s32 4, %v1186
        %v1188 = vrot.slane %v783, %v1187
        %1190 = vbcast.lane.b32.xlu0 %v1188, 256
        %v1191 = vpop.permute.xlu0 %1190
        %s1193 = sor.u32 256, 8
        %1194 = vbcast.lane.b32.xlu0 %v1188, %s1193
        %v1195 = vpop.permute.xlu0 %1194
        %v1196 = vlaneseq
        %v1197 = vshrl.u32 %v1196, 7
        %v1198 = vsub.s32 5, %v1197
        %v1199 = vrot.slane %v783, %v1198
        %1201 = vbcast.lane.b32.xlu0 %v1199, 256
        %v1202 = vpop.permute.xlu0 %1201
        %s1204 = sor.u32 256, 8
        %1205 = vbcast.lane.b32.xlu0 %v1199, %s1204
        %v1206 = vpop.permute.xlu0 %1205
        %v1207 = vlaneseq
        %v1208 = vshrl.u32 %v1207, 7
        %v1209 = vsub.s32 6, %v1208
        %v1210 = vrot.slane %v783, %v1209
        %1212 = vbcast.lane.b32.xlu0 %v1210, 256
        %v1213 = vpop.permute.xlu0 %1212
        %s1215 = sor.u32 256, 8
        %1216 = vbcast.lane.b32.xlu0 %v1210, %s1215
        %v1217 = vpop.permute.xlu0 %1216
        %v1218 = vlaneseq
        %v1219 = vshrl.u32 %v1218, 7
        %v1220 = vsub.s32 7, %v1219
        %v1221 = vrot.slane %v783, %v1220
        %1223 = vbcast.lane.b32.xlu0 %v1221, 256
        %v1224 = vpop.permute.xlu0 %1223
        %s1226 = sor.u32 256, 8
        %1227 = vbcast.lane.b32.xlu0 %v1221, %s1226
        %v1228 = vpop.permute.xlu0 %1227
        %v1229 = vlaneseq
        %v1230 = vshrl.u32 %v1229, 7
        %v1231 = vsub.s32 0, %v1230
        %v1232 = vrot.slane %v784, %v1231
        %1234 = vbcast.lane.b32.xlu0 %v1232, 256
        %v1235 = vpop.permute.xlu0 %1234
        %s1237 = sor.u32 256, 8
        %1238 = vbcast.lane.b32.xlu0 %v1232, %s1237
        %v1239 = vpop.permute.xlu0 %1238
        %v1240 = vlaneseq
        %v1241 = vshrl.u32 %v1240, 7
        %v1242 = vsub.s32 1, %v1241
        %v1243 = vrot.slane %v784, %v1242
        %1245 = vbcast.lane.b32.xlu0 %v1243, 256
        %v1246 = vpop.permute.xlu0 %1245
        %s1248 = sor.u32 256, 8
        %1249 = vbcast.lane.b32.xlu0 %v1243, %s1248
        %v1250 = vpop.permute.xlu0 %1249
        %v1251 = vlaneseq
        %v1252 = vshrl.u32 %v1251, 7
        %v1253 = vsub.s32 2, %v1252
        %v1254 = vrot.slane %v784, %v1253
        %1256 = vbcast.lane.b32.xlu0 %v1254, 256
        %v1257 = vpop.permute.xlu0 %1256
        %s1259 = sor.u32 256, 8
        %1260 = vbcast.lane.b32.xlu0 %v1254, %s1259
        %v1261 = vpop.permute.xlu0 %1260
        %v1262 = vlaneseq
        %v1263 = vshrl.u32 %v1262, 7
        %v1264 = vsub.s32 3, %v1263
        %v1265 = vrot.slane %v784, %v1264
        %1267 = vbcast.lane.b32.xlu0 %v1265, 256
        %v1268 = vpop.permute.xlu0 %1267
        %s1270 = sor.u32 256, 8
        %1271 = vbcast.lane.b32.xlu0 %v1265, %s1270
        %v1272 = vpop.permute.xlu0 %1271
        %v1273 = vlaneseq
        %v1274 = vshrl.u32 %v1273, 7
        %v1275 = vsub.s32 4, %v1274
        %v1276 = vrot.slane %v784, %v1275
        %1278 = vbcast.lane.b32.xlu0 %v1276, 256
        %v1279 = vpop.permute.xlu0 %1278
        %s1281 = sor.u32 256, 8
        %1282 = vbcast.lane.b32.xlu0 %v1276, %s1281
        %v1283 = vpop.permute.xlu0 %1282
        %v1284 = vlaneseq
        %v1285 = vshrl.u32 %v1284, 7
        %v1286 = vsub.s32 5, %v1285
        %v1287 = vrot.slane %v784, %v1286
        %1289 = vbcast.lane.b32.xlu0 %v1287, 256
        %v1290 = vpop.permute.xlu0 %1289
        %s1292 = sor.u32 256, 8
        %1293 = vbcast.lane.b32.xlu0 %v1287, %s1292
        %v1294 = vpop.permute.xlu0 %1293
        %v1295 = vlaneseq
        %v1296 = vshrl.u32 %v1295, 7
        %v1297 = vsub.s32 6, %v1296
        %v1298 = vrot.slane %v784, %v1297
        %1300 = vbcast.lane.b32.xlu0 %v1298, 256
        %v1301 = vpop.permute.xlu0 %1300
        %s1303 = sor.u32 256, 8
        %1304 = vbcast.lane.b32.xlu0 %v1298, %s1303
        %v1305 = vpop.permute.xlu0 %1304
        %v1306 = vlaneseq
        %v1307 = vshrl.u32 %v1306, 7
        %v1308 = vsub.s32 7, %v1307
        %v1309 = vrot.slane %v784, %v1308
        %1311 = vbcast.lane.b32.xlu0 %v1309, 256
        %v1312 = vpop.permute.xlu0 %1311
        %s1314 = sor.u32 256, 8
        %1315 = vbcast.lane.b32.xlu0 %v1309, %s1314
        %v1316 = vpop.permute.xlu0 %1315
        %v1317 = vlaneseq
        %v1318 = vshrl.u32 %v1317, 7
        %v1319 = vsub.s32 0, %v1318
        %v1320 = vrot.slane %v785, %v1319
        %1322 = vbcast.lane.b32.xlu0 %v1320, 256
        %v1323 = vpop.permute.xlu0 %1322
        %s1325 = sor.u32 256, 8
        %1326 = vbcast.lane.b32.xlu0 %v1320, %s1325
        %v1327 = vpop.permute.xlu0 %1326
        %v1328 = vlaneseq
        %v1329 = vshrl.u32 %v1328, 7
        %v1330 = vsub.s32 1, %v1329
        %v1331 = vrot.slane %v785, %v1330
        %1333 = vbcast.lane.b32.xlu0 %v1331, 256
        %v1334 = vpop.permute.xlu0 %1333
        %s1336 = sor.u32 256, 8
        %1337 = vbcast.lane.b32.xlu0 %v1331, %s1336
        %v1338 = vpop.permute.xlu0 %1337
        %v1339 = vlaneseq
        %v1340 = vshrl.u32 %v1339, 7
        %v1341 = vsub.s32 2, %v1340
        %v1342 = vrot.slane %v785, %v1341
        %1344 = vbcast.lane.b32.xlu0 %v1342, 256
        %v1345 = vpop.permute.xlu0 %1344
        %s1347 = sor.u32 256, 8
        %1348 = vbcast.lane.b32.xlu0 %v1342, %s1347
        %v1349 = vpop.permute.xlu0 %1348
        %v1350 = vlaneseq
        %v1351 = vshrl.u32 %v1350, 7
        %v1352 = vsub.s32 3, %v1351
        %v1353 = vrot.slane %v785, %v1352
        %1355 = vbcast.lane.b32.xlu0 %v1353, 256
        %v1356 = vpop.permute.xlu0 %1355
        %s1358 = sor.u32 256, 8
        %1359 = vbcast.lane.b32.xlu0 %v1353, %s1358
        %v1360 = vpop.permute.xlu0 %1359
        %v1361 = vlaneseq
        %v1362 = vshrl.u32 %v1361, 7
        %v1363 = vsub.s32 4, %v1362
        %v1364 = vrot.slane %v785, %v1363
        %1366 = vbcast.lane.b32.xlu0 %v1364, 256
        %v1367 = vpop.permute.xlu0 %1366
        %s1369 = sor.u32 256, 8
        %1370 = vbcast.lane.b32.xlu0 %v1364, %s1369
        %v1371 = vpop.permute.xlu0 %1370
        %v1372 = vlaneseq
        %v1373 = vshrl.u32 %v1372, 7
        %v1374 = vsub.s32 5, %v1373
        %v1375 = vrot.slane %v785, %v1374
        %1377 = vbcast.lane.b32.xlu0 %v1375, 256
        %v1378 = vpop.permute.xlu0 %1377
        %s1380 = sor.u32 256, 8
        %1381 = vbcast.lane.b32.xlu0 %v1375, %s1380
        %v1382 = vpop.permute.xlu0 %1381
        %v1383 = vlaneseq
        %v1384 = vshrl.u32 %v1383, 7
        %v1385 = vsub.s32 6, %v1384
        %v1386 = vrot.slane %v785, %v1385
        %1388 = vbcast.lane.b32.xlu0 %v1386, 256
        %v1389 = vpop.permute.xlu0 %1388
        %s1391 = sor.u32 256, 8
        %1392 = vbcast.lane.b32.xlu0 %v1386, %s1391
        %v1393 = vpop.permute.xlu0 %1392
        %v1394 = vlaneseq
        %v1395 = vshrl.u32 %v1394, 7
        %v1396 = vsub.s32 7, %v1395
        %v1397 = vrot.slane %v785, %v1396
        %1399 = vbcast.lane.b32.xlu0 %v1397, 256
        %v1400 = vpop.permute.xlu0 %1399
        %s1402 = sor.u32 256, 8
        %1403 = vbcast.lane.b32.xlu0 %v1397, %s1402
        %v1404 = vpop.permute.xlu0 %1403
        %v1405 = vlaneseq
        %v1406 = vshrl.u32 %v1405, 7
        %v1407 = vsub.s32 0, %v1406
        %v1408 = vrot.slane %v786, %v1407
        %1410 = vbcast.lane.b32.xlu0 %v1408, 256
        %v1411 = vpop.permute.xlu0 %1410
        %s1413 = sor.u32 256, 8
        %1414 = vbcast.lane.b32.xlu0 %v1408, %s1413
        %v1415 = vpop.permute.xlu0 %1414
        %v1416 = vlaneseq
        %v1417 = vshrl.u32 %v1416, 7
        %v1418 = vsub.s32 1, %v1417
        %v1419 = vrot.slane %v786, %v1418
        %1421 = vbcast.lane.b32.xlu0 %v1419, 256
        %v1422 = vpop.permute.xlu0 %1421
        %s1424 = sor.u32 256, 8
        %1425 = vbcast.lane.b32.xlu0 %v1419, %s1424
        %v1426 = vpop.permute.xlu0 %1425
        %v1427 = vlaneseq
        %v1428 = vshrl.u32 %v1427, 7
        %v1429 = vsub.s32 2, %v1428
        %v1430 = vrot.slane %v786, %v1429
        %1432 = vbcast.lane.b32.xlu0 %v1430, 256
        %v1433 = vpop.permute.xlu0 %1432
        %s1435 = sor.u32 256, 8
        %1436 = vbcast.lane.b32.xlu0 %v1430, %s1435
        %v1437 = vpop.permute.xlu0 %1436
        %v1438 = vlaneseq
        %v1439 = vshrl.u32 %v1438, 7
        %v1440 = vsub.s32 3, %v1439
        %v1441 = vrot.slane %v786, %v1440
        %1443 = vbcast.lane.b32.xlu0 %v1441, 256
        %v1444 = vpop.permute.xlu0 %1443
        %s1446 = sor.u32 256, 8
        %1447 = vbcast.lane.b32.xlu0 %v1441, %s1446
        %v1448 = vpop.permute.xlu0 %1447
        %v1449 = vlaneseq
        %v1450 = vshrl.u32 %v1449, 7
        %v1451 = vsub.s32 4, %v1450
        %v1452 = vrot.slane %v786, %v1451
        %1454 = vbcast.lane.b32.xlu0 %v1452, 256
        %v1455 = vpop.permute.xlu0 %1454
        %s1457 = sor.u32 256, 8
        %1458 = vbcast.lane.b32.xlu0 %v1452, %s1457
        %v1459 = vpop.permute.xlu0 %1458
        %v1460 = vlaneseq
        %v1461 = vshrl.u32 %v1460, 7
        %v1462 = vsub.s32 5, %v1461
        %v1463 = vrot.slane %v786, %v1462
        %1465 = vbcast.lane.b32.xlu0 %v1463, 256
        %v1466 = vpop.permute.xlu0 %1465
        %s1468 = sor.u32 256, 8
        %1469 = vbcast.lane.b32.xlu0 %v1463, %s1468
        %v1470 = vpop.permute.xlu0 %1469
        %v1471 = vlaneseq
        %v1472 = vshrl.u32 %v1471, 7
        %v1473 = vsub.s32 6, %v1472
        %v1474 = vrot.slane %v786, %v1473
        %1476 = vbcast.lane.b32.xlu0 %v1474, 256
        %v1477 = vpop.permute.xlu0 %1476
        %s1479 = sor.u32 256, 8
        %1480 = vbcast.lane.b32.xlu0 %v1474, %s1479
        %v1481 = vpop.permute.xlu0 %1480
        %v1482 = vlaneseq
        %v1483 = vshrl.u32 %v1482, 7
        %v1484 = vsub.s32 7, %v1483
        %v1485 = vrot.slane %v786, %v1484
        %1487 = vbcast.lane.b32.xlu0 %v1485, 256
        %v1488 = vpop.permute.xlu0 %1487
        %s1490 = sor.u32 256, 8
        %1491 = vbcast.lane.b32.xlu0 %v1485, %s1490
        %v1492 = vpop.permute.xlu0 %1491
        %vm1493 = vcmp.eq.s32.totalorder %v788, %v795
        %vm1494 = vcmp.eq.s32.totalorder %v788, %v799
        %vm1495 = vcmp.eq.s32.totalorder %v788, %v806
        %vm1496 = vcmp.eq.s32.totalorder %v788, %v810
        %vm1497 = vcmp.eq.s32.totalorder %v788, %v817
        %vm1498 = vcmp.eq.s32.totalorder %v788, %v821
        %vm1499 = vcmp.eq.s32.totalorder %v788, %v828
        %vm1500 = vcmp.eq.s32.totalorder %v788, %v832
        %vm1501 = vcmp.eq.s32.totalorder %v788, %v839
        %vm1502 = vcmp.eq.s32.totalorder %v788, %v843
        %vm1503 = vcmp.eq.s32.totalorder %v788, %v850
        %vm1504 = vcmp.eq.s32.totalorder %v788, %v854
        %vm1505 = vcmp.eq.s32.totalorder %v788, %v861
        %vm1506 = vcmp.eq.s32.totalorder %v788, %v865
        %vm1507 = vcmp.eq.s32.totalorder %v788, %v872
        %vm1508 = vcmp.eq.s32.totalorder %v788, %v876
        %vm1509 = vcmp.eq.s32.totalorder %v788, %v883
        %vm1510 = vcmp.eq.s32.totalorder %v788, %v887
        %vm1511 = vcmp.eq.s32.totalorder %v788, %v894
        %vm1512 = vcmp.eq.s32.totalorder %v788, %v898
        %vm1513 = vcmp.eq.s32.totalorder %v788, %v905
        %vm1514 = vcmp.eq.s32.totalorder %v788, %v909
        %vm1515 = vcmp.eq.s32.totalorder %v788, %v916
        %vm1516 = vcmp.eq.s32.totalorder %v788, %v920
        %vm1517 = vcmp.eq.s32.totalorder %v788, %v927
        %vm1518 = vcmp.eq.s32.totalorder %v788, %v931
        %vm1519 = vcmp.eq.s32.totalorder %v788, %v938
        %vm1520 = vcmp.eq.s32.totalorder %v788, %v942
        %vm1521 = vcmp.eq.s32.totalorder %v788, %v949
        %vm1522 = vcmp.eq.s32.totalorder %v788, %v953
        %vm1523 = vcmp.eq.s32.totalorder %v788, %v960
        %vm1524 = vcmp.eq.s32.totalorder %v788, %v964
        %vm1525 = vcmp.eq.s32.totalorder %v788, %v971
        %vm1526 = vcmp.eq.s32.totalorder %v788, %v975
        %vm1527 = vcmp.eq.s32.totalorder %v788, %v982
        %vm1528 = vcmp.eq.s32.totalorder %v788, %v986
        %vm1529 = vcmp.eq.s32.totalorder %v788, %v993
        %vm1530 = vcmp.eq.s32.totalorder %v788, %v997
        %vm1531 = vcmp.eq.s32.totalorder %v788, %v1004
        %vm1532 = vcmp.eq.s32.totalorder %v788, %v1008
        %vm1533 = vcmp.eq.s32.totalorder %v788, %v1015
        %vm1534 = vcmp.eq.s32.totalorder %v788, %v1019
        %vm1535 = vcmp.eq.s32.totalorder %v788, %v1026
        %vm1536 = vcmp.eq.s32.totalorder %v788, %v1030
        %vm1537 = vcmp.eq.s32.totalorder %v788, %v1037
        %vm1538 = vcmp.eq.s32.totalorder %v788, %v1041
        %vm1539 = vcmp.eq.s32.totalorder %v788, %v1048
        %vm1540 = vcmp.eq.s32.totalorder %v788, %v1052
        %vm1541 = vcmp.eq.s32.totalorder %v788, %v1059
        %vm1542 = vcmp.eq.s32.totalorder %v788, %v1063
        %vm1543 = vcmp.eq.s32.totalorder %v788, %v1070
        %vm1544 = vcmp.eq.s32.totalorder %v788, %v1074
        %vm1545 = vcmp.eq.s32.totalorder %v788, %v1081
        %vm1546 = vcmp.eq.s32.totalorder %v788, %v1085
        %vm1547 = vcmp.eq.s32.totalorder %v788, %v1092
        %vm1548 = vcmp.eq.s32.totalorder %v788, %v1096
        %vm1549 = vcmp.eq.s32.totalorder %v788, %v1103
        %vm1550 = vcmp.eq.s32.totalorder %v788, %v1107
        %vm1551 = vcmp.eq.s32.totalorder %v788, %v1114
        %vm1552 = vcmp.eq.s32.totalorder %v788, %v1118
        %vm1553 = vcmp.eq.s32.totalorder %v788, %v1125
        %vm1554 = vcmp.eq.s32.totalorder %v788, %v1129
        %vm1555 = vcmp.eq.s32.totalorder %v788, %v1136
        %vm1556 = vcmp.eq.s32.totalorder %v788, %v1140
        %vm1557 = vcmp.eq.s32.totalorder %v788, %v1147
        %vm1558 = vcmp.eq.s32.totalorder %v788, %v1151
        %vm1559 = vcmp.eq.s32.totalorder %v788, %v1158
        %vm1560 = vcmp.eq.s32.totalorder %v788, %v1162
        %vm1561 = vcmp.eq.s32.totalorder %v788, %v1169
        %vm1562 = vcmp.eq.s32.totalorder %v788, %v1173
        %vm1563 = vcmp.eq.s32.totalorder %v788, %v1180
        %vm1564 = vcmp.eq.s32.totalorder %v788, %v1184
        %vm1565 = vcmp.eq.s32.totalorder %v788, %v1191
        %vm1566 = vcmp.eq.s32.totalorder %v788, %v1195
        %vm1567 = vcmp.eq.s32.totalorder %v788, %v1202
        %vm1568 = vcmp.eq.s32.totalorder %v788, %v1206
        %vm1569 = vcmp.eq.s32.totalorder %v788, %v1213
        %vm1570 = vcmp.eq.s32.totalorder %v788, %v1217
        %vm1571 = vcmp.eq.s32.totalorder %v788, %v1224
        %vm1572 = vcmp.eq.s32.totalorder %v788, %v1228
        %vm1573 = vcmp.eq.s32.totalorder %v788, %v1235
        %vm1574 = vcmp.eq.s32.totalorder %v788, %v1239
        %vm1575 = vcmp.eq.s32.totalorder %v788, %v1246
        %vm1576 = vcmp.eq.s32.totalorder %v788, %v1250
        %vm1577 = vcmp.eq.s32.totalorder %v788, %v1257
        %vm1578 = vcmp.eq.s32.totalorder %v788, %v1261
        %vm1579 = vcmp.eq.s32.totalorder %v788, %v1268
        %vm1580 = vcmp.eq.s32.totalorder %v788, %v1272
        %vm1581 = vcmp.eq.s32.totalorder %v788, %v1279
        %vm1582 = vcmp.eq.s32.totalorder %v788, %v1283
        %vm1583 = vcmp.eq.s32.totalorder %v788, %v1290
        %vm1584 = vcmp.eq.s32.totalorder %v788, %v1294
        %vm1585 = vcmp.eq.s32.totalorder %v788, %v1301
        %vm1586 = vcmp.eq.s32.totalorder %v788, %v1305
        %vm1587 = vcmp.eq.s32.totalorder %v788, %v1312
        %vm1588 = vcmp.eq.s32.totalorder %v788, %v1316
        %vm1589 = vcmp.eq.s32.totalorder %v788, %v1323
        %vm1590 = vcmp.eq.s32.totalorder %v788, %v1327
        %vm1591 = vcmp.eq.s32.totalorder %v788, %v1334
        %vm1592 = vcmp.eq.s32.totalorder %v788, %v1338
        %vm1593 = vcmp.eq.s32.totalorder %v788, %v1345
        %vm1594 = vcmp.eq.s32.totalorder %v788, %v1349
        %vm1595 = vcmp.eq.s32.totalorder %v788, %v1356
        %vm1596 = vcmp.eq.s32.totalorder %v788, %v1360
        %vm1597 = vcmp.eq.s32.totalorder %v788, %v1367
        %vm1598 = vcmp.eq.s32.totalorder %v788, %v1371
        %vm1599 = vcmp.eq.s32.totalorder %v788, %v1378
        %vm1600 = vcmp.eq.s32.totalorder %v788, %v1382
        %vm1601 = vcmp.eq.s32.totalorder %v788, %v1389
        %vm1602 = vcmp.eq.s32.totalorder %v788, %v1393
        %vm1603 = vcmp.eq.s32.totalorder %v788, %v1400
        %vm1604 = vcmp.eq.s32.totalorder %v788, %v1404
        %vm1605 = vcmp.eq.s32.totalorder %v788, %v1411
        %vm1606 = vcmp.eq.s32.totalorder %v788, %v1415
        %vm1607 = vcmp.eq.s32.totalorder %v788, %v1422
        %vm1608 = vcmp.eq.s32.totalorder %v788, %v1426
        %vm1609 = vcmp.eq.s32.totalorder %v788, %v1433
        %vm1610 = vcmp.eq.s32.totalorder %v788, %v1437
        %vm1611 = vcmp.eq.s32.totalorder %v788, %v1444
        %vm1612 = vcmp.eq.s32.totalorder %v788, %v1448
        %vm1613 = vcmp.eq.s32.totalorder %v788, %v1455
        %vm1614 = vcmp.eq.s32.totalorder %v788, %v1459
        %vm1615 = vcmp.eq.s32.totalorder %v788, %v1466
        %vm1616 = vcmp.eq.s32.totalorder %v788, %v1470
        %vm1617 = vcmp.eq.s32.totalorder %v788, %v1477
        %vm1618 = vcmp.eq.s32.totalorder %v788, %v1481
        %vm1619 = vcmp.eq.s32.totalorder %v788, %v1488
        %vm1620 = vcmp.eq.s32.totalorder %v788, %v1492
        %v1621 = vsel %vm1493, 1, 0
        %v1622 = vsel %vm1494, 1, 0
        %v1623 = vsel %vm1495, 1, 0
        %v1624 = vsel %vm1496, 1, 0
        %v1625 = vsel %vm1497, 1, 0
        %v1626 = vsel %vm1498, 1, 0
        %v1627 = vsel %vm1499, 1, 0
        %v1628 = vsel %vm1500, 1, 0
        %v1629 = vsel %vm1501, 1, 0
        %v1630 = vsel %vm1502, 1, 0
        %v1631 = vsel %vm1503, 1, 0
        %v1632 = vsel %vm1504, 1, 0
        %v1633 = vsel %vm1505, 1, 0
        %v1634 = vsel %vm1506, 1, 0
        %v1635 = vsel %vm1507, 1, 0
        %v1636 = vsel %vm1508, 1, 0
        %v1637 = vsel %vm1509, 1, 0
        %v1638 = vsel %vm1510, 1, 0
        %v1639 = vsel %vm1511, 1, 0
        %v1640 = vsel %vm1512, 1, 0
        %v1641 = vsel %vm1513, 1, 0
        %v1642 = vsel %vm1514, 1, 0
        %v1643 = vsel %vm1515, 1, 0
        %v1644 = vsel %vm1516, 1, 0
        %v1645 = vsel %vm1517, 1, 0
        %v1646 = vsel %vm1518, 1, 0
        %v1647 = vsel %vm1519, 1, 0
        %v1648 = vsel %vm1520, 1, 0
        %v1649 = vsel %vm1521, 1, 0
        %v1650 = vsel %vm1522, 1, 0
        %v1651 = vsel %vm1523, 1, 0
        %v1652 = vsel %vm1524, 1, 0
        %v1653 = vsel %vm1525, 1, 0
        %v1654 = vsel %vm1526, 1, 0
        %v1655 = vsel %vm1527, 1, 0
        %v1656 = vsel %vm1528, 1, 0
        %v1657 = vsel %vm1529, 1, 0
        %v1658 = vsel %vm1530, 1, 0
        %v1659 = vsel %vm1531, 1, 0
        %v1660 = vsel %vm1532, 1, 0
        %v1661 = vsel %vm1533, 1, 0
        %v1662 = vsel %vm1534, 1, 0
        %v1663 = vsel %vm1535, 1, 0
        %v1664 = vsel %vm1536, 1, 0
        %v1665 = vsel %vm1537, 1, 0
        %v1666 = vsel %vm1538, 1, 0
        %v1667 = vsel %vm1539, 1, 0
        %v1668 = vsel %vm1540, 1, 0
        %v1669 = vsel %vm1541, 1, 0
        %v1670 = vsel %vm1542, 1, 0
        %v1671 = vsel %vm1543, 1, 0
        %v1672 = vsel %vm1544, 1, 0
        %v1673 = vsel %vm1545, 1, 0
        %v1674 = vsel %vm1546, 1, 0
        %v1675 = vsel %vm1547, 1, 0
        %v1676 = vsel %vm1548, 1, 0
        %v1677 = vsel %vm1549, 1, 0
        %v1678 = vsel %vm1550, 1, 0
        %v1679 = vsel %vm1551, 1, 0
        %v1680 = vsel %vm1552, 1, 0
        %v1681 = vsel %vm1553, 1, 0
        %v1682 = vsel %vm1554, 1, 0
        %v1683 = vsel %vm1555, 1, 0
        %v1684 = vsel %vm1556, 1, 0
        %v1685 = vsel %vm1557, 1, 0
        %v1686 = vsel %vm1558, 1, 0
        %v1687 = vsel %vm1559, 1, 0
        %v1688 = vsel %vm1560, 1, 0
        %v1689 = vsel %vm1561, 1, 0
        %v1690 = vsel %vm1562, 1, 0
        %v1691 = vsel %vm1563, 1, 0
        %v1692 = vsel %vm1564, 1, 0
        %v1693 = vsel %vm1565, 1, 0
        %v1694 = vsel %vm1566, 1, 0
        %v1695 = vsel %vm1567, 1, 0
        %v1696 = vsel %vm1568, 1, 0
        %v1697 = vsel %vm1569, 1, 0
        %v1698 = vsel %vm1570, 1, 0
        %v1699 = vsel %vm1571, 1, 0
        %v1700 = vsel %vm1572, 1, 0
        %v1701 = vsel %vm1573, 1, 0
        %v1702 = vsel %vm1574, 1, 0
        %v1703 = vsel %vm1575, 1, 0
        %v1704 = vsel %vm1576, 1, 0
        %v1705 = vsel %vm1577, 1, 0
        %v1706 = vsel %vm1578, 1, 0
        %v1707 = vsel %vm1579, 1, 0
        %v1708 = vsel %vm1580, 1, 0
        %v1709 = vsel %vm1581, 1, 0
        %v1710 = vsel %vm1582, 1, 0
        %v1711 = vsel %vm1583, 1, 0
        %v1712 = vsel %vm1584, 1, 0
        %v1713 = vsel %vm1585, 1, 0
        %v1714 = vsel %vm1586, 1, 0
        %v1715 = vsel %vm1587, 1, 0
        %v1716 = vsel %vm1588, 1, 0
        %v1717 = vsel %vm1589, 1, 0
        %v1718 = vsel %vm1590, 1, 0
        %v1719 = vsel %vm1591, 1, 0
        %v1720 = vsel %vm1592, 1, 0
        %v1721 = vsel %vm1593, 1, 0
        %v1722 = vsel %vm1594, 1, 0
        %v1723 = vsel %vm1595, 1, 0
        %v1724 = vsel %vm1596, 1, 0
        %v1725 = vsel %vm1597, 1, 0
        %v1726 = vsel %vm1598, 1, 0
        %v1727 = vsel %vm1599, 1, 0
        %v1728 = vsel %vm1600, 1, 0
        %v1729 = vsel %vm1601, 1, 0
        %v1730 = vsel %vm1602, 1, 0
        %v1731 = vsel %vm1603, 1, 0
        %v1732 = vsel %vm1604, 1, 0
        %v1733 = vsel %vm1605, 1, 0
        %v1734 = vsel %vm1606, 1, 0
        %v1735 = vsel %vm1607, 1, 0
        %v1736 = vsel %vm1608, 1, 0
        %v1737 = vsel %vm1609, 1, 0
        %v1738 = vsel %vm1610, 1, 0
        %v1739 = vsel %vm1611, 1, 0
        %v1740 = vsel %vm1612, 1, 0
        %v1741 = vsel %vm1613, 1, 0
        %v1742 = vsel %vm1614, 1, 0
        %v1743 = vsel %vm1615, 1, 0
        %v1744 = vsel %vm1616, 1, 0
        %v1745 = vsel %vm1617, 1, 0
        %v1746 = vsel %vm1618, 1, 0
        %v1747 = vsel %vm1619, 1, 0
        %v1748 = vsel %vm1620, 1, 0
        %v1749 = vcvt.s32.f32 %v1621
        %v1750 = vcvt.s32.f32 %v1622
        %v1751 = vcvt.s32.f32 %v1623
        %v1752 = vcvt.s32.f32 %v1624
        %v1753 = vcvt.s32.f32 %v1625
        %v1754 = vcvt.s32.f32 %v1626
        %v1755 = vcvt.s32.f32 %v1627
        %v1756 = vcvt.s32.f32 %v1628
        %v1757 = vcvt.s32.f32 %v1629
        %v1758 = vcvt.s32.f32 %v1630
        %v1759 = vcvt.s32.f32 %v1631
        %v1760 = vcvt.s32.f32 %v1632
        %v1761 = vcvt.s32.f32 %v1633
        %v1762 = vcvt.s32.f32 %v1634
        %v1763 = vcvt.s32.f32 %v1635
        %v1764 = vcvt.s32.f32 %v1636
        %v1765 = vcvt.s32.f32 %v1637
        %v1766 = vcvt.s32.f32 %v1638
        %v1767 = vcvt.s32.f32 %v1639
        %v1768 = vcvt.s32.f32 %v1640
        %v1769 = vcvt.s32.f32 %v1641
        %v1770 = vcvt.s32.f32 %v1642
        %v1771 = vcvt.s32.f32 %v1643
        %v1772 = vcvt.s32.f32 %v1644
        %v1773 = vcvt.s32.f32 %v1645
        %v1774 = vcvt.s32.f32 %v1646
        %v1775 = vcvt.s32.f32 %v1647
        %v1776 = vcvt.s32.f32 %v1648
        %v1777 = vcvt.s32.f32 %v1649
        %v1778 = vcvt.s32.f32 %v1650
        %v1779 = vcvt.s32.f32 %v1651
        %v1780 = vcvt.s32.f32 %v1652
        %v1781 = vcvt.s32.f32 %v1653
        %v1782 = vcvt.s32.f32 %v1654
        %v1783 = vcvt.s32.f32 %v1655
        %v1784 = vcvt.s32.f32 %v1656
        %v1785 = vcvt.s32.f32 %v1657
        %v1786 = vcvt.s32.f32 %v1658
        %v1787 = vcvt.s32.f32 %v1659
        %v1788 = vcvt.s32.f32 %v1660
        %v1789 = vcvt.s32.f32 %v1661
        %v1790 = vcvt.s32.f32 %v1662
        %v1791 = vcvt.s32.f32 %v1663
        %v1792 = vcvt.s32.f32 %v1664
        %v1793 = vcvt.s32.f32 %v1665
        %v1794 = vcvt.s32.f32 %v1666
        %v1795 = vcvt.s32.f32 %v1667
        %v1796 = vcvt.s32.f32 %v1668
        %v1797 = vcvt.s32.f32 %v1669
        %v1798 = vcvt.s32.f32 %v1670
        %v1799 = vcvt.s32.f32 %v1671
        %v1800 = vcvt.s32.f32 %v1672
        %v1801 = vcvt.s32.f32 %v1673
        %v1802 = vcvt.s32.f32 %v1674
        %v1803 = vcvt.s32.f32 %v1675
        %v1804 = vcvt.s32.f32 %v1676
        %v1805 = vcvt.s32.f32 %v1677
        %v1806 = vcvt.s32.f32 %v1678
        %v1807 = vcvt.s32.f32 %v1679
        %v1808 = vcvt.s32.f32 %v1680
        %v1809 = vcvt.s32.f32 %v1681
        %v1810 = vcvt.s32.f32 %v1682
        %v1811 = vcvt.s32.f32 %v1683
        %v1812 = vcvt.s32.f32 %v1684
        %v1813 = vcvt.s32.f32 %v1685
        %v1814 = vcvt.s32.f32 %v1686
        %v1815 = vcvt.s32.f32 %v1687
        %v1816 = vcvt.s32.f32 %v1688
        %v1817 = vcvt.s32.f32 %v1689
        %v1818 = vcvt.s32.f32 %v1690
        %v1819 = vcvt.s32.f32 %v1691
        %v1820 = vcvt.s32.f32 %v1692
        %v1821 = vcvt.s32.f32 %v1693
        %v1822 = vcvt.s32.f32 %v1694
        %v1823 = vcvt.s32.f32 %v1695
        %v1824 = vcvt.s32.f32 %v1696
        %v1825 = vcvt.s32.f32 %v1697
        %v1826 = vcvt.s32.f32 %v1698
        %v1827 = vcvt.s32.f32 %v1699
        %v1828 = vcvt.s32.f32 %v1700
        %v1829 = vcvt.s32.f32 %v1701
        %v1830 = vcvt.s32.f32 %v1702
        %v1831 = vcvt.s32.f32 %v1703
        %v1832 = vcvt.s32.f32 %v1704
        %v1833 = vcvt.s32.f32 %v1705
        %v1834 = vcvt.s32.f32 %v1706
        %v1835 = vcvt.s32.f32 %v1707
        %v1836 = vcvt.s32.f32 %v1708
        %v1837 = vcvt.s32.f32 %v1709
        %v1838 = vcvt.s32.f32 %v1710
        %v1839 = vcvt.s32.f32 %v1711
        %v1840 = vcvt.s32.f32 %v1712
        %v1841 = vcvt.s32.f32 %v1713
        %v1842 = vcvt.s32.f32 %v1714
        %v1843 = vcvt.s32.f32 %v1715
        %v1844 = vcvt.s32.f32 %v1716
        %v1845 = vcvt.s32.f32 %v1717
        %v1846 = vcvt.s32.f32 %v1718
        %v1847 = vcvt.s32.f32 %v1719
        %v1848 = vcvt.s32.f32 %v1720
        %v1849 = vcvt.s32.f32 %v1721
        %v1850 = vcvt.s32.f32 %v1722
        %v1851 = vcvt.s32.f32 %v1723
        %v1852 = vcvt.s32.f32 %v1724
        %v1853 = vcvt.s32.f32 %v1725
        %v1854 = vcvt.s32.f32 %v1726
        %v1855 = vcvt.s32.f32 %v1727
        %v1856 = vcvt.s32.f32 %v1728
        %v1857 = vcvt.s32.f32 %v1729
        %v1858 = vcvt.s32.f32 %v1730
        %v1859 = vcvt.s32.f32 %v1731
        %v1860 = vcvt.s32.f32 %v1732
        %v1861 = vcvt.s32.f32 %v1733
        %v1862 = vcvt.s32.f32 %v1734
        %v1863 = vcvt.s32.f32 %v1735
        %v1864 = vcvt.s32.f32 %v1736
        %v1865 = vcvt.s32.f32 %v1737
        %v1866 = vcvt.s32.f32 %v1738
        %v1867 = vcvt.s32.f32 %v1739
        %v1868 = vcvt.s32.f32 %v1740
        %v1869 = vcvt.s32.f32 %v1741
        %v1870 = vcvt.s32.f32 %v1742
        %v1871 = vcvt.s32.f32 %v1743
        %v1872 = vcvt.s32.f32 %v1744
        %v1873 = vcvt.s32.f32 %v1745
        %v1874 = vcvt.s32.f32 %v1746
        %v1875 = vcvt.s32.f32 %v1747
        %v1876 = vcvt.s32.f32 %v1748
        %v1877 = vpack.c.bf16 %v1750, %v1749
        %v1878 = vpack.c.bf16 %v1752, %v1751
        %v1879 = vpack.c.bf16 %v1754, %v1753
        %v1880 = vpack.c.bf16 %v1756, %v1755
        %v1881 = vpack.c.bf16 %v1758, %v1757
        %v1882 = vpack.c.bf16 %v1760, %v1759
        %v1883 = vpack.c.bf16 %v1762, %v1761
        %v1884 = vpack.c.bf16 %v1764, %v1763
        %v1885 = vpack.c.bf16 %v1766, %v1765
        %v1886 = vpack.c.bf16 %v1768, %v1767
        %v1887 = vpack.c.bf16 %v1770, %v1769
        %v1888 = vpack.c.bf16 %v1772, %v1771
        %v1889 = vpack.c.bf16 %v1774, %v1773
        %v1890 = vpack.c.bf16 %v1776, %v1775
        %v1891 = vpack.c.bf16 %v1778, %v1777
        %v1892 = vpack.c.bf16 %v1780, %v1779
        %v1893 = vpack.c.bf16 %v1782, %v1781
        %v1894 = vpack.c.bf16 %v1784, %v1783
        %v1895 = vpack.c.bf16 %v1786, %v1785
        %v1896 = vpack.c.bf16 %v1788, %v1787
        %v1897 = vpack.c.bf16 %v1790, %v1789
        %v1898 = vpack.c.bf16 %v1792, %v1791
        %v1899 = vpack.c.bf16 %v1794, %v1793
        %v1900 = vpack.c.bf16 %v1796, %v1795
        %v1901 = vpack.c.bf16 %v1798, %v1797
        %v1902 = vpack.c.bf16 %v1800, %v1799
        %v1903 = vpack.c.bf16 %v1802, %v1801
        %v1904 = vpack.c.bf16 %v1804, %v1803
        %v1905 = vpack.c.bf16 %v1806, %v1805
        %v1906 = vpack.c.bf16 %v1808, %v1807
        %v1907 = vpack.c.bf16 %v1810, %v1809
        %v1908 = vpack.c.bf16 %v1812, %v1811
        %v1909 = vpack.c.bf16 %v1814, %v1813
        %v1910 = vpack.c.bf16 %v1816, %v1815
        %v1911 = vpack.c.bf16 %v1818, %v1817
        %v1912 = vpack.c.bf16 %v1820, %v1819
        %v1913 = vpack.c.bf16 %v1822, %v1821
        %v1914 = vpack.c.bf16 %v1824, %v1823
        %v1915 = vpack.c.bf16 %v1826, %v1825
        %v1916 = vpack.c.bf16 %v1828, %v1827
        %v1917 = vpack.c.bf16 %v1830, %v1829
        %v1918 = vpack.c.bf16 %v1832, %v1831
        %v1919 = vpack.c.bf16 %v1834, %v1833
        %v1920 = vpack.c.bf16 %v1836, %v1835
        %v1921 = vpack.c.bf16 %v1838, %v1837
        %v1922 = vpack.c.bf16 %v1840, %v1839
        %v1923 = vpack.c.bf16 %v1842, %v1841
        %v1924 = vpack.c.bf16 %v1844, %v1843
        %v1925 = vpack.c.bf16 %v1846, %v1845
        %v1926 = vpack.c.bf16 %v1848, %v1847
        %v1927 = vpack.c.bf16 %v1850, %v1849
        %v1928 = vpack.c.bf16 %v1852, %v1851
        %v1929 = vpack.c.bf16 %v1854, %v1853
        %v1930 = vpack.c.bf16 %v1856, %v1855
        %v1931 = vpack.c.bf16 %v1858, %v1857
        %v1932 = vpack.c.bf16 %v1860, %v1859
        %v1933 = vpack.c.bf16 %v1862, %v1861
        %v1934 = vpack.c.bf16 %v1864, %v1863
        %v1935 = vpack.c.bf16 %v1866, %v1865
        %v1936 = vpack.c.bf16 %v1868, %v1867
        %v1937 = vpack.c.bf16 %v1870, %v1869
        %v1938 = vpack.c.bf16 %v1872, %v1871
        %v1939 = vpack.c.bf16 %v1874, %v1873
        %v1940 = vpack.c.bf16 %v1876, %v1875
        %v1941 = vpack.c.bf16 %v772, %v771
        %v1942 = vpack.c.bf16 %v774, %v773
        %v1943 = vpack.c.bf16 %v776, %v775
        %v1944 = vpack.c.bf16 %v778, %v777
        %vm1945 = vcmask 523264
        %v1947 = vsel %vm1945, %v1877, 0
        %v1950 = vsel %vm1945, %v1878, 0
        %v1953 = vsel %vm1945, %v1879, 0
        %v1956 = vsel %vm1945, %v1880, 0
        %v1959 = vsel %vm1945, %v1881, 0
        %v1962 = vsel %vm1945, %v1882, 0
        %v1965 = vsel %vm1945, %v1883, 0
        %v1968 = vsel %vm1945, %v1884, 0
        %v1971 = vsel %vm1945, %v1885, 0
        %v1974 = vsel %vm1945, %v1886, 0
        %v1977 = vsel %vm1945, %v1887, 0
        %v1980 = vsel %vm1945, %v1888, 0
        %v1983 = vsel %vm1945, %v1889, 0
        %v1986 = vsel %vm1945, %v1890, 0
        %v1989 = vsel %vm1945, %v1891, 0
        %v1992 = vsel %vm1945, %v1892, 0
        %v1995 = vsel %vm1945, %v1893, 0
        %v1998 = vsel %vm1945, %v1894, 0
        %v2001 = vsel %vm1945, %v1895, 0
        %v2004 = vsel %vm1945, %v1896, 0
        %v2007 = vsel %vm1945, %v1897, 0
        %v2010 = vsel %vm1945, %v1898, 0
        %v2013 = vsel %vm1945, %v1899, 0
        %v2016 = vsel %vm1945, %v1900, 0
        %v2019 = vsel %vm1945, %v1901, 0
        %v2022 = vsel %vm1945, %v1902, 0
        %v2025 = vsel %vm1945, %v1903, 0
        %v2028 = vsel %vm1945, %v1904, 0
        %v2031 = vsel %vm1945, %v1905, 0
        %v2034 = vsel %vm1945, %v1906, 0
        %v2037 = vsel %vm1945, %v1907, 0
        %v2040 = vsel %vm1945, %v1908, 0
        %v2043 = vsel %vm1945, %v1909, 0
        %v2046 = vsel %vm1945, %v1910, 0
        %v2049 = vsel %vm1945, %v1911, 0
        %v2052 = vsel %vm1945, %v1912, 0
        %v2055 = vsel %vm1945, %v1913, 0
        %v2058 = vsel %vm1945, %v1914, 0
        %v2061 = vsel %vm1945, %v1915, 0
        %v2064 = vsel %vm1945, %v1916, 0
        %v2067 = vsel %vm1945, %v1917, 0
        %v2070 = vsel %vm1945, %v1918, 0
        %v2073 = vsel %vm1945, %v1919, 0
        %v2076 = vsel %vm1945, %v1920, 0
        %v2079 = vsel %vm1945, %v1921, 0
        %v2082 = vsel %vm1945, %v1922, 0
        %v2085 = vsel %vm1945, %v1923, 0
        %v2088 = vsel %vm1945, %v1924, 0
        %v2091 = vsel %vm1945, %v1925, 0
        %v2094 = vsel %vm1945, %v1926, 0
        %v2097 = vsel %vm1945, %v1927, 0
        %v2100 = vsel %vm1945, %v1928, 0
        %v2103 = vsel %vm1945, %v1929, 0
        %v2106 = vsel %vm1945, %v1930, 0
        %v2109 = vsel %vm1945, %v1931, 0
        %v2112 = vsel %vm1945, %v1932, 0
        %v2115 = vsel %vm1945, %v1933, 0
        %v2118 = vsel %vm1945, %v1934, 0
        %v2121 = vsel %vm1945, %v1935, 0
        %v2124 = vsel %vm1945, %v1936, 0
        %v2127 = vsel %vm1945, %v1937, 0
        %v2130 = vsel %vm1945, %v1938, 0
        %v2133 = vsel %vm1945, %v1939, 0
        %v2136 = vsel %vm1945, %v1940, 0
        %2138 = vmatprep.subr.bf16.mxu0 0
        %2139 = vmatpush1.bf16.msra.mxu0 %v1941
        %2140 = vmatprep.subr.bf16.mxu0 0
        %2141 = vmatpush1.bf16.msra.mxu0 %v1942
        %2142 = vmatprep.subr.bf16.mxu0 0
        %2143 = vmatpush1.bf16.msra.mxu0 %v1943
        %2144 = vmatprep.subr.bf16.mxu0 0
        %2145 = vmatpush1.bf16.msra.mxu0 %v1944
        %2146 = vmatprep.subr.bf16.mxu0 0
        %2147 = vmatpush1.bf16.msra.mxu0 0
        %2148 = vmatprep.subr.bf16.mxu0 0
        %2149 = vmatpush1.bf16.msra.mxu0 0
        %2150 = vmatprep.subr.bf16.mxu0 0
        %2151 = vmatpush1.bf16.msra.mxu0 0
        %2152 = vmatprep.subr.bf16.mxu0 0
        %2153 = vmatpush1.bf16.msra.mxu0 0
        %2154 = vmatprep.subr.bf16.mxu0 0
        %2155 = vmatpush1.bf16.msra.mxu0 0
        %2156 = vmatprep.subr.bf16.mxu0 0
        %2157 = vmatpush1.bf16.msra.mxu0 0
        %2158 = vmatprep.subr.bf16.mxu0 0
        %2159 = vmatpush1.bf16.msra.mxu0 0
        %2160 = vmatprep.subr.bf16.mxu0 0
        %2161 = vmatpush1.bf16.msra.mxu0 0
        %2162 = vmatprep.subr.bf16.mxu0 0
        %2163 = vmatpush1.bf16.msra.mxu0 0
        %2164 = vmatprep.subr.bf16.mxu0 0
        %2165 = vmatpush1.bf16.msra.mxu0 0
        %2166 = vmatprep.subr.bf16.mxu0 0
        %2167 = vmatpush1.bf16.msra.mxu0 0
        %2168 = vmatprep.subr.bf16.mxu0 0
        %2169 = vmatpush1.bf16.msra.mxu0 0
        %2170 = vmatprep.mubr.bf16.mxu0 0
        %2171 = vmatmul.mubr.bf16.gmra.mrb[0].mxu0 %v1947
        %v2172 = vpop.f32.mrb[0].mxu0
        %v2173 = vadd.f32 0.0, %v2172
        %v2174 = vpop.f32.mrb[0].mxu0
        %v2175 = vpop.f32.mrb[0].mxu0
        %v2176 = vadd.f32 0.0, %v2175
        %v2177 = vpop.f32.mrb[0].mxu0
        %2178 = vmatprep.mubr.bf16.mxu0 0
        %2179 = vmatmul.mubr.bf16.gmra.mrb[0].mxu0 %v1950
        %v2180 = vpop.f32.mrb[0].mxu0
        %v2181 = vadd.f32 0.0, %v2180
        %v2182 = vpop.f32.mrb[0].mxu0
        %v2183 = vpop.f32.mrb[0].mxu0
        %v2184 = vadd.f32 0.0, %v2183
        %v2185 = vpop.f32.mrb[0].mxu0
        %2186 = vmatprep.mubr.bf16.mxu0 0
        %2187 = vmatmul.mubr.bf16.gmra.mrb[0].mxu0 %v1953
        %v2188 = vpop.f32.mrb[0].mxu0
        %v2189 = vadd.f32 0.0, %v2188
        %v2190 = vpop.f32.mrb[0].mxu0
        %v2191 = vpop.f32.mrb[0].mxu0
        %v2192 = vadd.f32 0.0, %v2191
        %v2193 = vpop.f32.mrb[0].mxu0
        %2194 = vmatprep.mubr.bf16.mxu0 0
        %2195 = vmatmul.mubr.bf16.gmra.mrb[0].mxu0 %v1956
        %v2196 = vpop.f32.mrb[0].mxu0
        %v2197 = vadd.f32 0.0, %v2196
        %v2198 = vpop.f32.mrb[0].mxu0
        %v2199 = vpop.f32.mrb[0].mxu0
        %v2200 = vadd.f32 0.0, %v2199
        %v2201 = vpop.f32.mrb[0].mxu0
        %2202 = vmatprep.mubr.bf16.mxu0 0
        %2203 = vmatmul.mubr.bf16.gmra.mrb[0].mxu0 %v1959
        %v2204 = vpop.f32.mrb[0].mxu0
        %v2205 = vadd.f32 0.0, %v2204
        %v2206 = vpop.f32.mrb[0].mxu0
        %v2207 = vpop.f32.mrb[0].mxu0
        %v2208 = vadd.f32 0.0, %v2207
        %v2209 = vpop.f32.mrb[0].mxu0
        %2210 = vmatprep.mubr.bf16.mxu0 0
        %2211 = vmatmul.mubr.bf16.gmra.mrb[0].mxu0 %v1962
        %v2212 = vpop.f32.mrb[0].mxu0
        %v2213 = vadd.f32 0.0, %v2212
        %v2214 = vpop.f32.mrb[0].mxu0
        %v2215 = vpop.f32.mrb[0].mxu0
        %v2216 = vadd.f32 0.0, %v2215
        %v2217 = vpop.f32.mrb[0].mxu0
        %2218 = vmatprep.mubr.bf16.mxu0 0
        %2219 = vmatmul.mubr.bf16.gmra.mrb[0].mxu0 %v1965
        %v2220 = vpop.f32.mrb[0].mxu0
        %v2221 = vadd.f32 0.0, %v2220
        %v2222 = vpop.f32.mrb[0].mxu0
        %v2223 = vpop.f32.mrb[0].mxu0
        %v2224 = vadd.f32 0.0, %v2223
        %v2225 = vpop.f32.mrb[0].mxu0
        %2226 = vmatprep.mubr.bf16.mxu0 0
        %2227 = vmatmul.mubr.bf16.gmra.mrb[0].mxu0 %v1968
        %v2228 = vpop.f32.mrb[0].mxu0
        %v2229 = vadd.f32 0.0, %v2228
        %v2230 = vpop.f32.mrb[0].mxu0
        %v2231 = vpop.f32.mrb[0].mxu0
        %v2232 = vadd.f32 0.0, %v2231
        %v2233 = vpop.f32.mrb[0].mxu0
        %2234 = vmatprep.mubr.bf16.mxu0 0
        %2235 = vmatmul.mubr.bf16.gmra.mrb[0].mxu0 %v1971
        %v2236 = vpop.f32.mrb[0].mxu0
        %v2237 = vadd.f32 0.0, %v2236
        %v2238 = vpop.f32.mrb[0].mxu0
        %v2239 = vpop.f32.mrb[0].mxu0
        %v2240 = vadd.f32 0.0, %v2239
        %v2241 = vpop.f32.mrb[0].mxu0
        %2242 = vmatprep.mubr.bf16.mxu0 0
        %2243 = vmatmul.mubr.bf16.gmra.mrb[0].mxu0 %v1974
        %v2244 = vpop.f32.mrb[0].mxu0
        %v2245 = vadd.f32 0.0, %v2244
        %v2246 = vpop.f32.mrb[0].mxu0
        %v2247 = vpop.f32.mrb[0].mxu0
        %v2248 = vadd.f32 0.0, %v2247
        %v2249 = vpop.f32.mrb[0].mxu0
        %2250 = vmatprep.mubr.bf16.mxu0 0
        %2251 = vmatmul.mubr.bf16.gmra.mrb[0].mxu0 %v1977
        %v2252 = vpop.f32.mrb[0].mxu0
        %v2253 = vadd.f32 0.0, %v2252
        %v2254 = vpop.f32.mrb[0].mxu0
        %v2255 = vpop.f32.mrb[0].mxu0
        %v2256 = vadd.f32 0.0, %v2255
        %v2257 = vpop.f32.mrb[0].mxu0
        %2258 = vmatprep.mubr.bf16.mxu0 0
        %2259 = vmatmul.mubr.bf16.gmra.mrb[0].mxu0 %v1980
        %v2260 = vpop.f32.mrb[0].mxu0
        %v2261 = vadd.f32 0.0, %v2260
        %v2262 = vpop.f32.mrb[0].mxu0
        %v2263 = vpop.f32.mrb[0].mxu0
        %v2264 = vadd.f32 0.0, %v2263
        %v2265 = vpop.f32.mrb[0].mxu0
        %2266 = vmatprep.mubr.bf16.mxu0 0
        %2267 = vmatmul.mubr.bf16.gmra.mrb[0].mxu0 %v1983
        %v2268 = vpop.f32.mrb[0].mxu0
        %v2269 = vadd.f32 0.0, %v2268
        %v2270 = vpop.f32.mrb[0].mxu0
        %v2271 = vpop.f32.mrb[0].mxu0
        %v2272 = vadd.f32 0.0, %v2271
        %v2273 = vpop.f32.mrb[0].mxu0
        %2274 = vmatprep.mubr.bf16.mxu0 0
        %2275 = vmatmul.mubr.bf16.gmra.mrb[0].mxu0 %v1986
        %v2276 = vpop.f32.mrb[0].mxu0
        %v2277 = vadd.f32 0.0, %v2276
        %v2278 = vpop.f32.mrb[0].mxu0
        %v2279 = vpop.f32.mrb[0].mxu0
        %v2280 = vadd.f32 0.0, %v2279
        %v2281 = vpop.f32.mrb[0].mxu0
        %2282 = vmatprep.mubr.bf16.mxu0 0
        %2283 = vmatmul.mubr.bf16.gmra.mrb[0].mxu0 %v1989
        %v2284 = vpop.f32.mrb[0].mxu0
        %v2285 = vadd.f32 0.0, %v2284
        %v2286 = vpop.f32.mrb[0].mxu0
        %v2287 = vpop.f32.mrb[0].mxu0
        %v2288 = vadd.f32 0.0, %v2287
        %v2289 = vpop.f32.mrb[0].mxu0
        %2290 = vmatprep.mubr.bf16.mxu0 0
        %2291 = vmatmul.mubr.bf16.gmra.mrb[0].mxu0 %v1992
        %v2292 = vpop.f32.mrb[0].mxu0
        %v2293 = vadd.f32 0.0, %v2292
        %v2294 = vpop.f32.mrb[0].mxu0
        %v2295 = vpop.f32.mrb[0].mxu0
        %v2296 = vadd.f32 0.0, %v2295
        %v2297 = vpop.f32.mrb[0].mxu0
        %2298 = vmatprep.mubr.bf16.mxu0 0
        %2299 = vmatmul.mubr.bf16.gmra.mrb[0].mxu0 %v1995
        %v2300 = vpop.f32.mrb[0].mxu0
        %v2301 = vadd.f32 0.0, %v2300
        %v2302 = vpop.f32.mrb[0].mxu0
        %v2303 = vpop.f32.mrb[0].mxu0
        %v2304 = vadd.f32 0.0, %v2303
        %v2305 = vpop.f32.mrb[0].mxu0
        %2306 = vmatprep.mubr.bf16.mxu0 0
        %2307 = vmatmul.mubr.bf16.gmra.mrb[0].mxu0 %v1998
        %v2308 = vpop.f32.mrb[0].mxu0
        %v2309 = vadd.f32 0.0, %v2308
        %v2310 = vpop.f32.mrb[0].mxu0
        %v2311 = vpop.f32.mrb[0].mxu0
        %v2312 = vadd.f32 0.0, %v2311
        %v2313 = vpop.f32.mrb[0].mxu0
        %2314 = vmatprep.mubr.bf16.mxu0 0
        %2315 = vmatmul.mubr.bf16.gmra.mrb[0].mxu0 %v2001
        %v2316 = vpop.f32.mrb[0].mxu0
        %v2317 = vadd.f32 0.0, %v2316
        %v2318 = vpop.f32.mrb[0].mxu0
        %v2319 = vpop.f32.mrb[0].mxu0
        %v2320 = vadd.f32 0.0, %v2319
        %v2321 = vpop.f32.mrb[0].mxu0
        %2322 = vmatprep.mubr.bf16.mxu0 0
        %2323 = vmatmul.mubr.bf16.gmra.mrb[0].mxu0 %v2004
        %v2324 = vpop.f32.mrb[0].mxu0
        %v2325 = vadd.f32 0.0, %v2324
        %v2326 = vpop.f32.mrb[0].mxu0
        %v2327 = vpop.f32.mrb[0].mxu0
        %v2328 = vadd.f32 0.0, %v2327
        %v2329 = vpop.f32.mrb[0].mxu0
        %2330 = vmatprep.mubr.bf16.mxu0 0
        %2331 = vmatmul.mubr.bf16.gmra.mrb[0].mxu0 %v2007
        %v2332 = vpop.f32.mrb[0].mxu0
        %v2333 = vadd.f32 0.0, %v2332
        %v2334 = vpop.f32.mrb[0].mxu0
        %v2335 = vpop.f32.mrb[0].mxu0
        %v2336 = vadd.f32 0.0, %v2335
        %v2337 = vpop.f32.mrb[0].mxu0
        %2338 = vmatprep.mubr.bf16.mxu0 0
        %2339 = vmatmul.mubr.bf16.gmra.mrb[0].mxu0 %v2010
        %v2340 = vpop.f32.mrb[0].mxu0
        %v2341 = vadd.f32 0.0, %v2340
        %v2342 = vpop.f32.mrb[0].mxu0
        %v2343 = vpop.f32.mrb[0].mxu0
        %v2344 = vadd.f32 0.0, %v2343
        %v2345 = vpop.f32.mrb[0].mxu0
        %2346 = vmatprep.mubr.bf16.mxu0 0
        %2347 = vmatmul.mubr.bf16.gmra.mrb[0].mxu0 %v2013
        %v2348 = vpop.f32.mrb[0].mxu0
        %v2349 = vadd.f32 0.0, %v2348
        %v2350 = vpop.f32.mrb[0].mxu0
        %v2351 = vpop.f32.mrb[0].mxu0
        %v2352 = vadd.f32 0.0, %v2351
        %v2353 = vpop.f32.mrb[0].mxu0
        %2354 = vmatprep.mubr.bf16.mxu0 0
        %2355 = vmatmul.mubr.bf16.gmra.mrb[0].mxu0 %v2016
        %v2356 = vpop.f32.mrb[0].mxu0
        %v2357 = vadd.f32 0.0, %v2356
        %v2358 = vpop.f32.mrb[0].mxu0
        %v2359 = vpop.f32.mrb[0].mxu0
        %v2360 = vadd.f32 0.0, %v2359
        %v2361 = vpop.f32.mrb[0].mxu0
        %2362 = vmatprep.mubr.bf16.mxu0 0
        %2363 = vmatmul.mubr.bf16.gmra.mrb[0].mxu0 %v2019
        %v2364 = vpop.f32.mrb[0].mxu0
        %v2365 = vadd.f32 0.0, %v2364
        %v2366 = vpop.f32.mrb[0].mxu0
        %v2367 = vpop.f32.mrb[0].mxu0
        %v2368 = vadd.f32 0.0, %v2367
        %v2369 = vpop.f32.mrb[0].mxu0
        %2370 = vmatprep.mubr.bf16.mxu0 0
        %2371 = vmatmul.mubr.bf16.gmra.mrb[0].mxu0 %v2022
        %v2372 = vpop.f32.mrb[0].mxu0
        %v2373 = vadd.f32 0.0, %v2372
        %v2374 = vpop.f32.mrb[0].mxu0
        %v2375 = vpop.f32.mrb[0].mxu0
        %v2376 = vadd.f32 0.0, %v2375
        %v2377 = vpop.f32.mrb[0].mxu0
        %2378 = vmatprep.mubr.bf16.mxu0 0
        %2379 = vmatmul.mubr.bf16.gmra.mrb[0].mxu0 %v2025
        %v2380 = vpop.f32.mrb[0].mxu0
        %v2381 = vadd.f32 0.0, %v2380
        %v2382 = vpop.f32.mrb[0].mxu0
        %v2383 = vpop.f32.mrb[0].mxu0
        %v2384 = vadd.f32 0.0, %v2383
        %v2385 = vpop.f32.mrb[0].mxu0
        %2386 = vmatprep.mubr.bf16.mxu0 0
        %2387 = vmatmul.mubr.bf16.gmra.mrb[0].mxu0 %v2028
        %v2388 = vpop.f32.mrb[0].mxu0
        %v2389 = vadd.f32 0.0, %v2388
        %v2390 = vpop.f32.mrb[0].mxu0
        %v2391 = vpop.f32.mrb[0].mxu0
        %v2392 = vadd.f32 0.0, %v2391
        %v2393 = vpop.f32.mrb[0].mxu0
        %2394 = vmatprep.mubr.bf16.mxu0 0
        %2395 = vmatmul.mubr.bf16.gmra.mrb[0].mxu0 %v2031
        %v2396 = vpop.f32.mrb[0].mxu0
        %v2397 = vadd.f32 0.0, %v2396
        %v2398 = vpop.f32.mrb[0].mxu0
        %v2399 = vpop.f32.mrb[0].mxu0
        %v2400 = vadd.f32 0.0, %v2399
        %v2401 = vpop.f32.mrb[0].mxu0
        %2402 = vmatprep.mubr.bf16.mxu0 0
        %2403 = vmatmul.mubr.bf16.gmra.mrb[0].mxu0 %v2034
        %v2404 = vpop.f32.mrb[0].mxu0
        %v2405 = vadd.f32 0.0, %v2404
        %v2406 = vpop.f32.mrb[0].mxu0
        %v2407 = vpop.f32.mrb[0].mxu0
        %v2408 = vadd.f32 0.0, %v2407
        %v2409 = vpop.f32.mrb[0].mxu0
        %2410 = vmatprep.mubr.bf16.mxu0 0
        %2411 = vmatmul.mubr.bf16.gmra.mrb[0].mxu0 %v2037
        %v2412 = vpop.f32.mrb[0].mxu0
        %v2413 = vadd.f32 0.0, %v2412
        %v2414 = vpop.f32.mrb[0].mxu0
        %v2415 = vpop.f32.mrb[0].mxu0
        %v2416 = vadd.f32 0.0, %v2415
        %v2417 = vpop.f32.mrb[0].mxu0
        %2418 = vmatprep.mubr.bf16.mxu0 0
        %2419 = vmatmul.mubr.bf16.gmra.mrb[0].mxu0 %v2040
        %v2420 = vpop.f32.mrb[0].mxu0
        %v2421 = vadd.f32 0.0, %v2420
        %v2422 = vpop.f32.mrb[0].mxu0
        %v2423 = vpop.f32.mrb[0].mxu0
        %v2424 = vadd.f32 0.0, %v2423
        %v2425 = vpop.f32.mrb[0].mxu0
        %2426 = vmatprep.mubr.bf16.mxu0 0
        %2427 = vmatmul.mubr.bf16.gmra.mrb[0].mxu0 %v2043
        %v2428 = vpop.f32.mrb[0].mxu0
        %v2429 = vadd.f32 0.0, %v2428
        %v2430 = vpop.f32.mrb[0].mxu0
        %v2431 = vpop.f32.mrb[0].mxu0
        %v2432 = vadd.f32 0.0, %v2431
        %v2433 = vpop.f32.mrb[0].mxu0
        %2434 = vmatprep.mubr.bf16.mxu0 0
        %2435 = vmatmul.mubr.bf16.gmra.mrb[0].mxu0 %v2046
        %v2436 = vpop.f32.mrb[0].mxu0
        %v2437 = vadd.f32 0.0, %v2436
        %v2438 = vpop.f32.mrb[0].mxu0
        %v2439 = vpop.f32.mrb[0].mxu0
        %v2440 = vadd.f32 0.0, %v2439
        %v2441 = vpop.f32.mrb[0].mxu0
        %2442 = vmatprep.mubr.bf16.mxu0 0
        %2443 = vmatmul.mubr.bf16.gmra.mrb[0].mxu0 %v2049
        %v2444 = vpop.f32.mrb[0].mxu0
        %v2445 = vadd.f32 0.0, %v2444
        %v2446 = vpop.f32.mrb[0].mxu0
        %v2447 = vpop.f32.mrb[0].mxu0
        %v2448 = vadd.f32 0.0, %v2447
        %v2449 = vpop.f32.mrb[0].mxu0
        %2450 = vmatprep.mubr.bf16.mxu0 0
        %2451 = vmatmul.mubr.bf16.gmra.mrb[0].mxu0 %v2052
        %v2452 = vpop.f32.mrb[0].mxu0
        %v2453 = vadd.f32 0.0, %v2452
        %v2454 = vpop.f32.mrb[0].mxu0
        %v2455 = vpop.f32.mrb[0].mxu0
        %v2456 = vadd.f32 0.0, %v2455
        %v2457 = vpop.f32.mrb[0].mxu0
        %2458 = vmatprep.mubr.bf16.mxu0 0
        %2459 = vmatmul.mubr.bf16.gmra.mrb[0].mxu0 %v2055
        %v2460 = vpop.f32.mrb[0].mxu0
        %v2461 = vadd.f32 0.0, %v2460
        %v2462 = vpop.f32.mrb[0].mxu0
        %v2463 = vpop.f32.mrb[0].mxu0
        %v2464 = vadd.f32 0.0, %v2463
        %v2465 = vpop.f32.mrb[0].mxu0
        %2466 = vmatprep.mubr.bf16.mxu0 0
        %2467 = vmatmul.mubr.bf16.gmra.mrb[0].mxu0 %v2058
        %v2468 = vpop.f32.mrb[0].mxu0
        %v2469 = vadd.f32 0.0, %v2468
        %v2470 = vpop.f32.mrb[0].mxu0
        %v2471 = vpop.f32.mrb[0].mxu0
        %v2472 = vadd.f32 0.0, %v2471
        %v2473 = vpop.f32.mrb[0].mxu0
        %2474 = vmatprep.mubr.bf16.mxu0 0
        %2475 = vmatmul.mubr.bf16.gmra.mrb[0].mxu0 %v2061
        %v2476 = vpop.f32.mrb[0].mxu0
        %v2477 = vadd.f32 0.0, %v2476
        %v2478 = vpop.f32.mrb[0].mxu0
        %v2479 = vpop.f32.mrb[0].mxu0
        %v2480 = vadd.f32 0.0, %v2479
        %v2481 = vpop.f32.mrb[0].mxu0
        %2482 = vmatprep.mubr.bf16.mxu0 0
        %2483 = vmatmul.mubr.bf16.gmra.mrb[0].mxu0 %v2064
        %v2484 = vpop.f32.mrb[0].mxu0
        %v2485 = vadd.f32 0.0, %v2484
        %v2486 = vpop.f32.mrb[0].mxu0
        %v2487 = vpop.f32.mrb[0].mxu0
        %v2488 = vadd.f32 0.0, %v2487
        %v2489 = vpop.f32.mrb[0].mxu0
        %2490 = vmatprep.mubr.bf16.mxu0 0
        %2491 = vmatmul.mubr.bf16.gmra.mrb[0].mxu0 %v2067
        %v2492 = vpop.f32.mrb[0].mxu0
        %v2493 = vadd.f32 0.0, %v2492
        %v2494 = vpop.f32.mrb[0].mxu0
        %v2495 = vpop.f32.mrb[0].mxu0
        %v2496 = vadd.f32 0.0, %v2495
        %v2497 = vpop.f32.mrb[0].mxu0
        %2498 = vmatprep.mubr.bf16.mxu0 0
        %2499 = vmatmul.mubr.bf16.gmra.mrb[0].mxu0 %v2070
        %v2500 = vpop.f32.mrb[0].mxu0
        %v2501 = vadd.f32 0.0, %v2500
        %v2502 = vpop.f32.mrb[0].mxu0
        %v2503 = vpop.f32.mrb[0].mxu0
        %v2504 = vadd.f32 0.0, %v2503
        %v2505 = vpop.f32.mrb[0].mxu0
        %2506 = vmatprep.mubr.bf16.mxu0 0
        %2507 = vmatmul.mubr.bf16.gmra.mrb[0].mxu0 %v2073
        %v2508 = vpop.f32.mrb[0].mxu0
        %v2509 = vadd.f32 0.0, %v2508
        %v2510 = vpop.f32.mrb[0].mxu0
        %v2511 = vpop.f32.mrb[0].mxu0
        %v2512 = vadd.f32 0.0, %v2511
        %v2513 = vpop.f32.mrb[0].mxu0
        %2514 = vmatprep.mubr.bf16.mxu0 0
        %2515 = vmatmul.mubr.bf16.gmra.mrb[0].mxu0 %v2076
        %v2516 = vpop.f32.mrb[0].mxu0
        %v2517 = vadd.f32 0.0, %v2516
        %v2518 = vpop.f32.mrb[0].mxu0
        %v2519 = vpop.f32.mrb[0].mxu0
        %v2520 = vadd.f32 0.0, %v2519
        %v2521 = vpop.f32.mrb[0].mxu0
        %2522 = vmatprep.mubr.bf16.mxu0 0
        %2523 = vmatmul.mubr.bf16.gmra.mrb[0].mxu0 %v2079
        %v2524 = vpop.f32.mrb[0].mxu0
        %v2525 = vadd.f32 0.0, %v2524
        %v2526 = vpop.f32.mrb[0].mxu0
        %v2527 = vpop.f32.mrb[0].mxu0
        %v2528 = vadd.f32 0.0, %v2527
        %v2529 = vpop.f32.mrb[0].mxu0
        %2530 = vmatprep.mubr.bf16.mxu0 0
        %2531 = vmatmul.mubr.bf16.gmra.mrb[0].mxu0 %v2082
        %v2532 = vpop.f32.mrb[0].mxu0
        %v2533 = vadd.f32 0.0, %v2532
        %v2534 = vpop.f32.mrb[0].mxu0
        %v2535 = vpop.f32.mrb[0].mxu0
        %v2536 = vadd.f32 0.0, %v2535
        %v2537 = vpop.f32.mrb[0].mxu0
        %2538 = vmatprep.mubr.bf16.mxu0 0
        %2539 = vmatmul.mubr.bf16.gmra.mrb[0].mxu0 %v2085
        %v2540 = vpop.f32.mrb[0].mxu0
        %v2541 = vadd.f32 0.0, %v2540
        %v2542 = vpop.f32.mrb[0].mxu0
        %v2543 = vpop.f32.mrb[0].mxu0
        %v2544 = vadd.f32 0.0, %v2543
        %v2545 = vpop.f32.mrb[0].mxu0
        %2546 = vmatprep.mubr.bf16.mxu0 0
        %2547 = vmatmul.mubr.bf16.gmra.mrb[0].mxu0 %v2088
        %v2548 = vpop.f32.mrb[0].mxu0
        %v2549 = vadd.f32 0.0, %v2548
        %v2550 = vpop.f32.mrb[0].mxu0
        %v2551 = vpop.f32.mrb[0].mxu0
        %v2552 = vadd.f32 0.0, %v2551
        %v2553 = vpop.f32.mrb[0].mxu0
        %2554 = vmatprep.mubr.bf16.mxu0 0
        %2555 = vmatmul.mubr.bf16.gmra.mrb[0].mxu0 %v2091
        %v2556 = vpop.f32.mrb[0].mxu0
        %v2557 = vadd.f32 0.0, %v2556
        %v2558 = vpop.f32.mrb[0].mxu0
        %v2559 = vpop.f32.mrb[0].mxu0
        %v2560 = vadd.f32 0.0, %v2559
        %v2561 = vpop.f32.mrb[0].mxu0
        %2562 = vmatprep.mubr.bf16.mxu0 0
        %2563 = vmatmul.mubr.bf16.gmra.mrb[0].mxu0 %v2094
        %v2564 = vpop.f32.mrb[0].mxu0
        %v2565 = vadd.f32 0.0, %v2564
        %v2566 = vpop.f32.mrb[0].mxu0
        %v2567 = vpop.f32.mrb[0].mxu0
        %v2568 = vadd.f32 0.0, %v2567
        %v2569 = vpop.f32.mrb[0].mxu0
        %2570 = vmatprep.mubr.bf16.mxu0 0
        %2571 = vmatmul.mubr.bf16.gmra.mrb[0].mxu0 %v2097
        %v2572 = vpop.f32.mrb[0].mxu0
        %v2573 = vadd.f32 0.0, %v2572
        %v2574 = vpop.f32.mrb[0].mxu0
        %v2575 = vpop.f32.mrb[0].mxu0
        %v2576 = vadd.f32 0.0, %v2575
        %v2577 = vpop.f32.mrb[0].mxu0
        %2578 = vmatprep.mubr.bf16.mxu0 0
        %2579 = vmatmul.mubr.bf16.gmra.mrb[0].mxu0 %v2100
        %v2580 = vpop.f32.mrb[0].mxu0
        %v2581 = vadd.f32 0.0, %v2580
        %v2582 = vpop.f32.mrb[0].mxu0
        %v2583 = vpop.f32.mrb[0].mxu0
        %v2584 = vadd.f32 0.0, %v2583
        %v2585 = vpop.f32.mrb[0].mxu0
        %2586 = vmatprep.mubr.bf16.mxu0 0
        %2587 = vmatmul.mubr.bf16.gmra.mrb[0].mxu0 %v2103
        %v2588 = vpop.f32.mrb[0].mxu0
        %v2589 = vadd.f32 0.0, %v2588
        %v2590 = vpop.f32.mrb[0].mxu0
        %v2591 = vpop.f32.mrb[0].mxu0
        %v2592 = vadd.f32 0.0, %v2591
        %v2593 = vpop.f32.mrb[0].mxu0
        %2594 = vmatprep.mubr.bf16.mxu0 0
        %2595 = vmatmul.mubr.bf16.gmra.mrb[0].mxu0 %v2106
        %v2596 = vpop.f32.mrb[0].mxu0
        %v2597 = vadd.f32 0.0, %v2596
        %v2598 = vpop.f32.mrb[0].mxu0
        %v2599 = vpop.f32.mrb[0].mxu0
        %v2600 = vadd.f32 0.0, %v2599
        %v2601 = vpop.f32.mrb[0].mxu0
        %2602 = vmatprep.mubr.bf16.mxu0 0
        %2603 = vmatmul.mubr.bf16.gmra.mrb[0].mxu0 %v2109
        %v2604 = vpop.f32.mrb[0].mxu0
        %v2605 = vadd.f32 0.0, %v2604
        %v2606 = vpop.f32.mrb[0].mxu0
        %v2607 = vpop.f32.mrb[0].mxu0
        %v2608 = vadd.f32 0.0, %v2607
        %v2609 = vpop.f32.mrb[0].mxu0
        %2610 = vmatprep.mubr.bf16.mxu0 0
        %2611 = vmatmul.mubr.bf16.gmra.mrb[0].mxu0 %v2112
        %v2612 = vpop.f32.mrb[0].mxu0
        %v2613 = vadd.f32 0.0, %v2612
        %v2614 = vpop.f32.mrb[0].mxu0
        %v2615 = vpop.f32.mrb[0].mxu0
        %v2616 = vadd.f32 0.0, %v2615
        %v2617 = vpop.f32.mrb[0].mxu0
        %2618 = vmatprep.mubr.bf16.mxu0 0
        %2619 = vmatmul.mubr.bf16.gmra.mrb[0].mxu0 %v2115
        %v2620 = vpop.f32.mrb[0].mxu0
        %v2621 = vadd.f32 0.0, %v2620
        %v2622 = vpop.f32.mrb[0].mxu0
        %v2623 = vpop.f32.mrb[0].mxu0
        %v2624 = vadd.f32 0.0, %v2623
        %v2625 = vpop.f32.mrb[0].mxu0
        %2626 = vmatprep.mubr.bf16.mxu0 0
        %2627 = vmatmul.mubr.bf16.gmra.mrb[0].mxu0 %v2118
        %v2628 = vpop.f32.mrb[0].mxu0
        %v2629 = vadd.f32 0.0, %v2628
        %v2630 = vpop.f32.mrb[0].mxu0
        %v2631 = vpop.f32.mrb[0].mxu0
        %v2632 = vadd.f32 0.0, %v2631
        %v2633 = vpop.f32.mrb[0].mxu0
        %2634 = vmatprep.mubr.bf16.mxu0 0
        %2635 = vmatmul.mubr.bf16.gmra.mrb[0].mxu0 %v2121
        %v2636 = vpop.f32.mrb[0].mxu0
        %v2637 = vadd.f32 0.0, %v2636
        %v2638 = vpop.f32.mrb[0].mxu0
        %v2639 = vpop.f32.mrb[0].mxu0
        %v2640 = vadd.f32 0.0, %v2639
        %v2641 = vpop.f32.mrb[0].mxu0
        %2642 = vmatprep.mubr.bf16.mxu0 0
        %2643 = vmatmul.mubr.bf16.gmra.mrb[0].mxu0 %v2124
        %v2644 = vpop.f32.mrb[0].mxu0
        %v2645 = vadd.f32 0.0, %v2644
        %v2646 = vpop.f32.mrb[0].mxu0
        %v2647 = vpop.f32.mrb[0].mxu0
        %v2648 = vadd.f32 0.0, %v2647
        %v2649 = vpop.f32.mrb[0].mxu0
        %2650 = vmatprep.mubr.bf16.mxu0 0
        %2651 = vmatmul.mubr.bf16.gmra.mrb[0].mxu0 %v2127
        %v2652 = vpop.f32.mrb[0].mxu0
        %v2653 = vadd.f32 0.0, %v2652
        %v2654 = vpop.f32.mrb[0].mxu0
        %v2655 = vpop.f32.mrb[0].mxu0
        %v2656 = vadd.f32 0.0, %v2655
        %v2657 = vpop.f32.mrb[0].mxu0
        %2658 = vmatprep.mubr.bf16.mxu0 0
        %2659 = vmatmul.mubr.bf16.gmra.mrb[0].mxu0 %v2130
        %v2660 = vpop.f32.mrb[0].mxu0
        %v2661 = vadd.f32 0.0, %v2660
        %v2662 = vpop.f32.mrb[0].mxu0
        %v2663 = vpop.f32.mrb[0].mxu0
        %v2664 = vadd.f32 0.0, %v2663
        %v2665 = vpop.f32.mrb[0].mxu0
        %2666 = vmatprep.mubr.bf16.mxu0 0
        %2667 = vmatmul.mubr.bf16.gmra.mrb[0].mxu0 %v2133
        %v2668 = vpop.f32.mrb[0].mxu0
        %v2669 = vadd.f32 0.0, %v2668
        %v2670 = vpop.f32.mrb[0].mxu0
        %v2671 = vpop.f32.mrb[0].mxu0
        %v2672 = vadd.f32 0.0, %v2671
        %v2673 = vpop.f32.mrb[0].mxu0
        %2674 = vmatprep.mubr.bf16.mxu0 0
        %2675 = vmatmul.mubr.bf16.gmra.mrb[0].mxu0 %v2136
        %v2676 = vpop.f32.mrb[0].mxu0
        %v2677 = vadd.f32 0.0, %v2676
        %v2678 = vpop.f32.mrb[0].mxu0
        %v2679 = vpop.f32.mrb[0].mxu0
        %v2680 = vadd.f32 0.0, %v2679
        %v2681 = vpop.f32.mrb[0].mxu0
        %2682 = vdwg.mxu0
        %v2683 = vld [vmem:[%s694] sm:$0xff]
        %v2684 = vld [vmem:[%s694 + $0x8] sm:$0xff]
        %v2685 = vld [vmem:[%s694 + $0x10] sm:$0xff]
        %v2686 = vld [vmem:[%s694 + $0x18] sm:$0xff]
        %v2687 = vld [vmem:[%s694 + $0x20] sm:$0xff]
        %v2688 = vld [vmem:[%s694 + $0x28] sm:$0xff]
        %v2689 = vld [vmem:[%s694 + $0x30] sm:$0xff]
        %v2690 = vld [vmem:[%s694 + $0x38] sm:$0xff]
        %v2691 = vld [vmem:[%s694 + $0x40] sm:$0xff]
        %v2692 = vld [vmem:[%s694 + $0x48] sm:$0xff]
        %v2693 = vld [vmem:[%s694 + $0x50] sm:$0xff]
        %v2694 = vld [vmem:[%s694 + $0x58] sm:$0xff]
        %v2695 = vld [vmem:[%s694 + $0x60] sm:$0xff]
        %v2696 = vld [vmem:[%s694 + $0x68] sm:$0xff]
        %v2697 = vld [vmem:[%s694 + $0x70] sm:$0xff]
        %v2698 = vld [vmem:[%s694 + $0x78] sm:$0xff]
        %v2699 = vld [vmem:[%s694 + $0x80] sm:$0xff]
        %v2700 = vld [vmem:[%s694 + $0x88] sm:$0xff]
        %v2701 = vld [vmem:[%s694 + $0x90] sm:$0xff]
        %v2702 = vld [vmem:[%s694 + $0x98] sm:$0xff]
        %v2703 = vld [vmem:[%s694 + $0xa0] sm:$0xff]
        %v2704 = vld [vmem:[%s694 + $0xa8] sm:$0xff]
        %v2705 = vld [vmem:[%s694 + $0xb0] sm:$0xff]
        %v2706 = vld [vmem:[%s694 + $0xb8] sm:$0xff]
        %v2707 = vld [vmem:[%s694 + $0xc0] sm:$0xff]
        %v2708 = vld [vmem:[%s694 + $0xc8] sm:$0xff]
        %v2709 = vld [vmem:[%s694 + $0xd0] sm:$0xff]
        %v2710 = vld [vmem:[%s694 + $0xd8] sm:$0xff]
        %v2711 = vld [vmem:[%s694 + $0xe0] sm:$0xff]
        %v2712 = vld [vmem:[%s694 + $0xe8] sm:$0xff]
        %v2713 = vld [vmem:[%s694 + $0xf0] sm:$0xff]
        %v2714 = vld [vmem:[%s694 + $0xf8] sm:$0xff]
        %v2715 = vld [vmem:[%s694 + $0x100] sm:$0xff]
        %v2716 = vld [vmem:[%s694 + $0x108] sm:$0xff]
        %v2717 = vld [vmem:[%s694 + $0x110] sm:$0xff]
        %v2718 = vld [vmem:[%s694 + $0x118] sm:$0xff]
        %v2719 = vld [vmem:[%s694 + $0x120] sm:$0xff]
        %v2720 = vld [vmem:[%s694 + $0x128] sm:$0xff]
        %v2721 = vld [vmem:[%s694 + $0x130] sm:$0xff]
        %v2722 = vld [vmem:[%s694 + $0x138] sm:$0xff]
        %v2723 = vld [vmem:[%s694 + $0x140] sm:$0xff]
        %v2724 = vld [vmem:[%s694 + $0x148] sm:$0xff]
        %v2725 = vld [vmem:[%s694 + $0x150] sm:$0xff]
        %v2726 = vld [vmem:[%s694 + $0x158] sm:$0xff]
        %v2727 = vld [vmem:[%s694 + $0x160] sm:$0xff]
        %v2728 = vld [vmem:[%s694 + $0x168] sm:$0xff]
        %v2729 = vld [vmem:[%s694 + $0x170] sm:$0xff]
        %v2730 = vld [vmem:[%s694 + $0x178] sm:$0xff]
        %v2731 = vld [vmem:[%s694 + $0x180] sm:$0xff]
        %v2732 = vld [vmem:[%s694 + $0x188] sm:$0xff]
        %v2733 = vld [vmem:[%s694 + $0x190] sm:$0xff]
        %v2734 = vld [vmem:[%s694 + $0x198] sm:$0xff]
        %v2735 = vld [vmem:[%s694 + $0x1a0] sm:$0xff]
        %v2736 = vld [vmem:[%s694 + $0x1a8] sm:$0xff]
        %v2737 = vld [vmem:[%s694 + $0x1b0] sm:$0xff]
        %v2738 = vld [vmem:[%s694 + $0x1b8] sm:$0xff]
        %v2739 = vld [vmem:[%s694 + $0x1c0] sm:$0xff]
        %v2740 = vld [vmem:[%s694 + $0x1c8] sm:$0xff]
        %v2741 = vld [vmem:[%s694 + $0x1d0] sm:$0xff]
        %v2742 = vld [vmem:[%s694 + $0x1d8] sm:$0xff]
        %v2743 = vld [vmem:[%s694 + $0x1e0] sm:$0xff]
        %v2744 = vld [vmem:[%s694 + $0x1e8] sm:$0xff]
        %v2745 = vld [vmem:[%s694 + $0x1f0] sm:$0xff]
        %v2746 = vld [vmem:[%s694 + $0x1f8] sm:$0xff]
        %v2747 = vld [vmem:[%s694 + $0x200] sm:$0xff]
        %v2748 = vld [vmem:[%s694 + $0x208] sm:$0xff]
        %v2749 = vld [vmem:[%s694 + $0x210] sm:$0xff]
        %v2750 = vld [vmem:[%s694 + $0x218] sm:$0xff]
        %v2751 = vld [vmem:[%s694 + $0x220] sm:$0xff]
        %v2752 = vld [vmem:[%s694 + $0x228] sm:$0xff]
        %v2753 = vld [vmem:[%s694 + $0x230] sm:$0xff]
        %v2754 = vld [vmem:[%s694 + $0x238] sm:$0xff]
        %v2755 = vld [vmem:[%s694 + $0x240] sm:$0xff]
        %v2756 = vld [vmem:[%s694 + $0x248] sm:$0xff]
        %v2757 = vld [vmem:[%s694 + $0x250] sm:$0xff]
        %v2758 = vld [vmem:[%s694 + $0x258] sm:$0xff]
        %v2759 = vld [vmem:[%s694 + $0x260] sm:$0xff]
        %v2760 = vld [vmem:[%s694 + $0x268] sm:$0xff]
        %v2761 = vld [vmem:[%s694 + $0x270] sm:$0xff]
        %v2762 = vld [vmem:[%s694 + $0x278] sm:$0xff]
        %v2763 = vld [vmem:[%s694 + $0x280] sm:$0xff]
        %v2764 = vld [vmem:[%s694 + $0x288] sm:$0xff]
        %v2765 = vld [vmem:[%s694 + $0x290] sm:$0xff]
        %v2766 = vld [vmem:[%s694 + $0x298] sm:$0xff]
        %v2767 = vld [vmem:[%s694 + $0x2a0] sm:$0xff]
        %v2768 = vld [vmem:[%s694 + $0x2a8] sm:$0xff]
        %v2769 = vld [vmem:[%s694 + $0x2b0] sm:$0xff]
        %v2770 = vld [vmem:[%s694 + $0x2b8] sm:$0xff]
        %v2771 = vld [vmem:[%s694 + $0x2c0] sm:$0xff]
        %v2772 = vld [vmem:[%s694 + $0x2c8] sm:$0xff]
        %v2773 = vld [vmem:[%s694 + $0x2d0] sm:$0xff]
        %v2774 = vld [vmem:[%s694 + $0x2d8] sm:$0xff]
        %v2775 = vld [vmem:[%s694 + $0x2e0] sm:$0xff]
        %v2776 = vld [vmem:[%s694 + $0x2e8] sm:$0xff]
        %v2777 = vld [vmem:[%s694 + $0x2f0] sm:$0xff]
        %v2778 = vld [vmem:[%s694 + $0x2f8] sm:$0xff]
        %v2779 = vld [vmem:[%s694 + $0x300] sm:$0xff]
        %v2780 = vld [vmem:[%s694 + $0x308] sm:$0xff]
        %v2781 = vld [vmem:[%s694 + $0x310] sm:$0xff]
        %v2782 = vld [vmem:[%s694 + $0x318] sm:$0xff]
        %v2783 = vld [vmem:[%s694 + $0x320] sm:$0xff]
        %v2784 = vld [vmem:[%s694 + $0x328] sm:$0xff]
        %v2785 = vld [vmem:[%s694 + $0x330] sm:$0xff]
        %v2786 = vld [vmem:[%s694 + $0x338] sm:$0xff]
        %v2787 = vld [vmem:[%s694 + $0x340] sm:$0xff]
        %v2788 = vld [vmem:[%s694 + $0x348] sm:$0xff]
        %v2789 = vld [vmem:[%s694 + $0x350] sm:$0xff]
        %v2790 = vld [vmem:[%s694 + $0x358] sm:$0xff]
        %v2791 = vld [vmem:[%s694 + $0x360] sm:$0xff]
        %v2792 = vld [vmem:[%s694 + $0x368] sm:$0xff]
        %v2793 = vld [vmem:[%s694 + $0x370] sm:$0xff]
        %v2794 = vld [vmem:[%s694 + $0x378] sm:$0xff]
        %v2795 = vld [vmem:[%s694 + $0x380] sm:$0xff]
        %v2796 = vld [vmem:[%s694 + $0x388] sm:$0xff]
        %v2797 = vld [vmem:[%s694 + $0x390] sm:$0xff]
        %v2798 = vld [vmem:[%s694 + $0x398] sm:$0xff]
        %v2799 = vld [vmem:[%s694 + $0x3a0] sm:$0xff]
        %v2800 = vld [vmem:[%s694 + $0x3a8] sm:$0xff]
        %v2801 = vld [vmem:[%s694 + $0x3b0] sm:$0xff]
        %v2802 = vld [vmem:[%s694 + $0x3b8] sm:$0xff]
        %v2803 = vld [vmem:[%s694 + $0x3c0] sm:$0xff]
        %v2804 = vld [vmem:[%s694 + $0x3c8] sm:$0xff]
        %v2805 = vld [vmem:[%s694 + $0x3d0] sm:$0xff]
        %v2806 = vld [vmem:[%s694 + $0x3d8] sm:$0xff]
        %v2807 = vld [vmem:[%s694 + $0x3e0] sm:$0xff]
        %v2808 = vld [vmem:[%s694 + $0x3e8] sm:$0xff]
        %v2809 = vld [vmem:[%s694 + $0x3f0] sm:$0xff]
        %v2810 = vld [vmem:[%s694 + $0x3f8] sm:$0xff]
        %v2812 = vlaneseq
        %v2813 = vshrl.u32 %v2812, 7
        %v2814 = vsub.s32 0, %v2813
        %v2815 = vrot.slane %v704, %v2814
        %v2825 = vunpack.c.l.b16 %v696
        %v2826 = vunpack.c.l.b16 %v697
        %v2827 = vunpack.c.l.b16 %v698
        %v2828 = vunpack.c.l.b16 %v699
        %v2829 = vunpack.c.l.b16 %v700
        %v2830 = vunpack.c.l.b16 %v701
        %v2831 = vunpack.c.l.b16 %v702
        %v2832 = vunpack.c.l.b16 %v703
        %v2833 = vpack.c.b16 %v2826, %v2825
        %v2834 = vpack.c.b16 %v2828, %v2827
        %v2835 = vpack.c.b16 %v2830, %v2829
        %v2836 = vpack.c.b16 %v2832, %v2831
        %v2842 = vsel %vm1945, %v1941, 0
        %v2845 = vsel %vm1945, %v1942, 0
        %v2848 = vsel %vm1945, %v1943, 0
        %v2851 = vsel %vm1945, %v1944, 0
        %2853 = vmatprep.subr.bf16.mxu0 0
        %2854 = vmatpush1.bf16.msra.mxu0 %v2833
        %2855 = vmatprep.subr.bf16.mxu0 0
        %2856 = vmatpush1.bf16.msra.mxu0 %v2834
        %2857 = vmatprep.subr.bf16.mxu0 0
        %2858 = vmatpush1.bf16.msra.mxu0 %v2835
        %2859 = vmatprep.subr.bf16.mxu0 0
        %2860 = vmatpush1.bf16.msra.mxu0 %v2836
        %2861 = vmatprep.subr.bf16.mxu0 0
        %2862 = vmatpush1.bf16.msra.mxu0 0
        %2863 = vmatprep.subr.bf16.mxu0 0
        %2864 = vmatpush1.bf16.msra.mxu0 0
        %2865 = vmatprep.subr.bf16.mxu0 0
        %2866 = vmatpush1.bf16.msra.mxu0 0
        %2867 = vmatprep.subr.bf16.mxu0 0
        %2868 = vmatpush1.bf16.msra.mxu0 0
        %2869 = vmatprep.subr.bf16.mxu0 0
        %2870 = vmatpush1.bf16.msra.mxu0 0
        %2871 = vmatprep.subr.bf16.mxu0 0
        %2872 = vmatpush1.bf16.msra.mxu0 0
        %2873 = vmatprep.subr.bf16.mxu0 0
        %2874 = vmatpush1.bf16.msra.mxu0 0
        %2875 = vmatprep.subr.bf16.mxu0 0
        %2876 = vmatpush1.bf16.msra.mxu0 0
        %2877 = vmatprep.subr.bf16.mxu0 0
        %2878 = vmatpush1.bf16.msra.mxu0 0
        %2879 = vmatprep.subr.bf16.mxu0 0
        %2880 = vmatpush1.bf16.msra.mxu0 0
        %2881 = vmatprep.subr.bf16.mxu0 0
        %2882 = vmatpush1.bf16.msra.mxu0 0
        %2883 = vmatprep.subr.bf16.mxu0 0
        %2884 = vmatpush1.bf16.msra.mxu0 0
        %2885 = vmatprep.mubr.bf16.mxu0 0
        %2886 = vmatmul.mubr.bf16.gmra.mrb[0].mxu0 %v2842
        %v2887 = vpop.f32.mrb[0].mxu0
        %v2888 = vadd.f32 %v2815, %v2887
        %v2889 = vpop.f32.mrb[0].mxu0
        %v2890 = vpop.f32.mrb[0].mxu0
        %v2891 = vadd.f32 %v2815, %v2890
        %v2892 = vpop.f32.mrb[0].mxu0
        %2893 = vmatprep.mubr.bf16.mxu0 0
        %2894 = vmatmul.mubr.bf16.gmra.mrb[0].mxu0 %v2845
        %v2895 = vpop.f32.mrb[0].mxu0
        %v2896 = vadd.f32 %v2815, %v2895
        %v2897 = vpop.f32.mrb[0].mxu0
        %v2898 = vpop.f32.mrb[0].mxu0
        %v2899 = vadd.f32 %v2815, %v2898
        %v2900 = vpop.f32.mrb[0].mxu0
        %2901 = vmatprep.mubr.bf16.mxu0 0
        %2902 = vmatmul.mubr.bf16.gmra.mrb[0].mxu0 %v2848
        %v2903 = vpop.f32.mrb[0].mxu0
        %v2904 = vadd.f32 %v2815, %v2903
        %v2905 = vpop.f32.mrb[0].mxu0
        %v2906 = vpop.f32.mrb[0].mxu0
        %v2907 = vadd.f32 %v2815, %v2906
        %v2908 = vpop.f32.mrb[0].mxu0
        %2909 = vmatprep.mubr.bf16.mxu0 0
        %2910 = vmatmul.mubr.bf16.gmra.mrb[0].mxu0 %v2851
        %v2911 = vpop.f32.mrb[0].mxu0
        %v2912 = vadd.f32 %v2815, %v2911
        %v2913 = vpop.f32.mrb[0].mxu0
        %v2914 = vpop.f32.mrb[0].mxu0
        %v2915 = vadd.f32 %v2815, %v2914
        %v2916 = vpop.f32.mrb[0].mxu0
        %2917 = vdwg.mxu0
        %v2918 = vpack.c.bf16 %v2176, %v2173
        %v2919 = vpack.c.bf16 %v2184, %v2181
        %v2920 = vpack.c.bf16 %v2192, %v2189
        %v2921 = vpack.c.bf16 %v2200, %v2197
        %v2922 = vpack.c.bf16 %v2208, %v2205
        %v2923 = vpack.c.bf16 %v2216, %v2213
        %v2924 = vpack.c.bf16 %v2224, %v2221
        %v2925 = vpack.c.bf16 %v2232, %v2229
        %v2926 = vpack.c.bf16 %v2240, %v2237
        %v2927 = vpack.c.bf16 %v2248, %v2245
        %v2928 = vpack.c.bf16 %v2256, %v2253
        %v2929 = vpack.c.bf16 %v2264, %v2261
        %v2930 = vpack.c.bf16 %v2272, %v2269
        %v2931 = vpack.c.bf16 %v2280, %v2277
        %v2932 = vpack.c.bf16 %v2288, %v2285
        %v2933 = vpack.c.bf16 %v2296, %v2293
        %v2934 = vpack.c.bf16 %v2304, %v2301
        %v2935 = vpack.c.bf16 %v2312, %v2309
        %v2936 = vpack.c.bf16 %v2320, %v2317
        %v2937 = vpack.c.bf16 %v2328, %v2325
        %v2938 = vpack.c.bf16 %v2336, %v2333
        %v2939 = vpack.c.bf16 %v2344, %v2341
        %v2940 = vpack.c.bf16 %v2352, %v2349
        %v2941 = vpack.c.bf16 %v2360, %v2357
        %v2942 = vpack.c.bf16 %v2368, %v2365
        %v2943 = vpack.c.bf16 %v2376, %v2373
        %v2944 = vpack.c.bf16 %v2384, %v2381
        %v2945 = vpack.c.bf16 %v2392, %v2389
        %v2946 = vpack.c.bf16 %v2400, %v2397
        %v2947 = vpack.c.bf16 %v2408, %v2405
        %v2948 = vpack.c.bf16 %v2416, %v2413
        %v2949 = vpack.c.bf16 %v2424, %v2421
        %v2950 = vpack.c.bf16 %v2432, %v2429
        %v2951 = vpack.c.bf16 %v2440, %v2437
        %v2952 = vpack.c.bf16 %v2448, %v2445
        %v2953 = vpack.c.bf16 %v2456, %v2453
        %v2954 = vpack.c.bf16 %v2464, %v2461
        %v2955 = vpack.c.bf16 %v2472, %v2469
        %v2956 = vpack.c.bf16 %v2480, %v2477
        %v2957 = vpack.c.bf16 %v2488, %v2485
        %v2958 = vpack.c.bf16 %v2496, %v2493
        %v2959 = vpack.c.bf16 %v2504, %v2501
        %v2960 = vpack.c.bf16 %v2512, %v2509
        %v2961 = vpack.c.bf16 %v2520, %v2517
        %v2962 = vpack.c.bf16 %v2528, %v2525
        %v2963 = vpack.c.bf16 %v2536, %v2533
        %v2964 = vpack.c.bf16 %v2544, %v2541
        %v2965 = vpack.c.bf16 %v2552, %v2549
        %v2966 = vpack.c.bf16 %v2560, %v2557
        %v2967 = vpack.c.bf16 %v2568, %v2565
        %v2968 = vpack.c.bf16 %v2576, %v2573
        %v2969 = vpack.c.bf16 %v2584, %v2581
        %v2970 = vpack.c.bf16 %v2592, %v2589
        %v2971 = vpack.c.bf16 %v2600, %v2597
        %v2972 = vpack.c.bf16 %v2608, %v2605
        %v2973 = vpack.c.bf16 %v2616, %v2613
        %v2974 = vpack.c.bf16 %v2624, %v2621
        %v2975 = vpack.c.bf16 %v2632, %v2629
        %v2976 = vpack.c.bf16 %v2640, %v2637
        %v2977 = vpack.c.bf16 %v2648, %v2645
        %v2978 = vpack.c.bf16 %v2656, %v2653
        %v2979 = vpack.c.bf16 %v2664, %v2661
        %v2980 = vpack.c.bf16 %v2672, %v2669
        %v2981 = vpack.c.bf16 %v2680, %v2677
        %v2983 = vlaneseq
        %v2984 = vshrl.u32 %v2983, 7
        %v2985 = vsub.s32 0, %v2984
        %v2986 = vrot.slane %v713, %v2985
        %v2996 = vunpack.c.l.b16 %v705
        %v2997 = vunpack.c.l.b16 %v706
        %v2998 = vunpack.c.l.b16 %v707
        %v2999 = vunpack.c.l.b16 %v708
        %v3000 = vunpack.c.l.b16 %v709
        %v3001 = vunpack.c.l.b16 %v710
        %v3002 = vunpack.c.l.b16 %v711
        %v3003 = vunpack.c.l.b16 %v712
        %v3004 = vpack.c.b16 %v2997, %v2996
        %v3005 = vpack.c.b16 %v2999, %v2998
        %v3006 = vpack.c.b16 %v3001, %v3000
        %v3007 = vpack.c.b16 %v3003, %v3002
        %v3013 = vsel %vm1945, %v2918, 0
        %v3016 = vsel %vm1945, %v2919, 0
        %v3019 = vsel %vm1945, %v2920, 0
        %v3022 = vsel %vm1945, %v2921, 0
        %v3025 = vsel %vm1945, %v2922, 0
        %v3028 = vsel %vm1945, %v2923, 0
        %v3031 = vsel %vm1945, %v2924, 0
        %v3034 = vsel %vm1945, %v2925, 0
        %v3037 = vsel %vm1945, %v2926, 0
        %v3040 = vsel %vm1945, %v2927, 0
        %v3043 = vsel %vm1945, %v2928, 0
        %v3046 = vsel %vm1945, %v2929, 0
        %v3049 = vsel %vm1945, %v2930, 0
        %v3052 = vsel %vm1945, %v2931, 0
        %v3055 = vsel %vm1945, %v2932, 0
        %v3058 = vsel %vm1945, %v2933, 0
        %v3061 = vsel %vm1945, %v2934, 0
        %v3064 = vsel %vm1945, %v2935, 0
        %v3067 = vsel %vm1945, %v2936, 0
        %v3070 = vsel %vm1945, %v2937, 0
        %v3073 = vsel %vm1945, %v2938, 0
        %v3076 = vsel %vm1945, %v2939, 0
        %v3079 = vsel %vm1945, %v2940, 0
        %v3082 = vsel %vm1945, %v2941, 0
        %v3085 = vsel %vm1945, %v2942, 0
        %v3088 = vsel %vm1945, %v2943, 0
        %v3091 = vsel %vm1945, %v2944, 0
        %v3094 = vsel %vm1945, %v2945, 0
        %v3097 = vsel %vm1945, %v2946, 0
        %v3100 = vsel %vm1945, %v2947, 0
        %v3103 = vsel %vm1945, %v2948, 0
        %v3106 = vsel %vm1945, %v2949, 0
        %v3109 = vsel %vm1945, %v2950, 0
        %v3112 = vsel %vm1945, %v2951, 0
        %v3115 = vsel %vm1945, %v2952, 0
        %v3118 = vsel %vm1945, %v2953, 0
        %v3121 = vsel %vm1945, %v2954, 0
        %v3124 = vsel %vm1945, %v2955, 0
        %v3127 = vsel %vm1945, %v2956, 0
        %v3130 = vsel %vm1945, %v2957, 0
        %v3133 = vsel %vm1945, %v2958, 0
        %v3136 = vsel %vm1945, %v2959, 0
        %v3139 = vsel %vm1945, %v2960, 0
        %v3142 = vsel %vm1945, %v2961, 0
        %v3145 = vsel %vm1945, %v2962, 0
        %v3148 = vsel %vm1945, %v2963, 0
        %v3151 = vsel %vm1945, %v2964, 0
        %v3154 = vsel %vm1945, %v2965, 0
        %v3157 = vsel %vm1945, %v2966, 0
        %v3160 = vsel %vm1945, %v2967, 0
        %v3163 = vsel %vm1945, %v2968, 0
        %v3166 = vsel %vm1945, %v2969, 0
        %v3169 = vsel %vm1945, %v2970, 0
        %v3172 = vsel %vm1945, %v2971, 0
        %v3175 = vsel %vm1945, %v2972, 0
        %v3178 = vsel %vm1945, %v2973, 0
        %v3181 = vsel %vm1945, %v2974, 0
        %v3184 = vsel %vm1945, %v2975, 0
        %v3187 = vsel %vm1945, %v2976, 0
        %v3190 = vsel %vm1945, %v2977, 0
        %v3193 = vsel %vm1945, %v2978, 0
        %v3196 = vsel %vm1945, %v2979, 0
        %v3199 = vsel %vm1945, %v2980, 0
        %v3202 = vsel %vm1945, %v2981, 0
        %3204 = vmatprep.subr.bf16.mxu0 0
        %3205 = vmatpush1.bf16.msra.mxu0 %v3004
        %3206 = vmatprep.subr.bf16.mxu0 0
        %3207 = vmatpush1.bf16.msra.mxu0 %v3005
        %3208 = vmatprep.subr.bf16.mxu0 0
        %3209 = vmatpush1.bf16.msra.mxu0 %v3006
        %3210 = vmatprep.subr.bf16.mxu0 0
        %3211 = vmatpush1.bf16.msra.mxu0 %v3007
        %3212 = vmatprep.subr.bf16.mxu0 0
        %3213 = vmatpush1.bf16.msra.mxu0 0
        %3214 = vmatprep.subr.bf16.mxu0 0
        %3215 = vmatpush1.bf16.msra.mxu0 0
        %3216 = vmatprep.subr.bf16.mxu0 0
        %3217 = vmatpush1.bf16.msra.mxu0 0
        %3218 = vmatprep.subr.bf16.mxu0 0
        %3219 = vmatpush1.bf16.msra.mxu0 0
        %3220 = vmatprep.subr.bf16.mxu0 0
        %3221 = vmatpush1.bf16.msra.mxu0 0
        %3222 = vmatprep.subr.bf16.mxu0 0
        %3223 = vmatpush1.bf16.msra.mxu0 0
        %3224 = vmatprep.subr.bf16.mxu0 0
        %3225 = vmatpush1.bf16.msra.mxu0 0
        %3226 = vmatprep.subr.bf16.mxu0 0
        %3227 = vmatpush1.bf16.msra.mxu0 0
        %3228 = vmatprep.subr.bf16.mxu0 0
        %3229 = vmatpush1.bf16.msra.mxu0 0
        %3230 = vmatprep.subr.bf16.mxu0 0
        %3231 = vmatpush1.bf16.msra.mxu0 0
        %3232 = vmatprep.subr.bf16.mxu0 0
        %3233 = vmatpush1.bf16.msra.mxu0 0
        %3234 = vmatprep.subr.bf16.mxu0 0
        %3235 = vmatpush1.bf16.msra.mxu0 0
        %3236 = vmatprep.mubr.bf16.mxu0 0
        %3237 = vmatmul.mubr.bf16.gmra.mrb[0].mxu0 %v3013
        %v3238 = vpop.f32.mrb[0].mxu0
        %v3239 = vadd.f32 %v2986, %v3238
        %v3240 = vpop.f32.mrb[0].mxu0
        %v3241 = vpop.f32.mrb[0].mxu0
        %v3242 = vadd.f32 %v2986, %v3241
        %v3243 = vpop.f32.mrb[0].mxu0
        %3244 = vmatprep.mubr.bf16.mxu0 0
        %3245 = vmatmul.mubr.bf16.gmra.mrb[0].mxu0 %v3016
        %v3246 = vpop.f32.mrb[0].mxu0
        %v3247 = vadd.f32 %v2986, %v3246
        %v3248 = vpop.f32.mrb[0].mxu0
        %v3249 = vpop.f32.mrb[0].mxu0
        %v3250 = vadd.f32 %v2986, %v3249
        %v3251 = vpop.f32.mrb[0].mxu0
        %3252 = vmatprep.mubr.bf16.mxu0 0
        %3253 = vmatmul.mubr.bf16.gmra.mrb[0].mxu0 %v3019
        %v3254 = vpop.f32.mrb[0].mxu0
        %v3255 = vadd.f32 %v2986, %v3254
        %v3256 = vpop.f32.mrb[0].mxu0
        %v3257 = vpop.f32.mrb[0].mxu0
        %v3258 = vadd.f32 %v2986, %v3257
        %v3259 = vpop.f32.mrb[0].mxu0
        %3260 = vmatprep.mubr.bf16.mxu0 0
        %3261 = vmatmul.mubr.bf16.gmra.mrb[0].mxu0 %v3022
        %v3262 = vpop.f32.mrb[0].mxu0
        %v3263 = vadd.f32 %v2986, %v3262
        %v3264 = vpop.f32.mrb[0].mxu0
        %v3265 = vpop.f32.mrb[0].mxu0
        %v3266 = vadd.f32 %v2986, %v3265
        %v3267 = vpop.f32.mrb[0].mxu0
        %3268 = vmatprep.mubr.bf16.mxu0 0
        %3269 = vmatmul.mubr.bf16.gmra.mrb[0].mxu0 %v3025
        %v3270 = vpop.f32.mrb[0].mxu0
        %v3271 = vadd.f32 %v2986, %v3270
        %v3272 = vpop.f32.mrb[0].mxu0
        %v3273 = vpop.f32.mrb[0].mxu0
        %v3274 = vadd.f32 %v2986, %v3273
        %v3275 = vpop.f32.mrb[0].mxu0
        %3276 = vmatprep.mubr.bf16.mxu0 0
        %3277 = vmatmul.mubr.bf16.gmra.mrb[0].mxu0 %v3028
        %v3278 = vpop.f32.mrb[0].mxu0
        %v3279 = vadd.f32 %v2986, %v3278
        %v3280 = vpop.f32.mrb[0].mxu0
        %v3281 = vpop.f32.mrb[0].mxu0
        %v3282 = vadd.f32 %v2986, %v3281
        %v3283 = vpop.f32.mrb[0].mxu0
        %3284 = vmatprep.mubr.bf16.mxu0 0
        %3285 = vmatmul.mubr.bf16.gmra.mrb[0].mxu0 %v3031
        %v3286 = vpop.f32.mrb[0].mxu0
        %v3287 = vadd.f32 %v2986, %v3286
        %v3288 = vpop.f32.mrb[0].mxu0
        %v3289 = vpop.f32.mrb[0].mxu0
        %v3290 = vadd.f32 %v2986, %v3289
        %v3291 = vpop.f32.mrb[0].mxu0
        %3292 = vmatprep.mubr.bf16.mxu0 0
        %3293 = vmatmul.mubr.bf16.gmra.mrb[0].mxu0 %v3034
        %v3294 = vpop.f32.mrb[0].mxu0
        %v3295 = vadd.f32 %v2986, %v3294
        %v3296 = vpop.f32.mrb[0].mxu0
        %v3297 = vpop.f32.mrb[0].mxu0
        %v3298 = vadd.f32 %v2986, %v3297
        %v3299 = vpop.f32.mrb[0].mxu0
        %3300 = vmatprep.mubr.bf16.mxu0 0
        %3301 = vmatmul.mubr.bf16.gmra.mrb[0].mxu0 %v3037
        %v3302 = vpop.f32.mrb[0].mxu0
        %v3303 = vadd.f32 %v2986, %v3302
        %v3304 = vpop.f32.mrb[0].mxu0
        %v3305 = vpop.f32.mrb[0].mxu0
        %v3306 = vadd.f32 %v2986, %v3305
        %v3307 = vpop.f32.mrb[0].mxu0
        %3308 = vmatprep.mubr.bf16.mxu0 0
        %3309 = vmatmul.mubr.bf16.gmra.mrb[0].mxu0 %v3040
        %v3310 = vpop.f32.mrb[0].mxu0
        %v3311 = vadd.f32 %v2986, %v3310
        %v3312 = vpop.f32.mrb[0].mxu0
        %v3313 = vpop.f32.mrb[0].mxu0
        %v3314 = vadd.f32 %v2986, %v3313
        %v3315 = vpop.f32.mrb[0].mxu0
        %3316 = vmatprep.mubr.bf16.mxu0 0
        %3317 = vmatmul.mubr.bf16.gmra.mrb[0].mxu0 %v3043
        %v3318 = vpop.f32.mrb[0].mxu0
        %v3319 = vadd.f32 %v2986, %v3318
        %v3320 = vpop.f32.mrb[0].mxu0
        %v3321 = vpop.f32.mrb[0].mxu0
        %v3322 = vadd.f32 %v2986, %v3321
        %v3323 = vpop.f32.mrb[0].mxu0
        %3324 = vmatprep.mubr.bf16.mxu0 0
        %3325 = vmatmul.mubr.bf16.gmra.mrb[0].mxu0 %v3046
        %v3326 = vpop.f32.mrb[0].mxu0
        %v3327 = vadd.f32 %v2986, %v3326
        %v3328 = vpop.f32.mrb[0].mxu0
        %v3329 = vpop.f32.mrb[0].mxu0
        %v3330 = vadd.f32 %v2986, %v3329
        %v3331 = vpop.f32.mrb[0].mxu0
        %3332 = vmatprep.mubr.bf16.mxu0 0
        %3333 = vmatmul.mubr.bf16.gmra.mrb[0].mxu0 %v3049
        %v3334 = vpop.f32.mrb[0].mxu0
        %v3335 = vadd.f32 %v2986, %v3334
        %v3336 = vpop.f32.mrb[0].mxu0
        %v3337 = vpop.f32.mrb[0].mxu0
        %v3338 = vadd.f32 %v2986, %v3337
        %v3339 = vpop.f32.mrb[0].mxu0
        %3340 = vmatprep.mubr.bf16.mxu0 0
        %3341 = vmatmul.mubr.bf16.gmra.mrb[0].mxu0 %v3052
        %v3342 = vpop.f32.mrb[0].mxu0
        %v3343 = vadd.f32 %v2986, %v3342
        %v3344 = vpop.f32.mrb[0].mxu0
        %v3345 = vpop.f32.mrb[0].mxu0
        %v3346 = vadd.f32 %v2986, %v3345
        %v3347 = vpop.f32.mrb[0].mxu0
        %3348 = vmatprep.mubr.bf16.mxu0 0
        %3349 = vmatmul.mubr.bf16.gmra.mrb[0].mxu0 %v3055
        %v3350 = vpop.f32.mrb[0].mxu0
        %v3351 = vadd.f32 %v2986, %v3350
        %v3352 = vpop.f32.mrb[0].mxu0
        %v3353 = vpop.f32.mrb[0].mxu0
        %v3354 = vadd.f32 %v2986, %v3353
        %v3355 = vpop.f32.mrb[0].mxu0
        %3356 = vmatprep.mubr.bf16.mxu0 0
        %3357 = vmatmul.mubr.bf16.gmra.mrb[0].mxu0 %v3058
        %v3358 = vpop.f32.mrb[0].mxu0
        %v3359 = vadd.f32 %v2986, %v3358
        %v3360 = vpop.f32.mrb[0].mxu0
        %v3361 = vpop.f32.mrb[0].mxu0
        %v3362 = vadd.f32 %v2986, %v3361
        %v3363 = vpop.f32.mrb[0].mxu0
        %3364 = vmatprep.mubr.bf16.mxu0 0
        %3365 = vmatmul.mubr.bf16.gmra.mrb[0].mxu0 %v3061
        %v3366 = vpop.f32.mrb[0].mxu0
        %v3367 = vadd.f32 %v2986, %v3366
        %v3368 = vpop.f32.mrb[0].mxu0
        %v3369 = vpop.f32.mrb[0].mxu0
        %v3370 = vadd.f32 %v2986, %v3369
        %v3371 = vpop.f32.mrb[0].mxu0
        %3372 = vmatprep.mubr.bf16.mxu0 0
        %3373 = vmatmul.mubr.bf16.gmra.mrb[0].mxu0 %v3064
        %v3374 = vpop.f32.mrb[0].mxu0
        %v3375 = vadd.f32 %v2986, %v3374
        %v3376 = vpop.f32.mrb[0].mxu0
        %v3377 = vpop.f32.mrb[0].mxu0
        %v3378 = vadd.f32 %v2986, %v3377
        %v3379 = vpop.f32.mrb[0].mxu0
        %3380 = vmatprep.mubr.bf16.mxu0 0
        %3381 = vmatmul.mubr.bf16.gmra.mrb[0].mxu0 %v3067
        %v3382 = vpop.f32.mrb[0].mxu0
        %v3383 = vadd.f32 %v2986, %v3382
        %v3384 = vpop.f32.mrb[0].mxu0
        %v3385 = vpop.f32.mrb[0].mxu0
        %v3386 = vadd.f32 %v2986, %v3385
        %v3387 = vpop.f32.mrb[0].mxu0
        %3388 = vmatprep.mubr.bf16.mxu0 0
        %3389 = vmatmul.mubr.bf16.gmra.mrb[0].mxu0 %v3070
        %v3390 = vpop.f32.mrb[0].mxu0
        %v3391 = vadd.f32 %v2986, %v3390
        %v3392 = vpop.f32.mrb[0].mxu0
        %v3393 = vpop.f32.mrb[0].mxu0
        %v3394 = vadd.f32 %v2986, %v3393
        %v3395 = vpop.f32.mrb[0].mxu0
        %3396 = vmatprep.mubr.bf16.mxu0 0
        %3397 = vmatmul.mubr.bf16.gmra.mrb[0].mxu0 %v3073
        %v3398 = vpop.f32.mrb[0].mxu0
        %v3399 = vadd.f32 %v2986, %v3398
        %v3400 = vpop.f32.mrb[0].mxu0
        %v3401 = vpop.f32.mrb[0].mxu0
        %v3402 = vadd.f32 %v2986, %v3401
        %v3403 = vpop.f32.mrb[0].mxu0
        %3404 = vmatprep.mubr.bf16.mxu0 0
        %3405 = vmatmul.mubr.bf16.gmra.mrb[0].mxu0 %v3076
        %v3406 = vpop.f32.mrb[0].mxu0
        %v3407 = vadd.f32 %v2986, %v3406
        %v3408 = vpop.f32.mrb[0].mxu0
        %v3409 = vpop.f32.mrb[0].mxu0
        %v3410 = vadd.f32 %v2986, %v3409
        %v3411 = vpop.f32.mrb[0].mxu0
        %3412 = vmatprep.mubr.bf16.mxu0 0
        %3413 = vmatmul.mubr.bf16.gmra.mrb[0].mxu0 %v3079
        %v3414 = vpop.f32.mrb[0].mxu0
        %v3415 = vadd.f32 %v2986, %v3414
        %v3416 = vpop.f32.mrb[0].mxu0
        %v3417 = vpop.f32.mrb[0].mxu0
        %v3418 = vadd.f32 %v2986, %v3417
        %v3419 = vpop.f32.mrb[0].mxu0
        %3420 = vmatprep.mubr.bf16.mxu0 0
        %3421 = vmatmul.mubr.bf16.gmra.mrb[0].mxu0 %v3082
        %v3422 = vpop.f32.mrb[0].mxu0
        %v3423 = vadd.f32 %v2986, %v3422
        %v3424 = vpop.f32.mrb[0].mxu0
        %v3425 = vpop.f32.mrb[0].mxu0
        %v3426 = vadd.f32 %v2986, %v3425
        %v3427 = vpop.f32.mrb[0].mxu0
        %3428 = vmatprep.mubr.bf16.mxu0 0
        %3429 = vmatmul.mubr.bf16.gmra.mrb[0].mxu0 %v3085
        %v3430 = vpop.f32.mrb[0].mxu0
        %v3431 = vadd.f32 %v2986, %v3430
        %v3432 = vpop.f32.mrb[0].mxu0
        %v3433 = vpop.f32.mrb[0].mxu0
        %v3434 = vadd.f32 %v2986, %v3433
        %v3435 = vpop.f32.mrb[0].mxu0
        %3436 = vmatprep.mubr.bf16.mxu0 0
        %3437 = vmatmul.mubr.bf16.gmra.mrb[0].mxu0 %v3088
        %v3438 = vpop.f32.mrb[0].mxu0
        %v3439 = vadd.f32 %v2986, %v3438
        %v3440 = vpop.f32.mrb[0].mxu0
        %v3441 = vpop.f32.mrb[0].mxu0
        %v3442 = vadd.f32 %v2986, %v3441
        %v3443 = vpop.f32.mrb[0].mxu0
        %3444 = vmatprep.mubr.bf16.mxu0 0
        %3445 = vmatmul.mubr.bf16.gmra.mrb[0].mxu0 %v3091
        %v3446 = vpop.f32.mrb[0].mxu0
        %v3447 = vadd.f32 %v2986, %v3446
        %v3448 = vpop.f32.mrb[0].mxu0
        %v3449 = vpop.f32.mrb[0].mxu0
        %v3450 = vadd.f32 %v2986, %v3449
        %v3451 = vpop.f32.mrb[0].mxu0
        %3452 = vmatprep.mubr.bf16.mxu0 0
        %3453 = vmatmul.mubr.bf16.gmra.mrb[0].mxu0 %v3094
        %v3454 = vpop.f32.mrb[0].mxu0
        %v3455 = vadd.f32 %v2986, %v3454
        %v3456 = vpop.f32.mrb[0].mxu0
        %v3457 = vpop.f32.mrb[0].mxu0
        %v3458 = vadd.f32 %v2986, %v3457
        %v3459 = vpop.f32.mrb[0].mxu0
        %3460 = vmatprep.mubr.bf16.mxu0 0
        %3461 = vmatmul.mubr.bf16.gmra.mrb[0].mxu0 %v3097
        %v3462 = vpop.f32.mrb[0].mxu0
        %v3463 = vadd.f32 %v2986, %v3462
        %v3464 = vpop.f32.mrb[0].mxu0
        %v3465 = vpop.f32.mrb[0].mxu0
        %v3466 = vadd.f32 %v2986, %v3465
        %v3467 = vpop.f32.mrb[0].mxu0
        %3468 = vmatprep.mubr.bf16.mxu0 0
        %3469 = vmatmul.mubr.bf16.gmra.mrb[0].mxu0 %v3100
        %v3470 = vpop.f32.mrb[0].mxu0
        %v3471 = vadd.f32 %v2986, %v3470
        %v3472 = vpop.f32.mrb[0].mxu0
        %v3473 = vpop.f32.mrb[0].mxu0
        %v3474 = vadd.f32 %v2986, %v3473
        %v3475 = vpop.f32.mrb[0].mxu0
        %3476 = vmatprep.mubr.bf16.mxu0 0
        %3477 = vmatmul.mubr.bf16.gmra.mrb[0].mxu0 %v3103
        %v3478 = vpop.f32.mrb[0].mxu0
        %v3479 = vadd.f32 %v2986, %v3478
        %v3480 = vpop.f32.mrb[0].mxu0
        %v3481 = vpop.f32.mrb[0].mxu0
        %v3482 = vadd.f32 %v2986, %v3481
        %v3483 = vpop.f32.mrb[0].mxu0
        %3484 = vmatprep.mubr.bf16.mxu0 0
        %3485 = vmatmul.mubr.bf16.gmra.mrb[0].mxu0 %v3106
        %v3486 = vpop.f32.mrb[0].mxu0
        %v3487 = vadd.f32 %v2986, %v3486
        %v3488 = vpop.f32.mrb[0].mxu0
        %v3489 = vpop.f32.mrb[0].mxu0
        %v3490 = vadd.f32 %v2986, %v3489
        %v3491 = vpop.f32.mrb[0].mxu0
        %3492 = vmatprep.mubr.bf16.mxu0 0
        %3493 = vmatmul.mubr.bf16.gmra.mrb[0].mxu0 %v3109
        %v3494 = vpop.f32.mrb[0].mxu0
        %v3495 = vadd.f32 %v2986, %v3494
        %v3496 = vpop.f32.mrb[0].mxu0
        %v3497 = vpop.f32.mrb[0].mxu0
        %v3498 = vadd.f32 %v2986, %v3497
        %v3499 = vpop.f32.mrb[0].mxu0
        %3500 = vmatprep.mubr.bf16.mxu0 0
        %3501 = vmatmul.mubr.bf16.gmra.mrb[0].mxu0 %v3112
        %v3502 = vpop.f32.mrb[0].mxu0
        %v3503 = vadd.f32 %v2986, %v3502
        %v3504 = vpop.f32.mrb[0].mxu0
        %v3505 = vpop.f32.mrb[0].mxu0
        %v3506 = vadd.f32 %v2986, %v3505
        %v3507 = vpop.f32.mrb[0].mxu0
        %3508 = vmatprep.mubr.bf16.mxu0 0
        %3509 = vmatmul.mubr.bf16.gmra.mrb[0].mxu0 %v3115
        %v3510 = vpop.f32.mrb[0].mxu0
        %v3511 = vadd.f32 %v2986, %v3510
        %v3512 = vpop.f32.mrb[0].mxu0
        %v3513 = vpop.f32.mrb[0].mxu0
        %v3514 = vadd.f32 %v2986, %v3513
        %v3515 = vpop.f32.mrb[0].mxu0
        %3516 = vmatprep.mubr.bf16.mxu0 0
        %3517 = vmatmul.mubr.bf16.gmra.mrb[0].mxu0 %v3118
        %v3518 = vpop.f32.mrb[0].mxu0
        %v3519 = vadd.f32 %v2986, %v3518
        %v3520 = vpop.f32.mrb[0].mxu0
        %v3521 = vpop.f32.mrb[0].mxu0
        %v3522 = vadd.f32 %v2986, %v3521
        %v3523 = vpop.f32.mrb[0].mxu0
        %3524 = vmatprep.mubr.bf16.mxu0 0
        %3525 = vmatmul.mubr.bf16.gmra.mrb[0].mxu0 %v3121
        %v3526 = vpop.f32.mrb[0].mxu0
        %v3527 = vadd.f32 %v2986, %v3526
        %v3528 = vpop.f32.mrb[0].mxu0
        %v3529 = vpop.f32.mrb[0].mxu0
        %v3530 = vadd.f32 %v2986, %v3529
        %v3531 = vpop.f32.mrb[0].mxu0
        %3532 = vmatprep.mubr.bf16.mxu0 0
        %3533 = vmatmul.mubr.bf16.gmra.mrb[0].mxu0 %v3124
        %v3534 = vpop.f32.mrb[0].mxu0
        %v3535 = vadd.f32 %v2986, %v3534
        %v3536 = vpop.f32.mrb[0].mxu0
        %v3537 = vpop.f32.mrb[0].mxu0
        %v3538 = vadd.f32 %v2986, %v3537
        %v3539 = vpop.f32.mrb[0].mxu0
        %3540 = vmatprep.mubr.bf16.mxu0 0
        %3541 = vmatmul.mubr.bf16.gmra.mrb[0].mxu0 %v3127
        %v3542 = vpop.f32.mrb[0].mxu0
        %v3543 = vadd.f32 %v2986, %v3542
        %v3544 = vpop.f32.mrb[0].mxu0
        %v3545 = vpop.f32.mrb[0].mxu0
        %v3546 = vadd.f32 %v2986, %v3545
        %v3547 = vpop.f32.mrb[0].mxu0
        %3548 = vmatprep.mubr.bf16.mxu0 0
        %3549 = vmatmul.mubr.bf16.gmra.mrb[0].mxu0 %v3130
        %v3550 = vpop.f32.mrb[0].mxu0
        %v3551 = vadd.f32 %v2986, %v3550
        %v3552 = vpop.f32.mrb[0].mxu0
        %v3553 = vpop.f32.mrb[0].mxu0
        %v3554 = vadd.f32 %v2986, %v3553
        %v3555 = vpop.f32.mrb[0].mxu0
        %3556 = vmatprep.mubr.bf16.mxu0 0
        %3557 = vmatmul.mubr.bf16.gmra.mrb[0].mxu0 %v3133
        %v3558 = vpop.f32.mrb[0].mxu0
        %v3559 = vadd.f32 %v2986, %v3558
        %v3560 = vpop.f32.mrb[0].mxu0
        %v3561 = vpop.f32.mrb[0].mxu0
        %v3562 = vadd.f32 %v2986, %v3561
        %v3563 = vpop.f32.mrb[0].mxu0
        %3564 = vmatprep.mubr.bf16.mxu0 0
        %3565 = vmatmul.mubr.bf16.gmra.mrb[0].mxu0 %v3136
        %v3566 = vpop.f32.mrb[0].mxu0
        %v3567 = vadd.f32 %v2986, %v3566
        %v3568 = vpop.f32.mrb[0].mxu0
        %v3569 = vpop.f32.mrb[0].mxu0
        %v3570 = vadd.f32 %v2986, %v3569
        %v3571 = vpop.f32.mrb[0].mxu0
        %3572 = vmatprep.mubr.bf16.mxu0 0
        %3573 = vmatmul.mubr.bf16.gmra.mrb[0].mxu0 %v3139
        %v3574 = vpop.f32.mrb[0].mxu0
        %v3575 = vadd.f32 %v2986, %v3574
        %v3576 = vpop.f32.mrb[0].mxu0
        %v3577 = vpop.f32.mrb[0].mxu0
        %v3578 = vadd.f32 %v2986, %v3577
        %v3579 = vpop.f32.mrb[0].mxu0
        %3580 = vmatprep.mubr.bf16.mxu0 0
        %3581 = vmatmul.mubr.bf16.gmra.mrb[0].mxu0 %v3142
        %v3582 = vpop.f32.mrb[0].mxu0
        %v3583 = vadd.f32 %v2986, %v3582
        %v3584 = vpop.f32.mrb[0].mxu0
        %v3585 = vpop.f32.mrb[0].mxu0
        %v3586 = vadd.f32 %v2986, %v3585
        %v3587 = vpop.f32.mrb[0].mxu0
        %3588 = vmatprep.mubr.bf16.mxu0 0
        %3589 = vmatmul.mubr.bf16.gmra.mrb[0].mxu0 %v3145
        %v3590 = vpop.f32.mrb[0].mxu0
        %v3591 = vadd.f32 %v2986, %v3590
        %v3592 = vpop.f32.mrb[0].mxu0
        %v3593 = vpop.f32.mrb[0].mxu0
        %v3594 = vadd.f32 %v2986, %v3593
        %v3595 = vpop.f32.mrb[0].mxu0
        %3596 = vmatprep.mubr.bf16.mxu0 0
        %3597 = vmatmul.mubr.bf16.gmra.mrb[0].mxu0 %v3148
        %v3598 = vpop.f32.mrb[0].mxu0
        %v3599 = vadd.f32 %v2986, %v3598
        %v3600 = vpop.f32.mrb[0].mxu0
        %v3601 = vpop.f32.mrb[0].mxu0
        %v3602 = vadd.f32 %v2986, %v3601
        %v3603 = vpop.f32.mrb[0].mxu0
        %3604 = vmatprep.mubr.bf16.mxu0 0
        %3605 = vmatmul.mubr.bf16.gmra.mrb[0].mxu0 %v3151
        %v3606 = vpop.f32.mrb[0].mxu0
        %v3607 = vadd.f32 %v2986, %v3606
        %v3608 = vpop.f32.mrb[0].mxu0
        %v3609 = vpop.f32.mrb[0].mxu0
        %v3610 = vadd.f32 %v2986, %v3609
        %v3611 = vpop.f32.mrb[0].mxu0
        %3612 = vmatprep.mubr.bf16.mxu0 0
        %3613 = vmatmul.mubr.bf16.gmra.mrb[0].mxu0 %v3154
        %v3614 = vpop.f32.mrb[0].mxu0
        %v3615 = vadd.f32 %v2986, %v3614
        %v3616 = vpop.f32.mrb[0].mxu0
        %v3617 = vpop.f32.mrb[0].mxu0
        %v3618 = vadd.f32 %v2986, %v3617
        %v3619 = vpop.f32.mrb[0].mxu0
        %3620 = vmatprep.mubr.bf16.mxu0 0
        %3621 = vmatmul.mubr.bf16.gmra.mrb[0].mxu0 %v3157
        %v3622 = vpop.f32.mrb[0].mxu0
        %v3623 = vadd.f32 %v2986, %v3622
        %v3624 = vpop.f32.mrb[0].mxu0
        %v3625 = vpop.f32.mrb[0].mxu0
        %v3626 = vadd.f32 %v2986, %v3625
        %v3627 = vpop.f32.mrb[0].mxu0
        %3628 = vmatprep.mubr.bf16.mxu0 0
        %3629 = vmatmul.mubr.bf16.gmra.mrb[0].mxu0 %v3160
        %v3630 = vpop.f32.mrb[0].mxu0
        %v3631 = vadd.f32 %v2986, %v3630
        %v3632 = vpop.f32.mrb[0].mxu0
        %v3633 = vpop.f32.mrb[0].mxu0
        %v3634 = vadd.f32 %v2986, %v3633
        %v3635 = vpop.f32.mrb[0].mxu0
        %3636 = vmatprep.mubr.bf16.mxu0 0
        %3637 = vmatmul.mubr.bf16.gmra.mrb[0].mxu0 %v3163
        %v3638 = vpop.f32.mrb[0].mxu0
        %v3639 = vadd.f32 %v2986, %v3638
        %v3640 = vpop.f32.mrb[0].mxu0
        %v3641 = vpop.f32.mrb[0].mxu0
        %v3642 = vadd.f32 %v2986, %v3641
        %v3643 = vpop.f32.mrb[0].mxu0
        %3644 = vmatprep.mubr.bf16.mxu0 0
        %3645 = vmatmul.mubr.bf16.gmra.mrb[0].mxu0 %v3166
        %v3646 = vpop.f32.mrb[0].mxu0
        %v3647 = vadd.f32 %v2986, %v3646
        %v3648 = vpop.f32.mrb[0].mxu0
        %v3649 = vpop.f32.mrb[0].mxu0
        %v3650 = vadd.f32 %v2986, %v3649
        %v3651 = vpop.f32.mrb[0].mxu0
        %3652 = vmatprep.mubr.bf16.mxu0 0
        %3653 = vmatmul.mubr.bf16.gmra.mrb[0].mxu0 %v3169
        %v3654 = vpop.f32.mrb[0].mxu0
        %v3655 = vadd.f32 %v2986, %v3654
        %v3656 = vpop.f32.mrb[0].mxu0
        %v3657 = vpop.f32.mrb[0].mxu0
        %v3658 = vadd.f32 %v2986, %v3657
        %v3659 = vpop.f32.mrb[0].mxu0
        %3660 = vmatprep.mubr.bf16.mxu0 0
        %3661 = vmatmul.mubr.bf16.gmra.mrb[0].mxu0 %v3172
        %v3662 = vpop.f32.mrb[0].mxu0
        %v3663 = vadd.f32 %v2986, %v3662
        %v3664 = vpop.f32.mrb[0].mxu0
        %v3665 = vpop.f32.mrb[0].mxu0
        %v3666 = vadd.f32 %v2986, %v3665
        %v3667 = vpop.f32.mrb[0].mxu0
        %3668 = vmatprep.mubr.bf16.mxu0 0
        %3669 = vmatmul.mubr.bf16.gmra.mrb[0].mxu0 %v3175
        %v3670 = vpop.f32.mrb[0].mxu0
        %v3671 = vadd.f32 %v2986, %v3670
        %v3672 = vpop.f32.mrb[0].mxu0
        %v3673 = vpop.f32.mrb[0].mxu0
        %v3674 = vadd.f32 %v2986, %v3673
        %v3675 = vpop.f32.mrb[0].mxu0
        %3676 = vmatprep.mubr.bf16.mxu0 0
        %3677 = vmatmul.mubr.bf16.gmra.mrb[0].mxu0 %v3178
        %v3678 = vpop.f32.mrb[0].mxu0
        %v3679 = vadd.f32 %v2986, %v3678
        %v3680 = vpop.f32.mrb[0].mxu0
        %v3681 = vpop.f32.mrb[0].mxu0
        %v3682 = vadd.f32 %v2986, %v3681
        %v3683 = vpop.f32.mrb[0].mxu0
        %3684 = vmatprep.mubr.bf16.mxu0 0
        %3685 = vmatmul.mubr.bf16.gmra.mrb[0].mxu0 %v3181
        %v3686 = vpop.f32.mrb[0].mxu0
        %v3687 = vadd.f32 %v2986, %v3686
        %v3688 = vpop.f32.mrb[0].mxu0
        %v3689 = vpop.f32.mrb[0].mxu0
        %v3690 = vadd.f32 %v2986, %v3689
        %v3691 = vpop.f32.mrb[0].mxu0
        %3692 = vmatprep.mubr.bf16.mxu0 0
        %3693 = vmatmul.mubr.bf16.gmra.mrb[0].mxu0 %v3184
        %v3694 = vpop.f32.mrb[0].mxu0
        %v3695 = vadd.f32 %v2986, %v3694
        %v3696 = vpop.f32.mrb[0].mxu0
        %v3697 = vpop.f32.mrb[0].mxu0
        %v3698 = vadd.f32 %v2986, %v3697
        %v3699 = vpop.f32.mrb[0].mxu0
        %3700 = vmatprep.mubr.bf16.mxu0 0
        %3701 = vmatmul.mubr.bf16.gmra.mrb[0].mxu0 %v3187
        %v3702 = vpop.f32.mrb[0].mxu0
        %v3703 = vadd.f32 %v2986, %v3702
        %v3704 = vpop.f32.mrb[0].mxu0
        %v3705 = vpop.f32.mrb[0].mxu0
        %v3706 = vadd.f32 %v2986, %v3705
        %v3707 = vpop.f32.mrb[0].mxu0
        %3708 = vmatprep.mubr.bf16.mxu0 0
        %3709 = vmatmul.mubr.bf16.gmra.mrb[0].mxu0 %v3190
        %v3710 = vpop.f32.mrb[0].mxu0
        %v3711 = vadd.f32 %v2986, %v3710
        %v3712 = vpop.f32.mrb[0].mxu0
        %v3713 = vpop.f32.mrb[0].mxu0
        %v3714 = vadd.f32 %v2986, %v3713
        %v3715 = vpop.f32.mrb[0].mxu0
        %3716 = vmatprep.mubr.bf16.mxu0 0
        %3717 = vmatmul.mubr.bf16.gmra.mrb[0].mxu0 %v3193
        %v3718 = vpop.f32.mrb[0].mxu0
        %v3719 = vadd.f32 %v2986, %v3718
        %v3720 = vpop.f32.mrb[0].mxu0
        %v3721 = vpop.f32.mrb[0].mxu0
        %v3722 = vadd.f32 %v2986, %v3721
        %v3723 = vpop.f32.mrb[0].mxu0
        %3724 = vmatprep.mubr.bf16.mxu0 0
        %3725 = vmatmul.mubr.bf16.gmra.mrb[0].mxu0 %v3196
        %v3726 = vpop.f32.mrb[0].mxu0
        %v3727 = vadd.f32 %v2986, %v3726
        %v3728 = vpop.f32.mrb[0].mxu0
        %v3729 = vpop.f32.mrb[0].mxu0
        %v3730 = vadd.f32 %v2986, %v3729
        %v3731 = vpop.f32.mrb[0].mxu0
        %3732 = vmatprep.mubr.bf16.mxu0 0
        %3733 = vmatmul.mubr.bf16.gmra.mrb[0].mxu0 %v3199
        %v3734 = vpop.f32.mrb[0].mxu0
        %v3735 = vadd.f32 %v2986, %v3734
        %v3736 = vpop.f32.mrb[0].mxu0
        %v3737 = vpop.f32.mrb[0].mxu0
        %v3738 = vadd.f32 %v2986, %v3737
        %v3739 = vpop.f32.mrb[0].mxu0
        %3740 = vmatprep.mubr.bf16.mxu0 0
        %3741 = vmatmul.mubr.bf16.gmra.mrb[0].mxu0 %v3202
        %v3742 = vpop.f32.mrb[0].mxu0
        %v3743 = vadd.f32 %v2986, %v3742
        %v3744 = vpop.f32.mrb[0].mxu0
        %v3745 = vpop.f32.mrb[0].mxu0
        %v3746 = vadd.f32 %v2986, %v3745
        %v3747 = vpop.f32.mrb[0].mxu0
        %3748 = vdwg.mxu0
        %v3749 = vpack.c.bf16 %v2684, %v2683
        %v3750 = vpack.c.bf16 %v2686, %v2685
        %v3751 = vpack.c.bf16 %v2688, %v2687
        %v3752 = vpack.c.bf16 %v2690, %v2689
        %v3753 = vpack.c.bf16 %v2692, %v2691
        %v3754 = vpack.c.bf16 %v2694, %v2693
        %v3755 = vpack.c.bf16 %v2696, %v2695
        %v3756 = vpack.c.bf16 %v2698, %v2697
        %v3757 = vpack.c.bf16 %v2700, %v2699
        %v3758 = vpack.c.bf16 %v2702, %v2701
        %v3759 = vpack.c.bf16 %v2704, %v2703
        %v3760 = vpack.c.bf16 %v2706, %v2705
        %v3761 = vpack.c.bf16 %v2708, %v2707
        %v3762 = vpack.c.bf16 %v2710, %v2709
        %v3763 = vpack.c.bf16 %v2712, %v2711
        %v3764 = vpack.c.bf16 %v2714, %v2713
        %v3765 = vpack.c.bf16 %v2716, %v2715
        %v3766 = vpack.c.bf16 %v2718, %v2717
        %v3767 = vpack.c.bf16 %v2720, %v2719
        %v3768 = vpack.c.bf16 %v2722, %v2721
        %v3769 = vpack.c.bf16 %v2724, %v2723
        %v3770 = vpack.c.bf16 %v2726, %v2725
        %v3771 = vpack.c.bf16 %v2728, %v2727
        %v3772 = vpack.c.bf16 %v2730, %v2729
        %v3773 = vpack.c.bf16 %v2732, %v2731
        %v3774 = vpack.c.bf16 %v2734, %v2733
        %v3775 = vpack.c.bf16 %v2736, %v2735
        %v3776 = vpack.c.bf16 %v2738, %v2737
        %v3777 = vpack.c.bf16 %v2740, %v2739
        %v3778 = vpack.c.bf16 %v2742, %v2741
        %v3779 = vpack.c.bf16 %v2744, %v2743
        %v3780 = vpack.c.bf16 %v2746, %v2745
        %v3781 = vpack.c.bf16 %v2748, %v2747
        %v3782 = vpack.c.bf16 %v2750, %v2749
        %v3783 = vpack.c.bf16 %v2752, %v2751
        %v3784 = vpack.c.bf16 %v2754, %v2753
        %v3785 = vpack.c.bf16 %v2756, %v2755
        %v3786 = vpack.c.bf16 %v2758, %v2757
        %v3787 = vpack.c.bf16 %v2760, %v2759
        %v3788 = vpack.c.bf16 %v2762, %v2761
        %v3789 = vpack.c.bf16 %v2764, %v2763
        %v3790 = vpack.c.bf16 %v2766, %v2765
        %v3791 = vpack.c.bf16 %v2768, %v2767
        %v3792 = vpack.c.bf16 %v2770, %v2769
        %v3793 = vpack.c.bf16 %v2772, %v2771
        %v3794 = vpack.c.bf16 %v2774, %v2773
        %v3795 = vpack.c.bf16 %v2776, %v2775
        %v3796 = vpack.c.bf16 %v2778, %v2777
        %v3797 = vpack.c.bf16 %v2780, %v2779
        %v3798 = vpack.c.bf16 %v2782, %v2781
        %v3799 = vpack.c.bf16 %v2784, %v2783
        %v3800 = vpack.c.bf16 %v2786, %v2785
        %v3801 = vpack.c.bf16 %v2788, %v2787
        %v3802 = vpack.c.bf16 %v2790, %v2789
        %v3803 = vpack.c.bf16 %v2792, %v2791
        %v3804 = vpack.c.bf16 %v2794, %v2793
        %v3805 = vpack.c.bf16 %v2796, %v2795
        %v3806 = vpack.c.bf16 %v2798, %v2797
        %v3807 = vpack.c.bf16 %v2800, %v2799
        %v3808 = vpack.c.bf16 %v2802, %v2801
        %v3809 = vpack.c.bf16 %v2804, %v2803
        %v3810 = vpack.c.bf16 %v2806, %v2805
        %v3811 = vpack.c.bf16 %v2808, %v2807
        %v3812 = vpack.c.bf16 %v2810, %v2809
        %v3814 = vlaneseq
        %v3815 = vshrl.u32 %v3814, 7
        %v3816 = vsub.s32 0, %v3815
        %v3817 = vrot.slane %v722, %v3816
        %v3827 = vunpack.c.l.b16 %v714
        %v3828 = vunpack.c.l.b16 %v715
        %v3829 = vunpack.c.l.b16 %v716
        %v3830 = vunpack.c.l.b16 %v717
        %v3831 = vunpack.c.l.b16 %v718
        %v3832 = vunpack.c.l.b16 %v719
        %v3833 = vunpack.c.l.b16 %v720
        %v3834 = vunpack.c.l.b16 %v721
        %v3835 = vpack.c.b16 %v3828, %v3827
        %v3836 = vpack.c.b16 %v3830, %v3829
        %v3837 = vpack.c.b16 %v3832, %v3831
        %v3838 = vpack.c.b16 %v3834, %v3833
        %v3844 = vsel %vm1945, %v3749, 0
        %v3847 = vsel %vm1945, %v3750, 0
        %v3850 = vsel %vm1945, %v3751, 0
        %v3853 = vsel %vm1945, %v3752, 0
        %v3856 = vsel %vm1945, %v3753, 0
        %v3859 = vsel %vm1945, %v3754, 0
        %v3862 = vsel %vm1945, %v3755, 0
        %v3865 = vsel %vm1945, %v3756, 0
        %v3868 = vsel %vm1945, %v3757, 0
        %v3871 = vsel %vm1945, %v3758, 0
        %v3874 = vsel %vm1945, %v3759, 0
        %v3877 = vsel %vm1945, %v3760, 0
        %v3880 = vsel %vm1945, %v3761, 0
        %v3883 = vsel %vm1945, %v3762, 0
        %v3886 = vsel %vm1945, %v3763, 0
        %v3889 = vsel %vm1945, %v3764, 0
        %v3892 = vsel %vm1945, %v3765, 0
        %v3895 = vsel %vm1945, %v3766, 0
        %v3898 = vsel %vm1945, %v3767, 0
        %v3901 = vsel %vm1945, %v3768, 0
        %v3904 = vsel %vm1945, %v3769, 0
        %v3907 = vsel %vm1945, %v3770, 0
        %v3910 = vsel %vm1945, %v3771, 0
        %v3913 = vsel %vm1945, %v3772, 0
        %v3916 = vsel %vm1945, %v3773, 0
        %v3919 = vsel %vm1945, %v3774, 0
        %v3922 = vsel %vm1945, %v3775, 0
        %v3925 = vsel %vm1945, %v3776, 0
        %v3928 = vsel %vm1945, %v3777, 0
        %v3931 = vsel %vm1945, %v3778, 0
        %v3934 = vsel %vm1945, %v3779, 0
        %v3937 = vsel %vm1945, %v3780, 0
        %v3940 = vsel %vm1945, %v3781, 0
        %v3943 = vsel %vm1945, %v3782, 0
        %v3946 = vsel %vm1945, %v3783, 0
        %v3949 = vsel %vm1945, %v3784, 0
        %v3952 = vsel %vm1945, %v3785, 0
        %v3955 = vsel %vm1945, %v3786, 0
        %v3958 = vsel %vm1945, %v3787, 0
        %v3961 = vsel %vm1945, %v3788, 0
        %v3964 = vsel %vm1945, %v3789, 0
        %v3967 = vsel %vm1945, %v3790, 0
        %v3970 = vsel %vm1945, %v3791, 0
        %v3973 = vsel %vm1945, %v3792, 0
        %v3976 = vsel %vm1945, %v3793, 0
        %v3979 = vsel %vm1945, %v3794, 0
        %v3982 = vsel %vm1945, %v3795, 0
        %v3985 = vsel %vm1945, %v3796, 0
        %v3988 = vsel %vm1945, %v3797, 0
        %v3991 = vsel %vm1945, %v3798, 0
        %v3994 = vsel %vm1945, %v3799, 0
        %v3997 = vsel %vm1945, %v3800, 0
        %v4000 = vsel %vm1945, %v3801, 0
        %v4003 = vsel %vm1945, %v3802, 0
        %v4006 = vsel %vm1945, %v3803, 0
        %v4009 = vsel %vm1945, %v3804, 0
        %v4012 = vsel %vm1945, %v3805, 0
        %v4015 = vsel %vm1945, %v3806, 0
        %v4018 = vsel %vm1945, %v3807, 0
        %v4021 = vsel %vm1945, %v3808, 0
        %v4024 = vsel %vm1945, %v3809, 0
        %v4027 = vsel %vm1945, %v3810, 0
        %v4030 = vsel %vm1945, %v3811, 0
        %v4033 = vsel %vm1945, %v3812, 0
        %4035 = vmatprep.subr.bf16.mxu0 0
        %4036 = vmatpush1.bf16.msra.mxu0 %v3835
        %4037 = vmatprep.subr.bf16.mxu0 0
        %4038 = vmatpush1.bf16.msra.mxu0 %v3836
        %4039 = vmatprep.subr.bf16.mxu0 0
        %4040 = vmatpush1.bf16.msra.mxu0 %v3837
        %4041 = vmatprep.subr.bf16.mxu0 0
        %4042 = vmatpush1.bf16.msra.mxu0 %v3838
        %4043 = vmatprep.subr.bf16.mxu0 0
        %4044 = vmatpush1.bf16.msra.mxu0 0
        %4045 = vmatprep.subr.bf16.mxu0 0
        %4046 = vmatpush1.bf16.msra.mxu0 0
        %4047 = vmatprep.subr.bf16.mxu0 0
        %4048 = vmatpush1.bf16.msra.mxu0 0
        %4049 = vmatprep.subr.bf16.mxu0 0
        %4050 = vmatpush1.bf16.msra.mxu0 0
        %4051 = vmatprep.subr.bf16.mxu0 0
        %4052 = vmatpush1.bf16.msra.mxu0 0
        %4053 = vmatprep.subr.bf16.mxu0 0
        %4054 = vmatpush1.bf16.msra.mxu0 0
        %4055 = vmatprep.subr.bf16.mxu0 0
        %4056 = vmatpush1.bf16.msra.mxu0 0
        %4057 = vmatprep.subr.bf16.mxu0 0
        %4058 = vmatpush1.bf16.msra.mxu0 0
        %4059 = vmatprep.subr.bf16.mxu0 0
        %4060 = vmatpush1.bf16.msra.mxu0 0
        %4061 = vmatprep.subr.bf16.mxu0 0
        %4062 = vmatpush1.bf16.msra.mxu0 0
        %4063 = vmatprep.subr.bf16.mxu0 0
        %4064 = vmatpush1.bf16.msra.mxu0 0
        %4065 = vmatprep.subr.bf16.mxu0 0
        %4066 = vmatpush1.bf16.msra.mxu0 0
        %4067 = vmatprep.mubr.bf16.mxu0 0
        %4068 = vmatmul.mubr.bf16.gmra.mrb[0].mxu0 %v3844
        %v4069 = vpop.f32.mrb[0].mxu0
        %v4070 = vadd.f32 %v3817, %v4069
        %v4071 = vpop.f32.mrb[0].mxu0
        %v4072 = vpop.f32.mrb[0].mxu0
        %v4073 = vadd.f32 %v3817, %v4072
        %v4074 = vpop.f32.mrb[0].mxu0
        %4075 = vmatprep.mubr.bf16.mxu0 0
        %4076 = vmatmul.mubr.bf16.gmra.mrb[0].mxu0 %v3847
        %v4077 = vpop.f32.mrb[0].mxu0
        %v4078 = vadd.f32 %v3817, %v4077
        %v4079 = vpop.f32.mrb[0].mxu0
        %v4080 = vpop.f32.mrb[0].mxu0
        %v4081 = vadd.f32 %v3817, %v4080
        %v4082 = vpop.f32.mrb[0].mxu0
        %4083 = vmatprep.mubr.bf16.mxu0 0
        %4084 = vmatmul.mubr.bf16.gmra.mrb[0].mxu0 %v3850
        %v4085 = vpop.f32.mrb[0].mxu0
        %v4086 = vadd.f32 %v3817, %v4085
        %v4087 = vpop.f32.mrb[0].mxu0
        %v4088 = vpop.f32.mrb[0].mxu0
        %v4089 = vadd.f32 %v3817, %v4088
        %v4090 = vpop.f32.mrb[0].mxu0
        %4091 = vmatprep.mubr.bf16.mxu0 0
        %4092 = vmatmul.mubr.bf16.gmra.mrb[0].mxu0 %v3853
        %v4093 = vpop.f32.mrb[0].mxu0
        %v4094 = vadd.f32 %v3817, %v4093
        %v4095 = vpop.f32.mrb[0].mxu0
        %v4096 = vpop.f32.mrb[0].mxu0
        %v4097 = vadd.f32 %v3817, %v4096
        %v4098 = vpop.f32.mrb[0].mxu0
        %4099 = vmatprep.mubr.bf16.mxu0 0
        %4100 = vmatmul.mubr.bf16.gmra.mrb[0].mxu0 %v3856
        %v4101 = vpop.f32.mrb[0].mxu0
        %v4102 = vadd.f32 %v3817, %v4101
        %v4103 = vpop.f32.mrb[0].mxu0
        %v4104 = vpop.f32.mrb[0].mxu0
        %v4105 = vadd.f32 %v3817, %v4104
        %v4106 = vpop.f32.mrb[0].mxu0
        %4107 = vmatprep.mubr.bf16.mxu0 0
        %4108 = vmatmul.mubr.bf16.gmra.mrb[0].mxu0 %v3859
        %v4109 = vpop.f32.mrb[0].mxu0
        %v4110 = vadd.f32 %v3817, %v4109
        %v4111 = vpop.f32.mrb[0].mxu0
        %v4112 = vpop.f32.mrb[0].mxu0
        %v4113 = vadd.f32 %v3817, %v4112
        %v4114 = vpop.f32.mrb[0].mxu0
        %4115 = vmatprep.mubr.bf16.mxu0 0
        %4116 = vmatmul.mubr.bf16.gmra.mrb[0].mxu0 %v3862
        %v4117 = vpop.f32.mrb[0].mxu0
        %v4118 = vadd.f32 %v3817, %v4117
        %v4119 = vpop.f32.mrb[0].mxu0
        %v4120 = vpop.f32.mrb[0].mxu0
        %v4121 = vadd.f32 %v3817, %v4120
        %v4122 = vpop.f32.mrb[0].mxu0
        %4123 = vmatprep.mubr.bf16.mxu0 0
        %4124 = vmatmul.mubr.bf16.gmra.mrb[0].mxu0 %v3865
        %v4125 = vpop.f32.mrb[0].mxu0
        %v4126 = vadd.f32 %v3817, %v4125
        %v4127 = vpop.f32.mrb[0].mxu0
        %v4128 = vpop.f32.mrb[0].mxu0
        %v4129 = vadd.f32 %v3817, %v4128
        %v4130 = vpop.f32.mrb[0].mxu0
        %4131 = vmatprep.mubr.bf16.mxu0 0
        %4132 = vmatmul.mubr.bf16.gmra.mrb[0].mxu0 %v3868
        %v4133 = vpop.f32.mrb[0].mxu0
        %v4134 = vadd.f32 %v3817, %v4133
        %v4135 = vpop.f32.mrb[0].mxu0
        %v4136 = vpop.f32.mrb[0].mxu0
        %v4137 = vadd.f32 %v3817, %v4136
        %v4138 = vpop.f32.mrb[0].mxu0
        %4139 = vmatprep.mubr.bf16.mxu0 0
        %4140 = vmatmul.mubr.bf16.gmra.mrb[0].mxu0 %v3871
        %v4141 = vpop.f32.mrb[0].mxu0
        %v4142 = vadd.f32 %v3817, %v4141
        %v4143 = vpop.f32.mrb[0].mxu0
        %v4144 = vpop.f32.mrb[0].mxu0
        %v4145 = vadd.f32 %v3817, %v4144
        %v4146 = vpop.f32.mrb[0].mxu0
        %4147 = vmatprep.mubr.bf16.mxu0 0
        %4148 = vmatmul.mubr.bf16.gmra.mrb[0].mxu0 %v3874
        %v4149 = vpop.f32.mrb[0].mxu0
        %v4150 = vadd.f32 %v3817, %v4149
        %v4151 = vpop.f32.mrb[0].mxu0
        %v4152 = vpop.f32.mrb[0].mxu0
        %v4153 = vadd.f32 %v3817, %v4152
        %v4154 = vpop.f32.mrb[0].mxu0
        %4155 = vmatprep.mubr.bf16.mxu0 0
        %4156 = vmatmul.mubr.bf16.gmra.mrb[0].mxu0 %v3877
        %v4157 = vpop.f32.mrb[0].mxu0
        %v4158 = vadd.f32 %v3817, %v4157
        %v4159 = vpop.f32.mrb[0].mxu0
        %v4160 = vpop.f32.mrb[0].mxu0
        %v4161 = vadd.f32 %v3817, %v4160
        %v4162 = vpop.f32.mrb[0].mxu0
        %4163 = vmatprep.mubr.bf16.mxu0 0
        %4164 = vmatmul.mubr.bf16.gmra.mrb[0].mxu0 %v3880
        %v4165 = vpop.f32.mrb[0].mxu0
        %v4166 = vadd.f32 %v3817, %v4165
        %v4167 = vpop.f32.mrb[0].mxu0
        %v4168 = vpop.f32.mrb[0].mxu0
        %v4169 = vadd.f32 %v3817, %v4168
        %v4170 = vpop.f32.mrb[0].mxu0
        %4171 = vmatprep.mubr.bf16.mxu0 0
        %4172 = vmatmul.mubr.bf16.gmra.mrb[0].mxu0 %v3883
        %v4173 = vpop.f32.mrb[0].mxu0
        %v4174 = vadd.f32 %v3817, %v4173
        %v4175 = vpop.f32.mrb[0].mxu0
        %v4176 = vpop.f32.mrb[0].mxu0
        %v4177 = vadd.f32 %v3817, %v4176
        %v4178 = vpop.f32.mrb[0].mxu0
        %4179 = vmatprep.mubr.bf16.mxu0 0
        %4180 = vmatmul.mubr.bf16.gmra.mrb[0].mxu0 %v3886
        %v4181 = vpop.f32.mrb[0].mxu0
        %v4182 = vadd.f32 %v3817, %v4181
        %v4183 = vpop.f32.mrb[0].mxu0
        %v4184 = vpop.f32.mrb[0].mxu0
        %v4185 = vadd.f32 %v3817, %v4184
        %v4186 = vpop.f32.mrb[0].mxu0
        %4187 = vmatprep.mubr.bf16.mxu0 0
        %4188 = vmatmul.mubr.bf16.gmra.mrb[0].mxu0 %v3889
        %v4189 = vpop.f32.mrb[0].mxu0
        %v4190 = vadd.f32 %v3817, %v4189
        %v4191 = vpop.f32.mrb[0].mxu0
        %v4192 = vpop.f32.mrb[0].mxu0
        %v4193 = vadd.f32 %v3817, %v4192
        %v4194 = vpop.f32.mrb[0].mxu0
        %4195 = vmatprep.mubr.bf16.mxu0 0
        %4196 = vmatmul.mubr.bf16.gmra.mrb[0].mxu0 %v3892
        %v4197 = vpop.f32.mrb[0].mxu0
        %v4198 = vadd.f32 %v3817, %v4197
        %v4199 = vpop.f32.mrb[0].mxu0
        %v4200 = vpop.f32.mrb[0].mxu0
        %v4201 = vadd.f32 %v3817, %v4200
        %v4202 = vpop.f32.mrb[0].mxu0
        %4203 = vmatprep.mubr.bf16.mxu0 0
        %4204 = vmatmul.mubr.bf16.gmra.mrb[0].mxu0 %v3895
        %v4205 = vpop.f32.mrb[0].mxu0
        %v4206 = vadd.f32 %v3817, %v4205
        %v4207 = vpop.f32.mrb[0].mxu0
        %v4208 = vpop.f32.mrb[0].mxu0
        %v4209 = vadd.f32 %v3817, %v4208
        %v4210 = vpop.f32.mrb[0].mxu0
        %4211 = vmatprep.mubr.bf16.mxu0 0
        %4212 = vmatmul.mubr.bf16.gmra.mrb[0].mxu0 %v3898
        %v4213 = vpop.f32.mrb[0].mxu0
        %v4214 = vadd.f32 %v3817, %v4213
        %v4215 = vpop.f32.mrb[0].mxu0
        %v4216 = vpop.f32.mrb[0].mxu0
        %v4217 = vadd.f32 %v3817, %v4216
        %v4218 = vpop.f32.mrb[0].mxu0
        %4219 = vmatprep.mubr.bf16.mxu0 0
        %4220 = vmatmul.mubr.bf16.gmra.mrb[0].mxu0 %v3901
        %v4221 = vpop.f32.mrb[0].mxu0
        %v4222 = vadd.f32 %v3817, %v4221
        %v4223 = vpop.f32.mrb[0].mxu0
        %v4224 = vpop.f32.mrb[0].mxu0
        %v4225 = vadd.f32 %v3817, %v4224
        %v4226 = vpop.f32.mrb[0].mxu0
        %4227 = vmatprep.mubr.bf16.mxu0 0
        %4228 = vmatmul.mubr.bf16.gmra.mrb[0].mxu0 %v3904
        %v4229 = vpop.f32.mrb[0].mxu0
        %v4230 = vadd.f32 %v3817, %v4229
        %v4231 = vpop.f32.mrb[0].mxu0
        %v4232 = vpop.f32.mrb[0].mxu0
        %v4233 = vadd.f32 %v3817, %v4232
        %v4234 = vpop.f32.mrb[0].mxu0
        %4235 = vmatprep.mubr.bf16.mxu0 0
        %4236 = vmatmul.mubr.bf16.gmra.mrb[0].mxu0 %v3907
        %v4237 = vpop.f32.mrb[0].mxu0
        %v4238 = vadd.f32 %v3817, %v4237
        %v4239 = vpop.f32.mrb[0].mxu0
        %v4240 = vpop.f32.mrb[0].mxu0
        %v4241 = vadd.f32 %v3817, %v4240
        %v4242 = vpop.f32.mrb[0].mxu0
        %4243 = vmatprep.mubr.bf16.mxu0 0
        %4244 = vmatmul.mubr.bf16.gmra.mrb[0].mxu0 %v3910
        %v4245 = vpop.f32.mrb[0].mxu0
        %v4246 = vadd.f32 %v3817, %v4245
        %v4247 = vpop.f32.mrb[0].mxu0
        %v4248 = vpop.f32.mrb[0].mxu0
        %v4249 = vadd.f32 %v3817, %v4248
        %v4250 = vpop.f32.mrb[0].mxu0
        %4251 = vmatprep.mubr.bf16.mxu0 0
        %4252 = vmatmul.mubr.bf16.gmra.mrb[0].mxu0 %v3913
        %v4253 = vpop.f32.mrb[0].mxu0
        %v4254 = vadd.f32 %v3817, %v4253
        %v4255 = vpop.f32.mrb[0].mxu0
        %v4256 = vpop.f32.mrb[0].mxu0
        %v4257 = vadd.f32 %v3817, %v4256
        %v4258 = vpop.f32.mrb[0].mxu0
        %4259 = vmatprep.mubr.bf16.mxu0 0
        %4260 = vmatmul.mubr.bf16.gmra.mrb[0].mxu0 %v3916
        %v4261 = vpop.f32.mrb[0].mxu0
        %v4262 = vadd.f32 %v3817, %v4261
        %v4263 = vpop.f32.mrb[0].mxu0
        %v4264 = vpop.f32.mrb[0].mxu0
        %v4265 = vadd.f32 %v3817, %v4264
        %v4266 = vpop.f32.mrb[0].mxu0
        %4267 = vmatprep.mubr.bf16.mxu0 0
        %4268 = vmatmul.mubr.bf16.gmra.mrb[0].mxu0 %v3919
        %v4269 = vpop.f32.mrb[0].mxu0
        %v4270 = vadd.f32 %v3817, %v4269
        %v4271 = vpop.f32.mrb[0].mxu0
        %v4272 = vpop.f32.mrb[0].mxu0
        %v4273 = vadd.f32 %v3817, %v4272
        %v4274 = vpop.f32.mrb[0].mxu0
        %4275 = vmatprep.mubr.bf16.mxu0 0
        %4276 = vmatmul.mubr.bf16.gmra.mrb[0].mxu0 %v3922
        %v4277 = vpop.f32.mrb[0].mxu0
        %v4278 = vadd.f32 %v3817, %v4277
        %v4279 = vpop.f32.mrb[0].mxu0
        %v4280 = vpop.f32.mrb[0].mxu0
        %v4281 = vadd.f32 %v3817, %v4280
        %v4282 = vpop.f32.mrb[0].mxu0
        %4283 = vmatprep.mubr.bf16.mxu0 0
        %4284 = vmatmul.mubr.bf16.gmra.mrb[0].mxu0 %v3925
        %v4285 = vpop.f32.mrb[0].mxu0
        %v4286 = vadd.f32 %v3817, %v4285
        %v4287 = vpop.f32.mrb[0].mxu0
        %v4288 = vpop.f32.mrb[0].mxu0
        %v4289 = vadd.f32 %v3817, %v4288
        %v4290 = vpop.f32.mrb[0].mxu0
        %4291 = vmatprep.mubr.bf16.mxu0 0
        %4292 = vmatmul.mubr.bf16.gmra.mrb[0].mxu0 %v3928
        %v4293 = vpop.f32.mrb[0].mxu0
        %v4294 = vadd.f32 %v3817, %v4293
        %v4295 = vpop.f32.mrb[0].mxu0
        %v4296 = vpop.f32.mrb[0].mxu0
        %v4297 = vadd.f32 %v3817, %v4296
        %v4298 = vpop.f32.mrb[0].mxu0
        %4299 = vmatprep.mubr.bf16.mxu0 0
        %4300 = vmatmul.mubr.bf16.gmra.mrb[0].mxu0 %v3931
        %v4301 = vpop.f32.mrb[0].mxu0
        %v4302 = vadd.f32 %v3817, %v4301
        %v4303 = vpop.f32.mrb[0].mxu0
        %v4304 = vpop.f32.mrb[0].mxu0
        %v4305 = vadd.f32 %v3817, %v4304
        %v4306 = vpop.f32.mrb[0].mxu0
        %4307 = vmatprep.mubr.bf16.mxu0 0
        %4308 = vmatmul.mubr.bf16.gmra.mrb[0].mxu0 %v3934
        %v4309 = vpop.f32.mrb[0].mxu0
        %v4310 = vadd.f32 %v3817, %v4309
        %v4311 = vpop.f32.mrb[0].mxu0
        %v4312 = vpop.f32.mrb[0].mxu0
        %v4313 = vadd.f32 %v3817, %v4312
        %v4314 = vpop.f32.mrb[0].mxu0
        %4315 = vmatprep.mubr.bf16.mxu0 0
        %4316 = vmatmul.mubr.bf16.gmra.mrb[0].mxu0 %v3937
        %v4317 = vpop.f32.mrb[0].mxu0
        %v4318 = vadd.f32 %v3817, %v4317
        %v4319 = vpop.f32.mrb[0].mxu0
        %v4320 = vpop.f32.mrb[0].mxu0
        %v4321 = vadd.f32 %v3817, %v4320
        %v4322 = vpop.f32.mrb[0].mxu0
        %4323 = vmatprep.mubr.bf16.mxu0 0
        %4324 = vmatmul.mubr.bf16.gmra.mrb[0].mxu0 %v3940
        %v4325 = vpop.f32.mrb[0].mxu0
        %v4326 = vadd.f32 %v3817, %v4325
        %v4327 = vpop.f32.mrb[0].mxu0
        %v4328 = vpop.f32.mrb[0].mxu0
        %v4329 = vadd.f32 %v3817, %v4328
        %v4330 = vpop.f32.mrb[0].mxu0
        %4331 = vmatprep.mubr.bf16.mxu0 0
        %4332 = vmatmul.mubr.bf16.gmra.mrb[0].mxu0 %v3943
        %v4333 = vpop.f32.mrb[0].mxu0
        %v4334 = vadd.f32 %v3817, %v4333
        %v4335 = vpop.f32.mrb[0].mxu0
        %v4336 = vpop.f32.mrb[0].mxu0
        %v4337 = vadd.f32 %v3817, %v4336
        %v4338 = vpop.f32.mrb[0].mxu0
        %4339 = vmatprep.mubr.bf16.mxu0 0
        %4340 = vmatmul.mubr.bf16.gmra.mrb[0].mxu0 %v3946
        %v4341 = vpop.f32.mrb[0].mxu0
        %v4342 = vadd.f32 %v3817, %v4341
        %v4343 = vpop.f32.mrb[0].mxu0
        %v4344 = vpop.f32.mrb[0].mxu0
        %v4345 = vadd.f32 %v3817, %v4344
        %v4346 = vpop.f32.mrb[0].mxu0
        %4347 = vmatprep.mubr.bf16.mxu0 0
        %4348 = vmatmul.mubr.bf16.gmra.mrb[0].mxu0 %v3949
        %v4349 = vpop.f32.mrb[0].mxu0
        %v4350 = vadd.f32 %v3817, %v4349
        %v4351 = vpop.f32.mrb[0].mxu0
        %v4352 = vpop.f32.mrb[0].mxu0
        %v4353 = vadd.f32 %v3817, %v4352
        %v4354 = vpop.f32.mrb[0].mxu0
        %4355 = vmatprep.mubr.bf16.mxu0 0
        %4356 = vmatmul.mubr.bf16.gmra.mrb[0].mxu0 %v3952
        %v4357 = vpop.f32.mrb[0].mxu0
        %v4358 = vadd.f32 %v3817, %v4357
        %v4359 = vpop.f32.mrb[0].mxu0
        %v4360 = vpop.f32.mrb[0].mxu0
        %v4361 = vadd.f32 %v3817, %v4360
        %v4362 = vpop.f32.mrb[0].mxu0
        %4363 = vmatprep.mubr.bf16.mxu0 0
        %4364 = vmatmul.mubr.bf16.gmra.mrb[0].mxu0 %v3955
        %v4365 = vpop.f32.mrb[0].mxu0
        %v4366 = vadd.f32 %v3817, %v4365
        %v4367 = vpop.f32.mrb[0].mxu0
        %v4368 = vpop.f32.mrb[0].mxu0
        %v4369 = vadd.f32 %v3817, %v4368
        %v4370 = vpop.f32.mrb[0].mxu0
        %4371 = vmatprep.mubr.bf16.mxu0 0
        %4372 = vmatmul.mubr.bf16.gmra.mrb[0].mxu0 %v3958
        %v4373 = vpop.f32.mrb[0].mxu0
        %v4374 = vadd.f32 %v3817, %v4373
        %v4375 = vpop.f32.mrb[0].mxu0
        %v4376 = vpop.f32.mrb[0].mxu0
        %v4377 = vadd.f32 %v3817, %v4376
        %v4378 = vpop.f32.mrb[0].mxu0
        %4379 = vmatprep.mubr.bf16.mxu0 0
        %4380 = vmatmul.mubr.bf16.gmra.mrb[0].mxu0 %v3961
        %v4381 = vpop.f32.mrb[0].mxu0
        %v4382 = vadd.f32 %v3817, %v4381
        %v4383 = vpop.f32.mrb[0].mxu0
        %v4384 = vpop.f32.mrb[0].mxu0
        %v4385 = vadd.f32 %v3817, %v4384
        %v4386 = vpop.f32.mrb[0].mxu0
        %4387 = vmatprep.mubr.bf16.mxu0 0
        %4388 = vmatmul.mubr.bf16.gmra.mrb[0].mxu0 %v3964
        %v4389 = vpop.f32.mrb[0].mxu0
        %v4390 = vadd.f32 %v3817, %v4389
        %v4391 = vpop.f32.mrb[0].mxu0
        %v4392 = vpop.f32.mrb[0].mxu0
        %v4393 = vadd.f32 %v3817, %v4392
        %v4394 = vpop.f32.mrb[0].mxu0
        %4395 = vmatprep.mubr.bf16.mxu0 0
        %4396 = vmatmul.mubr.bf16.gmra.mrb[0].mxu0 %v3967
        %v4397 = vpop.f32.mrb[0].mxu0
        %v4398 = vadd.f32 %v3817, %v4397
        %v4399 = vpop.f32.mrb[0].mxu0
        %v4400 = vpop.f32.mrb[0].mxu0
        %v4401 = vadd.f32 %v3817, %v4400
        %v4402 = vpop.f32.mrb[0].mxu0
        %4403 = vmatprep.mubr.bf16.mxu0 0
        %4404 = vmatmul.mubr.bf16.gmra.mrb[0].mxu0 %v3970
        %v4405 = vpop.f32.mrb[0].mxu0
        %v4406 = vadd.f32 %v3817, %v4405
        %v4407 = vpop.f32.mrb[0].mxu0
        %v4408 = vpop.f32.mrb[0].mxu0
        %v4409 = vadd.f32 %v3817, %v4408
        %v4410 = vpop.f32.mrb[0].mxu0
        %4411 = vmatprep.mubr.bf16.mxu0 0
        %4412 = vmatmul.mubr.bf16.gmra.mrb[0].mxu0 %v3973
        %v4413 = vpop.f32.mrb[0].mxu0
        %v4414 = vadd.f32 %v3817, %v4413
        %v4415 = vpop.f32.mrb[0].mxu0
        %v4416 = vpop.f32.mrb[0].mxu0
        %v4417 = vadd.f32 %v3817, %v4416
        %v4418 = vpop.f32.mrb[0].mxu0
        %4419 = vmatprep.mubr.bf16.mxu0 0
        %4420 = vmatmul.mubr.bf16.gmra.mrb[0].mxu0 %v3976
        %v4421 = vpop.f32.mrb[0].mxu0
        %v4422 = vadd.f32 %v3817, %v4421
        %v4423 = vpop.f32.mrb[0].mxu0
        %v4424 = vpop.f32.mrb[0].mxu0
        %v4425 = vadd.f32 %v3817, %v4424
        %v4426 = vpop.f32.mrb[0].mxu0
        %4427 = vmatprep.mubr.bf16.mxu0 0
        %4428 = vmatmul.mubr.bf16.gmra.mrb[0].mxu0 %v3979
        %v4429 = vpop.f32.mrb[0].mxu0
        %v4430 = vadd.f32 %v3817, %v4429
        %v4431 = vpop.f32.mrb[0].mxu0
        %v4432 = vpop.f32.mrb[0].mxu0
        %v4433 = vadd.f32 %v3817, %v4432
        %v4434 = vpop.f32.mrb[0].mxu0
        %4435 = vmatprep.mubr.bf16.mxu0 0
        %4436 = vmatmul.mubr.bf16.gmra.mrb[0].mxu0 %v3982
        %v4437 = vpop.f32.mrb[0].mxu0
        %v4438 = vadd.f32 %v3817, %v4437
        %v4439 = vpop.f32.mrb[0].mxu0
        %v4440 = vpop.f32.mrb[0].mxu0
        %v4441 = vadd.f32 %v3817, %v4440
        %v4442 = vpop.f32.mrb[0].mxu0
        %4443 = vmatprep.mubr.bf16.mxu0 0
        %4444 = vmatmul.mubr.bf16.gmra.mrb[0].mxu0 %v3985
        %v4445 = vpop.f32.mrb[0].mxu0
        %v4446 = vadd.f32 %v3817, %v4445
        %v4447 = vpop.f32.mrb[0].mxu0
        %v4448 = vpop.f32.mrb[0].mxu0
        %v4449 = vadd.f32 %v3817, %v4448
        %v4450 = vpop.f32.mrb[0].mxu0
        %4451 = vmatprep.mubr.bf16.mxu0 0
        %4452 = vmatmul.mubr.bf16.gmra.mrb[0].mxu0 %v3988
        %v4453 = vpop.f32.mrb[0].mxu0
        %v4454 = vadd.f32 %v3817, %v4453
        %v4455 = vpop.f32.mrb[0].mxu0
        %v4456 = vpop.f32.mrb[0].mxu0
        %v4457 = vadd.f32 %v3817, %v4456
        %v4458 = vpop.f32.mrb[0].mxu0
        %4459 = vmatprep.mubr.bf16.mxu0 0
        %4460 = vmatmul.mubr.bf16.gmra.mrb[0].mxu0 %v3991
        %v4461 = vpop.f32.mrb[0].mxu0
        %v4462 = vadd.f32 %v3817, %v4461
        %v4463 = vpop.f32.mrb[0].mxu0
        %v4464 = vpop.f32.mrb[0].mxu0
        %v4465 = vadd.f32 %v3817, %v4464
        %v4466 = vpop.f32.mrb[0].mxu0
        %4467 = vmatprep.mubr.bf16.mxu0 0
        %4468 = vmatmul.mubr.bf16.gmra.mrb[0].mxu0 %v3994
        %v4469 = vpop.f32.mrb[0].mxu0
        %v4470 = vadd.f32 %v3817, %v4469
        %v4471 = vpop.f32.mrb[0].mxu0
        %v4472 = vpop.f32.mrb[0].mxu0
        %v4473 = vadd.f32 %v3817, %v4472
        %v4474 = vpop.f32.mrb[0].mxu0
        %4475 = vmatprep.mubr.bf16.mxu0 0
        %4476 = vmatmul.mubr.bf16.gmra.mrb[0].mxu0 %v3997
        %v4477 = vpop.f32.mrb[0].mxu0
        %v4478 = vadd.f32 %v3817, %v4477
        %v4479 = vpop.f32.mrb[0].mxu0
        %v4480 = vpop.f32.mrb[0].mxu0
        %v4481 = vadd.f32 %v3817, %v4480
        %v4482 = vpop.f32.mrb[0].mxu0
        %4483 = vmatprep.mubr.bf16.mxu0 0
        %4484 = vmatmul.mubr.bf16.gmra.mrb[0].mxu0 %v4000
        %v4485 = vpop.f32.mrb[0].mxu0
        %v4486 = vadd.f32 %v3817, %v4485
        %v4487 = vpop.f32.mrb[0].mxu0
        %v4488 = vpop.f32.mrb[0].mxu0
        %v4489 = vadd.f32 %v3817, %v4488
        %v4490 = vpop.f32.mrb[0].mxu0
        %4491 = vmatprep.mubr.bf16.mxu0 0
        %4492 = vmatmul.mubr.bf16.gmra.mrb[0].mxu0 %v4003
        %v4493 = vpop.f32.mrb[0].mxu0
        %v4494 = vadd.f32 %v3817, %v4493
        %v4495 = vpop.f32.mrb[0].mxu0
        %v4496 = vpop.f32.mrb[0].mxu0
        %v4497 = vadd.f32 %v3817, %v4496
        %v4498 = vpop.f32.mrb[0].mxu0
        %4499 = vmatprep.mubr.bf16.mxu0 0
        %4500 = vmatmul.mubr.bf16.gmra.mrb[0].mxu0 %v4006
        %v4501 = vpop.f32.mrb[0].mxu0
        %v4502 = vadd.f32 %v3817, %v4501
        %v4503 = vpop.f32.mrb[0].mxu0
        %v4504 = vpop.f32.mrb[0].mxu0
        %v4505 = vadd.f32 %v3817, %v4504
        %v4506 = vpop.f32.mrb[0].mxu0
        %4507 = vmatprep.mubr.bf16.mxu0 0
        %4508 = vmatmul.mubr.bf16.gmra.mrb[0].mxu0 %v4009
        %v4509 = vpop.f32.mrb[0].mxu0
        %v4510 = vadd.f32 %v3817, %v4509
        %v4511 = vpop.f32.mrb[0].mxu0
        %v4512 = vpop.f32.mrb[0].mxu0
        %v4513 = vadd.f32 %v3817, %v4512
        %v4514 = vpop.f32.mrb[0].mxu0
        %4515 = vmatprep.mubr.bf16.mxu0 0
        %4516 = vmatmul.mubr.bf16.gmra.mrb[0].mxu0 %v4012
        %v4517 = vpop.f32.mrb[0].mxu0
        %v4518 = vadd.f32 %v3817, %v4517
        %v4519 = vpop.f32.mrb[0].mxu0
        %v4520 = vpop.f32.mrb[0].mxu0
        %v4521 = vadd.f32 %v3817, %v4520
        %v4522 = vpop.f32.mrb[0].mxu0
        %4523 = vmatprep.mubr.bf16.mxu0 0
        %4524 = vmatmul.mubr.bf16.gmra.mrb[0].mxu0 %v4015
        %v4525 = vpop.f32.mrb[0].mxu0
        %v4526 = vadd.f32 %v3817, %v4525
        %v4527 = vpop.f32.mrb[0].mxu0
        %v4528 = vpop.f32.mrb[0].mxu0
        %v4529 = vadd.f32 %v3817, %v4528
        %v4530 = vpop.f32.mrb[0].mxu0
        %4531 = vmatprep.mubr.bf16.mxu0 0
        %4532 = vmatmul.mubr.bf16.gmra.mrb[0].mxu0 %v4018
        %v4533 = vpop.f32.mrb[0].mxu0
        %v4534 = vadd.f32 %v3817, %v4533
        %v4535 = vpop.f32.mrb[0].mxu0
        %v4536 = vpop.f32.mrb[0].mxu0
        %v4537 = vadd.f32 %v3817, %v4536
        %v4538 = vpop.f32.mrb[0].mxu0
        %4539 = vmatprep.mubr.bf16.mxu0 0
        %4540 = vmatmul.mubr.bf16.gmra.mrb[0].mxu0 %v4021
        %v4541 = vpop.f32.mrb[0].mxu0
        %v4542 = vadd.f32 %v3817, %v4541
        %v4543 = vpop.f32.mrb[0].mxu0
        %v4544 = vpop.f32.mrb[0].mxu0
        %v4545 = vadd.f32 %v3817, %v4544
        %v4546 = vpop.f32.mrb[0].mxu0
        %4547 = vmatprep.mubr.bf16.mxu0 0
        %4548 = vmatmul.mubr.bf16.gmra.mrb[0].mxu0 %v4024
        %v4549 = vpop.f32.mrb[0].mxu0
        %v4550 = vadd.f32 %v3817, %v4549
        %v4551 = vpop.f32.mrb[0].mxu0
        %v4552 = vpop.f32.mrb[0].mxu0
        %v4553 = vadd.f32 %v3817, %v4552
        %v4554 = vpop.f32.mrb[0].mxu0
        %4555 = vmatprep.mubr.bf16.mxu0 0
        %4556 = vmatmul.mubr.bf16.gmra.mrb[0].mxu0 %v4027
        %v4557 = vpop.f32.mrb[0].mxu0
        %v4558 = vadd.f32 %v3817, %v4557
        %v4559 = vpop.f32.mrb[0].mxu0
        %v4560 = vpop.f32.mrb[0].mxu0
        %v4561 = vadd.f32 %v3817, %v4560
        %v4562 = vpop.f32.mrb[0].mxu0
        %4563 = vmatprep.mubr.bf16.mxu0 0
        %4564 = vmatmul.mubr.bf16.gmra.mrb[0].mxu0 %v4030
        %v4565 = vpop.f32.mrb[0].mxu0
        %v4566 = vadd.f32 %v3817, %v4565
        %v4567 = vpop.f32.mrb[0].mxu0
        %v4568 = vpop.f32.mrb[0].mxu0
        %v4569 = vadd.f32 %v3817, %v4568
        %v4570 = vpop.f32.mrb[0].mxu0
        %4571 = vmatprep.mubr.bf16.mxu0 0
        %4572 = vmatmul.mubr.bf16.gmra.mrb[0].mxu0 %v4033
        %v4573 = vpop.f32.mrb[0].mxu0
        %v4574 = vadd.f32 %v3817, %v4573
        %v4575 = vpop.f32.mrb[0].mxu0
        %v4576 = vpop.f32.mrb[0].mxu0
        %v4577 = vadd.f32 %v3817, %v4576
        %v4578 = vpop.f32.mrb[0].mxu0
        %4579 = vdwg.mxu0
        %v4580 = vadd.f32 %v3239, %v4070
        %v4581 = vadd.f32 %v3242, %v4073
        %v4582 = vadd.f32 %v3247, %v4078
        %v4583 = vadd.f32 %v3250, %v4081
        %v4584 = vadd.f32 %v3255, %v4086
        %v4585 = vadd.f32 %v3258, %v4089
        %v4586 = vadd.f32 %v3263, %v4094
        %v4587 = vadd.f32 %v3266, %v4097
        %v4588 = vadd.f32 %v3271, %v4102
        %v4589 = vadd.f32 %v3274, %v4105
        %v4590 = vadd.f32 %v3279, %v4110
        %v4591 = vadd.f32 %v3282, %v4113
        %v4592 = vadd.f32 %v3287, %v4118
        %v4593 = vadd.f32 %v3290, %v4121
        %v4594 = vadd.f32 %v3295, %v4126
        %v4595 = vadd.f32 %v3298, %v4129
        %v4596 = vadd.f32 %v3303, %v4134
        %v4597 = vadd.f32 %v3306, %v4137
        %v4598 = vadd.f32 %v3311, %v4142
        %v4599 = vadd.f32 %v3314, %v4145
        %v4600 = vadd.f32 %v3319, %v4150
        %v4601 = vadd.f32 %v3322, %v4153
        %v4602 = vadd.f32 %v3327, %v4158
        %v4603 = vadd.f32 %v3330, %v4161
        %v4604 = vadd.f32 %v3335, %v4166
        %v4605 = vadd.f32 %v3338, %v4169
        %v4606 = vadd.f32 %v3343, %v4174
        %v4607 = vadd.f32 %v3346, %v4177
        %v4608 = vadd.f32 %v3351, %v4182
        %v4609 = vadd.f32 %v3354, %v4185
        %v4610 = vadd.f32 %v3359, %v4190
        %v4611 = vadd.f32 %v3362, %v4193
        %v4612 = vadd.f32 %v3367, %v4198
        %v4613 = vadd.f32 %v3370, %v4201
        %v4614 = vadd.f32 %v3375, %v4206
        %v4615 = vadd.f32 %v3378, %v4209
        %v4616 = vadd.f32 %v3383, %v4214
        %v4617 = vadd.f32 %v3386, %v4217
        %v4618 = vadd.f32 %v3391, %v4222
        %v4619 = vadd.f32 %v3394, %v4225
        %v4620 = vadd.f32 %v3399, %v4230
        %v4621 = vadd.f32 %v3402, %v4233
        %v4622 = vadd.f32 %v3407, %v4238
        %v4623 = vadd.f32 %v3410, %v4241
        %v4624 = vadd.f32 %v3415, %v4246
        %v4625 = vadd.f32 %v3418, %v4249
        %v4626 = vadd.f32 %v3423, %v4254
        %v4627 = vadd.f32 %v3426, %v4257
        %v4628 = vadd.f32 %v3431, %v4262
        %v4629 = vadd.f32 %v3434, %v4265
        %v4630 = vadd.f32 %v3439, %v4270
        %v4631 = vadd.f32 %v3442, %v4273
        %v4632 = vadd.f32 %v3447, %v4278
        %v4633 = vadd.f32 %v3450, %v4281
        %v4634 = vadd.f32 %v3455, %v4286
        %v4635 = vadd.f32 %v3458, %v4289
        %v4636 = vadd.f32 %v3463, %v4294
        %v4637 = vadd.f32 %v3466, %v4297
        %v4638 = vadd.f32 %v3471, %v4302
        %v4639 = vadd.f32 %v3474, %v4305
        %v4640 = vadd.f32 %v3479, %v4310
        %v4641 = vadd.f32 %v3482, %v4313
        %v4642 = vadd.f32 %v3487, %v4318
        %v4643 = vadd.f32 %v3490, %v4321
        %v4644 = vadd.f32 %v3495, %v4326
        %v4645 = vadd.f32 %v3498, %v4329
        %v4646 = vadd.f32 %v3503, %v4334
        %v4647 = vadd.f32 %v3506, %v4337
        %v4648 = vadd.f32 %v3511, %v4342
        %v4649 = vadd.f32 %v3514, %v4345
        %v4650 = vadd.f32 %v3519, %v4350
        %v4651 = vadd.f32 %v3522, %v4353
        %v4652 = vadd.f32 %v3527, %v4358
        %v4653 = vadd.f32 %v3530, %v4361
        %v4654 = vadd.f32 %v3535, %v4366
        %v4655 = vadd.f32 %v3538, %v4369
        %v4656 = vadd.f32 %v3543, %v4374
        %v4657 = vadd.f32 %v3546, %v4377
        %v4658 = vadd.f32 %v3551, %v4382
        %v4659 = vadd.f32 %v3554, %v4385
        %v4660 = vadd.f32 %v3559, %v4390
        %v4661 = vadd.f32 %v3562, %v4393
        %v4662 = vadd.f32 %v3567, %v4398
        %v4663 = vadd.f32 %v3570, %v4401
        %v4664 = vadd.f32 %v3575, %v4406
        %v4665 = vadd.f32 %v3578, %v4409
        %v4666 = vadd.f32 %v3583, %v4414
        %v4667 = vadd.f32 %v3586, %v4417
        %v4668 = vadd.f32 %v3591, %v4422
        %v4669 = vadd.f32 %v3594, %v4425
        %v4670 = vadd.f32 %v3599, %v4430
        %v4671 = vadd.f32 %v3602, %v4433
        %v4672 = vadd.f32 %v3607, %v4438
        %v4673 = vadd.f32 %v3610, %v4441
        %v4674 = vadd.f32 %v3615, %v4446
        %v4675 = vadd.f32 %v3618, %v4449
        %v4676 = vadd.f32 %v3623, %v4454
        %v4677 = vadd.f32 %v3626, %v4457
        %v4678 = vadd.f32 %v3631, %v4462
        %v4679 = vadd.f32 %v3634, %v4465
        %v4680 = vadd.f32 %v3639, %v4470
        %v4681 = vadd.f32 %v3642, %v4473
        %v4682 = vadd.f32 %v3647, %v4478
        %v4683 = vadd.f32 %v3650, %v4481
        %v4684 = vadd.f32 %v3655, %v4486
        %v4685 = vadd.f32 %v3658, %v4489
        %v4686 = vadd.f32 %v3663, %v4494
        %v4687 = vadd.f32 %v3666, %v4497
        %v4688 = vadd.f32 %v3671, %v4502
        %v4689 = vadd.f32 %v3674, %v4505
        %v4690 = vadd.f32 %v3679, %v4510
        %v4691 = vadd.f32 %v3682, %v4513
        %v4692 = vadd.f32 %v3687, %v4518
        %v4693 = vadd.f32 %v3690, %v4521
        %v4694 = vadd.f32 %v3695, %v4526
        %v4695 = vadd.f32 %v3698, %v4529
        %v4696 = vadd.f32 %v3703, %v4534
        %v4697 = vadd.f32 %v3706, %v4537
        %v4698 = vadd.f32 %v3711, %v4542
        %v4699 = vadd.f32 %v3714, %v4545
        %v4700 = vadd.f32 %v3719, %v4550
        %v4701 = vadd.f32 %v3722, %v4553
        %v4702 = vadd.f32 %v3727, %v4558
        %v4703 = vadd.f32 %v3730, %v4561
        %v4704 = vadd.f32 %v3735, %v4566
        %v4705 = vadd.f32 %v3738, %v4569
        %v4706 = vadd.f32 %v3743, %v4574
        %v4707 = vadd.f32 %v3746, %v4577
        %v4708 = vpack.c.bf16 %v4581, %v4580
        %v4709 = vpack.c.bf16 %v4583, %v4582
        %v4710 = vpack.c.bf16 %v4585, %v4584
        %v4711 = vpack.c.bf16 %v4587, %v4586
        %v4712 = vpack.c.bf16 %v4589, %v4588
        %v4713 = vpack.c.bf16 %v4591, %v4590
        %v4714 = vpack.c.bf16 %v4593, %v4592
        %v4715 = vpack.c.bf16 %v4595, %v4594
        %v4716 = vpack.c.bf16 %v4597, %v4596
        %v4717 = vpack.c.bf16 %v4599, %v4598
        %v4718 = vpack.c.bf16 %v4601, %v4600
        %v4719 = vpack.c.bf16 %v4603, %v4602
        %v4720 = vpack.c.bf16 %v4605, %v4604
        %v4721 = vpack.c.bf16 %v4607, %v4606
        %v4722 = vpack.c.bf16 %v4609, %v4608
        %v4723 = vpack.c.bf16 %v4611, %v4610
        %v4724 = vpack.c.bf16 %v4613, %v4612
        %v4725 = vpack.c.bf16 %v4615, %v4614
        %v4726 = vpack.c.bf16 %v4617, %v4616
        %v4727 = vpack.c.bf16 %v4619, %v4618
        %v4728 = vpack.c.bf16 %v4621, %v4620
        %v4729 = vpack.c.bf16 %v4623, %v4622
        %v4730 = vpack.c.bf16 %v4625, %v4624
        %v4731 = vpack.c.bf16 %v4627, %v4626
        %v4732 = vpack.c.bf16 %v4629, %v4628
        %v4733 = vpack.c.bf16 %v4631, %v4630
        %v4734 = vpack.c.bf16 %v4633, %v4632
        %v4735 = vpack.c.bf16 %v4635, %v4634
        %v4736 = vpack.c.bf16 %v4637, %v4636
        %v4737 = vpack.c.bf16 %v4639, %v4638
        %v4738 = vpack.c.bf16 %v4641, %v4640
        %v4739 = vpack.c.bf16 %v4643, %v4642
        %v4740 = vpack.c.bf16 %v4645, %v4644
        %v4741 = vpack.c.bf16 %v4647, %v4646
        %v4742 = vpack.c.bf16 %v4649, %v4648
        %v4743 = vpack.c.bf16 %v4651, %v4650
        %v4744 = vpack.c.bf16 %v4653, %v4652
        %v4745 = vpack.c.bf16 %v4655, %v4654
        %v4746 = vpack.c.bf16 %v4657, %v4656
        %v4747 = vpack.c.bf16 %v4659, %v4658
        %v4748 = vpack.c.bf16 %v4661, %v4660
        %v4749 = vpack.c.bf16 %v4663, %v4662
        %v4750 = vpack.c.bf16 %v4665, %v4664
        %v4751 = vpack.c.bf16 %v4667, %v4666
        %v4752 = vpack.c.bf16 %v4669, %v4668
        %v4753 = vpack.c.bf16 %v4671, %v4670
        %v4754 = vpack.c.bf16 %v4673, %v4672
        %v4755 = vpack.c.bf16 %v4675, %v4674
        %v4756 = vpack.c.bf16 %v4677, %v4676
        %v4757 = vpack.c.bf16 %v4679, %v4678
        %v4758 = vpack.c.bf16 %v4681, %v4680
        %v4759 = vpack.c.bf16 %v4683, %v4682
        %v4760 = vpack.c.bf16 %v4685, %v4684
        %v4761 = vpack.c.bf16 %v4687, %v4686
        %v4762 = vpack.c.bf16 %v4689, %v4688
        %v4763 = vpack.c.bf16 %v4691, %v4690
        %v4764 = vpack.c.bf16 %v4693, %v4692
        %v4765 = vpack.c.bf16 %v4695, %v4694
        %v4766 = vpack.c.bf16 %v4697, %v4696
        %v4767 = vpack.c.bf16 %v4699, %v4698
        %v4768 = vpack.c.bf16 %v4701, %v4700
        %v4769 = vpack.c.bf16 %v4703, %v4702
        %v4770 = vpack.c.bf16 %v4705, %v4704
        %v4771 = vpack.c.bf16 %v4707, %v4706
        %v4772 = vpack.c.bf16 %v3242, %v3239
        %v4773 = vpack.c.bf16 %v3250, %v3247
        %v4774 = vpack.c.bf16 %v3258, %v3255
        %v4775 = vpack.c.bf16 %v3266, %v3263
        %v4776 = vpack.c.bf16 %v3274, %v3271
        %v4777 = vpack.c.bf16 %v3282, %v3279
        %v4778 = vpack.c.bf16 %v3290, %v3287
        %v4779 = vpack.c.bf16 %v3298, %v3295
        %v4780 = vpack.c.bf16 %v3306, %v3303
        %v4781 = vpack.c.bf16 %v3314, %v3311
        %v4782 = vpack.c.bf16 %v3322, %v3319
        %v4783 = vpack.c.bf16 %v3330, %v3327
        %v4784 = vpack.c.bf16 %v3338, %v3335
        %v4785 = vpack.c.bf16 %v3346, %v3343
        %v4786 = vpack.c.bf16 %v3354, %v3351
        %v4787 = vpack.c.bf16 %v3362, %v3359
        %v4788 = vpack.c.bf16 %v3370, %v3367
        %v4789 = vpack.c.bf16 %v3378, %v3375
        %v4790 = vpack.c.bf16 %v3386, %v3383
        %v4791 = vpack.c.bf16 %v3394, %v3391
        %v4792 = vpack.c.bf16 %v3402, %v3399
        %v4793 = vpack.c.bf16 %v3410, %v3407
        %v4794 = vpack.c.bf16 %v3418, %v3415
        %v4795 = vpack.c.bf16 %v3426, %v3423
        %v4796 = vpack.c.bf16 %v3434, %v3431
        %v4797 = vpack.c.bf16 %v3442, %v3439
        %v4798 = vpack.c.bf16 %v3450, %v3447
        %v4799 = vpack.c.bf16 %v3458, %v3455
        %v4800 = vpack.c.bf16 %v3466, %v3463
        %v4801 = vpack.c.bf16 %v3474, %v3471
        %v4802 = vpack.c.bf16 %v3482, %v3479
        %v4803 = vpack.c.bf16 %v3490, %v3487
        %v4804 = vpack.c.bf16 %v3498, %v3495
        %v4805 = vpack.c.bf16 %v3506, %v3503
        %v4806 = vpack.c.bf16 %v3514, %v3511
        %v4807 = vpack.c.bf16 %v3522, %v3519
        %v4808 = vpack.c.bf16 %v3530, %v3527
        %v4809 = vpack.c.bf16 %v3538, %v3535
        %v4810 = vpack.c.bf16 %v3546, %v3543
        %v4811 = vpack.c.bf16 %v3554, %v3551
        %v4812 = vpack.c.bf16 %v3562, %v3559
        %v4813 = vpack.c.bf16 %v3570, %v3567
        %v4814 = vpack.c.bf16 %v3578, %v3575
        %v4815 = vpack.c.bf16 %v3586, %v3583
        %v4816 = vpack.c.bf16 %v3594, %v3591
        %v4817 = vpack.c.bf16 %v3602, %v3599
        %v4818 = vpack.c.bf16 %v3610, %v3607
        %v4819 = vpack.c.bf16 %v3618, %v3615
        %v4820 = vpack.c.bf16 %v3626, %v3623
        %v4821 = vpack.c.bf16 %v3634, %v3631
        %v4822 = vpack.c.bf16 %v3642, %v3639
        %v4823 = vpack.c.bf16 %v3650, %v3647
        %v4824 = vpack.c.bf16 %v3658, %v3655
        %v4825 = vpack.c.bf16 %v3666, %v3663
        %v4826 = vpack.c.bf16 %v3674, %v3671
        %v4827 = vpack.c.bf16 %v3682, %v3679
        %v4828 = vpack.c.bf16 %v3690, %v3687
        %v4829 = vpack.c.bf16 %v3698, %v3695
        %v4830 = vpack.c.bf16 %v3706, %v3703
        %v4831 = vpack.c.bf16 %v3714, %v3711
        %v4832 = vpack.c.bf16 %v3722, %v3719
        %v4833 = vpack.c.bf16 %v3730, %v3727
        %v4834 = vpack.c.bf16 %v3738, %v3735
        %v4835 = vpack.c.bf16 %v3746, %v3743
        %v4836 = vpack.c.bf16 %v2891, %v2888
        %v4837 = vpack.c.bf16 %v2899, %v2896
        %v4838 = vpack.c.bf16 %v2907, %v2904
        %v4839 = vpack.c.bf16 %v2915, %v2912
        %v4844 = vcombine.high %v4836, %v4836
        %v4846 = vunpack.c.l.s4 1966171168
        %v4847 = vunpack.c.0.s8 %v4846
        %v4848 = vlaneseq
        %v4849 = vshrl.u32 %v4848, 7
        %v4850 = vsub.s32 %v4847, %v4849
        %v4851 = vrot.slane %v4836, %v4850
        %v4853 = vunpack.c.l.s4 1966171168
        %v4854 = vunpack.c.0.s8 %v4853
        %v4855 = vlaneseq
        %v4856 = vshrl.u32 %v4855, 7
        %v4857 = vsub.s32 %v4854, %v4856
        %v4858 = vrot.slane %v4844, %v4857
        %v4859 = vcombine.high %v4851, %v4851
        %v4860 = vcombine.high %v4858, %v4858
        %v4862 = vunpack.c.l.s4 1966171168
        %v4863 = vunpack.c.0.s8 %v4862
        %v4864 = vlaneseq
        %v4865 = vshrl.u32 %v4864, 7
        %v4866 = vsub.s32 %v4863, %v4865
        %v4867 = vrot.slane %v4851, %v4866
        %v4869 = vunpack.c.l.s4 1966171168
        %v4870 = vunpack.c.0.s8 %v4869
        %v4871 = vlaneseq
        %v4872 = vshrl.u32 %v4871, 7
        %v4873 = vsub.s32 %v4870, %v4872
        %v4874 = vrot.slane %v4858, %v4873
        %v4876 = vunpack.c.l.s4 1966171168
        %v4877 = vunpack.c.0.s8 %v4876
        %v4878 = vlaneseq
        %v4879 = vshrl.u32 %v4878, 7
        %v4880 = vsub.s32 %v4877, %v4879
        %v4881 = vrot.slane %v4859, %v4880
        %v4883 = vunpack.c.l.s4 1966171168
        %v4884 = vunpack.c.0.s8 %v4883
        %v4885 = vlaneseq
        %v4886 = vshrl.u32 %v4885, 7
        %v4887 = vsub.s32 %v4884, %v4886
        %v4888 = vrot.slane %v4860, %v4887
        %v4889 = vcombine.high %v4867, %v4867
        %v4890 = vcombine.high %v4874, %v4874
        %v4891 = vcombine.high %v4881, %v4881
        %v4892 = vcombine.high %v4888, %v4888
        %v4893 = vcombine.high %v4837, %v4837
        %v4895 = vunpack.c.l.s4 1966171168
        %v4896 = vunpack.c.0.s8 %v4895
        %v4897 = vlaneseq
        %v4898 = vshrl.u32 %v4897, 7
        %v4899 = vsub.s32 %v4896, %v4898
        %v4900 = vrot.slane %v4837, %v4899
        %v4902 = vunpack.c.l.s4 1966171168
        %v4903 = vunpack.c.0.s8 %v4902
        %v4904 = vlaneseq
        %v4905 = vshrl.u32 %v4904, 7
        %v4906 = vsub.s32 %v4903, %v4905
        %v4907 = vrot.slane %v4893, %v4906
        %v4908 = vcombine.high %v4900, %v4900
        %v4909 = vcombine.high %v4907, %v4907
        %v4911 = vunpack.c.l.s4 1966171168
        %v4912 = vunpack.c.0.s8 %v4911
        %v4913 = vlaneseq
        %v4914 = vshrl.u32 %v4913, 7
        %v4915 = vsub.s32 %v4912, %v4914
        %v4916 = vrot.slane %v4900, %v4915
        %v4918 = vunpack.c.l.s4 1966171168
        %v4919 = vunpack.c.0.s8 %v4918
        %v4920 = vlaneseq
        %v4921 = vshrl.u32 %v4920, 7
        %v4922 = vsub.s32 %v4919, %v4921
        %v4923 = vrot.slane %v4907, %v4922
        %v4925 = vunpack.c.l.s4 1966171168
        %v4926 = vunpack.c.0.s8 %v4925
        %v4927 = vlaneseq
        %v4928 = vshrl.u32 %v4927, 7
        %v4929 = vsub.s32 %v4926, %v4928
        %v4930 = vrot.slane %v4908, %v4929
        %v4932 = vunpack.c.l.s4 1966171168
        %v4933 = vunpack.c.0.s8 %v4932
        %v4934 = vlaneseq
        %v4935 = vshrl.u32 %v4934, 7
        %v4936 = vsub.s32 %v4933, %v4935
        %v4937 = vrot.slane %v4909, %v4936
        %v4938 = vcombine.high %v4916, %v4916
        %v4939 = vcombine.high %v4923, %v4923
        %v4940 = vcombine.high %v4930, %v4930
        %v4941 = vcombine.high %v4937, %v4937
        %v4942 = vcombine.high %v4838, %v4838
        %v4944 = vunpack.c.l.s4 1966171168
        %v4945 = vunpack.c.0.s8 %v4944
        %v4946 = vlaneseq
        %v4947 = vshrl.u32 %v4946, 7
        %v4948 = vsub.s32 %v4945, %v4947
        %v4949 = vrot.slane %v4838, %v4948
        %v4951 = vunpack.c.l.s4 1966171168
        %v4952 = vunpack.c.0.s8 %v4951
        %v4953 = vlaneseq
        %v4954 = vshrl.u32 %v4953, 7
        %v4955 = vsub.s32 %v4952, %v4954
        %v4956 = vrot.slane %v4942, %v4955
        %v4957 = vcombine.high %v4949, %v4949
        %v4958 = vcombine.high %v4956, %v4956
        %v4960 = vunpack.c.l.s4 1966171168
        %v4961 = vunpack.c.0.s8 %v4960
        %v4962 = vlaneseq
        %v4963 = vshrl.u32 %v4962, 7
        %v4964 = vsub.s32 %v4961, %v4963
        %v4965 = vrot.slane %v4949, %v4964
        %v4967 = vunpack.c.l.s4 1966171168
        %v4968 = vunpack.c.0.s8 %v4967
        %v4969 = vlaneseq
        %v4970 = vshrl.u32 %v4969, 7
        %v4971 = vsub.s32 %v4968, %v4970
        %v4972 = vrot.slane %v4956, %v4971
        %v4974 = vunpack.c.l.s4 1966171168
        %v4975 = vunpack.c.0.s8 %v4974
        %v4976 = vlaneseq
        %v4977 = vshrl.u32 %v4976, 7
        %v4978 = vsub.s32 %v4975, %v4977
        %v4979 = vrot.slane %v4957, %v4978
        %v4981 = vunpack.c.l.s4 1966171168
        %v4982 = vunpack.c.0.s8 %v4981
        %v4983 = vlaneseq
        %v4984 = vshrl.u32 %v4983, 7
        %v4985 = vsub.s32 %v4982, %v4984
        %v4986 = vrot.slane %v4958, %v4985
        %v4987 = vcombine.high %v4965, %v4965
        %v4988 = vcombine.high %v4972, %v4972
        %v4989 = vcombine.high %v4979, %v4979
        %v4990 = vcombine.high %v4986, %v4986
        %v4991 = vcombine.high %v4839, %v4839
        %v4993 = vunpack.c.l.s4 1966171168
        %v4994 = vunpack.c.0.s8 %v4993
        %v4995 = vlaneseq
        %v4996 = vshrl.u32 %v4995, 7
        %v4997 = vsub.s32 %v4994, %v4996
        %v4998 = vrot.slane %v4839, %v4997
        %v5000 = vunpack.c.l.s4 1966171168
        %v5001 = vunpack.c.0.s8 %v5000
        %v5002 = vlaneseq
        %v5003 = vshrl.u32 %v5002, 7
        %v5004 = vsub.s32 %v5001, %v5003
        %v5005 = vrot.slane %v4991, %v5004
        %v5006 = vcombine.high %v4998, %v4998
        %v5007 = vcombine.high %v5005, %v5005
        %v5009 = vunpack.c.l.s4 1966171168
        %v5010 = vunpack.c.0.s8 %v5009
        %v5011 = vlaneseq
        %v5012 = vshrl.u32 %v5011, 7
        %v5013 = vsub.s32 %v5010, %v5012
        %v5014 = vrot.slane %v4998, %v5013
        %v5016 = vunpack.c.l.s4 1966171168
        %v5017 = vunpack.c.0.s8 %v5016
        %v5018 = vlaneseq
        %v5019 = vshrl.u32 %v5018, 7
        %v5020 = vsub.s32 %v5017, %v5019
        %v5021 = vrot.slane %v5005, %v5020
        %v5023 = vunpack.c.l.s4 1966171168
        %v5024 = vunpack.c.0.s8 %v5023
        %v5025 = vlaneseq
        %v5026 = vshrl.u32 %v5025, 7
        %v5027 = vsub.s32 %v5024, %v5026
        %v5028 = vrot.slane %v5006, %v5027
        %v5030 = vunpack.c.l.s4 1966171168
        %v5031 = vunpack.c.0.s8 %v5030
        %v5032 = vlaneseq
        %v5033 = vshrl.u32 %v5032, 7
        %v5034 = vsub.s32 %v5031, %v5033
        %v5035 = vrot.slane %v5007, %v5034
        %v5036 = vcombine.high %v5014, %v5014
        %v5037 = vcombine.high %v5021, %v5021
        %v5038 = vcombine.high %v5028, %v5028
        %v5039 = vcombine.high %v5035, %v5035
        %v5040 = vunpack.i.l.s16 %v4867
        %v5041 = vunpack.i.h.s16 %v4867
        %v5042 = vunpack.i.l.s16 %v4881
        %v5043 = vunpack.i.h.s16 %v4881
        %v5044 = vunpack.i.l.s16 %v4889
        %v5045 = vunpack.i.h.s16 %v4889
        %v5046 = vunpack.i.l.s16 %v4891
        %v5047 = vunpack.i.h.s16 %v4891
        %v5048 = vunpack.i.l.s16 %v4874
        %v5049 = vunpack.i.h.s16 %v4874
        %v5050 = vunpack.i.l.s16 %v4888
        %v5051 = vunpack.i.h.s16 %v4888
        %v5052 = vunpack.i.l.s16 %v4890
        %v5053 = vunpack.i.h.s16 %v4890
        %v5054 = vunpack.i.l.s16 %v4892
        %v5055 = vunpack.i.h.s16 %v4892
        %v5056 = vunpack.i.l.s16 %v4916
        %v5057 = vunpack.i.h.s16 %v4916
        %v5058 = vunpack.i.l.s16 %v4930
        %v5059 = vunpack.i.h.s16 %v4930
        %v5060 = vunpack.i.l.s16 %v4938
        %v5061 = vunpack.i.h.s16 %v4938
        %v5062 = vunpack.i.l.s16 %v4940
        %v5063 = vunpack.i.h.s16 %v4940
        %v5064 = vunpack.i.l.s16 %v4923
        %v5065 = vunpack.i.h.s16 %v4923
        %v5066 = vunpack.i.l.s16 %v4937
        %v5067 = vunpack.i.h.s16 %v4937
        %v5068 = vunpack.i.l.s16 %v4939
        %v5069 = vunpack.i.h.s16 %v4939
        %v5070 = vunpack.i.l.s16 %v4941
        %v5071 = vunpack.i.h.s16 %v4941
        %v5072 = vunpack.i.l.s16 %v4965
        %v5073 = vunpack.i.h.s16 %v4965
        %v5074 = vunpack.i.l.s16 %v4979
        %v5075 = vunpack.i.h.s16 %v4979
        %v5076 = vunpack.i.l.s16 %v4987
        %v5077 = vunpack.i.h.s16 %v4987
        %v5078 = vunpack.i.l.s16 %v4989
        %v5079 = vunpack.i.h.s16 %v4989
        %v5080 = vunpack.i.l.s16 %v4972
        %v5081 = vunpack.i.h.s16 %v4972
        %v5082 = vunpack.i.l.s16 %v4986
        %v5083 = vunpack.i.h.s16 %v4986
        %v5084 = vunpack.i.l.s16 %v4988
        %v5085 = vunpack.i.h.s16 %v4988
        %v5086 = vunpack.i.l.s16 %v4990
        %v5087 = vunpack.i.h.s16 %v4990
        %v5088 = vunpack.i.l.s16 %v5014
        %v5089 = vunpack.i.h.s16 %v5014
        %v5090 = vunpack.i.l.s16 %v5028
        %v5091 = vunpack.i.h.s16 %v5028
        %v5092 = vunpack.i.l.s16 %v5036
        %v5093 = vunpack.i.h.s16 %v5036
        %v5094 = vunpack.i.l.s16 %v5038
        %v5095 = vunpack.i.h.s16 %v5038
        %v5096 = vunpack.i.l.s16 %v5021
        %v5097 = vunpack.i.h.s16 %v5021
        %v5098 = vunpack.i.l.s16 %v5035
        %v5099 = vunpack.i.h.s16 %v5035
        %v5100 = vunpack.i.l.s16 %v5037
        %v5101 = vunpack.i.h.s16 %v5037
        %v5102 = vunpack.i.l.s16 %v5039
        %v5103 = vunpack.i.h.s16 %v5039
        %v5104 = vpack.i.b16 %v5040, %v5040
        %v5105 = vpack.i.b16 %v5041, %v5041
        %v5106 = vpack.i.b16 %v5042, %v5042
        %v5107 = vpack.i.b16 %v5043, %v5043
        %v5108 = vpack.i.b16 %v5044, %v5044
        %v5109 = vpack.i.b16 %v5045, %v5045
        %v5110 = vpack.i.b16 %v5046, %v5046
        %v5111 = vpack.i.b16 %v5047, %v5047
        %v5112 = vpack.i.b16 %v5048, %v5048
        %v5113 = vpack.i.b16 %v5049, %v5049
        %v5114 = vpack.i.b16 %v5050, %v5050
        %v5115 = vpack.i.b16 %v5051, %v5051
        %v5116 = vpack.i.b16 %v5052, %v5052
        %v5117 = vpack.i.b16 %v5053, %v5053
        %v5118 = vpack.i.b16 %v5054, %v5054
        %v5119 = vpack.i.b16 %v5055, %v5055
        %v5120 = vpack.i.b16 %v5056, %v5056
        %v5121 = vpack.i.b16 %v5057, %v5057
        %v5122 = vpack.i.b16 %v5058, %v5058
        %v5123 = vpack.i.b16 %v5059, %v5059
        %v5124 = vpack.i.b16 %v5060, %v5060
        %v5125 = vpack.i.b16 %v5061, %v5061
        %v5126 = vpack.i.b16 %v5062, %v5062
        %v5127 = vpack.i.b16 %v5063, %v5063
        %v5128 = vpack.i.b16 %v5064, %v5064
        %v5129 = vpack.i.b16 %v5065, %v5065
        %v5130 = vpack.i.b16 %v5066, %v5066
        %v5131 = vpack.i.b16 %v5067, %v5067
        %v5132 = vpack.i.b16 %v5068, %v5068
        %v5133 = vpack.i.b16 %v5069, %v5069
        %v5134 = vpack.i.b16 %v5070, %v5070
        %v5135 = vpack.i.b16 %v5071, %v5071
        %v5136 = vpack.i.b16 %v5072, %v5072
        %v5137 = vpack.i.b16 %v5073, %v5073
        %v5138 = vpack.i.b16 %v5074, %v5074
        %v5139 = vpack.i.b16 %v5075, %v5075
        %v5140 = vpack.i.b16 %v5076, %v5076
        %v5141 = vpack.i.b16 %v5077, %v5077
        %v5142 = vpack.i.b16 %v5078, %v5078
        %v5143 = vpack.i.b16 %v5079, %v5079
        %v5144 = vpack.i.b16 %v5080, %v5080
        %v5145 = vpack.i.b16 %v5081, %v5081
        %v5146 = vpack.i.b16 %v5082, %v5082
        %v5147 = vpack.i.b16 %v5083, %v5083
        %v5148 = vpack.i.b16 %v5084, %v5084
        %v5149 = vpack.i.b16 %v5085, %v5085
        %v5150 = vpack.i.b16 %v5086, %v5086
        %v5151 = vpack.i.b16 %v5087, %v5087
        %v5152 = vpack.i.b16 %v5088, %v5088
        %v5153 = vpack.i.b16 %v5089, %v5089
        %v5154 = vpack.i.b16 %v5090, %v5090
        %v5155 = vpack.i.b16 %v5091, %v5091
        %v5156 = vpack.i.b16 %v5092, %v5092
        %v5157 = vpack.i.b16 %v5093, %v5093
        %v5158 = vpack.i.b16 %v5094, %v5094
        %v5159 = vpack.i.b16 %v5095, %v5095
        %v5160 = vpack.i.b16 %v5096, %v5096
        %v5161 = vpack.i.b16 %v5097, %v5097
        %v5162 = vpack.i.b16 %v5098, %v5098
        %v5163 = vpack.i.b16 %v5099, %v5099
        %v5164 = vpack.i.b16 %v5100, %v5100
        %v5165 = vpack.i.b16 %v5101, %v5101
        %v5166 = vpack.i.b16 %v5102, %v5102
        %v5167 = vpack.i.b16 %v5103, %v5103
        %v5168 = vlaneseq
        %v5169 = vshrl.u32 %v5168, 7
        %v5170 = vsub.s32 0, %v5169
        %v5171 = vrot.slane %v5104, %v5170
        %v5172 = vlaneseq
        %v5173 = vshrl.u32 %v5172, 7
        %v5174 = vsub.s32 0, %v5173
        %v5175 = vrot.slane %v5105, %v5174
        %v5176 = vlaneseq
        %v5177 = vshrl.u32 %v5176, 7
        %v5178 = vsub.s32 0, %v5177
        %v5179 = vrot.slane %v5106, %v5178
        %v5180 = vlaneseq
        %v5181 = vshrl.u32 %v5180, 7
        %v5182 = vsub.s32 0, %v5181
        %v5183 = vrot.slane %v5107, %v5182
        %v5184 = vlaneseq
        %v5185 = vshrl.u32 %v5184, 7
        %v5186 = vsub.s32 0, %v5185
        %v5187 = vrot.slane %v5108, %v5186
        %v5188 = vlaneseq
        %v5189 = vshrl.u32 %v5188, 7
        %v5190 = vsub.s32 0, %v5189
        %v5191 = vrot.slane %v5109, %v5190
        %v5192 = vlaneseq
        %v5193 = vshrl.u32 %v5192, 7
        %v5194 = vsub.s32 0, %v5193
        %v5195 = vrot.slane %v5110, %v5194
        %v5196 = vlaneseq
        %v5197 = vshrl.u32 %v5196, 7
        %v5198 = vsub.s32 0, %v5197
        %v5199 = vrot.slane %v5111, %v5198
        %v5200 = vlaneseq
        %v5201 = vshrl.u32 %v5200, 7
        %v5202 = vsub.s32 0, %v5201
        %v5203 = vrot.slane %v5112, %v5202
        %v5204 = vlaneseq
        %v5205 = vshrl.u32 %v5204, 7
        %v5206 = vsub.s32 0, %v5205
        %v5207 = vrot.slane %v5113, %v5206
        %v5208 = vlaneseq
        %v5209 = vshrl.u32 %v5208, 7
        %v5210 = vsub.s32 0, %v5209
        %v5211 = vrot.slane %v5114, %v5210
        %v5212 = vlaneseq
        %v5213 = vshrl.u32 %v5212, 7
        %v5214 = vsub.s32 0, %v5213
        %v5215 = vrot.slane %v5115, %v5214
        %v5216 = vlaneseq
        %v5217 = vshrl.u32 %v5216, 7
        %v5218 = vsub.s32 0, %v5217
        %v5219 = vrot.slane %v5116, %v5218
        %v5220 = vlaneseq
        %v5221 = vshrl.u32 %v5220, 7
        %v5222 = vsub.s32 0, %v5221
        %v5223 = vrot.slane %v5117, %v5222
        %v5224 = vlaneseq
        %v5225 = vshrl.u32 %v5224, 7
        %v5226 = vsub.s32 0, %v5225
        %v5227 = vrot.slane %v5118, %v5226
        %v5228 = vlaneseq
        %v5229 = vshrl.u32 %v5228, 7
        %v5230 = vsub.s32 0, %v5229
        %v5231 = vrot.slane %v5119, %v5230
        %v5232 = vlaneseq
        %v5233 = vshrl.u32 %v5232, 7
        %v5234 = vsub.s32 0, %v5233
        %v5235 = vrot.slane %v5120, %v5234
        %v5236 = vlaneseq
        %v5237 = vshrl.u32 %v5236, 7
        %v5238 = vsub.s32 0, %v5237
        %v5239 = vrot.slane %v5121, %v5238
        %v5240 = vlaneseq
        %v5241 = vshrl.u32 %v5240, 7
        %v5242 = vsub.s32 0, %v5241
        %v5243 = vrot.slane %v5122, %v5242
        %v5244 = vlaneseq
        %v5245 = vshrl.u32 %v5244, 7
        %v5246 = vsub.s32 0, %v5245
        %v5247 = vrot.slane %v5123, %v5246
        %v5248 = vlaneseq
        %v5249 = vshrl.u32 %v5248, 7
        %v5250 = vsub.s32 0, %v5249
        %v5251 = vrot.slane %v5124, %v5250
        %v5252 = vlaneseq
        %v5253 = vshrl.u32 %v5252, 7
        %v5254 = vsub.s32 0, %v5253
        %v5255 = vrot.slane %v5125, %v5254
        %v5256 = vlaneseq
        %v5257 = vshrl.u32 %v5256, 7
        %v5258 = vsub.s32 0, %v5257
        %v5259 = vrot.slane %v5126, %v5258
        %v5260 = vlaneseq
        %v5261 = vshrl.u32 %v5260, 7
        %v5262 = vsub.s32 0, %v5261
        %v5263 = vrot.slane %v5127, %v5262
        %v5264 = vlaneseq
        %v5265 = vshrl.u32 %v5264, 7
        %v5266 = vsub.s32 0, %v5265
        %v5267 = vrot.slane %v5128, %v5266
        %v5268 = vlaneseq
        %v5269 = vshrl.u32 %v5268, 7
        %v5270 = vsub.s32 0, %v5269
        %v5271 = vrot.slane %v5129, %v5270
        %v5272 = vlaneseq
        %v5273 = vshrl.u32 %v5272, 7
        %v5274 = vsub.s32 0, %v5273
        %v5275 = vrot.slane %v5130, %v5274
        %v5276 = vlaneseq
        %v5277 = vshrl.u32 %v5276, 7
        %v5278 = vsub.s32 0, %v5277
        %v5279 = vrot.slane %v5131, %v5278
        %v5280 = vlaneseq
        %v5281 = vshrl.u32 %v5280, 7
        %v5282 = vsub.s32 0, %v5281
        %v5283 = vrot.slane %v5132, %v5282
        %v5284 = vlaneseq
        %v5285 = vshrl.u32 %v5284, 7
        %v5286 = vsub.s32 0, %v5285
        %v5287 = vrot.slane %v5133, %v5286
        %v5288 = vlaneseq
        %v5289 = vshrl.u32 %v5288, 7
        %v5290 = vsub.s32 0, %v5289
        %v5291 = vrot.slane %v5134, %v5290
        %v5292 = vlaneseq
        %v5293 = vshrl.u32 %v5292, 7
        %v5294 = vsub.s32 0, %v5293
        %v5295 = vrot.slane %v5135, %v5294
        %v5296 = vlaneseq
        %v5297 = vshrl.u32 %v5296, 7
        %v5298 = vsub.s32 0, %v5297
        %v5299 = vrot.slane %v5136, %v5298
        %v5300 = vlaneseq
        %v5301 = vshrl.u32 %v5300, 7
        %v5302 = vsub.s32 0, %v5301
        %v5303 = vrot.slane %v5137, %v5302
        %v5304 = vlaneseq
        %v5305 = vshrl.u32 %v5304, 7
        %v5306 = vsub.s32 0, %v5305
        %v5307 = vrot.slane %v5138, %v5306
        %v5308 = vlaneseq
        %v5309 = vshrl.u32 %v5308, 7
        %v5310 = vsub.s32 0, %v5309
        %v5311 = vrot.slane %v5139, %v5310
        %v5312 = vlaneseq
        %v5313 = vshrl.u32 %v5312, 7
        %v5314 = vsub.s32 0, %v5313
        %v5315 = vrot.slane %v5140, %v5314
        %v5316 = vlaneseq
        %v5317 = vshrl.u32 %v5316, 7
        %v5318 = vsub.s32 0, %v5317
        %v5319 = vrot.slane %v5141, %v5318
        %v5320 = vlaneseq
        %v5321 = vshrl.u32 %v5320, 7
        %v5322 = vsub.s32 0, %v5321
        %v5323 = vrot.slane %v5142, %v5322
        %v5324 = vlaneseq
        %v5325 = vshrl.u32 %v5324, 7
        %v5326 = vsub.s32 0, %v5325
        %v5327 = vrot.slane %v5143, %v5326
        %v5328 = vlaneseq
        %v5329 = vshrl.u32 %v5328, 7
        %v5330 = vsub.s32 0, %v5329
        %v5331 = vrot.slane %v5144, %v5330
        %v5332 = vlaneseq
        %v5333 = vshrl.u32 %v5332, 7
        %v5334 = vsub.s32 0, %v5333
        %v5335 = vrot.slane %v5145, %v5334
        %v5336 = vlaneseq
        %v5337 = vshrl.u32 %v5336, 7
        %v5338 = vsub.s32 0, %v5337
        %v5339 = vrot.slane %v5146, %v5338
        %v5340 = vlaneseq
        %v5341 = vshrl.u32 %v5340, 7
        %v5342 = vsub.s32 0, %v5341
        %v5343 = vrot.slane %v5147, %v5342
        %v5344 = vlaneseq
        %v5345 = vshrl.u32 %v5344, 7
        %v5346 = vsub.s32 0, %v5345
        %v5347 = vrot.slane %v5148, %v5346
        %v5348 = vlaneseq
        %v5349 = vshrl.u32 %v5348, 7
        %v5350 = vsub.s32 0, %v5349
        %v5351 = vrot.slane %v5149, %v5350
        %v5352 = vlaneseq
        %v5353 = vshrl.u32 %v5352, 7
        %v5354 = vsub.s32 0, %v5353
        %v5355 = vrot.slane %v5150, %v5354
        %v5356 = vlaneseq
        %v5357 = vshrl.u32 %v5356, 7
        %v5358 = vsub.s32 0, %v5357
        %v5359 = vrot.slane %v5151, %v5358
        %v5360 = vlaneseq
        %v5361 = vshrl.u32 %v5360, 7
        %v5362 = vsub.s32 0, %v5361
        %v5363 = vrot.slane %v5152, %v5362
        %v5364 = vlaneseq
        %v5365 = vshrl.u32 %v5364, 7
        %v5366 = vsub.s32 0, %v5365
        %v5367 = vrot.slane %v5153, %v5366
        %v5368 = vlaneseq
        %v5369 = vshrl.u32 %v5368, 7
        %v5370 = vsub.s32 0, %v5369
        %v5371 = vrot.slane %v5154, %v5370
        %v5372 = vlaneseq
        %v5373 = vshrl.u32 %v5372, 7
        %v5374 = vsub.s32 0, %v5373
        %v5375 = vrot.slane %v5155, %v5374
        %v5376 = vlaneseq
        %v5377 = vshrl.u32 %v5376, 7
        %v5378 = vsub.s32 0, %v5377
        %v5379 = vrot.slane %v5156, %v5378
        %v5380 = vlaneseq
        %v5381 = vshrl.u32 %v5380, 7
        %v5382 = vsub.s32 0, %v5381
        %v5383 = vrot.slane %v5157, %v5382
        %v5384 = vlaneseq
        %v5385 = vshrl.u32 %v5384, 7
        %v5386 = vsub.s32 0, %v5385
        %v5387 = vrot.slane %v5158, %v5386
        %v5388 = vlaneseq
        %v5389 = vshrl.u32 %v5388, 7
        %v5390 = vsub.s32 0, %v5389
        %v5391 = vrot.slane %v5159, %v5390
        %v5392 = vlaneseq
        %v5393 = vshrl.u32 %v5392, 7
        %v5394 = vsub.s32 0, %v5393
        %v5395 = vrot.slane %v5160, %v5394
        %v5396 = vlaneseq
        %v5397 = vshrl.u32 %v5396, 7
        %v5398 = vsub.s32 0, %v5397
        %v5399 = vrot.slane %v5161, %v5398
        %v5400 = vlaneseq
        %v5401 = vshrl.u32 %v5400, 7
        %v5402 = vsub.s32 0, %v5401
        %v5403 = vrot.slane %v5162, %v5402
        %v5404 = vlaneseq
        %v5405 = vshrl.u32 %v5404, 7
        %v5406 = vsub.s32 0, %v5405
        %v5407 = vrot.slane %v5163, %v5406
        %v5408 = vlaneseq
        %v5409 = vshrl.u32 %v5408, 7
        %v5410 = vsub.s32 0, %v5409
        %v5411 = vrot.slane %v5164, %v5410
        %v5412 = vlaneseq
        %v5413 = vshrl.u32 %v5412, 7
        %v5414 = vsub.s32 0, %v5413
        %v5415 = vrot.slane %v5165, %v5414
        %v5416 = vlaneseq
        %v5417 = vshrl.u32 %v5416, 7
        %v5418 = vsub.s32 0, %v5417
        %v5419 = vrot.slane %v5166, %v5418
        %v5420 = vlaneseq
        %v5421 = vshrl.u32 %v5420, 7
        %v5422 = vsub.s32 0, %v5421
        %v5423 = vrot.slane %v5167, %v5422
        %v5425 = vpack.i.b16 %v5171, %v5171
        %v5427 = vlaneseq
        %v5428 = vshrl.u32 %v5427, 7
        %v5429 = vsub.s32 0, %v5428
        %v5430 = vrot.slane %v5425, %v5429
        %v5432 = vpack.i.b16 %v5175, %v5175
        %v5434 = vlaneseq
        %v5435 = vshrl.u32 %v5434, 7
        %v5436 = vsub.s32 0, %v5435
        %v5437 = vrot.slane %v5432, %v5436
        %v5439 = vpack.i.b16 %v5179, %v5179
        %v5441 = vlaneseq
        %v5442 = vshrl.u32 %v5441, 7
        %v5443 = vsub.s32 0, %v5442
        %v5444 = vrot.slane %v5439, %v5443
        %v5446 = vpack.i.b16 %v5183, %v5183
        %v5448 = vlaneseq
        %v5449 = vshrl.u32 %v5448, 7
        %v5450 = vsub.s32 0, %v5449
        %v5451 = vrot.slane %v5446, %v5450
        %v5453 = vpack.i.b16 %v5187, %v5187
        %v5455 = vlaneseq
        %v5456 = vshrl.u32 %v5455, 7
        %v5457 = vsub.s32 0, %v5456
        %v5458 = vrot.slane %v5453, %v5457
        %v5460 = vpack.i.b16 %v5191, %v5191
        %v5462 = vlaneseq
        %v5463 = vshrl.u32 %v5462, 7
        %v5464 = vsub.s32 0, %v5463
        %v5465 = vrot.slane %v5460, %v5464
        %v5467 = vpack.i.b16 %v5195, %v5195
        %v5469 = vlaneseq
        %v5470 = vshrl.u32 %v5469, 7
        %v5471 = vsub.s32 0, %v5470
        %v5472 = vrot.slane %v5467, %v5471
        %v5474 = vpack.i.b16 %v5199, %v5199
        %v5476 = vlaneseq
        %v5477 = vshrl.u32 %v5476, 7
        %v5478 = vsub.s32 0, %v5477
        %v5479 = vrot.slane %v5474, %v5478
        %v5481 = vpack.i.b16 %v5203, %v5203
        %v5483 = vlaneseq
        %v5484 = vshrl.u32 %v5483, 7
        %v5485 = vsub.s32 0, %v5484
        %v5486 = vrot.slane %v5481, %v5485
        %v5488 = vpack.i.b16 %v5207, %v5207
        %v5490 = vlaneseq
        %v5491 = vshrl.u32 %v5490, 7
        %v5492 = vsub.s32 0, %v5491
        %v5493 = vrot.slane %v5488, %v5492
        %v5495 = vpack.i.b16 %v5211, %v5211
        %v5497 = vlaneseq
        %v5498 = vshrl.u32 %v5497, 7
        %v5499 = vsub.s32 0, %v5498
        %v5500 = vrot.slane %v5495, %v5499
        %v5502 = vpack.i.b16 %v5215, %v5215
        %v5504 = vlaneseq
        %v5505 = vshrl.u32 %v5504, 7
        %v5506 = vsub.s32 0, %v5505
        %v5507 = vrot.slane %v5502, %v5506
        %v5509 = vpack.i.b16 %v5219, %v5219
        %v5511 = vlaneseq
        %v5512 = vshrl.u32 %v5511, 7
        %v5513 = vsub.s32 0, %v5512
        %v5514 = vrot.slane %v5509, %v5513
        %v5516 = vpack.i.b16 %v5223, %v5223
        %v5518 = vlaneseq
        %v5519 = vshrl.u32 %v5518, 7
        %v5520 = vsub.s32 0, %v5519
        %v5521 = vrot.slane %v5516, %v5520
        %v5523 = vpack.i.b16 %v5227, %v5227
        %v5525 = vlaneseq
        %v5526 = vshrl.u32 %v5525, 7
        %v5527 = vsub.s32 0, %v5526
        %v5528 = vrot.slane %v5523, %v5527
        %v5530 = vpack.i.b16 %v5231, %v5231
        %v5532 = vlaneseq
        %v5533 = vshrl.u32 %v5532, 7
        %v5534 = vsub.s32 0, %v5533
        %v5535 = vrot.slane %v5530, %v5534
        %v5537 = vpack.i.b16 %v5235, %v5235
        %v5539 = vlaneseq
        %v5540 = vshrl.u32 %v5539, 7
        %v5541 = vsub.s32 0, %v5540
        %v5542 = vrot.slane %v5537, %v5541
        %v5544 = vpack.i.b16 %v5239, %v5239
        %v5546 = vlaneseq
        %v5547 = vshrl.u32 %v5546, 7
        %v5548 = vsub.s32 0, %v5547
        %v5549 = vrot.slane %v5544, %v5548
        %v5551 = vpack.i.b16 %v5243, %v5243
        %v5553 = vlaneseq
        %v5554 = vshrl.u32 %v5553, 7
        %v5555 = vsub.s32 0, %v5554
        %v5556 = vrot.slane %v5551, %v5555
        %v5558 = vpack.i.b16 %v5247, %v5247
        %v5560 = vlaneseq
        %v5561 = vshrl.u32 %v5560, 7
        %v5562 = vsub.s32 0, %v5561
        %v5563 = vrot.slane %v5558, %v5562
        %v5565 = vpack.i.b16 %v5251, %v5251
        %v5567 = vlaneseq
        %v5568 = vshrl.u32 %v5567, 7
        %v5569 = vsub.s32 0, %v5568
        %v5570 = vrot.slane %v5565, %v5569
        %v5572 = vpack.i.b16 %v5255, %v5255
        %v5574 = vlaneseq
        %v5575 = vshrl.u32 %v5574, 7
        %v5576 = vsub.s32 0, %v5575
        %v5577 = vrot.slane %v5572, %v5576
        %v5579 = vpack.i.b16 %v5259, %v5259
        %v5581 = vlaneseq
        %v5582 = vshrl.u32 %v5581, 7
        %v5583 = vsub.s32 0, %v5582
        %v5584 = vrot.slane %v5579, %v5583
        %v5586 = vpack.i.b16 %v5263, %v5263
        %v5588 = vlaneseq
        %v5589 = vshrl.u32 %v5588, 7
        %v5590 = vsub.s32 0, %v5589
        %v5591 = vrot.slane %v5586, %v5590
        %v5593 = vpack.i.b16 %v5267, %v5267
        %v5595 = vlaneseq
        %v5596 = vshrl.u32 %v5595, 7
        %v5597 = vsub.s32 0, %v5596
        %v5598 = vrot.slane %v5593, %v5597
        %v5600 = vpack.i.b16 %v5271, %v5271
        %v5602 = vlaneseq
        %v5603 = vshrl.u32 %v5602, 7
        %v5604 = vsub.s32 0, %v5603
        %v5605 = vrot.slane %v5600, %v5604
        %v5607 = vpack.i.b16 %v5275, %v5275
        %v5609 = vlaneseq
        %v5610 = vshrl.u32 %v5609, 7
        %v5611 = vsub.s32 0, %v5610
        %v5612 = vrot.slane %v5607, %v5611
        %v5614 = vpack.i.b16 %v5279, %v5279
        %v5616 = vlaneseq
        %v5617 = vshrl.u32 %v5616, 7
        %v5618 = vsub.s32 0, %v5617
        %v5619 = vrot.slane %v5614, %v5618
        %v5621 = vpack.i.b16 %v5283, %v5283
        %v5623 = vlaneseq
        %v5624 = vshrl.u32 %v5623, 7
        %v5625 = vsub.s32 0, %v5624
        %v5626 = vrot.slane %v5621, %v5625
        %v5628 = vpack.i.b16 %v5287, %v5287
        %v5630 = vlaneseq
        %v5631 = vshrl.u32 %v5630, 7
        %v5632 = vsub.s32 0, %v5631
        %v5633 = vrot.slane %v5628, %v5632
        %v5635 = vpack.i.b16 %v5291, %v5291
        %v5637 = vlaneseq
        %v5638 = vshrl.u32 %v5637, 7
        %v5639 = vsub.s32 0, %v5638
        %v5640 = vrot.slane %v5635, %v5639
        %v5642 = vpack.i.b16 %v5295, %v5295
        %v5644 = vlaneseq
        %v5645 = vshrl.u32 %v5644, 7
        %v5646 = vsub.s32 0, %v5645
        %v5647 = vrot.slane %v5642, %v5646
        %v5649 = vpack.i.b16 %v5299, %v5299
        %v5651 = vlaneseq
        %v5652 = vshrl.u32 %v5651, 7
        %v5653 = vsub.s32 0, %v5652
        %v5654 = vrot.slane %v5649, %v5653
        %v5656 = vpack.i.b16 %v5303, %v5303
        %v5658 = vlaneseq
        %v5659 = vshrl.u32 %v5658, 7
        %v5660 = vsub.s32 0, %v5659
        %v5661 = vrot.slane %v5656, %v5660
        %v5663 = vpack.i.b16 %v5307, %v5307
        %v5665 = vlaneseq
        %v5666 = vshrl.u32 %v5665, 7
        %v5667 = vsub.s32 0, %v5666
        %v5668 = vrot.slane %v5663, %v5667
        %v5670 = vpack.i.b16 %v5311, %v5311
        %v5672 = vlaneseq
        %v5673 = vshrl.u32 %v5672, 7
        %v5674 = vsub.s32 0, %v5673
        %v5675 = vrot.slane %v5670, %v5674
        %v5677 = vpack.i.b16 %v5315, %v5315
        %v5679 = vlaneseq
        %v5680 = vshrl.u32 %v5679, 7
        %v5681 = vsub.s32 0, %v5680
        %v5682 = vrot.slane %v5677, %v5681
        %v5684 = vpack.i.b16 %v5319, %v5319
        %v5686 = vlaneseq
        %v5687 = vshrl.u32 %v5686, 7
        %v5688 = vsub.s32 0, %v5687
        %v5689 = vrot.slane %v5684, %v5688
        %v5691 = vpack.i.b16 %v5323, %v5323
        %v5693 = vlaneseq
        %v5694 = vshrl.u32 %v5693, 7
        %v5695 = vsub.s32 0, %v5694
        %v5696 = vrot.slane %v5691, %v5695
        %v5698 = vpack.i.b16 %v5327, %v5327
        %v5700 = vlaneseq
        %v5701 = vshrl.u32 %v5700, 7
        %v5702 = vsub.s32 0, %v5701
        %v5703 = vrot.slane %v5698, %v5702
        %v5705 = vpack.i.b16 %v5331, %v5331
        %v5707 = vlaneseq
        %v5708 = vshrl.u32 %v5707, 7
        %v5709 = vsub.s32 0, %v5708
        %v5710 = vrot.slane %v5705, %v5709
        %v5712 = vpack.i.b16 %v5335, %v5335
        %v5714 = vlaneseq
        %v5715 = vshrl.u32 %v5714, 7
        %v5716 = vsub.s32 0, %v5715
        %v5717 = vrot.slane %v5712, %v5716
        %v5719 = vpack.i.b16 %v5339, %v5339
        %v5721 = vlaneseq
        %v5722 = vshrl.u32 %v5721, 7
        %v5723 = vsub.s32 0, %v5722
        %v5724 = vrot.slane %v5719, %v5723
        %v5726 = vpack.i.b16 %v5343, %v5343
        %v5728 = vlaneseq
        %v5729 = vshrl.u32 %v5728, 7
        %v5730 = vsub.s32 0, %v5729
        %v5731 = vrot.slane %v5726, %v5730
        %v5733 = vpack.i.b16 %v5347, %v5347
        %v5735 = vlaneseq
        %v5736 = vshrl.u32 %v5735, 7
        %v5737 = vsub.s32 0, %v5736
        %v5738 = vrot.slane %v5733, %v5737
        %v5740 = vpack.i.b16 %v5351, %v5351
        %v5742 = vlaneseq
        %v5743 = vshrl.u32 %v5742, 7
        %v5744 = vsub.s32 0, %v5743
        %v5745 = vrot.slane %v5740, %v5744
        %v5747 = vpack.i.b16 %v5355, %v5355
        %v5749 = vlaneseq
        %v5750 = vshrl.u32 %v5749, 7
        %v5751 = vsub.s32 0, %v5750
        %v5752 = vrot.slane %v5747, %v5751
        %v5754 = vpack.i.b16 %v5359, %v5359
        %v5756 = vlaneseq
        %v5757 = vshrl.u32 %v5756, 7
        %v5758 = vsub.s32 0, %v5757
        %v5759 = vrot.slane %v5754, %v5758
        %v5761 = vpack.i.b16 %v5363, %v5363
        %v5763 = vlaneseq
        %v5764 = vshrl.u32 %v5763, 7
        %v5765 = vsub.s32 0, %v5764
        %v5766 = vrot.slane %v5761, %v5765
        %v5768 = vpack.i.b16 %v5367, %v5367
        %v5770 = vlaneseq
        %v5771 = vshrl.u32 %v5770, 7
        %v5772 = vsub.s32 0, %v5771
        %v5773 = vrot.slane %v5768, %v5772
        %v5775 = vpack.i.b16 %v5371, %v5371
        %v5777 = vlaneseq
        %v5778 = vshrl.u32 %v5777, 7
        %v5779 = vsub.s32 0, %v5778
        %v5780 = vrot.slane %v5775, %v5779
        %v5782 = vpack.i.b16 %v5375, %v5375
        %v5784 = vlaneseq
        %v5785 = vshrl.u32 %v5784, 7
        %v5786 = vsub.s32 0, %v5785
        %v5787 = vrot.slane %v5782, %v5786
        %v5789 = vpack.i.b16 %v5379, %v5379
        %v5791 = vlaneseq
        %v5792 = vshrl.u32 %v5791, 7
        %v5793 = vsub.s32 0, %v5792
        %v5794 = vrot.slane %v5789, %v5793
        %v5796 = vpack.i.b16 %v5383, %v5383
        %v5798 = vlaneseq
        %v5799 = vshrl.u32 %v5798, 7
        %v5800 = vsub.s32 0, %v5799
        %v5801 = vrot.slane %v5796, %v5800
        %v5803 = vpack.i.b16 %v5387, %v5387
        %v5805 = vlaneseq
        %v5806 = vshrl.u32 %v5805, 7
        %v5807 = vsub.s32 0, %v5806
        %v5808 = vrot.slane %v5803, %v5807
        %v5810 = vpack.i.b16 %v5391, %v5391
        %v5812 = vlaneseq
        %v5813 = vshrl.u32 %v5812, 7
        %v5814 = vsub.s32 0, %v5813
        %v5815 = vrot.slane %v5810, %v5814
        %v5817 = vpack.i.b16 %v5395, %v5395
        %v5819 = vlaneseq
        %v5820 = vshrl.u32 %v5819, 7
        %v5821 = vsub.s32 0, %v5820
        %v5822 = vrot.slane %v5817, %v5821
        %v5824 = vpack.i.b16 %v5399, %v5399
        %v5826 = vlaneseq
        %v5827 = vshrl.u32 %v5826, 7
        %v5828 = vsub.s32 0, %v5827
        %v5829 = vrot.slane %v5824, %v5828
        %v5831 = vpack.i.b16 %v5403, %v5403
        %v5833 = vlaneseq
        %v5834 = vshrl.u32 %v5833, 7
        %v5835 = vsub.s32 0, %v5834
        %v5836 = vrot.slane %v5831, %v5835
        %v5838 = vpack.i.b16 %v5407, %v5407
        %v5840 = vlaneseq
        %v5841 = vshrl.u32 %v5840, 7
        %v5842 = vsub.s32 0, %v5841
        %v5843 = vrot.slane %v5838, %v5842
        %v5845 = vpack.i.b16 %v5411, %v5411
        %v5847 = vlaneseq
        %v5848 = vshrl.u32 %v5847, 7
        %v5849 = vsub.s32 0, %v5848
        %v5850 = vrot.slane %v5845, %v5849
        %v5852 = vpack.i.b16 %v5415, %v5415
        %v5854 = vlaneseq
        %v5855 = vshrl.u32 %v5854, 7
        %v5856 = vsub.s32 0, %v5855
        %v5857 = vrot.slane %v5852, %v5856
        %v5859 = vpack.i.b16 %v5419, %v5419
        %v5861 = vlaneseq
        %v5862 = vshrl.u32 %v5861, 7
        %v5863 = vsub.s32 0, %v5862
        %v5864 = vrot.slane %v5859, %v5863
        %v5866 = vpack.i.b16 %v5423, %v5423
        %v5868 = vlaneseq
        %v5869 = vshrl.u32 %v5868, 7
        %v5870 = vsub.s32 0, %v5869
        %v5871 = vrot.slane %v5866, %v5870
        %v5872 = vmul.bf16 %v5430, %v4708
        %v5873 = vmul.bf16 %v5437, %v4709
        %v5874 = vmul.bf16 %v5444, %v4710
        %v5875 = vmul.bf16 %v5451, %v4711
        %v5876 = vmul.bf16 %v5458, %v4712
        %v5877 = vmul.bf16 %v5465, %v4713
        %v5878 = vmul.bf16 %v5472, %v4714
        %v5879 = vmul.bf16 %v5479, %v4715
        %v5880 = vmul.bf16 %v5486, %v4716
        %v5881 = vmul.bf16 %v5493, %v4717
        %v5882 = vmul.bf16 %v5500, %v4718
        %v5883 = vmul.bf16 %v5507, %v4719
        %v5884 = vmul.bf16 %v5514, %v4720
        %v5885 = vmul.bf16 %v5521, %v4721
        %v5886 = vmul.bf16 %v5528, %v4722
        %v5887 = vmul.bf16 %v5535, %v4723
        %v5888 = vmul.bf16 %v5542, %v4724
        %v5889 = vmul.bf16 %v5549, %v4725
        %v5890 = vmul.bf16 %v5556, %v4726
        %v5891 = vmul.bf16 %v5563, %v4727
        %v5892 = vmul.bf16 %v5570, %v4728
        %v5893 = vmul.bf16 %v5577, %v4729
        %v5894 = vmul.bf16 %v5584, %v4730
        %v5895 = vmul.bf16 %v5591, %v4731
        %v5896 = vmul.bf16 %v5598, %v4732
        %v5897 = vmul.bf16 %v5605, %v4733
        %v5898 = vmul.bf16 %v5612, %v4734
        %v5899 = vmul.bf16 %v5619, %v4735
        %v5900 = vmul.bf16 %v5626, %v4736
        %v5901 = vmul.bf16 %v5633, %v4737
        %v5902 = vmul.bf16 %v5640, %v4738
        %v5903 = vmul.bf16 %v5647, %v4739
        %v5904 = vmul.bf16 %v5654, %v4740
        %v5905 = vmul.bf16 %v5661, %v4741
        %v5906 = vmul.bf16 %v5668, %v4742
        %v5907 = vmul.bf16 %v5675, %v4743
        %v5908 = vmul.bf16 %v5682, %v4744
        %v5909 = vmul.bf16 %v5689, %v4745
        %v5910 = vmul.bf16 %v5696, %v4746
        %v5911 = vmul.bf16 %v5703, %v4747
        %v5912 = vmul.bf16 %v5710, %v4748
        %v5913 = vmul.bf16 %v5717, %v4749
        %v5914 = vmul.bf16 %v5724, %v4750
        %v5915 = vmul.bf16 %v5731, %v4751
        %v5916 = vmul.bf16 %v5738, %v4752
        %v5917 = vmul.bf16 %v5745, %v4753
        %v5918 = vmul.bf16 %v5752, %v4754
        %v5919 = vmul.bf16 %v5759, %v4755
        %v5920 = vmul.bf16 %v5766, %v4756
        %v5921 = vmul.bf16 %v5773, %v4757
        %v5922 = vmul.bf16 %v5780, %v4758
        %v5923 = vmul.bf16 %v5787, %v4759
        %v5924 = vmul.bf16 %v5794, %v4760
        %v5925 = vmul.bf16 %v5801, %v4761
        %v5926 = vmul.bf16 %v5808, %v4762
        %v5927 = vmul.bf16 %v5815, %v4763
        %v5928 = vmul.bf16 %v5822, %v4764
        %v5929 = vmul.bf16 %v5829, %v4765
        %v5930 = vmul.bf16 %v5836, %v4766
        %v5931 = vmul.bf16 %v5843, %v4767
        %v5932 = vmul.bf16 %v5850, %v4768
        %v5933 = vmul.bf16 %v5857, %v4769
        %v5934 = vmul.bf16 %v5864, %v4770
        %v5935 = vmul.bf16 %v5871, %v4771
        %v5944 = vunpack.c.l.b16 %v723
        %v5945 = vunpack.c.l.b16 %v724
        %v5946 = vunpack.c.l.b16 %v725
        %v5947 = vunpack.c.l.b16 %v726
        %v5948 = vunpack.c.l.b16 %v727
        %v5949 = vunpack.c.l.b16 %v728
        %v5950 = vunpack.c.l.b16 %v729
        %v5951 = vunpack.c.l.b16 %v730
        %v5952 = vpack.c.b16 %v5945, %v5944
        %v5953 = vpack.c.b16 %v5947, %v5946
        %v5954 = vpack.c.b16 %v5949, %v5948
        %v5955 = vpack.c.b16 %v5951, %v5950
        %v5961 = vsel %vm1945, %v5872, 0
        %v5964 = vsel %vm1945, %v5873, 0
        %v5967 = vsel %vm1945, %v5874, 0
        %v5970 = vsel %vm1945, %v5875, 0
        %v5973 = vsel %vm1945, %v5876, 0
        %v5976 = vsel %vm1945, %v5877, 0
        %v5979 = vsel %vm1945, %v5878, 0
        %v5982 = vsel %vm1945, %v5879, 0
        %v5985 = vsel %vm1945, %v5880, 0
        %v5988 = vsel %vm1945, %v5881, 0
        %v5991 = vsel %vm1945, %v5882, 0
        %v5994 = vsel %vm1945, %v5883, 0
        %v5997 = vsel %vm1945, %v5884, 0
        %v6000 = vsel %vm1945, %v5885, 0
        %v6003 = vsel %vm1945, %v5886, 0
        %v6006 = vsel %vm1945, %v5887, 0
        %v6009 = vsel %vm1945, %v5888, 0
        %v6012 = vsel %vm1945, %v5889, 0
        %v6015 = vsel %vm1945, %v5890, 0
        %v6018 = vsel %vm1945, %v5891, 0
        %v6021 = vsel %vm1945, %v5892, 0
        %v6024 = vsel %vm1945, %v5893, 0
        %v6027 = vsel %vm1945, %v5894, 0
        %v6030 = vsel %vm1945, %v5895, 0
        %v6033 = vsel %vm1945, %v5896, 0
        %v6036 = vsel %vm1945, %v5897, 0
        %v6039 = vsel %vm1945, %v5898, 0
        %v6042 = vsel %vm1945, %v5899, 0
        %v6045 = vsel %vm1945, %v5900, 0
        %v6048 = vsel %vm1945, %v5901, 0
        %v6051 = vsel %vm1945, %v5902, 0
        %v6054 = vsel %vm1945, %v5903, 0
        %v6057 = vsel %vm1945, %v5904, 0
        %v6060 = vsel %vm1945, %v5905, 0
        %v6063 = vsel %vm1945, %v5906, 0
        %v6066 = vsel %vm1945, %v5907, 0
        %v6069 = vsel %vm1945, %v5908, 0
        %v6072 = vsel %vm1945, %v5909, 0
        %v6075 = vsel %vm1945, %v5910, 0
        %v6078 = vsel %vm1945, %v5911, 0
        %v6081 = vsel %vm1945, %v5912, 0
        %v6084 = vsel %vm1945, %v5913, 0
        %v6087 = vsel %vm1945, %v5914, 0
        %v6090 = vsel %vm1945, %v5915, 0
        %v6093 = vsel %vm1945, %v5916, 0
        %v6096 = vsel %vm1945, %v5917, 0
        %v6099 = vsel %vm1945, %v5918, 0
        %v6102 = vsel %vm1945, %v5919, 0
        %v6105 = vsel %vm1945, %v5920, 0
        %v6108 = vsel %vm1945, %v5921, 0
        %v6111 = vsel %vm1945, %v5922, 0
        %v6114 = vsel %vm1945, %v5923, 0
        %v6117 = vsel %vm1945, %v5924, 0
        %v6120 = vsel %vm1945, %v5925, 0
        %v6123 = vsel %vm1945, %v5926, 0
        %v6126 = vsel %vm1945, %v5927, 0
        %v6129 = vsel %vm1945, %v5928, 0
        %v6132 = vsel %vm1945, %v5929, 0
        %v6135 = vsel %vm1945, %v5930, 0
        %v6138 = vsel %vm1945, %v5931, 0
        %v6141 = vsel %vm1945, %v5932, 0
        %v6144 = vsel %vm1945, %v5933, 0
        %v6147 = vsel %vm1945, %v5934, 0
        %v6150 = vsel %vm1945, %v5935, 0
        %6152 = vmatprep.subr.bf16.mxu0 0
        %6153 = vmatpush1.bf16.msra.mxu0 %v5952
        %6154 = vmatprep.subr.bf16.mxu0 0
        %6155 = vmatpush1.bf16.msra.mxu0 %v5953
        %6156 = vmatprep.subr.bf16.mxu0 0
        %6157 = vmatpush1.bf16.msra.mxu0 %v5954
        %6158 = vmatprep.subr.bf16.mxu0 0
        %6159 = vmatpush1.bf16.msra.mxu0 %v5955
        %6160 = vmatprep.subr.bf16.mxu0 0
        %6161 = vmatpush1.bf16.msra.mxu0 0
        %6162 = vmatprep.subr.bf16.mxu0 0
        %6163 = vmatpush1.bf16.msra.mxu0 0
        %6164 = vmatprep.subr.bf16.mxu0 0
        %6165 = vmatpush1.bf16.msra.mxu0 0
        %6166 = vmatprep.subr.bf16.mxu0 0
        %6167 = vmatpush1.bf16.msra.mxu0 0
        %6168 = vmatprep.subr.bf16.mxu0 0
        %6169 = vmatpush1.bf16.msra.mxu0 0
        %6170 = vmatprep.subr.bf16.mxu0 0
        %6171 = vmatpush1.bf16.msra.mxu0 0
        %6172 = vmatprep.subr.bf16.mxu0 0
        %6173 = vmatpush1.bf16.msra.mxu0 0
        %6174 = vmatprep.subr.bf16.mxu0 0
        %6175 = vmatpush1.bf16.msra.mxu0 0
        %6176 = vmatprep.subr.bf16.mxu0 0
        %6177 = vmatpush1.bf16.msra.mxu0 0
        %6178 = vmatprep.subr.bf16.mxu0 0
        %6179 = vmatpush1.bf16.msra.mxu0 0
        %6180 = vmatprep.subr.bf16.mxu0 0
        %6181 = vmatpush1.bf16.msra.mxu0 0
        %6182 = vmatprep.subr.bf16.mxu0 0
        %6183 = vmatpush1.bf16.msra.mxu0 0
        %6184 = vmatprep.mubr.bf16.mxu0 0
        %6185 = vmatmul.mubr.bf16.gmra.mrb[0].mxu0 %v5961
        %v6186 = vpop.f32.mrb[0].mxu0
        %v6187 = vadd.f32 0.0, %v6186
        %v6188 = vpop.f32.mrb[0].mxu0
        %v6189 = vpop.f32.mrb[0].mxu0
        %v6190 = vadd.f32 0.0, %v6189
        %v6191 = vpop.f32.mrb[0].mxu0
        %6192 = vmatprep.mubr.bf16.mxu0 0
        %6193 = vmatmul.mubr.bf16.gmra.mrb[0].mxu0 %v5964
        %v6194 = vpop.f32.mrb[0].mxu0
        %v6195 = vadd.f32 0.0, %v6194
        %v6196 = vpop.f32.mrb[0].mxu0
        %v6197 = vpop.f32.mrb[0].mxu0
        %v6198 = vadd.f32 0.0, %v6197
        %v6199 = vpop.f32.mrb[0].mxu0
        %6200 = vmatprep.mubr.bf16.mxu0 0
        %6201 = vmatmul.mubr.bf16.gmra.mrb[0].mxu0 %v5967
        %v6202 = vpop.f32.mrb[0].mxu0
        %v6203 = vadd.f32 0.0, %v6202
        %v6204 = vpop.f32.mrb[0].mxu0
        %v6205 = vpop.f32.mrb[0].mxu0
        %v6206 = vadd.f32 0.0, %v6205
        %v6207 = vpop.f32.mrb[0].mxu0
        %6208 = vmatprep.mubr.bf16.mxu0 0
        %6209 = vmatmul.mubr.bf16.gmra.mrb[0].mxu0 %v5970
        %v6210 = vpop.f32.mrb[0].mxu0
        %v6211 = vadd.f32 0.0, %v6210
        %v6212 = vpop.f32.mrb[0].mxu0
        %v6213 = vpop.f32.mrb[0].mxu0
        %v6214 = vadd.f32 0.0, %v6213
        %v6215 = vpop.f32.mrb[0].mxu0
        %6216 = vmatprep.mubr.bf16.mxu0 0
        %6217 = vmatmul.mubr.bf16.gmra.mrb[0].mxu0 %v5973
        %v6218 = vpop.f32.mrb[0].mxu0
        %v6219 = vadd.f32 0.0, %v6218
        %v6220 = vpop.f32.mrb[0].mxu0
        %v6221 = vpop.f32.mrb[0].mxu0
        %v6222 = vadd.f32 0.0, %v6221
        %v6223 = vpop.f32.mrb[0].mxu0
        %6224 = vmatprep.mubr.bf16.mxu0 0
        %6225 = vmatmul.mubr.bf16.gmra.mrb[0].mxu0 %v5976
        %v6226 = vpop.f32.mrb[0].mxu0
        %v6227 = vadd.f32 0.0, %v6226
        %v6228 = vpop.f32.mrb[0].mxu0
        %v6229 = vpop.f32.mrb[0].mxu0
        %v6230 = vadd.f32 0.0, %v6229
        %v6231 = vpop.f32.mrb[0].mxu0
        %6232 = vmatprep.mubr.bf16.mxu0 0
        %6233 = vmatmul.mubr.bf16.gmra.mrb[0].mxu0 %v5979
        %v6234 = vpop.f32.mrb[0].mxu0
        %v6235 = vadd.f32 0.0, %v6234
        %v6236 = vpop.f32.mrb[0].mxu0
        %v6237 = vpop.f32.mrb[0].mxu0
        %v6238 = vadd.f32 0.0, %v6237
        %v6239 = vpop.f32.mrb[0].mxu0
        %6240 = vmatprep.mubr.bf16.mxu0 0
        %6241 = vmatmul.mubr.bf16.gmra.mrb[0].mxu0 %v5982
        %v6242 = vpop.f32.mrb[0].mxu0
        %v6243 = vadd.f32 0.0, %v6242
        %v6244 = vpop.f32.mrb[0].mxu0
        %v6245 = vpop.f32.mrb[0].mxu0
        %v6246 = vadd.f32 0.0, %v6245
        %v6247 = vpop.f32.mrb[0].mxu0
        %6248 = vmatprep.mubr.bf16.mxu0 0
        %6249 = vmatmul.mubr.bf16.gmra.mrb[0].mxu0 %v5985
        %v6250 = vpop.f32.mrb[0].mxu0
        %v6251 = vadd.f32 0.0, %v6250
        %v6252 = vpop.f32.mrb[0].mxu0
        %v6253 = vpop.f32.mrb[0].mxu0
        %v6254 = vadd.f32 0.0, %v6253
        %v6255 = vpop.f32.mrb[0].mxu0
        %6256 = vmatprep.mubr.bf16.mxu0 0
        %6257 = vmatmul.mubr.bf16.gmra.mrb[0].mxu0 %v5988
        %v6258 = vpop.f32.mrb[0].mxu0
        %v6259 = vadd.f32 0.0, %v6258
        %v6260 = vpop.f32.mrb[0].mxu0
        %v6261 = vpop.f32.mrb[0].mxu0
        %v6262 = vadd.f32 0.0, %v6261
        %v6263 = vpop.f32.mrb[0].mxu0
        %6264 = vmatprep.mubr.bf16.mxu0 0
        %6265 = vmatmul.mubr.bf16.gmra.mrb[0].mxu0 %v5991
        %v6266 = vpop.f32.mrb[0].mxu0
        %v6267 = vadd.f32 0.0, %v6266
        %v6268 = vpop.f32.mrb[0].mxu0
        %v6269 = vpop.f32.mrb[0].mxu0
        %v6270 = vadd.f32 0.0, %v6269
        %v6271 = vpop.f32.mrb[0].mxu0
        %6272 = vmatprep.mubr.bf16.mxu0 0
        %6273 = vmatmul.mubr.bf16.gmra.mrb[0].mxu0 %v5994
        %v6274 = vpop.f32.mrb[0].mxu0
        %v6275 = vadd.f32 0.0, %v6274
        %v6276 = vpop.f32.mrb[0].mxu0
        %v6277 = vpop.f32.mrb[0].mxu0
        %v6278 = vadd.f32 0.0, %v6277
        %v6279 = vpop.f32.mrb[0].mxu0
        %6280 = vmatprep.mubr.bf16.mxu0 0
        %6281 = vmatmul.mubr.bf16.gmra.mrb[0].mxu0 %v5997
        %v6282 = vpop.f32.mrb[0].mxu0
        %v6283 = vadd.f32 0.0, %v6282
        %v6284 = vpop.f32.mrb[0].mxu0
        %v6285 = vpop.f32.mrb[0].mxu0
        %v6286 = vadd.f32 0.0, %v6285
        %v6287 = vpop.f32.mrb[0].mxu0
        %6288 = vmatprep.mubr.bf16.mxu0 0
        %6289 = vmatmul.mubr.bf16.gmra.mrb[0].mxu0 %v6000
        %v6290 = vpop.f32.mrb[0].mxu0
        %v6291 = vadd.f32 0.0, %v6290
        %v6292 = vpop.f32.mrb[0].mxu0
        %v6293 = vpop.f32.mrb[0].mxu0
        %v6294 = vadd.f32 0.0, %v6293
        %v6295 = vpop.f32.mrb[0].mxu0
        %6296 = vmatprep.mubr.bf16.mxu0 0
        %6297 = vmatmul.mubr.bf16.gmra.mrb[0].mxu0 %v6003
        %v6298 = vpop.f32.mrb[0].mxu0
        %v6299 = vadd.f32 0.0, %v6298
        %v6300 = vpop.f32.mrb[0].mxu0
        %v6301 = vpop.f32.mrb[0].mxu0
        %v6302 = vadd.f32 0.0, %v6301
        %v6303 = vpop.f32.mrb[0].mxu0
        %6304 = vmatprep.mubr.bf16.mxu0 0
        %6305 = vmatmul.mubr.bf16.gmra.mrb[0].mxu0 %v6006
        %v6306 = vpop.f32.mrb[0].mxu0
        %v6307 = vadd.f32 0.0, %v6306
        %v6308 = vpop.f32.mrb[0].mxu0
        %v6309 = vpop.f32.mrb[0].mxu0
        %v6310 = vadd.f32 0.0, %v6309
        %v6311 = vpop.f32.mrb[0].mxu0
        %6312 = vmatprep.mubr.bf16.mxu0 0
        %6313 = vmatmul.mubr.bf16.gmra.mrb[0].mxu0 %v6009
        %v6314 = vpop.f32.mrb[0].mxu0
        %v6315 = vadd.f32 0.0, %v6314
        %v6316 = vpop.f32.mrb[0].mxu0
        %v6317 = vpop.f32.mrb[0].mxu0
        %v6318 = vadd.f32 0.0, %v6317
        %v6319 = vpop.f32.mrb[0].mxu0
        %6320 = vmatprep.mubr.bf16.mxu0 0
        %6321 = vmatmul.mubr.bf16.gmra.mrb[0].mxu0 %v6012
        %v6322 = vpop.f32.mrb[0].mxu0
        %v6323 = vadd.f32 0.0, %v6322
        %v6324 = vpop.f32.mrb[0].mxu0
        %v6325 = vpop.f32.mrb[0].mxu0
        %v6326 = vadd.f32 0.0, %v6325
        %v6327 = vpop.f32.mrb[0].mxu0
        %6328 = vmatprep.mubr.bf16.mxu0 0
        %6329 = vmatmul.mubr.bf16.gmra.mrb[0].mxu0 %v6015
        %v6330 = vpop.f32.mrb[0].mxu0
        %v6331 = vadd.f32 0.0, %v6330
        %v6332 = vpop.f32.mrb[0].mxu0
        %v6333 = vpop.f32.mrb[0].mxu0
        %v6334 = vadd.f32 0.0, %v6333
        %v6335 = vpop.f32.mrb[0].mxu0
        %6336 = vmatprep.mubr.bf16.mxu0 0
        %6337 = vmatmul.mubr.bf16.gmra.mrb[0].mxu0 %v6018
        %v6338 = vpop.f32.mrb[0].mxu0
        %v6339 = vadd.f32 0.0, %v6338
        %v6340 = vpop.f32.mrb[0].mxu0
        %v6341 = vpop.f32.mrb[0].mxu0
        %v6342 = vadd.f32 0.0, %v6341
        %v6343 = vpop.f32.mrb[0].mxu0
        %6344 = vmatprep.mubr.bf16.mxu0 0
        %6345 = vmatmul.mubr.bf16.gmra.mrb[0].mxu0 %v6021
        %v6346 = vpop.f32.mrb[0].mxu0
        %v6347 = vadd.f32 0.0, %v6346
        %v6348 = vpop.f32.mrb[0].mxu0
        %v6349 = vpop.f32.mrb[0].mxu0
        %v6350 = vadd.f32 0.0, %v6349
        %v6351 = vpop.f32.mrb[0].mxu0
        %6352 = vmatprep.mubr.bf16.mxu0 0
        %6353 = vmatmul.mubr.bf16.gmra.mrb[0].mxu0 %v6024
        %v6354 = vpop.f32.mrb[0].mxu0
        %v6355 = vadd.f32 0.0, %v6354
        %v6356 = vpop.f32.mrb[0].mxu0
        %v6357 = vpop.f32.mrb[0].mxu0
        %v6358 = vadd.f32 0.0, %v6357
        %v6359 = vpop.f32.mrb[0].mxu0
        %6360 = vmatprep.mubr.bf16.mxu0 0
        %6361 = vmatmul.mubr.bf16.gmra.mrb[0].mxu0 %v6027
        %v6362 = vpop.f32.mrb[0].mxu0
        %v6363 = vadd.f32 0.0, %v6362
        %v6364 = vpop.f32.mrb[0].mxu0
        %v6365 = vpop.f32.mrb[0].mxu0
        %v6366 = vadd.f32 0.0, %v6365
        %v6367 = vpop.f32.mrb[0].mxu0
        %6368 = vmatprep.mubr.bf16.mxu0 0
        %6369 = vmatmul.mubr.bf16.gmra.mrb[0].mxu0 %v6030
        %v6370 = vpop.f32.mrb[0].mxu0
        %v6371 = vadd.f32 0.0, %v6370
        %v6372 = vpop.f32.mrb[0].mxu0
        %v6373 = vpop.f32.mrb[0].mxu0
        %v6374 = vadd.f32 0.0, %v6373
        %v6375 = vpop.f32.mrb[0].mxu0
        %6376 = vmatprep.mubr.bf16.mxu0 0
        %6377 = vmatmul.mubr.bf16.gmra.mrb[0].mxu0 %v6033
        %v6378 = vpop.f32.mrb[0].mxu0
        %v6379 = vadd.f32 0.0, %v6378
        %v6380 = vpop.f32.mrb[0].mxu0
        %v6381 = vpop.f32.mrb[0].mxu0
        %v6382 = vadd.f32 0.0, %v6381
        %v6383 = vpop.f32.mrb[0].mxu0
        %6384 = vmatprep.mubr.bf16.mxu0 0
        %6385 = vmatmul.mubr.bf16.gmra.mrb[0].mxu0 %v6036
        %v6386 = vpop.f32.mrb[0].mxu0
        %v6387 = vadd.f32 0.0, %v6386
        %v6388 = vpop.f32.mrb[0].mxu0
        %v6389 = vpop.f32.mrb[0].mxu0
        %v6390 = vadd.f32 0.0, %v6389
        %v6391 = vpop.f32.mrb[0].mxu0
        %6392 = vmatprep.mubr.bf16.mxu0 0
        %6393 = vmatmul.mubr.bf16.gmra.mrb[0].mxu0 %v6039
        %v6394 = vpop.f32.mrb[0].mxu0
        %v6395 = vadd.f32 0.0, %v6394
        %v6396 = vpop.f32.mrb[0].mxu0
        %v6397 = vpop.f32.mrb[0].mxu0
        %v6398 = vadd.f32 0.0, %v6397
        %v6399 = vpop.f32.mrb[0].mxu0
        %6400 = vmatprep.mubr.bf16.mxu0 0
        %6401 = vmatmul.mubr.bf16.gmra.mrb[0].mxu0 %v6042
        %v6402 = vpop.f32.mrb[0].mxu0
        %v6403 = vadd.f32 0.0, %v6402
        %v6404 = vpop.f32.mrb[0].mxu0
        %v6405 = vpop.f32.mrb[0].mxu0
        %v6406 = vadd.f32 0.0, %v6405
        %v6407 = vpop.f32.mrb[0].mxu0
        %6408 = vmatprep.mubr.bf16.mxu0 0
        %6409 = vmatmul.mubr.bf16.gmra.mrb[0].mxu0 %v6045
        %v6410 = vpop.f32.mrb[0].mxu0
        %v6411 = vadd.f32 0.0, %v6410
        %v6412 = vpop.f32.mrb[0].mxu0
        %v6413 = vpop.f32.mrb[0].mxu0
        %v6414 = vadd.f32 0.0, %v6413
        %v6415 = vpop.f32.mrb[0].mxu0
        %6416 = vmatprep.mubr.bf16.mxu0 0
        %6417 = vmatmul.mubr.bf16.gmra.mrb[0].mxu0 %v6048
        %v6418 = vpop.f32.mrb[0].mxu0
        %v6419 = vadd.f32 0.0, %v6418
        %v6420 = vpop.f32.mrb[0].mxu0
        %v6421 = vpop.f32.mrb[0].mxu0
        %v6422 = vadd.f32 0.0, %v6421
        %v6423 = vpop.f32.mrb[0].mxu0
        %6424 = vmatprep.mubr.bf16.mxu0 0
        %6425 = vmatmul.mubr.bf16.gmra.mrb[0].mxu0 %v6051
        %v6426 = vpop.f32.mrb[0].mxu0
        %v6427 = vadd.f32 0.0, %v6426
        %v6428 = vpop.f32.mrb[0].mxu0
        %v6429 = vpop.f32.mrb[0].mxu0
        %v6430 = vadd.f32 0.0, %v6429
        %v6431 = vpop.f32.mrb[0].mxu0
        %6432 = vmatprep.mubr.bf16.mxu0 0
        %6433 = vmatmul.mubr.bf16.gmra.mrb[0].mxu0 %v6054
        %v6434 = vpop.f32.mrb[0].mxu0
        %v6435 = vadd.f32 0.0, %v6434
        %v6436 = vpop.f32.mrb[0].mxu0
        %v6437 = vpop.f32.mrb[0].mxu0
        %v6438 = vadd.f32 0.0, %v6437
        %v6439 = vpop.f32.mrb[0].mxu0
        %6440 = vmatprep.mubr.bf16.mxu0 0
        %6441 = vmatmul.mubr.bf16.gmra.mrb[0].mxu0 %v6057
        %v6442 = vpop.f32.mrb[0].mxu0
        %v6443 = vadd.f32 0.0, %v6442
        %v6444 = vpop.f32.mrb[0].mxu0
        %v6445 = vpop.f32.mrb[0].mxu0
        %v6446 = vadd.f32 0.0, %v6445
        %v6447 = vpop.f32.mrb[0].mxu0
        %6448 = vmatprep.mubr.bf16.mxu0 0
        %6449 = vmatmul.mubr.bf16.gmra.mrb[0].mxu0 %v6060
        %v6450 = vpop.f32.mrb[0].mxu0
        %v6451 = vadd.f32 0.0, %v6450
        %v6452 = vpop.f32.mrb[0].mxu0
        %v6453 = vpop.f32.mrb[0].mxu0
        %v6454 = vadd.f32 0.0, %v6453
        %v6455 = vpop.f32.mrb[0].mxu0
        %6456 = vmatprep.mubr.bf16.mxu0 0
        %6457 = vmatmul.mubr.bf16.gmra.mrb[0].mxu0 %v6063
        %v6458 = vpop.f32.mrb[0].mxu0
        %v6459 = vadd.f32 0.0, %v6458
        %v6460 = vpop.f32.mrb[0].mxu0
        %v6461 = vpop.f32.mrb[0].mxu0
        %v6462 = vadd.f32 0.0, %v6461
        %v6463 = vpop.f32.mrb[0].mxu0
        %6464 = vmatprep.mubr.bf16.mxu0 0
        %6465 = vmatmul.mubr.bf16.gmra.mrb[0].mxu0 %v6066
        %v6466 = vpop.f32.mrb[0].mxu0
        %v6467 = vadd.f32 0.0, %v6466
        %v6468 = vpop.f32.mrb[0].mxu0
        %v6469 = vpop.f32.mrb[0].mxu0
        %v6470 = vadd.f32 0.0, %v6469
        %v6471 = vpop.f32.mrb[0].mxu0
        %6472 = vmatprep.mubr.bf16.mxu0 0
        %6473 = vmatmul.mubr.bf16.gmra.mrb[0].mxu0 %v6069
        %v6474 = vpop.f32.mrb[0].mxu0
        %v6475 = vadd.f32 0.0, %v6474
        %v6476 = vpop.f32.mrb[0].mxu0
        %v6477 = vpop.f32.mrb[0].mxu0
        %v6478 = vadd.f32 0.0, %v6477
        %v6479 = vpop.f32.mrb[0].mxu0
        %6480 = vmatprep.mubr.bf16.mxu0 0
        %6481 = vmatmul.mubr.bf16.gmra.mrb[0].mxu0 %v6072
        %v6482 = vpop.f32.mrb[0].mxu0
        %v6483 = vadd.f32 0.0, %v6482
        %v6484 = vpop.f32.mrb[0].mxu0
        %v6485 = vpop.f32.mrb[0].mxu0
        %v6486 = vadd.f32 0.0, %v6485
        %v6487 = vpop.f32.mrb[0].mxu0
        %6488 = vmatprep.mubr.bf16.mxu0 0
        %6489 = vmatmul.mubr.bf16.gmra.mrb[0].mxu0 %v6075
        %v6490 = vpop.f32.mrb[0].mxu0
        %v6491 = vadd.f32 0.0, %v6490
        %v6492 = vpop.f32.mrb[0].mxu0
        %v6493 = vpop.f32.mrb[0].mxu0
        %v6494 = vadd.f32 0.0, %v6493
        %v6495 = vpop.f32.mrb[0].mxu0
        %6496 = vmatprep.mubr.bf16.mxu0 0
        %6497 = vmatmul.mubr.bf16.gmra.mrb[0].mxu0 %v6078
        %v6498 = vpop.f32.mrb[0].mxu0
        %v6499 = vadd.f32 0.0, %v6498
        %v6500 = vpop.f32.mrb[0].mxu0
        %v6501 = vpop.f32.mrb[0].mxu0
        %v6502 = vadd.f32 0.0, %v6501
        %v6503 = vpop.f32.mrb[0].mxu0
        %6504 = vmatprep.mubr.bf16.mxu0 0
        %6505 = vmatmul.mubr.bf16.gmra.mrb[0].mxu0 %v6081
        %v6506 = vpop.f32.mrb[0].mxu0
        %v6507 = vadd.f32 0.0, %v6506
        %v6508 = vpop.f32.mrb[0].mxu0
        %v6509 = vpop.f32.mrb[0].mxu0
        %v6510 = vadd.f32 0.0, %v6509
        %v6511 = vpop.f32.mrb[0].mxu0
        %6512 = vmatprep.mubr.bf16.mxu0 0
        %6513 = vmatmul.mubr.bf16.gmra.mrb[0].mxu0 %v6084
        %v6514 = vpop.f32.mrb[0].mxu0
        %v6515 = vadd.f32 0.0, %v6514
        %v6516 = vpop.f32.mrb[0].mxu0
        %v6517 = vpop.f32.mrb[0].mxu0
        %v6518 = vadd.f32 0.0, %v6517
        %v6519 = vpop.f32.mrb[0].mxu0
        %6520 = vmatprep.mubr.bf16.mxu0 0
        %6521 = vmatmul.mubr.bf16.gmra.mrb[0].mxu0 %v6087
        %v6522 = vpop.f32.mrb[0].mxu0
        %v6523 = vadd.f32 0.0, %v6522
        %v6524 = vpop.f32.mrb[0].mxu0
        %v6525 = vpop.f32.mrb[0].mxu0
        %v6526 = vadd.f32 0.0, %v6525
        %v6527 = vpop.f32.mrb[0].mxu0
        %6528 = vmatprep.mubr.bf16.mxu0 0
        %6529 = vmatmul.mubr.bf16.gmra.mrb[0].mxu0 %v6090
        %v6530 = vpop.f32.mrb[0].mxu0
        %v6531 = vadd.f32 0.0, %v6530
        %v6532 = vpop.f32.mrb[0].mxu0
        %v6533 = vpop.f32.mrb[0].mxu0
        %v6534 = vadd.f32 0.0, %v6533
        %v6535 = vpop.f32.mrb[0].mxu0
        %6536 = vmatprep.mubr.bf16.mxu0 0
        %6537 = vmatmul.mubr.bf16.gmra.mrb[0].mxu0 %v6093
        %v6538 = vpop.f32.mrb[0].mxu0
        %v6539 = vadd.f32 0.0, %v6538
        %v6540 = vpop.f32.mrb[0].mxu0
        %v6541 = vpop.f32.mrb[0].mxu0
        %v6542 = vadd.f32 0.0, %v6541
        %v6543 = vpop.f32.mrb[0].mxu0
        %6544 = vmatprep.mubr.bf16.mxu0 0
        %6545 = vmatmul.mubr.bf16.gmra.mrb[0].mxu0 %v6096
        %v6546 = vpop.f32.mrb[0].mxu0
        %v6547 = vadd.f32 0.0, %v6546
        %v6548 = vpop.f32.mrb[0].mxu0
        %v6549 = vpop.f32.mrb[0].mxu0
        %v6550 = vadd.f32 0.0, %v6549
        %v6551 = vpop.f32.mrb[0].mxu0
        %6552 = vmatprep.mubr.bf16.mxu0 0
        %6553 = vmatmul.mubr.bf16.gmra.mrb[0].mxu0 %v6099
        %v6554 = vpop.f32.mrb[0].mxu0
        %v6555 = vadd.f32 0.0, %v6554
        %v6556 = vpop.f32.mrb[0].mxu0
        %v6557 = vpop.f32.mrb[0].mxu0
        %v6558 = vadd.f32 0.0, %v6557
        %v6559 = vpop.f32.mrb[0].mxu0
        %6560 = vmatprep.mubr.bf16.mxu0 0
        %6561 = vmatmul.mubr.bf16.gmra.mrb[0].mxu0 %v6102
        %v6562 = vpop.f32.mrb[0].mxu0
        %v6563 = vadd.f32 0.0, %v6562
        %v6564 = vpop.f32.mrb[0].mxu0
        %v6565 = vpop.f32.mrb[0].mxu0
        %v6566 = vadd.f32 0.0, %v6565
        %v6567 = vpop.f32.mrb[0].mxu0
        %6568 = vmatprep.mubr.bf16.mxu0 0
        %6569 = vmatmul.mubr.bf16.gmra.mrb[0].mxu0 %v6105
        %v6570 = vpop.f32.mrb[0].mxu0
        %v6571 = vadd.f32 0.0, %v6570
        %v6572 = vpop.f32.mrb[0].mxu0
        %v6573 = vpop.f32.mrb[0].mxu0
        %v6574 = vadd.f32 0.0, %v6573
        %v6575 = vpop.f32.mrb[0].mxu0
        %6576 = vmatprep.mubr.bf16.mxu0 0
        %6577 = vmatmul.mubr.bf16.gmra.mrb[0].mxu0 %v6108
        %v6578 = vpop.f32.mrb[0].mxu0
        %v6579 = vadd.f32 0.0, %v6578
        %v6580 = vpop.f32.mrb[0].mxu0
        %v6581 = vpop.f32.mrb[0].mxu0
        %v6582 = vadd.f32 0.0, %v6581
        %v6583 = vpop.f32.mrb[0].mxu0
        %6584 = vmatprep.mubr.bf16.mxu0 0
        %6585 = vmatmul.mubr.bf16.gmra.mrb[0].mxu0 %v6111
        %v6586 = vpop.f32.mrb[0].mxu0
        %v6587 = vadd.f32 0.0, %v6586
        %v6588 = vpop.f32.mrb[0].mxu0
        %v6589 = vpop.f32.mrb[0].mxu0
        %v6590 = vadd.f32 0.0, %v6589
        %v6591 = vpop.f32.mrb[0].mxu0
        %6592 = vmatprep.mubr.bf16.mxu0 0
        %6593 = vmatmul.mubr.bf16.gmra.mrb[0].mxu0 %v6114
        %v6594 = vpop.f32.mrb[0].mxu0
        %v6595 = vadd.f32 0.0, %v6594
        %v6596 = vpop.f32.mrb[0].mxu0
        %v6597 = vpop.f32.mrb[0].mxu0
        %v6598 = vadd.f32 0.0, %v6597
        %v6599 = vpop.f32.mrb[0].mxu0
        %6600 = vmatprep.mubr.bf16.mxu0 0
        %6601 = vmatmul.mubr.bf16.gmra.mrb[0].mxu0 %v6117
        %v6602 = vpop.f32.mrb[0].mxu0
        %v6603 = vadd.f32 0.0, %v6602
        %v6604 = vpop.f32.mrb[0].mxu0
        %v6605 = vpop.f32.mrb[0].mxu0
        %v6606 = vadd.f32 0.0, %v6605
        %v6607 = vpop.f32.mrb[0].mxu0
        %6608 = vmatprep.mubr.bf16.mxu0 0
        %6609 = vmatmul.mubr.bf16.gmra.mrb[0].mxu0 %v6120
        %v6610 = vpop.f32.mrb[0].mxu0
        %v6611 = vadd.f32 0.0, %v6610
        %v6612 = vpop.f32.mrb[0].mxu0
        %v6613 = vpop.f32.mrb[0].mxu0
        %v6614 = vadd.f32 0.0, %v6613
        %v6615 = vpop.f32.mrb[0].mxu0
        %6616 = vmatprep.mubr.bf16.mxu0 0
        %6617 = vmatmul.mubr.bf16.gmra.mrb[0].mxu0 %v6123
        %v6618 = vpop.f32.mrb[0].mxu0
        %v6619 = vadd.f32 0.0, %v6618
        %v6620 = vpop.f32.mrb[0].mxu0
        %v6621 = vpop.f32.mrb[0].mxu0
        %v6622 = vadd.f32 0.0, %v6621
        %v6623 = vpop.f32.mrb[0].mxu0
        %6624 = vmatprep.mubr.bf16.mxu0 0
        %6625 = vmatmul.mubr.bf16.gmra.mrb[0].mxu0 %v6126
        %v6626 = vpop.f32.mrb[0].mxu0
        %v6627 = vadd.f32 0.0, %v6626
        %v6628 = vpop.f32.mrb[0].mxu0
        %v6629 = vpop.f32.mrb[0].mxu0
        %v6630 = vadd.f32 0.0, %v6629
        %v6631 = vpop.f32.mrb[0].mxu0
        %6632 = vmatprep.mubr.bf16.mxu0 0
        %6633 = vmatmul.mubr.bf16.gmra.mrb[0].mxu0 %v6129
        %v6634 = vpop.f32.mrb[0].mxu0
        %v6635 = vadd.f32 0.0, %v6634
        %v6636 = vpop.f32.mrb[0].mxu0
        %v6637 = vpop.f32.mrb[0].mxu0
        %v6638 = vadd.f32 0.0, %v6637
        %v6639 = vpop.f32.mrb[0].mxu0
        %6640 = vmatprep.mubr.bf16.mxu0 0
        %6641 = vmatmul.mubr.bf16.gmra.mrb[0].mxu0 %v6132
        %v6642 = vpop.f32.mrb[0].mxu0
        %v6643 = vadd.f32 0.0, %v6642
        %v6644 = vpop.f32.mrb[0].mxu0
        %v6645 = vpop.f32.mrb[0].mxu0
        %v6646 = vadd.f32 0.0, %v6645
        %v6647 = vpop.f32.mrb[0].mxu0
        %6648 = vmatprep.mubr.bf16.mxu0 0
        %6649 = vmatmul.mubr.bf16.gmra.mrb[0].mxu0 %v6135
        %v6650 = vpop.f32.mrb[0].mxu0
        %v6651 = vadd.f32 0.0, %v6650
        %v6652 = vpop.f32.mrb[0].mxu0
        %v6653 = vpop.f32.mrb[0].mxu0
        %v6654 = vadd.f32 0.0, %v6653
        %v6655 = vpop.f32.mrb[0].mxu0
        %6656 = vmatprep.mubr.bf16.mxu0 0
        %6657 = vmatmul.mubr.bf16.gmra.mrb[0].mxu0 %v6138
        %v6658 = vpop.f32.mrb[0].mxu0
        %v6659 = vadd.f32 0.0, %v6658
        %v6660 = vpop.f32.mrb[0].mxu0
        %v6661 = vpop.f32.mrb[0].mxu0
        %v6662 = vadd.f32 0.0, %v6661
        %v6663 = vpop.f32.mrb[0].mxu0
        %6664 = vmatprep.mubr.bf16.mxu0 0
        %6665 = vmatmul.mubr.bf16.gmra.mrb[0].mxu0 %v6141
        %v6666 = vpop.f32.mrb[0].mxu0
        %v6667 = vadd.f32 0.0, %v6666
        %v6668 = vpop.f32.mrb[0].mxu0
        %v6669 = vpop.f32.mrb[0].mxu0
        %v6670 = vadd.f32 0.0, %v6669
        %v6671 = vpop.f32.mrb[0].mxu0
        %6672 = vmatprep.mubr.bf16.mxu0 0
        %6673 = vmatmul.mubr.bf16.gmra.mrb[0].mxu0 %v6144
        %v6674 = vpop.f32.mrb[0].mxu0
        %v6675 = vadd.f32 0.0, %v6674
        %v6676 = vpop.f32.mrb[0].mxu0
        %v6677 = vpop.f32.mrb[0].mxu0
        %v6678 = vadd.f32 0.0, %v6677
        %v6679 = vpop.f32.mrb[0].mxu0
        %6680 = vmatprep.mubr.bf16.mxu0 0
        %6681 = vmatmul.mubr.bf16.gmra.mrb[0].mxu0 %v6147
        %v6682 = vpop.f32.mrb[0].mxu0
        %v6683 = vadd.f32 0.0, %v6682
        %v6684 = vpop.f32.mrb[0].mxu0
        %v6685 = vpop.f32.mrb[0].mxu0
        %v6686 = vadd.f32 0.0, %v6685
        %v6687 = vpop.f32.mrb[0].mxu0
        %6688 = vmatprep.mubr.bf16.mxu0 0
        %6689 = vmatmul.mubr.bf16.gmra.mrb[0].mxu0 %v6150
        %v6690 = vpop.f32.mrb[0].mxu0
        %v6691 = vadd.f32 0.0, %v6690
        %v6692 = vpop.f32.mrb[0].mxu0
        %v6693 = vpop.f32.mrb[0].mxu0
        %v6694 = vadd.f32 0.0, %v6693
        %v6695 = vpop.f32.mrb[0].mxu0
        %6696 = vdwg.mxu0
        %v6697 = vmul.f32 %v6187, 0.25
        %v6698 = vmul.f32 %v6190, 0.25
        %v6699 = vmul.f32 %v6195, 0.25
        %v6700 = vmul.f32 %v6198, 0.25
        %v6701 = vmul.f32 %v6203, 0.25
        %v6702 = vmul.f32 %v6206, 0.25
        %v6703 = vmul.f32 %v6211, 0.25
        %v6704 = vmul.f32 %v6214, 0.25
        %v6705 = vmul.f32 %v6219, 0.25
        %v6706 = vmul.f32 %v6222, 0.25
        %v6707 = vmul.f32 %v6227, 0.25
        %v6708 = vmul.f32 %v6230, 0.25
        %v6709 = vmul.f32 %v6235, 0.25
        %v6710 = vmul.f32 %v6238, 0.25
        %v6711 = vmul.f32 %v6243, 0.25
        %v6712 = vmul.f32 %v6246, 0.25
        %v6713 = vmul.f32 %v6251, 0.25
        %v6714 = vmul.f32 %v6254, 0.25
        %v6715 = vmul.f32 %v6259, 0.25
        %v6716 = vmul.f32 %v6262, 0.25
        %v6717 = vmul.f32 %v6267, 0.25
        %v6718 = vmul.f32 %v6270, 0.25
        %v6719 = vmul.f32 %v6275, 0.25
        %v6720 = vmul.f32 %v6278, 0.25
        %v6721 = vmul.f32 %v6283, 0.25
        %v6722 = vmul.f32 %v6286, 0.25
        %v6723 = vmul.f32 %v6291, 0.25
        %v6724 = vmul.f32 %v6294, 0.25
        %v6725 = vmul.f32 %v6299, 0.25
        %v6726 = vmul.f32 %v6302, 0.25
        %v6727 = vmul.f32 %v6307, 0.25
        %v6728 = vmul.f32 %v6310, 0.25
        %v6729 = vmul.f32 %v6315, 0.25
        %v6730 = vmul.f32 %v6318, 0.25
        %v6731 = vmul.f32 %v6323, 0.25
        %v6732 = vmul.f32 %v6326, 0.25
        %v6733 = vmul.f32 %v6331, 0.25
        %v6734 = vmul.f32 %v6334, 0.25
        %v6735 = vmul.f32 %v6339, 0.25
        %v6736 = vmul.f32 %v6342, 0.25
        %v6737 = vmul.f32 %v6347, 0.25
        %v6738 = vmul.f32 %v6350, 0.25
        %v6739 = vmul.f32 %v6355, 0.25
        %v6740 = vmul.f32 %v6358, 0.25
        %v6741 = vmul.f32 %v6363, 0.25
        %v6742 = vmul.f32 %v6366, 0.25
        %v6743 = vmul.f32 %v6371, 0.25
        %v6744 = vmul.f32 %v6374, 0.25
        %v6745 = vmul.f32 %v6379, 0.25
        %v6746 = vmul.f32 %v6382, 0.25
        %v6747 = vmul.f32 %v6387, 0.25
        %v6748 = vmul.f32 %v6390, 0.25
        %v6749 = vmul.f32 %v6395, 0.25
        %v6750 = vmul.f32 %v6398, 0.25
        %v6751 = vmul.f32 %v6403, 0.25
        %v6752 = vmul.f32 %v6406, 0.25
        %v6753 = vmul.f32 %v6411, 0.25
        %v6754 = vmul.f32 %v6414, 0.25
        %v6755 = vmul.f32 %v6419, 0.25
        %v6756 = vmul.f32 %v6422, 0.25
        %v6757 = vmul.f32 %v6427, 0.25
        %v6758 = vmul.f32 %v6430, 0.25
        %v6759 = vmul.f32 %v6435, 0.25
        %v6760 = vmul.f32 %v6438, 0.25
        %v6761 = vmul.f32 %v6443, 0.25
        %v6762 = vmul.f32 %v6446, 0.25
        %v6763 = vmul.f32 %v6451, 0.25
        %v6764 = vmul.f32 %v6454, 0.25
        %v6765 = vmul.f32 %v6459, 0.25
        %v6766 = vmul.f32 %v6462, 0.25
        %v6767 = vmul.f32 %v6467, 0.25
        %v6768 = vmul.f32 %v6470, 0.25
        %v6769 = vmul.f32 %v6475, 0.25
        %v6770 = vmul.f32 %v6478, 0.25
        %v6771 = vmul.f32 %v6483, 0.25
        %v6772 = vmul.f32 %v6486, 0.25
        %v6773 = vmul.f32 %v6491, 0.25
        %v6774 = vmul.f32 %v6494, 0.25
        %v6775 = vmul.f32 %v6499, 0.25
        %v6776 = vmul.f32 %v6502, 0.25
        %v6777 = vmul.f32 %v6507, 0.25
        %v6778 = vmul.f32 %v6510, 0.25
        %v6779 = vmul.f32 %v6515, 0.25
        %v6780 = vmul.f32 %v6518, 0.25
        %v6781 = vmul.f32 %v6523, 0.25
        %v6782 = vmul.f32 %v6526, 0.25
        %v6783 = vmul.f32 %v6531, 0.25
        %v6784 = vmul.f32 %v6534, 0.25
        %v6785 = vmul.f32 %v6539, 0.25
        %v6786 = vmul.f32 %v6542, 0.25
        %v6787 = vmul.f32 %v6547, 0.25
        %v6788 = vmul.f32 %v6550, 0.25
        %v6789 = vmul.f32 %v6555, 0.25
        %v6790 = vmul.f32 %v6558, 0.25
        %v6791 = vmul.f32 %v6563, 0.25
        %v6792 = vmul.f32 %v6566, 0.25
        %v6793 = vmul.f32 %v6571, 0.25
        %v6794 = vmul.f32 %v6574, 0.25
        %v6795 = vmul.f32 %v6579, 0.25
        %v6796 = vmul.f32 %v6582, 0.25
        %v6797 = vmul.f32 %v6587, 0.25
        %v6798 = vmul.f32 %v6590, 0.25
        %v6799 = vmul.f32 %v6595, 0.25
        %v6800 = vmul.f32 %v6598, 0.25
        %v6801 = vmul.f32 %v6603, 0.25
        %v6802 = vmul.f32 %v6606, 0.25
        %v6803 = vmul.f32 %v6611, 0.25
        %v6804 = vmul.f32 %v6614, 0.25
        %v6805 = vmul.f32 %v6619, 0.25
        %v6806 = vmul.f32 %v6622, 0.25
        %v6807 = vmul.f32 %v6627, 0.25
        %v6808 = vmul.f32 %v6630, 0.25
        %v6809 = vmul.f32 %v6635, 0.25
        %v6810 = vmul.f32 %v6638, 0.25
        %v6811 = vmul.f32 %v6643, 0.25
        %v6812 = vmul.f32 %v6646, 0.25
        %v6813 = vmul.f32 %v6651, 0.25
        %v6814 = vmul.f32 %v6654, 0.25
        %v6815 = vmul.f32 %v6659, 0.25
        %v6816 = vmul.f32 %v6662, 0.25
        %v6817 = vmul.f32 %v6667, 0.25
        %v6818 = vmul.f32 %v6670, 0.25
        %v6819 = vmul.f32 %v6675, 0.25
        %v6820 = vmul.f32 %v6678, 0.25
        %v6821 = vmul.f32 %v6683, 0.25
        %v6822 = vmul.f32 %v6686, 0.25
        %v6823 = vmul.f32 %v6691, 0.25
        %v6824 = vmul.f32 %v6694, 0.25
        %vm6825 = vcmask 31744
        %v6826 = vsel %vm6825, %v6697, -inf
        %v6827 = vsel %vm6825, %v6698, -inf
        %v6828 = vmax.f32 %v6826, %v6827
        %v6829 = vrot.slane %v6828, 4
        %v6830 = vmax.f32 %v6828, %v6829
        %v6831 = vrot.slane %v6830, 2
        %v6832 = vmax.f32 %v6830, %v6831
        %v6833 = vrot.slane %v6832, 1
        %v6834 = vmax.f32 %v6832, %v6833
        %v6835 = vsel %vm6825, %v6699, -inf
        %v6836 = vsel %vm6825, %v6700, -inf
        %v6837 = vmax.f32 %v6835, %v6836
        %v6838 = vrot.slane %v6837, 4
        %v6839 = vmax.f32 %v6837, %v6838
        %v6840 = vrot.slane %v6839, 2
        %v6841 = vmax.f32 %v6839, %v6840
        %v6842 = vrot.slane %v6841, 1
        %v6843 = vmax.f32 %v6841, %v6842
        %v6844 = vsel %vm6825, %v6701, -inf
        %v6845 = vsel %vm6825, %v6702, -inf
        %v6846 = vmax.f32 %v6844, %v6845
        %v6847 = vrot.slane %v6846, 4
        %v6848 = vmax.f32 %v6846, %v6847
        %v6849 = vrot.slane %v6848, 2
        %v6850 = vmax.f32 %v6848, %v6849
        %v6851 = vrot.slane %v6850, 1
        %v6852 = vmax.f32 %v6850, %v6851
        %v6853 = vsel %vm6825, %v6703, -inf
        %v6854 = vsel %vm6825, %v6704, -inf
        %v6855 = vmax.f32 %v6853, %v6854
        %v6856 = vrot.slane %v6855, 4
        %v6857 = vmax.f32 %v6855, %v6856
        %v6858 = vrot.slane %v6857, 2
        %v6859 = vmax.f32 %v6857, %v6858
        %v6860 = vrot.slane %v6859, 1
        %v6861 = vmax.f32 %v6859, %v6860
        %v6862 = vsel %vm6825, %v6705, -inf
        %v6863 = vsel %vm6825, %v6706, -inf
        %v6864 = vmax.f32 %v6862, %v6863
        %v6865 = vrot.slane %v6864, 4
        %v6866 = vmax.f32 %v6864, %v6865
        %v6867 = vrot.slane %v6866, 2
        %v6868 = vmax.f32 %v6866, %v6867
        %v6869 = vrot.slane %v6868, 1
        %v6870 = vmax.f32 %v6868, %v6869
        %v6871 = vsel %vm6825, %v6707, -inf
        %v6872 = vsel %vm6825, %v6708, -inf
        %v6873 = vmax.f32 %v6871, %v6872
        %v6874 = vrot.slane %v6873, 4
        %v6875 = vmax.f32 %v6873, %v6874
        %v6876 = vrot.slane %v6875, 2
        %v6877 = vmax.f32 %v6875, %v6876
        %v6878 = vrot.slane %v6877, 1
        %v6879 = vmax.f32 %v6877, %v6878
        %v6880 = vsel %vm6825, %v6709, -inf
        %v6881 = vsel %vm6825, %v6710, -inf
        %v6882 = vmax.f32 %v6880, %v6881
        %v6883 = vrot.slane %v6882, 4
        %v6884 = vmax.f32 %v6882, %v6883
        %v6885 = vrot.slane %v6884, 2
        %v6886 = vmax.f32 %v6884, %v6885
        %v6887 = vrot.slane %v6886, 1
        %v6888 = vmax.f32 %v6886, %v6887
        %v6889 = vsel %vm6825, %v6711, -inf
        %v6890 = vsel %vm6825, %v6712, -inf
        %v6891 = vmax.f32 %v6889, %v6890
        %v6892 = vrot.slane %v6891, 4
        %v6893 = vmax.f32 %v6891, %v6892
        %v6894 = vrot.slane %v6893, 2
        %v6895 = vmax.f32 %v6893, %v6894
        %v6896 = vrot.slane %v6895, 1
        %v6897 = vmax.f32 %v6895, %v6896
        %v6898 = vsel %vm6825, %v6713, -inf
        %v6899 = vsel %vm6825, %v6714, -inf
        %v6900 = vmax.f32 %v6898, %v6899
        %v6901 = vrot.slane %v6900, 4
        %v6902 = vmax.f32 %v6900, %v6901
        %v6903 = vrot.slane %v6902, 2
        %v6904 = vmax.f32 %v6902, %v6903
        %v6905 = vrot.slane %v6904, 1
        %v6906 = vmax.f32 %v6904, %v6905
        %v6907 = vsel %vm6825, %v6715, -inf
        %v6908 = vsel %vm6825, %v6716, -inf
        %v6909 = vmax.f32 %v6907, %v6908
        %v6910 = vrot.slane %v6909, 4
        %v6911 = vmax.f32 %v6909, %v6910
        %v6912 = vrot.slane %v6911, 2
        %v6913 = vmax.f32 %v6911, %v6912
        %v6914 = vrot.slane %v6913, 1
        %v6915 = vmax.f32 %v6913, %v6914
        %v6916 = vsel %vm6825, %v6717, -inf
        %v6917 = vsel %vm6825, %v6718, -inf
        %v6918 = vmax.f32 %v6916, %v6917
        %v6919 = vrot.slane %v6918, 4
        %v6920 = vmax.f32 %v6918, %v6919
        %v6921 = vrot.slane %v6920, 2
        %v6922 = vmax.f32 %v6920, %v6921
        %v6923 = vrot.slane %v6922, 1
        %v6924 = vmax.f32 %v6922, %v6923
        %v6925 = vsel %vm6825, %v6719, -inf
        %v6926 = vsel %vm6825, %v6720, -inf
        %v6927 = vmax.f32 %v6925, %v6926
        %v6928 = vrot.slane %v6927, 4
        %v6929 = vmax.f32 %v6927, %v6928
        %v6930 = vrot.slane %v6929, 2
        %v6931 = vmax.f32 %v6929, %v6930
        %v6932 = vrot.slane %v6931, 1
        %v6933 = vmax.f32 %v6931, %v6932
        %v6934 = vsel %vm6825, %v6721, -inf
        %v6935 = vsel %vm6825, %v6722, -inf
        %v6936 = vmax.f32 %v6934, %v6935
        %v6937 = vrot.slane %v6936, 4
        %v6938 = vmax.f32 %v6936, %v6937
        %v6939 = vrot.slane %v6938, 2
        %v6940 = vmax.f32 %v6938, %v6939
        %v6941 = vrot.slane %v6940, 1
        %v6942 = vmax.f32 %v6940, %v6941
        %v6943 = vsel %vm6825, %v6723, -inf
        %v6944 = vsel %vm6825, %v6724, -inf
        %v6945 = vmax.f32 %v6943, %v6944
        %v6946 = vrot.slane %v6945, 4
        %v6947 = vmax.f32 %v6945, %v6946
        %v6948 = vrot.slane %v6947, 2
        %v6949 = vmax.f32 %v6947, %v6948
        %v6950 = vrot.slane %v6949, 1
        %v6951 = vmax.f32 %v6949, %v6950
        %v6952 = vsel %vm6825, %v6725, -inf
        %v6953 = vsel %vm6825, %v6726, -inf
        %v6954 = vmax.f32 %v6952, %v6953
        %v6955 = vrot.slane %v6954, 4
        %v6956 = vmax.f32 %v6954, %v6955
        %v6957 = vrot.slane %v6956, 2
        %v6958 = vmax.f32 %v6956, %v6957
        %v6959 = vrot.slane %v6958, 1
        %v6960 = vmax.f32 %v6958, %v6959
        %v6961 = vsel %vm6825, %v6727, -inf
        %v6962 = vsel %vm6825, %v6728, -inf
        %v6963 = vmax.f32 %v6961, %v6962
        %v6964 = vrot.slane %v6963, 4
        %v6965 = vmax.f32 %v6963, %v6964
        %v6966 = vrot.slane %v6965, 2
        %v6967 = vmax.f32 %v6965, %v6966
        %v6968 = vrot.slane %v6967, 1
        %v6969 = vmax.f32 %v6967, %v6968
        %v6970 = vsel %vm6825, %v6729, -inf
        %v6971 = vsel %vm6825, %v6730, -inf
        %v6972 = vmax.f32 %v6970, %v6971
        %v6973 = vrot.slane %v6972, 4
        %v6974 = vmax.f32 %v6972, %v6973
        %v6975 = vrot.slane %v6974, 2
        %v6976 = vmax.f32 %v6974, %v6975
        %v6977 = vrot.slane %v6976, 1
        %v6978 = vmax.f32 %v6976, %v6977
        %v6979 = vsel %vm6825, %v6731, -inf
        %v6980 = vsel %vm6825, %v6732, -inf
        %v6981 = vmax.f32 %v6979, %v6980
        %v6982 = vrot.slane %v6981, 4
        %v6983 = vmax.f32 %v6981, %v6982
        %v6984 = vrot.slane %v6983, 2
        %v6985 = vmax.f32 %v6983, %v6984
        %v6986 = vrot.slane %v6985, 1
        %v6987 = vmax.f32 %v6985, %v6986
        %v6988 = vsel %vm6825, %v6733, -inf
        %v6989 = vsel %vm6825, %v6734, -inf
        %v6990 = vmax.f32 %v6988, %v6989
        %v6991 = vrot.slane %v6990, 4
        %v6992 = vmax.f32 %v6990, %v6991
        %v6993 = vrot.slane %v6992, 2
        %v6994 = vmax.f32 %v6992, %v6993
        %v6995 = vrot.slane %v6994, 1
        %v6996 = vmax.f32 %v6994, %v6995
        %v6997 = vsel %vm6825, %v6735, -inf
        %v6998 = vsel %vm6825, %v6736, -inf
        %v6999 = vmax.f32 %v6997, %v6998
        %v7000 = vrot.slane %v6999, 4
        %v7001 = vmax.f32 %v6999, %v7000
        %v7002 = vrot.slane %v7001, 2
        %v7003 = vmax.f32 %v7001, %v7002
        %v7004 = vrot.slane %v7003, 1
        %v7005 = vmax.f32 %v7003, %v7004
        %v7006 = vsel %vm6825, %v6737, -inf
        %v7007 = vsel %vm6825, %v6738, -inf
        %v7008 = vmax.f32 %v7006, %v7007
        %v7009 = vrot.slane %v7008, 4
        %v7010 = vmax.f32 %v7008, %v7009
        %v7011 = vrot.slane %v7010, 2
        %v7012 = vmax.f32 %v7010, %v7011
        %v7013 = vrot.slane %v7012, 1
        %v7014 = vmax.f32 %v7012, %v7013
        %v7015 = vsel %vm6825, %v6739, -inf
        %v7016 = vsel %vm6825, %v6740, -inf
        %v7017 = vmax.f32 %v7015, %v7016
        %v7018 = vrot.slane %v7017, 4
        %v7019 = vmax.f32 %v7017, %v7018
        %v7020 = vrot.slane %v7019, 2
        %v7021 = vmax.f32 %v7019, %v7020
        %v7022 = vrot.slane %v7021, 1
        %v7023 = vmax.f32 %v7021, %v7022
        %v7024 = vsel %vm6825, %v6741, -inf
        %v7025 = vsel %vm6825, %v6742, -inf
        %v7026 = vmax.f32 %v7024, %v7025
        %v7027 = vrot.slane %v7026, 4
        %v7028 = vmax.f32 %v7026, %v7027
        %v7029 = vrot.slane %v7028, 2
        %v7030 = vmax.f32 %v7028, %v7029
        %v7031 = vrot.slane %v7030, 1
        %v7032 = vmax.f32 %v7030, %v7031
        %v7033 = vsel %vm6825, %v6743, -inf
        %v7034 = vsel %vm6825, %v6744, -inf
        %v7035 = vmax.f32 %v7033, %v7034
        %v7036 = vrot.slane %v7035, 4
        %v7037 = vmax.f32 %v7035, %v7036
        %v7038 = vrot.slane %v7037, 2
        %v7039 = vmax.f32 %v7037, %v7038
        %v7040 = vrot.slane %v7039, 1
        %v7041 = vmax.f32 %v7039, %v7040
        %v7042 = vsel %vm6825, %v6745, -inf
        %v7043 = vsel %vm6825, %v6746, -inf
        %v7044 = vmax.f32 %v7042, %v7043
        %v7045 = vrot.slane %v7044, 4
        %v7046 = vmax.f32 %v7044, %v7045
        %v7047 = vrot.slane %v7046, 2
        %v7048 = vmax.f32 %v7046, %v7047
        %v7049 = vrot.slane %v7048, 1
        %v7050 = vmax.f32 %v7048, %v7049
        %v7051 = vsel %vm6825, %v6747, -inf
        %v7052 = vsel %vm6825, %v6748, -inf
        %v7053 = vmax.f32 %v7051, %v7052
        %v7054 = vrot.slane %v7053, 4
        %v7055 = vmax.f32 %v7053, %v7054
        %v7056 = vrot.slane %v7055, 2
        %v7057 = vmax.f32 %v7055, %v7056
        %v7058 = vrot.slane %v7057, 1
        %v7059 = vmax.f32 %v7057, %v7058
        %v7060 = vsel %vm6825, %v6749, -inf
        %v7061 = vsel %vm6825, %v6750, -inf
        %v7062 = vmax.f32 %v7060, %v7061
        %v7063 = vrot.slane %v7062, 4
        %v7064 = vmax.f32 %v7062, %v7063
        %v7065 = vrot.slane %v7064, 2
        %v7066 = vmax.f32 %v7064, %v7065
        %v7067 = vrot.slane %v7066, 1
        %v7068 = vmax.f32 %v7066, %v7067
        %v7069 = vsel %vm6825, %v6751, -inf
        %v7070 = vsel %vm6825, %v6752, -inf
        %v7071 = vmax.f32 %v7069, %v7070
        %v7072 = vrot.slane %v7071, 4
        %v7073 = vmax.f32 %v7071, %v7072
        %v7074 = vrot.slane %v7073, 2
        %v7075 = vmax.f32 %v7073, %v7074
        %v7076 = vrot.slane %v7075, 1
        %v7077 = vmax.f32 %v7075, %v7076
        %v7078 = vsel %vm6825, %v6753, -inf
        %v7079 = vsel %vm6825, %v6754, -inf
        %v7080 = vmax.f32 %v7078, %v7079
        %v7081 = vrot.slane %v7080, 4
        %v7082 = vmax.f32 %v7080, %v7081
        %v7083 = vrot.slane %v7082, 2
        %v7084 = vmax.f32 %v7082, %v7083
        %v7085 = vrot.slane %v7084, 1
        %v7086 = vmax.f32 %v7084, %v7085
        %v7087 = vsel %vm6825, %v6755, -inf
        %v7088 = vsel %vm6825, %v6756, -inf
        %v7089 = vmax.f32 %v7087, %v7088
        %v7090 = vrot.slane %v7089, 4
        %v7091 = vmax.f32 %v7089, %v7090
        %v7092 = vrot.slane %v7091, 2
        %v7093 = vmax.f32 %v7091, %v7092
        %v7094 = vrot.slane %v7093, 1
        %v7095 = vmax.f32 %v7093, %v7094
        %v7096 = vsel %vm6825, %v6757, -inf
        %v7097 = vsel %vm6825, %v6758, -inf
        %v7098 = vmax.f32 %v7096, %v7097
        %v7099 = vrot.slane %v7098, 4
        %v7100 = vmax.f32 %v7098, %v7099
        %v7101 = vrot.slane %v7100, 2
        %v7102 = vmax.f32 %v7100, %v7101
        %v7103 = vrot.slane %v7102, 1
        %v7104 = vmax.f32 %v7102, %v7103
        %v7105 = vsel %vm6825, %v6759, -inf
        %v7106 = vsel %vm6825, %v6760, -inf
        %v7107 = vmax.f32 %v7105, %v7106
        %v7108 = vrot.slane %v7107, 4
        %v7109 = vmax.f32 %v7107, %v7108
        %v7110 = vrot.slane %v7109, 2
        %v7111 = vmax.f32 %v7109, %v7110
        %v7112 = vrot.slane %v7111, 1
        %v7113 = vmax.f32 %v7111, %v7112
        %v7114 = vsel %vm6825, %v6761, -inf
        %v7115 = vsel %vm6825, %v6762, -inf
        %v7116 = vmax.f32 %v7114, %v7115
        %v7117 = vrot.slane %v7116, 4
        %v7118 = vmax.f32 %v7116, %v7117
        %v7119 = vrot.slane %v7118, 2
        %v7120 = vmax.f32 %v7118, %v7119
        %v7121 = vrot.slane %v7120, 1
        %v7122 = vmax.f32 %v7120, %v7121
        %v7123 = vsel %vm6825, %v6763, -inf
        %v7124 = vsel %vm6825, %v6764, -inf
        %v7125 = vmax.f32 %v7123, %v7124
        %v7126 = vrot.slane %v7125, 4
        %v7127 = vmax.f32 %v7125, %v7126
        %v7128 = vrot.slane %v7127, 2
        %v7129 = vmax.f32 %v7127, %v7128
        %v7130 = vrot.slane %v7129, 1
        %v7131 = vmax.f32 %v7129, %v7130
        %v7132 = vsel %vm6825, %v6765, -inf
        %v7133 = vsel %vm6825, %v6766, -inf
        %v7134 = vmax.f32 %v7132, %v7133
        %v7135 = vrot.slane %v7134, 4
        %v7136 = vmax.f32 %v7134, %v7135
        %v7137 = vrot.slane %v7136, 2
        %v7138 = vmax.f32 %v7136, %v7137
        %v7139 = vrot.slane %v7138, 1
        %v7140 = vmax.f32 %v7138, %v7139
        %v7141 = vsel %vm6825, %v6767, -inf
        %v7142 = vsel %vm6825, %v6768, -inf
        %v7143 = vmax.f32 %v7141, %v7142
        %v7144 = vrot.slane %v7143, 4
        %v7145 = vmax.f32 %v7143, %v7144
        %v7146 = vrot.slane %v7145, 2
        %v7147 = vmax.f32 %v7145, %v7146
        %v7148 = vrot.slane %v7147, 1
        %v7149 = vmax.f32 %v7147, %v7148
        %v7150 = vsel %vm6825, %v6769, -inf
        %v7151 = vsel %vm6825, %v6770, -inf
        %v7152 = vmax.f32 %v7150, %v7151
        %v7153 = vrot.slane %v7152, 4
        %v7154 = vmax.f32 %v7152, %v7153
        %v7155 = vrot.slane %v7154, 2
        %v7156 = vmax.f32 %v7154, %v7155
        %v7157 = vrot.slane %v7156, 1
        %v7158 = vmax.f32 %v7156, %v7157
        %v7159 = vsel %vm6825, %v6771, -inf
        %v7160 = vsel %vm6825, %v6772, -inf
        %v7161 = vmax.f32 %v7159, %v7160
        %v7162 = vrot.slane %v7161, 4
        %v7163 = vmax.f32 %v7161, %v7162
        %v7164 = vrot.slane %v7163, 2
        %v7165 = vmax.f32 %v7163, %v7164
        %v7166 = vrot.slane %v7165, 1
        %v7167 = vmax.f32 %v7165, %v7166
        %v7168 = vsel %vm6825, %v6773, -inf
        %v7169 = vsel %vm6825, %v6774, -inf
        %v7170 = vmax.f32 %v7168, %v7169
        %v7171 = vrot.slane %v7170, 4
        %v7172 = vmax.f32 %v7170, %v7171
        %v7173 = vrot.slane %v7172, 2
        %v7174 = vmax.f32 %v7172, %v7173
        %v7175 = vrot.slane %v7174, 1
        %v7176 = vmax.f32 %v7174, %v7175
        %v7177 = vsel %vm6825, %v6775, -inf
        %v7178 = vsel %vm6825, %v6776, -inf
        %v7179 = vmax.f32 %v7177, %v7178
        %v7180 = vrot.slane %v7179, 4
        %v7181 = vmax.f32 %v7179, %v7180
        %v7182 = vrot.slane %v7181, 2
        %v7183 = vmax.f32 %v7181, %v7182
        %v7184 = vrot.slane %v7183, 1
        %v7185 = vmax.f32 %v7183, %v7184
        %v7186 = vsel %vm6825, %v6777, -inf
        %v7187 = vsel %vm6825, %v6778, -inf
        %v7188 = vmax.f32 %v7186, %v7187
        %v7189 = vrot.slane %v7188, 4
        %v7190 = vmax.f32 %v7188, %v7189
        %v7191 = vrot.slane %v7190, 2
        %v7192 = vmax.f32 %v7190, %v7191
        %v7193 = vrot.slane %v7192, 1
        %v7194 = vmax.f32 %v7192, %v7193
        %v7195 = vsel %vm6825, %v6779, -inf
        %v7196 = vsel %vm6825, %v6780, -inf
        %v7197 = vmax.f32 %v7195, %v7196
        %v7198 = vrot.slane %v7197, 4
        %v7199 = vmax.f32 %v7197, %v7198
        %v7200 = vrot.slane %v7199, 2
        %v7201 = vmax.f32 %v7199, %v7200
        %v7202 = vrot.slane %v7201, 1
        %v7203 = vmax.f32 %v7201, %v7202
        %v7204 = vsel %vm6825, %v6781, -inf
        %v7205 = vsel %vm6825, %v6782, -inf
        %v7206 = vmax.f32 %v7204, %v7205
        %v7207 = vrot.slane %v7206, 4
        %v7208 = vmax.f32 %v7206, %v7207
        %v7209 = vrot.slane %v7208, 2
        %v7210 = vmax.f32 %v7208, %v7209
        %v7211 = vrot.slane %v7210, 1
        %v7212 = vmax.f32 %v7210, %v7211
        %v7213 = vsel %vm6825, %v6783, -inf
        %v7214 = vsel %vm6825, %v6784, -inf
        %v7215 = vmax.f32 %v7213, %v7214
        %v7216 = vrot.slane %v7215, 4
        %v7217 = vmax.f32 %v7215, %v7216
        %v7218 = vrot.slane %v7217, 2
        %v7219 = vmax.f32 %v7217, %v7218
        %v7220 = vrot.slane %v7219, 1
        %v7221 = vmax.f32 %v7219, %v7220
        %v7222 = vsel %vm6825, %v6785, -inf
        %v7223 = vsel %vm6825, %v6786, -inf
        %v7224 = vmax.f32 %v7222, %v7223
        %v7225 = vrot.slane %v7224, 4
        %v7226 = vmax.f32 %v7224, %v7225
        %v7227 = vrot.slane %v7226, 2
        %v7228 = vmax.f32 %v7226, %v7227
        %v7229 = vrot.slane %v7228, 1
        %v7230 = vmax.f32 %v7228, %v7229
        %v7231 = vsel %vm6825, %v6787, -inf
        %v7232 = vsel %vm6825, %v6788, -inf
        %v7233 = vmax.f32 %v7231, %v7232
        %v7234 = vrot.slane %v7233, 4
        %v7235 = vmax.f32 %v7233, %v7234
        %v7236 = vrot.slane %v7235, 2
        %v7237 = vmax.f32 %v7235, %v7236
        %v7238 = vrot.slane %v7237, 1
        %v7239 = vmax.f32 %v7237, %v7238
        %v7240 = vsel %vm6825, %v6789, -inf
        %v7241 = vsel %vm6825, %v6790, -inf
        %v7242 = vmax.f32 %v7240, %v7241
        %v7243 = vrot.slane %v7242, 4
        %v7244 = vmax.f32 %v7242, %v7243
        %v7245 = vrot.slane %v7244, 2
        %v7246 = vmax.f32 %v7244, %v7245
        %v7247 = vrot.slane %v7246, 1
        %v7248 = vmax.f32 %v7246, %v7247
        %v7249 = vsel %vm6825, %v6791, -inf
        %v7250 = vsel %vm6825, %v6792, -inf
        %v7251 = vmax.f32 %v7249, %v7250
        %v7252 = vrot.slane %v7251, 4
        %v7253 = vmax.f32 %v7251, %v7252
        %v7254 = vrot.slane %v7253, 2
        %v7255 = vmax.f32 %v7253, %v7254
        %v7256 = vrot.slane %v7255, 1
        %v7257 = vmax.f32 %v7255, %v7256
        %v7258 = vsel %vm6825, %v6793, -inf
        %v7259 = vsel %vm6825, %v6794, -inf
        %v7260 = vmax.f32 %v7258, %v7259
        %v7261 = vrot.slane %v7260, 4
        %v7262 = vmax.f32 %v7260, %v7261
        %v7263 = vrot.slane %v7262, 2
        %v7264 = vmax.f32 %v7262, %v7263
        %v7265 = vrot.slane %v7264, 1
        %v7266 = vmax.f32 %v7264, %v7265
        %v7267 = vsel %vm6825, %v6795, -inf
        %v7268 = vsel %vm6825, %v6796, -inf
        %v7269 = vmax.f32 %v7267, %v7268
        %v7270 = vrot.slane %v7269, 4
        %v7271 = vmax.f32 %v7269, %v7270
        %v7272 = vrot.slane %v7271, 2
        %v7273 = vmax.f32 %v7271, %v7272
        %v7274 = vrot.slane %v7273, 1
        %v7275 = vmax.f32 %v7273, %v7274
        %v7276 = vsel %vm6825, %v6797, -inf
        %v7277 = vsel %vm6825, %v6798, -inf
        %v7278 = vmax.f32 %v7276, %v7277
        %v7279 = vrot.slane %v7278, 4
        %v7280 = vmax.f32 %v7278, %v7279
        %v7281 = vrot.slane %v7280, 2
        %v7282 = vmax.f32 %v7280, %v7281
        %v7283 = vrot.slane %v7282, 1
        %v7284 = vmax.f32 %v7282, %v7283
        %v7285 = vsel %vm6825, %v6799, -inf
        %v7286 = vsel %vm6825, %v6800, -inf
        %v7287 = vmax.f32 %v7285, %v7286
        %v7288 = vrot.slane %v7287, 4
        %v7289 = vmax.f32 %v7287, %v7288
        %v7290 = vrot.slane %v7289, 2
        %v7291 = vmax.f32 %v7289, %v7290
        %v7292 = vrot.slane %v7291, 1
        %v7293 = vmax.f32 %v7291, %v7292
        %v7294 = vsel %vm6825, %v6801, -inf
        %v7295 = vsel %vm6825, %v6802, -inf
        %v7296 = vmax.f32 %v7294, %v7295
        %v7297 = vrot.slane %v7296, 4
        %v7298 = vmax.f32 %v7296, %v7297
        %v7299 = vrot.slane %v7298, 2
        %v7300 = vmax.f32 %v7298, %v7299
        %v7301 = vrot.slane %v7300, 1
        %v7302 = vmax.f32 %v7300, %v7301
        %v7303 = vsel %vm6825, %v6803, -inf
        %v7304 = vsel %vm6825, %v6804, -inf
        %v7305 = vmax.f32 %v7303, %v7304
        %v7306 = vrot.slane %v7305, 4
        %v7307 = vmax.f32 %v7305, %v7306
        %v7308 = vrot.slane %v7307, 2
        %v7309 = vmax.f32 %v7307, %v7308
        %v7310 = vrot.slane %v7309, 1
        %v7311 = vmax.f32 %v7309, %v7310
        %v7312 = vsel %vm6825, %v6805, -inf
        %v7313 = vsel %vm6825, %v6806, -inf
        %v7314 = vmax.f32 %v7312, %v7313
        %v7315 = vrot.slane %v7314, 4
        %v7316 = vmax.f32 %v7314, %v7315
        %v7317 = vrot.slane %v7316, 2
        %v7318 = vmax.f32 %v7316, %v7317
        %v7319 = vrot.slane %v7318, 1
        %v7320 = vmax.f32 %v7318, %v7319
        %v7321 = vsel %vm6825, %v6807, -inf
        %v7322 = vsel %vm6825, %v6808, -inf
        %v7323 = vmax.f32 %v7321, %v7322
        %v7324 = vrot.slane %v7323, 4
        %v7325 = vmax.f32 %v7323, %v7324
        %v7326 = vrot.slane %v7325, 2
        %v7327 = vmax.f32 %v7325, %v7326
        %v7328 = vrot.slane %v7327, 1
        %v7329 = vmax.f32 %v7327, %v7328
        %v7330 = vsel %vm6825, %v6809, -inf
        %v7331 = vsel %vm6825, %v6810, -inf
        %v7332 = vmax.f32 %v7330, %v7331
        %v7333 = vrot.slane %v7332, 4
        %v7334 = vmax.f32 %v7332, %v7333
        %v7335 = vrot.slane %v7334, 2
        %v7336 = vmax.f32 %v7334, %v7335
        %v7337 = vrot.slane %v7336, 1
        %v7338 = vmax.f32 %v7336, %v7337
        %v7339 = vsel %vm6825, %v6811, -inf
        %v7340 = vsel %vm6825, %v6812, -inf
        %v7341 = vmax.f32 %v7339, %v7340
        %v7342 = vrot.slane %v7341, 4
        %v7343 = vmax.f32 %v7341, %v7342
        %v7344 = vrot.slane %v7343, 2
        %v7345 = vmax.f32 %v7343, %v7344
        %v7346 = vrot.slane %v7345, 1
        %v7347 = vmax.f32 %v7345, %v7346
        %v7348 = vsel %vm6825, %v6813, -inf
        %v7349 = vsel %vm6825, %v6814, -inf
        %v7350 = vmax.f32 %v7348, %v7349
        %v7351 = vrot.slane %v7350, 4
        %v7352 = vmax.f32 %v7350, %v7351
        %v7353 = vrot.slane %v7352, 2
        %v7354 = vmax.f32 %v7352, %v7353
        %v7355 = vrot.slane %v7354, 1
        %v7356 = vmax.f32 %v7354, %v7355
        %v7357 = vsel %vm6825, %v6815, -inf
        %v7358 = vsel %vm6825, %v6816, -inf
        %v7359 = vmax.f32 %v7357, %v7358
        %v7360 = vrot.slane %v7359, 4
        %v7361 = vmax.f32 %v7359, %v7360
        %v7362 = vrot.slane %v7361, 2
        %v7363 = vmax.f32 %v7361, %v7362
        %v7364 = vrot.slane %v7363, 1
        %v7365 = vmax.f32 %v7363, %v7364
        %v7366 = vsel %vm6825, %v6817, -inf
        %v7367 = vsel %vm6825, %v6818, -inf
        %v7368 = vmax.f32 %v7366, %v7367
        %v7369 = vrot.slane %v7368, 4
        %v7370 = vmax.f32 %v7368, %v7369
        %v7371 = vrot.slane %v7370, 2
        %v7372 = vmax.f32 %v7370, %v7371
        %v7373 = vrot.slane %v7372, 1
        %v7374 = vmax.f32 %v7372, %v7373
        %v7375 = vsel %vm6825, %v6819, -inf
        %v7376 = vsel %vm6825, %v6820, -inf
        %v7377 = vmax.f32 %v7375, %v7376
        %v7378 = vrot.slane %v7377, 4
        %v7379 = vmax.f32 %v7377, %v7378
        %v7380 = vrot.slane %v7379, 2
        %v7381 = vmax.f32 %v7379, %v7380
        %v7382 = vrot.slane %v7381, 1
        %v7383 = vmax.f32 %v7381, %v7382
        %v7384 = vsel %vm6825, %v6821, -inf
        %v7385 = vsel %vm6825, %v6822, -inf
        %v7386 = vmax.f32 %v7384, %v7385
        %v7387 = vrot.slane %v7386, 4
        %v7388 = vmax.f32 %v7386, %v7387
        %v7389 = vrot.slane %v7388, 2
        %v7390 = vmax.f32 %v7388, %v7389
        %v7391 = vrot.slane %v7390, 1
        %v7392 = vmax.f32 %v7390, %v7391
        %v7393 = vsel %vm6825, %v6823, -inf
        %v7394 = vsel %vm6825, %v6824, -inf
        %v7395 = vmax.f32 %v7393, %v7394
        %v7396 = vrot.slane %v7395, 4
        %v7397 = vmax.f32 %v7395, %v7396
        %v7398 = vrot.slane %v7397, 2
        %v7399 = vmax.f32 %v7397, %v7398
        %v7400 = vrot.slane %v7399, 1
        %v7401 = vmax.f32 %v7399, %v7400
        %v7402 = vsub.f32 %v6697, %v6834
        %v7403 = vsub.f32 %v6698, %v6834
        %v7404 = vsub.f32 %v6699, %v6843
        %v7405 = vsub.f32 %v6700, %v6843
        %v7406 = vsub.f32 %v6701, %v6852
        %v7407 = vsub.f32 %v6702, %v6852
        %v7408 = vsub.f32 %v6703, %v6861
        %v7409 = vsub.f32 %v6704, %v6861
        %v7410 = vsub.f32 %v6705, %v6870
        %v7411 = vsub.f32 %v6706, %v6870
        %v7412 = vsub.f32 %v6707, %v6879
        %v7413 = vsub.f32 %v6708, %v6879
        %v7414 = vsub.f32 %v6709, %v6888
        %v7415 = vsub.f32 %v6710, %v6888
        %v7416 = vsub.f32 %v6711, %v6897
        %v7417 = vsub.f32 %v6712, %v6897
        %v7418 = vsub.f32 %v6713, %v6906
        %v7419 = vsub.f32 %v6714, %v6906
        %v7420 = vsub.f32 %v6715, %v6915
        %v7421 = vsub.f32 %v6716, %v6915
        %v7422 = vsub.f32 %v6717, %v6924
        %v7423 = vsub.f32 %v6718, %v6924
        %v7424 = vsub.f32 %v6719, %v6933
        %v7425 = vsub.f32 %v6720, %v6933
        %v7426 = vsub.f32 %v6721, %v6942
        %v7427 = vsub.f32 %v6722, %v6942
        %v7428 = vsub.f32 %v6723, %v6951
        %v7429 = vsub.f32 %v6724, %v6951
        %v7430 = vsub.f32 %v6725, %v6960
        %v7431 = vsub.f32 %v6726, %v6960
        %v7432 = vsub.f32 %v6727, %v6969
        %v7433 = vsub.f32 %v6728, %v6969
        %v7434 = vsub.f32 %v6729, %v6978
        %v7435 = vsub.f32 %v6730, %v6978
        %v7436 = vsub.f32 %v6731, %v6987
        %v7437 = vsub.f32 %v6732, %v6987
        %v7438 = vsub.f32 %v6733, %v6996
        %v7439 = vsub.f32 %v6734, %v6996
        %v7440 = vsub.f32 %v6735, %v7005
        %v7441 = vsub.f32 %v6736, %v7005
        %v7442 = vsub.f32 %v6737, %v7014
        %v7443 = vsub.f32 %v6738, %v7014
        %v7444 = vsub.f32 %v6739, %v7023
        %v7445 = vsub.f32 %v6740, %v7023
        %v7446 = vsub.f32 %v6741, %v7032
        %v7447 = vsub.f32 %v6742, %v7032
        %v7448 = vsub.f32 %v6743, %v7041
        %v7449 = vsub.f32 %v6744, %v7041
        %v7450 = vsub.f32 %v6745, %v7050
        %v7451 = vsub.f32 %v6746, %v7050
        %v7452 = vsub.f32 %v6747, %v7059
        %v7453 = vsub.f32 %v6748, %v7059
        %v7454 = vsub.f32 %v6749, %v7068
        %v7455 = vsub.f32 %v6750, %v7068
        %v7456 = vsub.f32 %v6751, %v7077
        %v7457 = vsub.f32 %v6752, %v7077
        %v7458 = vsub.f32 %v6753, %v7086
        %v7459 = vsub.f32 %v6754, %v7086
        %v7460 = vsub.f32 %v6755, %v7095
        %v7461 = vsub.f32 %v6756, %v7095
        %v7462 = vsub.f32 %v6757, %v7104
        %v7463 = vsub.f32 %v6758, %v7104
        %v7464 = vsub.f32 %v6759, %v7113
        %v7465 = vsub.f32 %v6760, %v7113
        %v7466 = vsub.f32 %v6761, %v7122
        %v7467 = vsub.f32 %v6762, %v7122
        %v7468 = vsub.f32 %v6763, %v7131
        %v7469 = vsub.f32 %v6764, %v7131
        %v7470 = vsub.f32 %v6765, %v7140
        %v7471 = vsub.f32 %v6766, %v7140
        %v7472 = vsub.f32 %v6767, %v7149
        %v7473 = vsub.f32 %v6768, %v7149
        %v7474 = vsub.f32 %v6769, %v7158
        %v7475 = vsub.f32 %v6770, %v7158
        %v7476 = vsub.f32 %v6771, %v7167
        %v7477 = vsub.f32 %v6772, %v7167
        %v7478 = vsub.f32 %v6773, %v7176
        %v7479 = vsub.f32 %v6774, %v7176
        %v7480 = vsub.f32 %v6775, %v7185
        %v7481 = vsub.f32 %v6776, %v7185
        %v7482 = vsub.f32 %v6777, %v7194
        %v7483 = vsub.f32 %v6778, %v7194
        %v7484 = vsub.f32 %v6779, %v7203
        %v7485 = vsub.f32 %v6780, %v7203
        %v7486 = vsub.f32 %v6781, %v7212
        %v7487 = vsub.f32 %v6782, %v7212
        %v7488 = vsub.f32 %v6783, %v7221
        %v7489 = vsub.f32 %v6784, %v7221
        %v7490 = vsub.f32 %v6785, %v7230
        %v7491 = vsub.f32 %v6786, %v7230
        %v7492 = vsub.f32 %v6787, %v7239
        %v7493 = vsub.f32 %v6788, %v7239
        %v7494 = vsub.f32 %v6789, %v7248
        %v7495 = vsub.f32 %v6790, %v7248
        %v7496 = vsub.f32 %v6791, %v7257
        %v7497 = vsub.f32 %v6792, %v7257
        %v7498 = vsub.f32 %v6793, %v7266
        %v7499 = vsub.f32 %v6794, %v7266
        %v7500 = vsub.f32 %v6795, %v7275
        %v7501 = vsub.f32 %v6796, %v7275
        %v7502 = vsub.f32 %v6797, %v7284
        %v7503 = vsub.f32 %v6798, %v7284
        %v7504 = vsub.f32 %v6799, %v7293
        %v7505 = vsub.f32 %v6800, %v7293
        %v7506 = vsub.f32 %v6801, %v7302
        %v7507 = vsub.f32 %v6802, %v7302
        %v7508 = vsub.f32 %v6803, %v7311
        %v7509 = vsub.f32 %v6804, %v7311
        %v7510 = vsub.f32 %v6805, %v7320
        %v7511 = vsub.f32 %v6806, %v7320
        %v7512 = vsub.f32 %v6807, %v7329
        %v7513 = vsub.f32 %v6808, %v7329
        %v7514 = vsub.f32 %v6809, %v7338
        %v7515 = vsub.f32 %v6810, %v7338
        %v7516 = vsub.f32 %v6811, %v7347
        %v7517 = vsub.f32 %v6812, %v7347
        %v7518 = vsub.f32 %v6813, %v7356
        %v7519 = vsub.f32 %v6814, %v7356
        %v7520 = vsub.f32 %v6815, %v7365
        %v7521 = vsub.f32 %v6816, %v7365
        %v7522 = vsub.f32 %v6817, %v7374
        %v7523 = vsub.f32 %v6818, %v7374
        %v7524 = vsub.f32 %v6819, %v7383
        %v7525 = vsub.f32 %v6820, %v7383
        %v7526 = vsub.f32 %v6821, %v7392
        %v7527 = vsub.f32 %v6822, %v7392
        %v7528 = vsub.f32 %v6823, %v7401
        %v7529 = vsub.f32 %v6824, %v7401
        %v7530 = vmul.f32 %v7402, 1.442695
        %v7531 = vpow.pop %v7530
        %v7532 = vmul.f32 %v7403, 1.442695
        %v7533 = vpow.pop %v7532
        %v7534 = vmul.f32 %v7404, 1.442695
        %v7535 = vpow.pop %v7534
        %v7536 = vmul.f32 %v7405, 1.442695
        %v7537 = vpow.pop %v7536
        %v7538 = vmul.f32 %v7406, 1.442695
        %v7539 = vpow.pop %v7538
        %v7540 = vmul.f32 %v7407, 1.442695
        %v7541 = vpow.pop %v7540
        %v7542 = vmul.f32 %v7408, 1.442695
        %v7543 = vpow.pop %v7542
        %v7544 = vmul.f32 %v7409, 1.442695
        %v7545 = vpow.pop %v7544
        %v7546 = vmul.f32 %v7410, 1.442695
        %v7547 = vpow.pop %v7546
        %v7548 = vmul.f32 %v7411, 1.442695
        %v7549 = vpow.pop %v7548
        %v7550 = vmul.f32 %v7412, 1.442695
        %v7551 = vpow.pop %v7550
        %v7552 = vmul.f32 %v7413, 1.442695
        %v7553 = vpow.pop %v7552
        %v7554 = vmul.f32 %v7414, 1.442695
        %v7555 = vpow.pop %v7554
        %v7556 = vmul.f32 %v7415, 1.442695
        %v7557 = vpow.pop %v7556
        %v7558 = vmul.f32 %v7416, 1.442695
        %v7559 = vpow.pop %v7558
        %v7560 = vmul.f32 %v7417, 1.442695
        %v7561 = vpow.pop %v7560
        %v7562 = vmul.f32 %v7418, 1.442695
        %v7563 = vpow.pop %v7562
        %v7564 = vmul.f32 %v7419, 1.442695
        %v7565 = vpow.pop %v7564
        %v7566 = vmul.f32 %v7420, 1.442695
        %v7567 = vpow.pop %v7566
        %v7568 = vmul.f32 %v7421, 1.442695
        %v7569 = vpow.pop %v7568
        %v7570 = vmul.f32 %v7422, 1.442695
        %v7571 = vpow.pop %v7570
        %v7572 = vmul.f32 %v7423, 1.442695
        %v7573 = vpow.pop %v7572
        %v7574 = vmul.f32 %v7424, 1.442695
        %v7575 = vpow.pop %v7574
        %v7576 = vmul.f32 %v7425, 1.442695
        %v7577 = vpow.pop %v7576
        %v7578 = vmul.f32 %v7426, 1.442695
        %v7579 = vpow.pop %v7578
        %v7580 = vmul.f32 %v7427, 1.442695
        %v7581 = vpow.pop %v7580
        %v7582 = vmul.f32 %v7428, 1.442695
        %v7583 = vpow.pop %v7582
        %v7584 = vmul.f32 %v7429, 1.442695
        %v7585 = vpow.pop %v7584
        %v7586 = vmul.f32 %v7430, 1.442695
        %v7587 = vpow.pop %v7586
        %v7588 = vmul.f32 %v7431, 1.442695
        %v7589 = vpow.pop %v7588
        %v7590 = vmul.f32 %v7432, 1.442695
        %v7591 = vpow.pop %v7590
        %v7592 = vmul.f32 %v7433, 1.442695
        %v7593 = vpow.pop %v7592
        %v7594 = vmul.f32 %v7434, 1.442695
        %v7595 = vpow.pop %v7594
        %v7596 = vmul.f32 %v7435, 1.442695
        %v7597 = vpow.pop %v7596
        %v7598 = vmul.f32 %v7436, 1.442695
        %v7599 = vpow.pop %v7598
        %v7600 = vmul.f32 %v7437, 1.442695
        %v7601 = vpow.pop %v7600
        %v7602 = vmul.f32 %v7438, 1.442695
        %v7603 = vpow.pop %v7602
        %v7604 = vmul.f32 %v7439, 1.442695
        %v7605 = vpow.pop %v7604
        %v7606 = vmul.f32 %v7440, 1.442695
        %v7607 = vpow.pop %v7606
        %v7608 = vmul.f32 %v7441, 1.442695
        %v7609 = vpow.pop %v7608
        %v7610 = vmul.f32 %v7442, 1.442695
        %v7611 = vpow.pop %v7610
        %v7612 = vmul.f32 %v7443, 1.442695
        %v7613 = vpow.pop %v7612
        %v7614 = vmul.f32 %v7444, 1.442695
        %v7615 = vpow.pop %v7614
        %v7616 = vmul.f32 %v7445, 1.442695
        %v7617 = vpow.pop %v7616
        %v7618 = vmul.f32 %v7446, 1.442695
        %v7619 = vpow.pop %v7618
        %v7620 = vmul.f32 %v7447, 1.442695
        %v7621 = vpow.pop %v7620
        %v7622 = vmul.f32 %v7448, 1.442695
        %v7623 = vpow.pop %v7622
        %v7624 = vmul.f32 %v7449, 1.442695
        %v7625 = vpow.pop %v7624
        %v7626 = vmul.f32 %v7450, 1.442695
        %v7627 = vpow.pop %v7626
        %v7628 = vmul.f32 %v7451, 1.442695
        %v7629 = vpow.pop %v7628
        %v7630 = vmul.f32 %v7452, 1.442695
        %v7631 = vpow.pop %v7630
        %v7632 = vmul.f32 %v7453, 1.442695
        %v7633 = vpow.pop %v7632
        %v7634 = vmul.f32 %v7454, 1.442695
        %v7635 = vpow.pop %v7634
        %v7636 = vmul.f32 %v7455, 1.442695
        %v7637 = vpow.pop %v7636
        %v7638 = vmul.f32 %v7456, 1.442695
        %v7639 = vpow.pop %v7638
        %v7640 = vmul.f32 %v7457, 1.442695
        %v7641 = vpow.pop %v7640
        %v7642 = vmul.f32 %v7458, 1.442695
        %v7643 = vpow.pop %v7642
        %v7644 = vmul.f32 %v7459, 1.442695
        %v7645 = vpow.pop %v7644
        %v7646 = vmul.f32 %v7460, 1.442695
        %v7647 = vpow.pop %v7646
        %v7648 = vmul.f32 %v7461, 1.442695
        %v7649 = vpow.pop %v7648
        %v7650 = vmul.f32 %v7462, 1.442695
        %v7651 = vpow.pop %v7650
        %v7652 = vmul.f32 %v7463, 1.442695
        %v7653 = vpow.pop %v7652
        %v7654 = vmul.f32 %v7464, 1.442695
        %v7655 = vpow.pop %v7654
        %v7656 = vmul.f32 %v7465, 1.442695
        %v7657 = vpow.pop %v7656
        %v7658 = vmul.f32 %v7466, 1.442695
        %v7659 = vpow.pop %v7658
        %v7660 = vmul.f32 %v7467, 1.442695
        %v7661 = vpow.pop %v7660
        %v7662 = vmul.f32 %v7468, 1.442695
        %v7663 = vpow.pop %v7662
        %v7664 = vmul.f32 %v7469, 1.442695
        %v7665 = vpow.pop %v7664
        %v7666 = vmul.f32 %v7470, 1.442695
        %v7667 = vpow.pop %v7666
        %v7668 = vmul.f32 %v7471, 1.442695
        %v7669 = vpow.pop %v7668
        %v7670 = vmul.f32 %v7472, 1.442695
        %v7671 = vpow.pop %v7670
        %v7672 = vmul.f32 %v7473, 1.442695
        %v7673 = vpow.pop %v7672
        %v7674 = vmul.f32 %v7474, 1.442695
        %v7675 = vpow.pop %v7674
        %v7676 = vmul.f32 %v7475, 1.442695
        %v7677 = vpow.pop %v7676
        %v7678 = vmul.f32 %v7476, 1.442695
        %v7679 = vpow.pop %v7678
        %v7680 = vmul.f32 %v7477, 1.442695
        %v7681 = vpow.pop %v7680
        %v7682 = vmul.f32 %v7478, 1.442695
        %v7683 = vpow.pop %v7682
        %v7684 = vmul.f32 %v7479, 1.442695
        %v7685 = vpow.pop %v7684
        %v7686 = vmul.f32 %v7480, 1.442695
        %v7687 = vpow.pop %v7686
        %v7688 = vmul.f32 %v7481, 1.442695
        %v7689 = vpow.pop %v7688
        %v7690 = vmul.f32 %v7482, 1.442695
        %v7691 = vpow.pop %v7690
        %v7692 = vmul.f32 %v7483, 1.442695
        %v7693 = vpow.pop %v7692
        %v7694 = vmul.f32 %v7484, 1.442695
        %v7695 = vpow.pop %v7694
        %v7696 = vmul.f32 %v7485, 1.442695
        %v7697 = vpow.pop %v7696
        %v7698 = vmul.f32 %v7486, 1.442695
        %v7699 = vpow.pop %v7698
        %v7700 = vmul.f32 %v7487, 1.442695
        %v7701 = vpow.pop %v7700
        %v7702 = vmul.f32 %v7488, 1.442695
        %v7703 = vpow.pop %v7702
        %v7704 = vmul.f32 %v7489, 1.442695
        %v7705 = vpow.pop %v7704
        %v7706 = vmul.f32 %v7490, 1.442695
        %v7707 = vpow.pop %v7706
        %v7708 = vmul.f32 %v7491, 1.442695
        %v7709 = vpow.pop %v7708
        %v7710 = vmul.f32 %v7492, 1.442695
        %v7711 = vpow.pop %v7710
        %v7712 = vmul.f32 %v7493, 1.442695
        %v7713 = vpow.pop %v7712
        %v7714 = vmul.f32 %v7494, 1.442695
        %v7715 = vpow.pop %v7714
        %v7716 = vmul.f32 %v7495, 1.442695
        %v7717 = vpow.pop %v7716
        %v7718 = vmul.f32 %v7496, 1.442695
        %v7719 = vpow.pop %v7718
        %v7720 = vmul.f32 %v7497, 1.442695
        %v7721 = vpow.pop %v7720
        %v7722 = vmul.f32 %v7498, 1.442695
        %v7723 = vpow.pop %v7722
        %v7724 = vmul.f32 %v7499, 1.442695
        %v7725 = vpow.pop %v7724
        %v7726 = vmul.f32 %v7500, 1.442695
        %v7727 = vpow.pop %v7726
        %v7728 = vmul.f32 %v7501, 1.442695
        %v7729 = vpow.pop %v7728
        %v7730 = vmul.f32 %v7502, 1.442695
        %v7731 = vpow.pop %v7730
        %v7732 = vmul.f32 %v7503, 1.442695
        %v7733 = vpow.pop %v7732
        %v7734 = vmul.f32 %v7504, 1.442695
        %v7735 = vpow.pop %v7734
        %v7736 = vmul.f32 %v7505, 1.442695
        %v7737 = vpow.pop %v7736
        %v7738 = vmul.f32 %v7506, 1.442695
        %v7739 = vpow.pop %v7738
        %v7740 = vmul.f32 %v7507, 1.442695
        %v7741 = vpow.pop %v7740
        %v7742 = vmul.f32 %v7508, 1.442695
        %v7743 = vpow.pop %v7742
        %v7744 = vmul.f32 %v7509, 1.442695
        %v7745 = vpow.pop %v7744
        %v7746 = vmul.f32 %v7510, 1.442695
        %v7747 = vpow.pop %v7746
        %v7748 = vmul.f32 %v7511, 1.442695
        %v7749 = vpow.pop %v7748
        %v7750 = vmul.f32 %v7512, 1.442695
        %v7751 = vpow.pop %v7750
        %v7752 = vmul.f32 %v7513, 1.442695
        %v7753 = vpow.pop %v7752
        %v7754 = vmul.f32 %v7514, 1.442695
        %v7755 = vpow.pop %v7754
        %v7756 = vmul.f32 %v7515, 1.442695
        %v7757 = vpow.pop %v7756
        %v7758 = vmul.f32 %v7516, 1.442695
        %v7759 = vpow.pop %v7758
        %v7760 = vmul.f32 %v7517, 1.442695
        %v7761 = vpow.pop %v7760
        %v7762 = vmul.f32 %v7518, 1.442695
        %v7763 = vpow.pop %v7762
        %v7764 = vmul.f32 %v7519, 1.442695
        %v7765 = vpow.pop %v7764
        %v7766 = vmul.f32 %v7520, 1.442695
        %v7767 = vpow.pop %v7766
        %v7768 = vmul.f32 %v7521, 1.442695
        %v7769 = vpow.pop %v7768
        %v7770 = vmul.f32 %v7522, 1.442695
        %v7771 = vpow.pop %v7770
        %v7772 = vmul.f32 %v7523, 1.442695
        %v7773 = vpow.pop %v7772
        %v7774 = vmul.f32 %v7524, 1.442695
        %v7775 = vpow.pop %v7774
        %v7776 = vmul.f32 %v7525, 1.442695
        %v7777 = vpow.pop %v7776
        %v7778 = vmul.f32 %v7526, 1.442695
        %v7779 = vpow.pop %v7778
        %v7780 = vmul.f32 %v7527, 1.442695
        %v7781 = vpow.pop %v7780
        %v7782 = vmul.f32 %v7528, 1.442695
        %v7783 = vpow.pop %v7782
        %v7784 = vmul.f32 %v7529, 1.442695
        %v7785 = vpow.pop %v7784
        %v7786 = vsel %vm6825, %v7531, 0.0
        %v7787 = vsel %vm6825, %v7533, 0.0
        %v7788 = vadd.f32 %v7786, %v7787
        %v7789 = vrot.slane %v7788, 4
        %v7790 = vadd.f32 %v7788, %v7789
        %v7791 = vrot.slane %v7790, 2
        %v7792 = vadd.f32 %v7790, %v7791
        %v7793 = vrot.slane %v7792, 1
        %v7794 = vadd.f32 %v7792, %v7793
        %v7795 = vsel %vm6825, %v7535, 0.0
        %v7796 = vsel %vm6825, %v7537, 0.0
        %v7797 = vadd.f32 %v7795, %v7796
        %v7798 = vrot.slane %v7797, 4
        %v7799 = vadd.f32 %v7797, %v7798
        %v7800 = vrot.slane %v7799, 2
        %v7801 = vadd.f32 %v7799, %v7800
        %v7802 = vrot.slane %v7801, 1
        %v7803 = vadd.f32 %v7801, %v7802
        %v7804 = vsel %vm6825, %v7539, 0.0
        %v7805 = vsel %vm6825, %v7541, 0.0
        %v7806 = vadd.f32 %v7804, %v7805
        %v7807 = vrot.slane %v7806, 4
        %v7808 = vadd.f32 %v7806, %v7807
        %v7809 = vrot.slane %v7808, 2
        %v7810 = vadd.f32 %v7808, %v7809
        %v7811 = vrot.slane %v7810, 1
        %v7812 = vadd.f32 %v7810, %v7811
        %v7813 = vsel %vm6825, %v7543, 0.0
        %v7814 = vsel %vm6825, %v7545, 0.0
        %v7815 = vadd.f32 %v7813, %v7814
        %v7816 = vrot.slane %v7815, 4
        %v7817 = vadd.f32 %v7815, %v7816
        %v7818 = vrot.slane %v7817, 2
        %v7819 = vadd.f32 %v7817, %v7818
        %v7820 = vrot.slane %v7819, 1
        %v7821 = vadd.f32 %v7819, %v7820
        %v7822 = vsel %vm6825, %v7547, 0.0
        %v7823 = vsel %vm6825, %v7549, 0.0
        %v7824 = vadd.f32 %v7822, %v7823
        %v7825 = vrot.slane %v7824, 4
        %v7826 = vadd.f32 %v7824, %v7825
        %v7827 = vrot.slane %v7826, 2
        %v7828 = vadd.f32 %v7826, %v7827
        %v7829 = vrot.slane %v7828, 1
        %v7830 = vadd.f32 %v7828, %v7829
        %v7831 = vsel %vm6825, %v7551, 0.0
        %v7832 = vsel %vm6825, %v7553, 0.0
        %v7833 = vadd.f32 %v7831, %v7832
        %v7834 = vrot.slane %v7833, 4
        %v7835 = vadd.f32 %v7833, %v7834
        %v7836 = vrot.slane %v7835, 2
        %v7837 = vadd.f32 %v7835, %v7836
        %v7838 = vrot.slane %v7837, 1
        %v7839 = vadd.f32 %v7837, %v7838
        %v7840 = vsel %vm6825, %v7555, 0.0
        %v7841 = vsel %vm6825, %v7557, 0.0
        %v7842 = vadd.f32 %v7840, %v7841
        %v7843 = vrot.slane %v7842, 4
        %v7844 = vadd.f32 %v7842, %v7843
        %v7845 = vrot.slane %v7844, 2
        %v7846 = vadd.f32 %v7844, %v7845
        %v7847 = vrot.slane %v7846, 1
        %v7848 = vadd.f32 %v7846, %v7847
        %v7849 = vsel %vm6825, %v7559, 0.0
        %v7850 = vsel %vm6825, %v7561, 0.0
        %v7851 = vadd.f32 %v7849, %v7850
        %v7852 = vrot.slane %v7851, 4
        %v7853 = vadd.f32 %v7851, %v7852
        %v7854 = vrot.slane %v7853, 2
        %v7855 = vadd.f32 %v7853, %v7854
        %v7856 = vrot.slane %v7855, 1
        %v7857 = vadd.f32 %v7855, %v7856
        %v7858 = vsel %vm6825, %v7563, 0.0
        %v7859 = vsel %vm6825, %v7565, 0.0
        %v7860 = vadd.f32 %v7858, %v7859
        %v7861 = vrot.slane %v7860, 4
        %v7862 = vadd.f32 %v7860, %v7861
        %v7863 = vrot.slane %v7862, 2
        %v7864 = vadd.f32 %v7862, %v7863
        %v7865 = vrot.slane %v7864, 1
        %v7866 = vadd.f32 %v7864, %v7865
        %v7867 = vsel %vm6825, %v7567, 0.0
        %v7868 = vsel %vm6825, %v7569, 0.0
        %v7869 = vadd.f32 %v7867, %v7868
        %v7870 = vrot.slane %v7869, 4
        %v7871 = vadd.f32 %v7869, %v7870
        %v7872 = vrot.slane %v7871, 2
        %v7873 = vadd.f32 %v7871, %v7872
        %v7874 = vrot.slane %v7873, 1
        %v7875 = vadd.f32 %v7873, %v7874
        %v7876 = vsel %vm6825, %v7571, 0.0
        %v7877 = vsel %vm6825, %v7573, 0.0
        %v7878 = vadd.f32 %v7876, %v7877
        %v7879 = vrot.slane %v7878, 4
        %v7880 = vadd.f32 %v7878, %v7879
        %v7881 = vrot.slane %v7880, 2
        %v7882 = vadd.f32 %v7880, %v7881
        %v7883 = vrot.slane %v7882, 1
        %v7884 = vadd.f32 %v7882, %v7883
        %v7885 = vsel %vm6825, %v7575, 0.0
        %v7886 = vsel %vm6825, %v7577, 0.0
        %v7887 = vadd.f32 %v7885, %v7886
        %v7888 = vrot.slane %v7887, 4
        %v7889 = vadd.f32 %v7887, %v7888
        %v7890 = vrot.slane %v7889, 2
        %v7891 = vadd.f32 %v7889, %v7890
        %v7892 = vrot.slane %v7891, 1
        %v7893 = vadd.f32 %v7891, %v7892
        %v7894 = vsel %vm6825, %v7579, 0.0
        %v7895 = vsel %vm6825, %v7581, 0.0
        %v7896 = vadd.f32 %v7894, %v7895
        %v7897 = vrot.slane %v7896, 4
        %v7898 = vadd.f32 %v7896, %v7897
        %v7899 = vrot.slane %v7898, 2
        %v7900 = vadd.f32 %v7898, %v7899
        %v7901 = vrot.slane %v7900, 1
        %v7902 = vadd.f32 %v7900, %v7901
        %v7903 = vsel %vm6825, %v7583, 0.0
        %v7904 = vsel %vm6825, %v7585, 0.0
        %v7905 = vadd.f32 %v7903, %v7904
        %v7906 = vrot.slane %v7905, 4
        %v7907 = vadd.f32 %v7905, %v7906
        %v7908 = vrot.slane %v7907, 2
        %v7909 = vadd.f32 %v7907, %v7908
        %v7910 = vrot.slane %v7909, 1
        %v7911 = vadd.f32 %v7909, %v7910
        %v7912 = vsel %vm6825, %v7587, 0.0
        %v7913 = vsel %vm6825, %v7589, 0.0
        %v7914 = vadd.f32 %v7912, %v7913
        %v7915 = vrot.slane %v7914, 4
        %v7916 = vadd.f32 %v7914, %v7915
        %v7917 = vrot.slane %v7916, 2
        %v7918 = vadd.f32 %v7916, %v7917
        %v7919 = vrot.slane %v7918, 1
        %v7920 = vadd.f32 %v7918, %v7919
        %v7921 = vsel %vm6825, %v7591, 0.0
        %v7922 = vsel %vm6825, %v7593, 0.0
        %v7923 = vadd.f32 %v7921, %v7922
        %v7924 = vrot.slane %v7923, 4
        %v7925 = vadd.f32 %v7923, %v7924
        %v7926 = vrot.slane %v7925, 2
        %v7927 = vadd.f32 %v7925, %v7926
        %v7928 = vrot.slane %v7927, 1
        %v7929 = vadd.f32 %v7927, %v7928
        %v7930 = vsel %vm6825, %v7595, 0.0
        %v7931 = vsel %vm6825, %v7597, 0.0
        %v7932 = vadd.f32 %v7930, %v7931
        %v7933 = vrot.slane %v7932, 4
        %v7934 = vadd.f32 %v7932, %v7933
        %v7935 = vrot.slane %v7934, 2
        %v7936 = vadd.f32 %v7934, %v7935
        %v7937 = vrot.slane %v7936, 1
        %v7938 = vadd.f32 %v7936, %v7937
        %v7939 = vsel %vm6825, %v7599, 0.0
        %v7940 = vsel %vm6825, %v7601, 0.0
        %v7941 = vadd.f32 %v7939, %v7940
        %v7942 = vrot.slane %v7941, 4
        %v7943 = vadd.f32 %v7941, %v7942
        %v7944 = vrot.slane %v7943, 2
        %v7945 = vadd.f32 %v7943, %v7944
        %v7946 = vrot.slane %v7945, 1
        %v7947 = vadd.f32 %v7945, %v7946
        %v7948 = vsel %vm6825, %v7603, 0.0
        %v7949 = vsel %vm6825, %v7605, 0.0
        %v7950 = vadd.f32 %v7948, %v7949
        %v7951 = vrot.slane %v7950, 4
        %v7952 = vadd.f32 %v7950, %v7951
        %v7953 = vrot.slane %v7952, 2
        %v7954 = vadd.f32 %v7952, %v7953
        %v7955 = vrot.slane %v7954, 1
        %v7956 = vadd.f32 %v7954, %v7955
        %v7957 = vsel %vm6825, %v7607, 0.0
        %v7958 = vsel %vm6825, %v7609, 0.0
        %v7959 = vadd.f32 %v7957, %v7958
        %v7960 = vrot.slane %v7959, 4
        %v7961 = vadd.f32 %v7959, %v7960
        %v7962 = vrot.slane %v7961, 2
        %v7963 = vadd.f32 %v7961, %v7962
        %v7964 = vrot.slane %v7963, 1
        %v7965 = vadd.f32 %v7963, %v7964
        %v7966 = vsel %vm6825, %v7611, 0.0
        %v7967 = vsel %vm6825, %v7613, 0.0
        %v7968 = vadd.f32 %v7966, %v7967
        %v7969 = vrot.slane %v7968, 4
        %v7970 = vadd.f32 %v7968, %v7969
        %v7971 = vrot.slane %v7970, 2
        %v7972 = vadd.f32 %v7970, %v7971
        %v7973 = vrot.slane %v7972, 1
        %v7974 = vadd.f32 %v7972, %v7973
        %v7975 = vsel %vm6825, %v7615, 0.0
        %v7976 = vsel %vm6825, %v7617, 0.0
        %v7977 = vadd.f32 %v7975, %v7976
        %v7978 = vrot.slane %v7977, 4
        %v7979 = vadd.f32 %v7977, %v7978
        %v7980 = vrot.slane %v7979, 2
        %v7981 = vadd.f32 %v7979, %v7980
        %v7982 = vrot.slane %v7981, 1
        %v7983 = vadd.f32 %v7981, %v7982
        %v7984 = vsel %vm6825, %v7619, 0.0
        %v7985 = vsel %vm6825, %v7621, 0.0
        %v7986 = vadd.f32 %v7984, %v7985
        %v7987 = vrot.slane %v7986, 4
        %v7988 = vadd.f32 %v7986, %v7987
        %v7989 = vrot.slane %v7988, 2
        %v7990 = vadd.f32 %v7988, %v7989
        %v7991 = vrot.slane %v7990, 1
        %v7992 = vadd.f32 %v7990, %v7991
        %v7993 = vsel %vm6825, %v7623, 0.0
        %v7994 = vsel %vm6825, %v7625, 0.0
        %v7995 = vadd.f32 %v7993, %v7994
        %v7996 = vrot.slane %v7995, 4
        %v7997 = vadd.f32 %v7995, %v7996
        %v7998 = vrot.slane %v7997, 2
        %v7999 = vadd.f32 %v7997, %v7998
        %v8000 = vrot.slane %v7999, 1
        %v8001 = vadd.f32 %v7999, %v8000
        %v8002 = vsel %vm6825, %v7627, 0.0
        %v8003 = vsel %vm6825, %v7629, 0.0
        %v8004 = vadd.f32 %v8002, %v8003
        %v8005 = vrot.slane %v8004, 4
        %v8006 = vadd.f32 %v8004, %v8005
        %v8007 = vrot.slane %v8006, 2
        %v8008 = vadd.f32 %v8006, %v8007
        %v8009 = vrot.slane %v8008, 1
        %v8010 = vadd.f32 %v8008, %v8009
        %v8011 = vsel %vm6825, %v7631, 0.0
        %v8012 = vsel %vm6825, %v7633, 0.0
        %v8013 = vadd.f32 %v8011, %v8012
        %v8014 = vrot.slane %v8013, 4
        %v8015 = vadd.f32 %v8013, %v8014
        %v8016 = vrot.slane %v8015, 2
        %v8017 = vadd.f32 %v8015, %v8016
        %v8018 = vrot.slane %v8017, 1
        %v8019 = vadd.f32 %v8017, %v8018
        %v8020 = vsel %vm6825, %v7635, 0.0
        %v8021 = vsel %vm6825, %v7637, 0.0
        %v8022 = vadd.f32 %v8020, %v8021
        %v8023 = vrot.slane %v8022, 4
        %v8024 = vadd.f32 %v8022, %v8023
        %v8025 = vrot.slane %v8024, 2
        %v8026 = vadd.f32 %v8024, %v8025
        %v8027 = vrot.slane %v8026, 1
        %v8028 = vadd.f32 %v8026, %v8027
        %v8029 = vsel %vm6825, %v7639, 0.0
        %v8030 = vsel %vm6825, %v7641, 0.0
        %v8031 = vadd.f32 %v8029, %v8030
        %v8032 = vrot.slane %v8031, 4
        %v8033 = vadd.f32 %v8031, %v8032
        %v8034 = vrot.slane %v8033, 2
        %v8035 = vadd.f32 %v8033, %v8034
        %v8036 = vrot.slane %v8035, 1
        %v8037 = vadd.f32 %v8035, %v8036
        %v8038 = vsel %vm6825, %v7643, 0.0
        %v8039 = vsel %vm6825, %v7645, 0.0
        %v8040 = vadd.f32 %v8038, %v8039
        %v8041 = vrot.slane %v8040, 4
        %v8042 = vadd.f32 %v8040, %v8041
        %v8043 = vrot.slane %v8042, 2
        %v8044 = vadd.f32 %v8042, %v8043
        %v8045 = vrot.slane %v8044, 1
        %v8046 = vadd.f32 %v8044, %v8045
        %v8047 = vsel %vm6825, %v7647, 0.0
        %v8048 = vsel %vm6825, %v7649, 0.0
        %v8049 = vadd.f32 %v8047, %v8048
        %v8050 = vrot.slane %v8049, 4
        %v8051 = vadd.f32 %v8049, %v8050
        %v8052 = vrot.slane %v8051, 2
        %v8053 = vadd.f32 %v8051, %v8052
        %v8054 = vrot.slane %v8053, 1
        %v8055 = vadd.f32 %v8053, %v8054
        %v8056 = vsel %vm6825, %v7651, 0.0
        %v8057 = vsel %vm6825, %v7653, 0.0
        %v8058 = vadd.f32 %v8056, %v8057
        %v8059 = vrot.slane %v8058, 4
        %v8060 = vadd.f32 %v8058, %v8059
        %v8061 = vrot.slane %v8060, 2
        %v8062 = vadd.f32 %v8060, %v8061
        %v8063 = vrot.slane %v8062, 1
        %v8064 = vadd.f32 %v8062, %v8063
        %v8065 = vsel %vm6825, %v7655, 0.0
        %v8066 = vsel %vm6825, %v7657, 0.0
        %v8067 = vadd.f32 %v8065, %v8066
        %v8068 = vrot.slane %v8067, 4
        %v8069 = vadd.f32 %v8067, %v8068
        %v8070 = vrot.slane %v8069, 2
        %v8071 = vadd.f32 %v8069, %v8070
        %v8072 = vrot.slane %v8071, 1
        %v8073 = vadd.f32 %v8071, %v8072
        %v8074 = vsel %vm6825, %v7659, 0.0
        %v8075 = vsel %vm6825, %v7661, 0.0
        %v8076 = vadd.f32 %v8074, %v8075
        %v8077 = vrot.slane %v8076, 4
        %v8078 = vadd.f32 %v8076, %v8077
        %v8079 = vrot.slane %v8078, 2
        %v8080 = vadd.f32 %v8078, %v8079
        %v8081 = vrot.slane %v8080, 1
        %v8082 = vadd.f32 %v8080, %v8081
        %v8083 = vsel %vm6825, %v7663, 0.0
        %v8084 = vsel %vm6825, %v7665, 0.0
        %v8085 = vadd.f32 %v8083, %v8084
        %v8086 = vrot.slane %v8085, 4
        %v8087 = vadd.f32 %v8085, %v8086
        %v8088 = vrot.slane %v8087, 2
        %v8089 = vadd.f32 %v8087, %v8088
        %v8090 = vrot.slane %v8089, 1
        %v8091 = vadd.f32 %v8089, %v8090
        %v8092 = vsel %vm6825, %v7667, 0.0
        %v8093 = vsel %vm6825, %v7669, 0.0
        %v8094 = vadd.f32 %v8092, %v8093
        %v8095 = vrot.slane %v8094, 4
        %v8096 = vadd.f32 %v8094, %v8095
        %v8097 = vrot.slane %v8096, 2
        %v8098 = vadd.f32 %v8096, %v8097
        %v8099 = vrot.slane %v8098, 1
        %v8100 = vadd.f32 %v8098, %v8099
        %v8101 = vsel %vm6825, %v7671, 0.0
        %v8102 = vsel %vm6825, %v7673, 0.0
        %v8103 = vadd.f32 %v8101, %v8102
        %v8104 = vrot.slane %v8103, 4
        %v8105 = vadd.f32 %v8103, %v8104
        %v8106 = vrot.slane %v8105, 2
        %v8107 = vadd.f32 %v8105, %v8106
        %v8108 = vrot.slane %v8107, 1
        %v8109 = vadd.f32 %v8107, %v8108
        %v8110 = vsel %vm6825, %v7675, 0.0
        %v8111 = vsel %vm6825, %v7677, 0.0
        %v8112 = vadd.f32 %v8110, %v8111
        %v8113 = vrot.slane %v8112, 4
        %v8114 = vadd.f32 %v8112, %v8113
        %v8115 = vrot.slane %v8114, 2
        %v8116 = vadd.f32 %v8114, %v8115
        %v8117 = vrot.slane %v8116, 1
        %v8118 = vadd.f32 %v8116, %v8117
        %v8119 = vsel %vm6825, %v7679, 0.0
        %v8120 = vsel %vm6825, %v7681, 0.0
        %v8121 = vadd.f32 %v8119, %v8120
        %v8122 = vrot.slane %v8121, 4
        %v8123 = vadd.f32 %v8121, %v8122
        %v8124 = vrot.slane %v8123, 2
        %v8125 = vadd.f32 %v8123, %v8124
        %v8126 = vrot.slane %v8125, 1
        %v8127 = vadd.f32 %v8125, %v8126
        %v8128 = vsel %vm6825, %v7683, 0.0
        %v8129 = vsel %vm6825, %v7685, 0.0
        %v8130 = vadd.f32 %v8128, %v8129
        %v8131 = vrot.slane %v8130, 4
        %v8132 = vadd.f32 %v8130, %v8131
        %v8133 = vrot.slane %v8132, 2
        %v8134 = vadd.f32 %v8132, %v8133
        %v8135 = vrot.slane %v8134, 1
        %v8136 = vadd.f32 %v8134, %v8135
        %v8137 = vsel %vm6825, %v7687, 0.0
        %v8138 = vsel %vm6825, %v7689, 0.0
        %v8139 = vadd.f32 %v8137, %v8138
        %v8140 = vrot.slane %v8139, 4
        %v8141 = vadd.f32 %v8139, %v8140
        %v8142 = vrot.slane %v8141, 2
        %v8143 = vadd.f32 %v8141, %v8142
        %v8144 = vrot.slane %v8143, 1
        %v8145 = vadd.f32 %v8143, %v8144
        %v8146 = vsel %vm6825, %v7691, 0.0
        %v8147 = vsel %vm6825, %v7693, 0.0
        %v8148 = vadd.f32 %v8146, %v8147
        %v8149 = vrot.slane %v8148, 4
        %v8150 = vadd.f32 %v8148, %v8149
        %v8151 = vrot.slane %v8150, 2
        %v8152 = vadd.f32 %v8150, %v8151
        %v8153 = vrot.slane %v8152, 1
        %v8154 = vadd.f32 %v8152, %v8153
        %v8155 = vsel %vm6825, %v7695, 0.0
        %v8156 = vsel %vm6825, %v7697, 0.0
        %v8157 = vadd.f32 %v8155, %v8156
        %v8158 = vrot.slane %v8157, 4
        %v8159 = vadd.f32 %v8157, %v8158
        %v8160 = vrot.slane %v8159, 2
        %v8161 = vadd.f32 %v8159, %v8160
        %v8162 = vrot.slane %v8161, 1
        %v8163 = vadd.f32 %v8161, %v8162
        %v8164 = vsel %vm6825, %v7699, 0.0
        %v8165 = vsel %vm6825, %v7701, 0.0
        %v8166 = vadd.f32 %v8164, %v8165
        %v8167 = vrot.slane %v8166, 4
        %v8168 = vadd.f32 %v8166, %v8167
        %v8169 = vrot.slane %v8168, 2
        %v8170 = vadd.f32 %v8168, %v8169
        %v8171 = vrot.slane %v8170, 1
        %v8172 = vadd.f32 %v8170, %v8171
        %v8173 = vsel %vm6825, %v7703, 0.0
        %v8174 = vsel %vm6825, %v7705, 0.0
        %v8175 = vadd.f32 %v8173, %v8174
        %v8176 = vrot.slane %v8175, 4
        %v8177 = vadd.f32 %v8175, %v8176
        %v8178 = vrot.slane %v8177, 2
        %v8179 = vadd.f32 %v8177, %v8178
        %v8180 = vrot.slane %v8179, 1
        %v8181 = vadd.f32 %v8179, %v8180
        %v8182 = vsel %vm6825, %v7707, 0.0
        %v8183 = vsel %vm6825, %v7709, 0.0
        %v8184 = vadd.f32 %v8182, %v8183
        %v8185 = vrot.slane %v8184, 4
        %v8186 = vadd.f32 %v8184, %v8185
        %v8187 = vrot.slane %v8186, 2
        %v8188 = vadd.f32 %v8186, %v8187
        %v8189 = vrot.slane %v8188, 1
        %v8190 = vadd.f32 %v8188, %v8189
        %v8191 = vsel %vm6825, %v7711, 0.0
        %v8192 = vsel %vm6825, %v7713, 0.0
        %v8193 = vadd.f32 %v8191, %v8192
        %v8194 = vrot.slane %v8193, 4
        %v8195 = vadd.f32 %v8193, %v8194
        %v8196 = vrot.slane %v8195, 2
        %v8197 = vadd.f32 %v8195, %v8196
        %v8198 = vrot.slane %v8197, 1
        %v8199 = vadd.f32 %v8197, %v8198
        %v8200 = vsel %vm6825, %v7715, 0.0
        %v8201 = vsel %vm6825, %v7717, 0.0
        %v8202 = vadd.f32 %v8200, %v8201
        %v8203 = vrot.slane %v8202, 4
        %v8204 = vadd.f32 %v8202, %v8203
        %v8205 = vrot.slane %v8204, 2
        %v8206 = vadd.f32 %v8204, %v8205
        %v8207 = vrot.slane %v8206, 1
        %v8208 = vadd.f32 %v8206, %v8207
        %v8209 = vsel %vm6825, %v7719, 0.0
        %v8210 = vsel %vm6825, %v7721, 0.0
        %v8211 = vadd.f32 %v8209, %v8210
        %v8212 = vrot.slane %v8211, 4
        %v8213 = vadd.f32 %v8211, %v8212
        %v8214 = vrot.slane %v8213, 2
        %v8215 = vadd.f32 %v8213, %v8214
        %v8216 = vrot.slane %v8215, 1
        %v8217 = vadd.f32 %v8215, %v8216
        %v8218 = vsel %vm6825, %v7723, 0.0
        %v8219 = vsel %vm6825, %v7725, 0.0
        %v8220 = vadd.f32 %v8218, %v8219
        %v8221 = vrot.slane %v8220, 4
        %v8222 = vadd.f32 %v8220, %v8221
        %v8223 = vrot.slane %v8222, 2
        %v8224 = vadd.f32 %v8222, %v8223
        %v8225 = vrot.slane %v8224, 1
        %v8226 = vadd.f32 %v8224, %v8225
        %v8227 = vsel %vm6825, %v7727, 0.0
        %v8228 = vsel %vm6825, %v7729, 0.0
        %v8229 = vadd.f32 %v8227, %v8228
        %v8230 = vrot.slane %v8229, 4
        %v8231 = vadd.f32 %v8229, %v8230
        %v8232 = vrot.slane %v8231, 2
        %v8233 = vadd.f32 %v8231, %v8232
        %v8234 = vrot.slane %v8233, 1
        %v8235 = vadd.f32 %v8233, %v8234
        %v8236 = vsel %vm6825, %v7731, 0.0
        %v8237 = vsel %vm6825, %v7733, 0.0
        %v8238 = vadd.f32 %v8236, %v8237
        %v8239 = vrot.slane %v8238, 4
        %v8240 = vadd.f32 %v8238, %v8239
        %v8241 = vrot.slane %v8240, 2
        %v8242 = vadd.f32 %v8240, %v8241
        %v8243 = vrot.slane %v8242, 1
        %v8244 = vadd.f32 %v8242, %v8243
        %v8245 = vsel %vm6825, %v7735, 0.0
        %v8246 = vsel %vm6825, %v7737, 0.0
        %v8247 = vadd.f32 %v8245, %v8246
        %v8248 = vrot.slane %v8247, 4
        %v8249 = vadd.f32 %v8247, %v8248
        %v8250 = vrot.slane %v8249, 2
        %v8251 = vadd.f32 %v8249, %v8250
        %v8252 = vrot.slane %v8251, 1
        %v8253 = vadd.f32 %v8251, %v8252
        %v8254 = vsel %vm6825, %v7739, 0.0
        %v8255 = vsel %vm6825, %v7741, 0.0
        %v8256 = vadd.f32 %v8254, %v8255
        %v8257 = vrot.slane %v8256, 4
        %v8258 = vadd.f32 %v8256, %v8257
        %v8259 = vrot.slane %v8258, 2
        %v8260 = vadd.f32 %v8258, %v8259
        %v8261 = vrot.slane %v8260, 1
        %v8262 = vadd.f32 %v8260, %v8261
        %v8263 = vsel %vm6825, %v7743, 0.0
        %v8264 = vsel %vm6825, %v7745, 0.0
        %v8265 = vadd.f32 %v8263, %v8264
        %v8266 = vrot.slane %v8265, 4
        %v8267 = vadd.f32 %v8265, %v8266
        %v8268 = vrot.slane %v8267, 2
        %v8269 = vadd.f32 %v8267, %v8268
        %v8270 = vrot.slane %v8269, 1
        %v8271 = vadd.f32 %v8269, %v8270
        %v8272 = vsel %vm6825, %v7747, 0.0
        %v8273 = vsel %vm6825, %v7749, 0.0
        %v8274 = vadd.f32 %v8272, %v8273
        %v8275 = vrot.slane %v8274, 4
        %v8276 = vadd.f32 %v8274, %v8275
        %v8277 = vrot.slane %v8276, 2
        %v8278 = vadd.f32 %v8276, %v8277
        %v8279 = vrot.slane %v8278, 1
        %v8280 = vadd.f32 %v8278, %v8279
        %v8281 = vsel %vm6825, %v7751, 0.0
        %v8282 = vsel %vm6825, %v7753, 0.0
        %v8283 = vadd.f32 %v8281, %v8282
        %v8284 = vrot.slane %v8283, 4
        %v8285 = vadd.f32 %v8283, %v8284
        %v8286 = vrot.slane %v8285, 2
        %v8287 = vadd.f32 %v8285, %v8286
        %v8288 = vrot.slane %v8287, 1
        %v8289 = vadd.f32 %v8287, %v8288
        %v8290 = vsel %vm6825, %v7755, 0.0
        %v8291 = vsel %vm6825, %v7757, 0.0
        %v8292 = vadd.f32 %v8290, %v8291
        %v8293 = vrot.slane %v8292, 4
        %v8294 = vadd.f32 %v8292, %v8293
        %v8295 = vrot.slane %v8294, 2
        %v8296 = vadd.f32 %v8294, %v8295
        %v8297 = vrot.slane %v8296, 1
        %v8298 = vadd.f32 %v8296, %v8297
        %v8299 = vsel %vm6825, %v7759, 0.0
        %v8300 = vsel %vm6825, %v7761, 0.0
        %v8301 = vadd.f32 %v8299, %v8300
        %v8302 = vrot.slane %v8301, 4
        %v8303 = vadd.f32 %v8301, %v8302
        %v8304 = vrot.slane %v8303, 2
        %v8305 = vadd.f32 %v8303, %v8304
        %v8306 = vrot.slane %v8305, 1
        %v8307 = vadd.f32 %v8305, %v8306
        %v8308 = vsel %vm6825, %v7763, 0.0
        %v8309 = vsel %vm6825, %v7765, 0.0
        %v8310 = vadd.f32 %v8308, %v8309
        %v8311 = vrot.slane %v8310, 4
        %v8312 = vadd.f32 %v8310, %v8311
        %v8313 = vrot.slane %v8312, 2
        %v8314 = vadd.f32 %v8312, %v8313
        %v8315 = vrot.slane %v8314, 1
        %v8316 = vadd.f32 %v8314, %v8315
        %v8317 = vsel %vm6825, %v7767, 0.0
        %v8318 = vsel %vm6825, %v7769, 0.0
        %v8319 = vadd.f32 %v8317, %v8318
        %v8320 = vrot.slane %v8319, 4
        %v8321 = vadd.f32 %v8319, %v8320
        %v8322 = vrot.slane %v8321, 2
        %v8323 = vadd.f32 %v8321, %v8322
        %v8324 = vrot.slane %v8323, 1
        %v8325 = vadd.f32 %v8323, %v8324
        %v8326 = vsel %vm6825, %v7771, 0.0
        %v8327 = vsel %vm6825, %v7773, 0.0
        %v8328 = vadd.f32 %v8326, %v8327
        %v8329 = vrot.slane %v8328, 4
        %v8330 = vadd.f32 %v8328, %v8329
        %v8331 = vrot.slane %v8330, 2
        %v8332 = vadd.f32 %v8330, %v8331
        %v8333 = vrot.slane %v8332, 1
        %v8334 = vadd.f32 %v8332, %v8333
        %v8335 = vsel %vm6825, %v7775, 0.0
        %v8336 = vsel %vm6825, %v7777, 0.0
        %v8337 = vadd.f32 %v8335, %v8336
        %v8338 = vrot.slane %v8337, 4
        %v8339 = vadd.f32 %v8337, %v8338
        %v8340 = vrot.slane %v8339, 2
        %v8341 = vadd.f32 %v8339, %v8340
        %v8342 = vrot.slane %v8341, 1
        %v8343 = vadd.f32 %v8341, %v8342
        %v8344 = vsel %vm6825, %v7779, 0.0
        %v8345 = vsel %vm6825, %v7781, 0.0
        %v8346 = vadd.f32 %v8344, %v8345
        %v8347 = vrot.slane %v8346, 4
        %v8348 = vadd.f32 %v8346, %v8347
        %v8349 = vrot.slane %v8348, 2
        %v8350 = vadd.f32 %v8348, %v8349
        %v8351 = vrot.slane %v8350, 1
        %v8352 = vadd.f32 %v8350, %v8351
        %v8353 = vsel %vm6825, %v7783, 0.0
        %v8354 = vsel %vm6825, %v7785, 0.0
        %v8355 = vadd.f32 %v8353, %v8354
        %v8356 = vrot.slane %v8355, 4
        %v8357 = vadd.f32 %v8355, %v8356
        %v8358 = vrot.slane %v8357, 2
        %v8359 = vadd.f32 %v8357, %v8358
        %v8360 = vrot.slane %v8359, 1
        %v8361 = vadd.f32 %v8359, %v8360
        %v8362 = vrcp.pop %v7794
        %v8363 = vmul.f32 %v7531, %v8362
        %v8364 = vmul.f32 %v7533, %v8362
        %v8365 = vrcp.pop %v7803
        %v8366 = vmul.f32 %v7535, %v8365
        %v8367 = vmul.f32 %v7537, %v8365
        %v8368 = vrcp.pop %v7812
        %v8369 = vmul.f32 %v7539, %v8368
        %v8370 = vmul.f32 %v7541, %v8368
        %v8371 = vrcp.pop %v7821
        %v8372 = vmul.f32 %v7543, %v8371
        %v8373 = vmul.f32 %v7545, %v8371
        %v8374 = vrcp.pop %v7830
        %v8375 = vmul.f32 %v7547, %v8374
        %v8376 = vmul.f32 %v7549, %v8374
        %v8377 = vrcp.pop %v7839
        %v8378 = vmul.f32 %v7551, %v8377
        %v8379 = vmul.f32 %v7553, %v8377
        %v8380 = vrcp.pop %v7848
        %v8381 = vmul.f32 %v7555, %v8380
        %v8382 = vmul.f32 %v7557, %v8380
        %v8383 = vrcp.pop %v7857
        %v8384 = vmul.f32 %v7559, %v8383
        %v8385 = vmul.f32 %v7561, %v8383
        %v8386 = vrcp.pop %v7866
        %v8387 = vmul.f32 %v7563, %v8386
        %v8388 = vmul.f32 %v7565, %v8386
        %v8389 = vrcp.pop %v7875
        %v8390 = vmul.f32 %v7567, %v8389
        %v8391 = vmul.f32 %v7569, %v8389
        %v8392 = vrcp.pop %v7884
        %v8393 = vmul.f32 %v7571, %v8392
        %v8394 = vmul.f32 %v7573, %v8392
        %v8395 = vrcp.pop %v7893
        %v8396 = vmul.f32 %v7575, %v8395
        %v8397 = vmul.f32 %v7577, %v8395
        %v8398 = vrcp.pop %v7902
        %v8399 = vmul.f32 %v7579, %v8398
        %v8400 = vmul.f32 %v7581, %v8398
        %v8401 = vrcp.pop %v7911
        %v8402 = vmul.f32 %v7583, %v8401
        %v8403 = vmul.f32 %v7585, %v8401
        %v8404 = vrcp.pop %v7920
        %v8405 = vmul.f32 %v7587, %v8404
        %v8406 = vmul.f32 %v7589, %v8404
        %v8407 = vrcp.pop %v7929
        %v8408 = vmul.f32 %v7591, %v8407
        %v8409 = vmul.f32 %v7593, %v8407
        %v8410 = vrcp.pop %v7938
        %v8411 = vmul.f32 %v7595, %v8410
        %v8412 = vmul.f32 %v7597, %v8410
        %v8413 = vrcp.pop %v7947
        %v8414 = vmul.f32 %v7599, %v8413
        %v8415 = vmul.f32 %v7601, %v8413
        %v8416 = vrcp.pop %v7956
        %v8417 = vmul.f32 %v7603, %v8416
        %v8418 = vmul.f32 %v7605, %v8416
        %v8419 = vrcp.pop %v7965
        %v8420 = vmul.f32 %v7607, %v8419
        %v8421 = vmul.f32 %v7609, %v8419
        %v8422 = vrcp.pop %v7974
        %v8423 = vmul.f32 %v7611, %v8422
        %v8424 = vmul.f32 %v7613, %v8422
        %v8425 = vrcp.pop %v7983
        %v8426 = vmul.f32 %v7615, %v8425
        %v8427 = vmul.f32 %v7617, %v8425
        %v8428 = vrcp.pop %v7992
        %v8429 = vmul.f32 %v7619, %v8428
        %v8430 = vmul.f32 %v7621, %v8428
        %v8431 = vrcp.pop %v8001
        %v8432 = vmul.f32 %v7623, %v8431
        %v8433 = vmul.f32 %v7625, %v8431
        %v8434 = vrcp.pop %v8010
        %v8435 = vmul.f32 %v7627, %v8434
        %v8436 = vmul.f32 %v7629, %v8434
        %v8437 = vrcp.pop %v8019
        %v8438 = vmul.f32 %v7631, %v8437
        %v8439 = vmul.f32 %v7633, %v8437
        %v8440 = vrcp.pop %v8028
        %v8441 = vmul.f32 %v7635, %v8440
        %v8442 = vmul.f32 %v7637, %v8440
        %v8443 = vrcp.pop %v8037
        %v8444 = vmul.f32 %v7639, %v8443
        %v8445 = vmul.f32 %v7641, %v8443
        %v8446 = vrcp.pop %v8046
        %v8447 = vmul.f32 %v7643, %v8446
        %v8448 = vmul.f32 %v7645, %v8446
        %v8449 = vrcp.pop %v8055
        %v8450 = vmul.f32 %v7647, %v8449
        %v8451 = vmul.f32 %v7649, %v8449
        %v8452 = vrcp.pop %v8064
        %v8453 = vmul.f32 %v7651, %v8452
        %v8454 = vmul.f32 %v7653, %v8452
        %v8455 = vrcp.pop %v8073
        %v8456 = vmul.f32 %v7655, %v8455
        %v8457 = vmul.f32 %v7657, %v8455
        %v8458 = vrcp.pop %v8082
        %v8459 = vmul.f32 %v7659, %v8458
        %v8460 = vmul.f32 %v7661, %v8458
        %v8461 = vrcp.pop %v8091
        %v8462 = vmul.f32 %v7663, %v8461
        %v8463 = vmul.f32 %v7665, %v8461
        %v8464 = vrcp.pop %v8100
        %v8465 = vmul.f32 %v7667, %v8464
        %v8466 = vmul.f32 %v7669, %v8464
        %v8467 = vrcp.pop %v8109
        %v8468 = vmul.f32 %v7671, %v8467
        %v8469 = vmul.f32 %v7673, %v8467
        %v8470 = vrcp.pop %v8118
        %v8471 = vmul.f32 %v7675, %v8470
        %v8472 = vmul.f32 %v7677, %v8470
        %v8473 = vrcp.pop %v8127
        %v8474 = vmul.f32 %v7679, %v8473
        %v8475 = vmul.f32 %v7681, %v8473
        %v8476 = vrcp.pop %v8136
        %v8477 = vmul.f32 %v7683, %v8476
        %v8478 = vmul.f32 %v7685, %v8476
        %v8479 = vrcp.pop %v8145
        %v8480 = vmul.f32 %v7687, %v8479
        %v8481 = vmul.f32 %v7689, %v8479
        %v8482 = vrcp.pop %v8154
        %v8483 = vmul.f32 %v7691, %v8482
        %v8484 = vmul.f32 %v7693, %v8482
        %v8485 = vrcp.pop %v8163
        %v8486 = vmul.f32 %v7695, %v8485
        %v8487 = vmul.f32 %v7697, %v8485
        %v8488 = vrcp.pop %v8172
        %v8489 = vmul.f32 %v7699, %v8488
        %v8490 = vmul.f32 %v7701, %v8488
        %v8491 = vrcp.pop %v8181
        %v8492 = vmul.f32 %v7703, %v8491
        %v8493 = vmul.f32 %v7705, %v8491
        %v8494 = vrcp.pop %v8190
        %v8495 = vmul.f32 %v7707, %v8494
        %v8496 = vmul.f32 %v7709, %v8494
        %v8497 = vrcp.pop %v8199
        %v8498 = vmul.f32 %v7711, %v8497
        %v8499 = vmul.f32 %v7713, %v8497
        %v8500 = vrcp.pop %v8208
        %v8501 = vmul.f32 %v7715, %v8500
        %v8502 = vmul.f32 %v7717, %v8500
        %v8503 = vrcp.pop %v8217
        %v8504 = vmul.f32 %v7719, %v8503
        %v8505 = vmul.f32 %v7721, %v8503
        %v8506 = vrcp.pop %v8226
        %v8507 = vmul.f32 %v7723, %v8506
        %v8508 = vmul.f32 %v7725, %v8506
        %v8509 = vrcp.pop %v8235
        %v8510 = vmul.f32 %v7727, %v8509
        %v8511 = vmul.f32 %v7729, %v8509
        %v8512 = vrcp.pop %v8244
        %v8513 = vmul.f32 %v7731, %v8512
        %v8514 = vmul.f32 %v7733, %v8512
        %v8515 = vrcp.pop %v8253
        %v8516 = vmul.f32 %v7735, %v8515
        %v8517 = vmul.f32 %v7737, %v8515
        %v8518 = vrcp.pop %v8262
        %v8519 = vmul.f32 %v7739, %v8518
        %v8520 = vmul.f32 %v7741, %v8518
        %v8521 = vrcp.pop %v8271
        %v8522 = vmul.f32 %v7743, %v8521
        %v8523 = vmul.f32 %v7745, %v8521
        %v8524 = vrcp.pop %v8280
        %v8525 = vmul.f32 %v7747, %v8524
        %v8526 = vmul.f32 %v7749, %v8524
        %v8527 = vrcp.pop %v8289
        %v8528 = vmul.f32 %v7751, %v8527
        %v8529 = vmul.f32 %v7753, %v8527
        %v8530 = vrcp.pop %v8298
        %v8531 = vmul.f32 %v7755, %v8530
        %v8532 = vmul.f32 %v7757, %v8530
        %v8533 = vrcp.pop %v8307
        %v8534 = vmul.f32 %v7759, %v8533
        %v8535 = vmul.f32 %v7761, %v8533
        %v8536 = vrcp.pop %v8316
        %v8537 = vmul.f32 %v7763, %v8536
        %v8538 = vmul.f32 %v7765, %v8536
        %v8539 = vrcp.pop %v8325
        %v8540 = vmul.f32 %v7767, %v8539
        %v8541 = vmul.f32 %v7769, %v8539
        %v8542 = vrcp.pop %v8334
        %v8543 = vmul.f32 %v7771, %v8542
        %v8544 = vmul.f32 %v7773, %v8542
        %v8545 = vrcp.pop %v8343
        %v8546 = vmul.f32 %v7775, %v8545
        %v8547 = vmul.f32 %v7777, %v8545
        %v8548 = vrcp.pop %v8352
        %v8549 = vmul.f32 %v7779, %v8548
        %v8550 = vmul.f32 %v7781, %v8548
        %v8551 = vrcp.pop %v8361
        %v8552 = vmul.f32 %v7783, %v8551
        %v8553 = vmul.f32 %v7785, %v8551
        %v8554 = vpack.c.bf16 %v8364, %v8363
        %v8555 = vpack.c.bf16 %v8367, %v8366
        %v8556 = vpack.c.bf16 %v8370, %v8369
        %v8557 = vpack.c.bf16 %v8373, %v8372
        %v8558 = vpack.c.bf16 %v8376, %v8375
        %v8559 = vpack.c.bf16 %v8379, %v8378
        %v8560 = vpack.c.bf16 %v8382, %v8381
        %v8561 = vpack.c.bf16 %v8385, %v8384
        %v8562 = vpack.c.bf16 %v8388, %v8387
        %v8563 = vpack.c.bf16 %v8391, %v8390
        %v8564 = vpack.c.bf16 %v8394, %v8393
        %v8565 = vpack.c.bf16 %v8397, %v8396
        %v8566 = vpack.c.bf16 %v8400, %v8399
        %v8567 = vpack.c.bf16 %v8403, %v8402
        %v8568 = vpack.c.bf16 %v8406, %v8405
        %v8569 = vpack.c.bf16 %v8409, %v8408
        %v8570 = vpack.c.bf16 %v8412, %v8411
        %v8571 = vpack.c.bf16 %v8415, %v8414
        %v8572 = vpack.c.bf16 %v8418, %v8417
        %v8573 = vpack.c.bf16 %v8421, %v8420
        %v8574 = vpack.c.bf16 %v8424, %v8423
        %v8575 = vpack.c.bf16 %v8427, %v8426
        %v8576 = vpack.c.bf16 %v8430, %v8429
        %v8577 = vpack.c.bf16 %v8433, %v8432
        %v8578 = vpack.c.bf16 %v8436, %v8435
        %v8579 = vpack.c.bf16 %v8439, %v8438
        %v8580 = vpack.c.bf16 %v8442, %v8441
        %v8581 = vpack.c.bf16 %v8445, %v8444
        %v8582 = vpack.c.bf16 %v8448, %v8447
        %v8583 = vpack.c.bf16 %v8451, %v8450
        %v8584 = vpack.c.bf16 %v8454, %v8453
        %v8585 = vpack.c.bf16 %v8457, %v8456
        %v8586 = vpack.c.bf16 %v8460, %v8459
        %v8587 = vpack.c.bf16 %v8463, %v8462
        %v8588 = vpack.c.bf16 %v8466, %v8465
        %v8589 = vpack.c.bf16 %v8469, %v8468
        %v8590 = vpack.c.bf16 %v8472, %v8471
        %v8591 = vpack.c.bf16 %v8475, %v8474
        %v8592 = vpack.c.bf16 %v8478, %v8477
        %v8593 = vpack.c.bf16 %v8481, %v8480
        %v8594 = vpack.c.bf16 %v8484, %v8483
        %v8595 = vpack.c.bf16 %v8487, %v8486
        %v8596 = vpack.c.bf16 %v8490, %v8489
        %v8597 = vpack.c.bf16 %v8493, %v8492
        %v8598 = vpack.c.bf16 %v8496, %v8495
        %v8599 = vpack.c.bf16 %v8499, %v8498
        %v8600 = vpack.c.bf16 %v8502, %v8501
        %v8601 = vpack.c.bf16 %v8505, %v8504
        %v8602 = vpack.c.bf16 %v8508, %v8507
        %v8603 = vpack.c.bf16 %v8511, %v8510
        %v8604 = vpack.c.bf16 %v8514, %v8513
        %v8605 = vpack.c.bf16 %v8517, %v8516
        %v8606 = vpack.c.bf16 %v8520, %v8519
        %v8607 = vpack.c.bf16 %v8523, %v8522
        %v8608 = vpack.c.bf16 %v8526, %v8525
        %v8609 = vpack.c.bf16 %v8529, %v8528
        %v8610 = vpack.c.bf16 %v8532, %v8531
        %v8611 = vpack.c.bf16 %v8535, %v8534
        %v8612 = vpack.c.bf16 %v8538, %v8537
        %v8613 = vpack.c.bf16 %v8541, %v8540
        %v8614 = vpack.c.bf16 %v8544, %v8543
        %v8615 = vpack.c.bf16 %v8547, %v8546
        %v8616 = vpack.c.bf16 %v8550, %v8549
        %v8617 = vpack.c.bf16 %v8553, %v8552
        %v8619 = vsel %vm6825, %v8554, 0
        %v8622 = vsel %vm6825, %v8555, 0
        %v8625 = vsel %vm6825, %v8556, 0
        %v8628 = vsel %vm6825, %v8557, 0
        %v8631 = vsel %vm6825, %v8558, 0
        %v8634 = vsel %vm6825, %v8559, 0
        %v8637 = vsel %vm6825, %v8560, 0
        %v8640 = vsel %vm6825, %v8561, 0
        %v8643 = vsel %vm6825, %v8562, 0
        %v8646 = vsel %vm6825, %v8563, 0
        %v8649 = vsel %vm6825, %v8564, 0
        %v8652 = vsel %vm6825, %v8565, 0
        %v8655 = vsel %vm6825, %v8566, 0
        %v8658 = vsel %vm6825, %v8567, 0
        %v8661 = vsel %vm6825, %v8568, 0
        %v8664 = vsel %vm6825, %v8569, 0
        %v8667 = vsel %vm6825, %v8570, 0
        %v8670 = vsel %vm6825, %v8571, 0
        %v8673 = vsel %vm6825, %v8572, 0
        %v8676 = vsel %vm6825, %v8573, 0
        %v8679 = vsel %vm6825, %v8574, 0
        %v8682 = vsel %vm6825, %v8575, 0
        %v8685 = vsel %vm6825, %v8576, 0
        %v8688 = vsel %vm6825, %v8577, 0
        %v8691 = vsel %vm6825, %v8578, 0
        %v8694 = vsel %vm6825, %v8579, 0
        %v8697 = vsel %vm6825, %v8580, 0
        %v8700 = vsel %vm6825, %v8581, 0
        %v8703 = vsel %vm6825, %v8582, 0
        %v8706 = vsel %vm6825, %v8583, 0
        %v8709 = vsel %vm6825, %v8584, 0
        %v8712 = vsel %vm6825, %v8585, 0
        %v8715 = vsel %vm6825, %v8586, 0
        %v8718 = vsel %vm6825, %v8587, 0
        %v8721 = vsel %vm6825, %v8588, 0
        %v8724 = vsel %vm6825, %v8589, 0
        %v8727 = vsel %vm6825, %v8590, 0
        %v8730 = vsel %vm6825, %v8591, 0
        %v8733 = vsel %vm6825, %v8592, 0
        %v8736 = vsel %vm6825, %v8593, 0
        %v8739 = vsel %vm6825, %v8594, 0
        %v8742 = vsel %vm6825, %v8595, 0
        %v8745 = vsel %vm6825, %v8596, 0
        %v8748 = vsel %vm6825, %v8597, 0
        %v8751 = vsel %vm6825, %v8598, 0
        %v8754 = vsel %vm6825, %v8599, 0
        %v8757 = vsel %vm6825, %v8600, 0
        %v8760 = vsel %vm6825, %v8601, 0
        %v8763 = vsel %vm6825, %v8602, 0
        %v8766 = vsel %vm6825, %v8603, 0
        %v8769 = vsel %vm6825, %v8604, 0
        %v8772 = vsel %vm6825, %v8605, 0
        %v8775 = vsel %vm6825, %v8606, 0
        %v8778 = vsel %vm6825, %v8607, 0
        %v8781 = vsel %vm6825, %v8608, 0
        %v8784 = vsel %vm6825, %v8609, 0
        %v8787 = vsel %vm6825, %v8610, 0
        %v8790 = vsel %vm6825, %v8611, 0
        %v8793 = vsel %vm6825, %v8612, 0
        %v8796 = vsel %vm6825, %v8613, 0
        %v8799 = vsel %vm6825, %v8614, 0
        %v8802 = vsel %vm6825, %v8615, 0
        %v8805 = vsel %vm6825, %v8616, 0
        %v8808 = vsel %vm6825, %v8617, 0
        %vm8810 = vcmask 1041408
        %v8812 = vsel %vm8810, %v731, 0
        %8814 = vmatprep.subr.bf16.mxu0 0
        %8815 = vmatpush1.bf16.msra.mxu0 %v8812
        %8816 = vmatprep.subr.bf16.mxu0 0
        %8817 = vmatpush1.bf16.msra.mxu0 0
        %8818 = vmatprep.subr.bf16.mxu0 0
        %8819 = vmatpush1.bf16.msra.mxu0 0
        %8820 = vmatprep.subr.bf16.mxu0 0
        %8821 = vmatpush1.bf16.msra.mxu0 0
        %8822 = vmatprep.subr.bf16.mxu0 0
        %8823 = vmatpush1.bf16.msra.mxu0 0
        %8824 = vmatprep.subr.bf16.mxu0 0
        %8825 = vmatpush1.bf16.msra.mxu0 0
        %8826 = vmatprep.subr.bf16.mxu0 0
        %8827 = vmatpush1.bf16.msra.mxu0 0
        %8828 = vmatprep.subr.bf16.mxu0 0
        %8829 = vmatpush1.bf16.msra.mxu0 0
        %8830 = vmatprep.subr.bf16.mxu0 0
        %8831 = vmatpush1.bf16.msra.mxu0 0
        %8832 = vmatprep.subr.bf16.mxu0 0
        %8833 = vmatpush1.bf16.msra.mxu0 0
        %8834 = vmatprep.subr.bf16.mxu0 0
        %8835 = vmatpush1.bf16.msra.mxu0 0
        %8836 = vmatprep.subr.bf16.mxu0 0
        %8837 = vmatpush1.bf16.msra.mxu0 0
        %8838 = vmatprep.subr.bf16.mxu0 0
        %8839 = vmatpush1.bf16.msra.mxu0 0
        %8840 = vmatprep.subr.bf16.mxu0 0
        %8841 = vmatpush1.bf16.msra.mxu0 0
        %8842 = vmatprep.subr.bf16.mxu0 0
        %8843 = vmatpush1.bf16.msra.mxu0 0
        %8844 = vmatprep.subr.bf16.mxu0 0
        %8845 = vmatpush1.bf16.msra.mxu0 0
        %8846 = vmatprep.mubr.bf16.mxu0 0
        %8847 = vmatmul.mubr.bf16.gmra.mrb[0].mxu0 %v8619
        %v8848 = vpop.f32.mrb[0].mxu0
        %v8849 = vadd.f32 0.0, %v8848
        %v8850 = vpop.f32.mrb[0].mxu0
        %v8851 = vpop.f32.mrb[0].mxu0
        %v8852 = vadd.f32 0.0, %v8851
        %v8853 = vpop.f32.mrb[0].mxu0
        %8854 = vmatprep.mubr.bf16.mxu0 0
        %8855 = vmatmul.mubr.bf16.gmra.mrb[0].mxu0 %v8622
        %v8856 = vpop.f32.mrb[0].mxu0
        %v8857 = vadd.f32 0.0, %v8856
        %v8858 = vpop.f32.mrb[0].mxu0
        %v8859 = vpop.f32.mrb[0].mxu0
        %v8860 = vadd.f32 0.0, %v8859
        %v8861 = vpop.f32.mrb[0].mxu0
        %8862 = vmatprep.mubr.bf16.mxu0 0
        %8863 = vmatmul.mubr.bf16.gmra.mrb[0].mxu0 %v8625
        %v8864 = vpop.f32.mrb[0].mxu0
        %v8865 = vadd.f32 0.0, %v8864
        %v8866 = vpop.f32.mrb[0].mxu0
        %v8867 = vpop.f32.mrb[0].mxu0
        %v8868 = vadd.f32 0.0, %v8867
        %v8869 = vpop.f32.mrb[0].mxu0
        %8870 = vmatprep.mubr.bf16.mxu0 0
        %8871 = vmatmul.mubr.bf16.gmra.mrb[0].mxu0 %v8628
        %v8872 = vpop.f32.mrb[0].mxu0
        %v8873 = vadd.f32 0.0, %v8872
        %v8874 = vpop.f32.mrb[0].mxu0
        %v8875 = vpop.f32.mrb[0].mxu0
        %v8876 = vadd.f32 0.0, %v8875
        %v8877 = vpop.f32.mrb[0].mxu0
        %8878 = vmatprep.mubr.bf16.mxu0 0
        %8879 = vmatmul.mubr.bf16.gmra.mrb[0].mxu0 %v8631
        %v8880 = vpop.f32.mrb[0].mxu0
        %v8881 = vadd.f32 0.0, %v8880
        %v8882 = vpop.f32.mrb[0].mxu0
        %v8883 = vpop.f32.mrb[0].mxu0
        %v8884 = vadd.f32 0.0, %v8883
        %v8885 = vpop.f32.mrb[0].mxu0
        %8886 = vmatprep.mubr.bf16.mxu0 0
        %8887 = vmatmul.mubr.bf16.gmra.mrb[0].mxu0 %v8634
        %v8888 = vpop.f32.mrb[0].mxu0
        %v8889 = vadd.f32 0.0, %v8888
        %v8890 = vpop.f32.mrb[0].mxu0
        %v8891 = vpop.f32.mrb[0].mxu0
        %v8892 = vadd.f32 0.0, %v8891
        %v8893 = vpop.f32.mrb[0].mxu0
        %8894 = vmatprep.mubr.bf16.mxu0 0
        %8895 = vmatmul.mubr.bf16.gmra.mrb[0].mxu0 %v8637
        %v8896 = vpop.f32.mrb[0].mxu0
        %v8897 = vadd.f32 0.0, %v8896
        %v8898 = vpop.f32.mrb[0].mxu0
        %v8899 = vpop.f32.mrb[0].mxu0
        %v8900 = vadd.f32 0.0, %v8899
        %v8901 = vpop.f32.mrb[0].mxu0
        %8902 = vmatprep.mubr.bf16.mxu0 0
        %8903 = vmatmul.mubr.bf16.gmra.mrb[0].mxu0 %v8640
        %v8904 = vpop.f32.mrb[0].mxu0
        %v8905 = vadd.f32 0.0, %v8904
        %v8906 = vpop.f32.mrb[0].mxu0
        %v8907 = vpop.f32.mrb[0].mxu0
        %v8908 = vadd.f32 0.0, %v8907
        %v8909 = vpop.f32.mrb[0].mxu0
        %8910 = vmatprep.mubr.bf16.mxu0 0
        %8911 = vmatmul.mubr.bf16.gmra.mrb[0].mxu0 %v8643
        %v8912 = vpop.f32.mrb[0].mxu0
        %v8913 = vadd.f32 0.0, %v8912
        %v8914 = vpop.f32.mrb[0].mxu0
        %v8915 = vpop.f32.mrb[0].mxu0
        %v8916 = vadd.f32 0.0, %v8915
        %v8917 = vpop.f32.mrb[0].mxu0
        %8918 = vmatprep.mubr.bf16.mxu0 0
        %8919 = vmatmul.mubr.bf16.gmra.mrb[0].mxu0 %v8646
        %v8920 = vpop.f32.mrb[0].mxu0
        %v8921 = vadd.f32 0.0, %v8920
        %v8922 = vpop.f32.mrb[0].mxu0
        %v8923 = vpop.f32.mrb[0].mxu0
        %v8924 = vadd.f32 0.0, %v8923
        %v8925 = vpop.f32.mrb[0].mxu0
        %8926 = vmatprep.mubr.bf16.mxu0 0
        %8927 = vmatmul.mubr.bf16.gmra.mrb[0].mxu0 %v8649
        %v8928 = vpop.f32.mrb[0].mxu0
        %v8929 = vadd.f32 0.0, %v8928
        %v8930 = vpop.f32.mrb[0].mxu0
        %v8931 = vpop.f32.mrb[0].mxu0
        %v8932 = vadd.f32 0.0, %v8931
        %v8933 = vpop.f32.mrb[0].mxu0
        %8934 = vmatprep.mubr.bf16.mxu0 0
        %8935 = vmatmul.mubr.bf16.gmra.mrb[0].mxu0 %v8652
        %v8936 = vpop.f32.mrb[0].mxu0
        %v8937 = vadd.f32 0.0, %v8936
        %v8938 = vpop.f32.mrb[0].mxu0
        %v8939 = vpop.f32.mrb[0].mxu0
        %v8940 = vadd.f32 0.0, %v8939
        %v8941 = vpop.f32.mrb[0].mxu0
        %8942 = vmatprep.mubr.bf16.mxu0 0
        %8943 = vmatmul.mubr.bf16.gmra.mrb[0].mxu0 %v8655
        %v8944 = vpop.f32.mrb[0].mxu0
        %v8945 = vadd.f32 0.0, %v8944
        %v8946 = vpop.f32.mrb[0].mxu0
        %v8947 = vpop.f32.mrb[0].mxu0
        %v8948 = vadd.f32 0.0, %v8947
        %v8949 = vpop.f32.mrb[0].mxu0
        %8950 = vmatprep.mubr.bf16.mxu0 0
        %8951 = vmatmul.mubr.bf16.gmra.mrb[0].mxu0 %v8658
        %v8952 = vpop.f32.mrb[0].mxu0
        %v8953 = vadd.f32 0.0, %v8952
        %v8954 = vpop.f32.mrb[0].mxu0
        %v8955 = vpop.f32.mrb[0].mxu0
        %v8956 = vadd.f32 0.0, %v8955
        %v8957 = vpop.f32.mrb[0].mxu0
        %8958 = vmatprep.mubr.bf16.mxu0 0
        %8959 = vmatmul.mubr.bf16.gmra.mrb[0].mxu0 %v8661
        %v8960 = vpop.f32.mrb[0].mxu0
        %v8961 = vadd.f32 0.0, %v8960
        %v8962 = vpop.f32.mrb[0].mxu0
        %v8963 = vpop.f32.mrb[0].mxu0
        %v8964 = vadd.f32 0.0, %v8963
        %v8965 = vpop.f32.mrb[0].mxu0
        %8966 = vmatprep.mubr.bf16.mxu0 0
        %8967 = vmatmul.mubr.bf16.gmra.mrb[0].mxu0 %v8664
        %v8968 = vpop.f32.mrb[0].mxu0
        %v8969 = vadd.f32 0.0, %v8968
        %v8970 = vpop.f32.mrb[0].mxu0
        %v8971 = vpop.f32.mrb[0].mxu0
        %v8972 = vadd.f32 0.0, %v8971
        %v8973 = vpop.f32.mrb[0].mxu0
        %8974 = vmatprep.mubr.bf16.mxu0 0
        %8975 = vmatmul.mubr.bf16.gmra.mrb[0].mxu0 %v8667
        %v8976 = vpop.f32.mrb[0].mxu0
        %v8977 = vadd.f32 0.0, %v8976
        %v8978 = vpop.f32.mrb[0].mxu0
        %v8979 = vpop.f32.mrb[0].mxu0
        %v8980 = vadd.f32 0.0, %v8979
        %v8981 = vpop.f32.mrb[0].mxu0
        %8982 = vmatprep.mubr.bf16.mxu0 0
        %8983 = vmatmul.mubr.bf16.gmra.mrb[0].mxu0 %v8670
        %v8984 = vpop.f32.mrb[0].mxu0
        %v8985 = vadd.f32 0.0, %v8984
        %v8986 = vpop.f32.mrb[0].mxu0
        %v8987 = vpop.f32.mrb[0].mxu0
        %v8988 = vadd.f32 0.0, %v8987
        %v8989 = vpop.f32.mrb[0].mxu0
        %8990 = vmatprep.mubr.bf16.mxu0 0
        %8991 = vmatmul.mubr.bf16.gmra.mrb[0].mxu0 %v8673
        %v8992 = vpop.f32.mrb[0].mxu0
        %v8993 = vadd.f32 0.0, %v8992
        %v8994 = vpop.f32.mrb[0].mxu0
        %v8995 = vpop.f32.mrb[0].mxu0
        %v8996 = vadd.f32 0.0, %v8995
        %v8997 = vpop.f32.mrb[0].mxu0
        %8998 = vmatprep.mubr.bf16.mxu0 0
        %8999 = vmatmul.mubr.bf16.gmra.mrb[0].mxu0 %v8676
        %v9000 = vpop.f32.mrb[0].mxu0
        %v9001 = vadd.f32 0.0, %v9000
        %v9002 = vpop.f32.mrb[0].mxu0
        %v9003 = vpop.f32.mrb[0].mxu0
        %v9004 = vadd.f32 0.0, %v9003
        %v9005 = vpop.f32.mrb[0].mxu0
        %9006 = vmatprep.mubr.bf16.mxu0 0
        %9007 = vmatmul.mubr.bf16.gmra.mrb[0].mxu0 %v8679
        %v9008 = vpop.f32.mrb[0].mxu0
        %v9009 = vadd.f32 0.0, %v9008
        %v9010 = vpop.f32.mrb[0].mxu0
        %v9011 = vpop.f32.mrb[0].mxu0
        %v9012 = vadd.f32 0.0, %v9011
        %v9013 = vpop.f32.mrb[0].mxu0
        %9014 = vmatprep.mubr.bf16.mxu0 0
        %9015 = vmatmul.mubr.bf16.gmra.mrb[0].mxu0 %v8682
        %v9016 = vpop.f32.mrb[0].mxu0
        %v9017 = vadd.f32 0.0, %v9016
        %v9018 = vpop.f32.mrb[0].mxu0
        %v9019 = vpop.f32.mrb[0].mxu0
        %v9020 = vadd.f32 0.0, %v9019
        %v9021 = vpop.f32.mrb[0].mxu0
        %9022 = vmatprep.mubr.bf16.mxu0 0
        %9023 = vmatmul.mubr.bf16.gmra.mrb[0].mxu0 %v8685
        %v9024 = vpop.f32.mrb[0].mxu0
        %v9025 = vadd.f32 0.0, %v9024
        %v9026 = vpop.f32.mrb[0].mxu0
        %v9027 = vpop.f32.mrb[0].mxu0
        %v9028 = vadd.f32 0.0, %v9027
        %v9029 = vpop.f32.mrb[0].mxu0
        %9030 = vmatprep.mubr.bf16.mxu0 0
        %9031 = vmatmul.mubr.bf16.gmra.mrb[0].mxu0 %v8688
        %v9032 = vpop.f32.mrb[0].mxu0
        %v9033 = vadd.f32 0.0, %v9032
        %v9034 = vpop.f32.mrb[0].mxu0
        %v9035 = vpop.f32.mrb[0].mxu0
        %v9036 = vadd.f32 0.0, %v9035
        %v9037 = vpop.f32.mrb[0].mxu0
        %9038 = vmatprep.mubr.bf16.mxu0 0
        %9039 = vmatmul.mubr.bf16.gmra.mrb[0].mxu0 %v8691
        %v9040 = vpop.f32.mrb[0].mxu0
        %v9041 = vadd.f32 0.0, %v9040
        %v9042 = vpop.f32.mrb[0].mxu0
        %v9043 = vpop.f32.mrb[0].mxu0
        %v9044 = vadd.f32 0.0, %v9043
        %v9045 = vpop.f32.mrb[0].mxu0
        %9046 = vmatprep.mubr.bf16.mxu0 0
        %9047 = vmatmul.mubr.bf16.gmra.mrb[0].mxu0 %v8694
        %v9048 = vpop.f32.mrb[0].mxu0
        %v9049 = vadd.f32 0.0, %v9048
        %v9050 = vpop.f32.mrb[0].mxu0
        %v9051 = vpop.f32.mrb[0].mxu0
        %v9052 = vadd.f32 0.0, %v9051
        %v9053 = vpop.f32.mrb[0].mxu0
        %9054 = vmatprep.mubr.bf16.mxu0 0
        %9055 = vmatmul.mubr.bf16.gmra.mrb[0].mxu0 %v8697
        %v9056 = vpop.f32.mrb[0].mxu0
        %v9057 = vadd.f32 0.0, %v9056
        %v9058 = vpop.f32.mrb[0].mxu0
        %v9059 = vpop.f32.mrb[0].mxu0
        %v9060 = vadd.f32 0.0, %v9059
        %v9061 = vpop.f32.mrb[0].mxu0
        %9062 = vmatprep.mubr.bf16.mxu0 0
        %9063 = vmatmul.mubr.bf16.gmra.mrb[0].mxu0 %v8700
        %v9064 = vpop.f32.mrb[0].mxu0
        %v9065 = vadd.f32 0.0, %v9064
        %v9066 = vpop.f32.mrb[0].mxu0
        %v9067 = vpop.f32.mrb[0].mxu0
        %v9068 = vadd.f32 0.0, %v9067
        %v9069 = vpop.f32.mrb[0].mxu0
        %9070 = vmatprep.mubr.bf16.mxu0 0
        %9071 = vmatmul.mubr.bf16.gmra.mrb[0].mxu0 %v8703
        %v9072 = vpop.f32.mrb[0].mxu0
        %v9073 = vadd.f32 0.0, %v9072
        %v9074 = vpop.f32.mrb[0].mxu0
        %v9075 = vpop.f32.mrb[0].mxu0
        %v9076 = vadd.f32 0.0, %v9075
        %v9077 = vpop.f32.mrb[0].mxu0
        %9078 = vmatprep.mubr.bf16.mxu0 0
        %9079 = vmatmul.mubr.bf16.gmra.mrb[0].mxu0 %v8706
        %v9080 = vpop.f32.mrb[0].mxu0
        %v9081 = vadd.f32 0.0, %v9080
        %v9082 = vpop.f32.mrb[0].mxu0
        %v9083 = vpop.f32.mrb[0].mxu0
        %v9084 = vadd.f32 0.0, %v9083
        %v9085 = vpop.f32.mrb[0].mxu0
        %9086 = vmatprep.mubr.bf16.mxu0 0
        %9087 = vmatmul.mubr.bf16.gmra.mrb[0].mxu0 %v8709
        %v9088 = vpop.f32.mrb[0].mxu0
        %v9089 = vadd.f32 0.0, %v9088
        %v9090 = vpop.f32.mrb[0].mxu0
        %v9091 = vpop.f32.mrb[0].mxu0
        %v9092 = vadd.f32 0.0, %v9091
        %v9093 = vpop.f32.mrb[0].mxu0
        %9094 = vmatprep.mubr.bf16.mxu0 0
        %9095 = vmatmul.mubr.bf16.gmra.mrb[0].mxu0 %v8712
        %v9096 = vpop.f32.mrb[0].mxu0
        %v9097 = vadd.f32 0.0, %v9096
        %v9098 = vpop.f32.mrb[0].mxu0
        %v9099 = vpop.f32.mrb[0].mxu0
        %v9100 = vadd.f32 0.0, %v9099
        %v9101 = vpop.f32.mrb[0].mxu0
        %9102 = vmatprep.mubr.bf16.mxu0 0
        %9103 = vmatmul.mubr.bf16.gmra.mrb[0].mxu0 %v8715
        %v9104 = vpop.f32.mrb[0].mxu0
        %v9105 = vadd.f32 0.0, %v9104
        %v9106 = vpop.f32.mrb[0].mxu0
        %v9107 = vpop.f32.mrb[0].mxu0
        %v9108 = vadd.f32 0.0, %v9107
        %v9109 = vpop.f32.mrb[0].mxu0
        %9110 = vmatprep.mubr.bf16.mxu0 0
        %9111 = vmatmul.mubr.bf16.gmra.mrb[0].mxu0 %v8718
        %v9112 = vpop.f32.mrb[0].mxu0
        %v9113 = vadd.f32 0.0, %v9112
        %v9114 = vpop.f32.mrb[0].mxu0
        %v9115 = vpop.f32.mrb[0].mxu0
        %v9116 = vadd.f32 0.0, %v9115
        %v9117 = vpop.f32.mrb[0].mxu0
        %9118 = vmatprep.mubr.bf16.mxu0 0
        %9119 = vmatmul.mubr.bf16.gmra.mrb[0].mxu0 %v8721
        %v9120 = vpop.f32.mrb[0].mxu0
        %v9121 = vadd.f32 0.0, %v9120
        %v9122 = vpop.f32.mrb[0].mxu0
        %v9123 = vpop.f32.mrb[0].mxu0
        %v9124 = vadd.f32 0.0, %v9123
        %v9125 = vpop.f32.mrb[0].mxu0
        %9126 = vmatprep.mubr.bf16.mxu0 0
        %9127 = vmatmul.mubr.bf16.gmra.mrb[0].mxu0 %v8724
        %v9128 = vpop.f32.mrb[0].mxu0
        %v9129 = vadd.f32 0.0, %v9128
        %v9130 = vpop.f32.mrb[0].mxu0
        %v9131 = vpop.f32.mrb[0].mxu0
        %v9132 = vadd.f32 0.0, %v9131
        %v9133 = vpop.f32.mrb[0].mxu0
        %9134 = vmatprep.mubr.bf16.mxu0 0
        %9135 = vmatmul.mubr.bf16.gmra.mrb[0].mxu0 %v8727
        %v9136 = vpop.f32.mrb[0].mxu0
        %v9137 = vadd.f32 0.0, %v9136
        %v9138 = vpop.f32.mrb[0].mxu0
        %v9139 = vpop.f32.mrb[0].mxu0
        %v9140 = vadd.f32 0.0, %v9139
        %v9141 = vpop.f32.mrb[0].mxu0
        %9142 = vmatprep.mubr.bf16.mxu0 0
        %9143 = vmatmul.mubr.bf16.gmra.mrb[0].mxu0 %v8730
        %v9144 = vpop.f32.mrb[0].mxu0
        %v9145 = vadd.f32 0.0, %v9144
        %v9146 = vpop.f32.mrb[0].mxu0
        %v9147 = vpop.f32.mrb[0].mxu0
        %v9148 = vadd.f32 0.0, %v9147
        %v9149 = vpop.f32.mrb[0].mxu0
        %9150 = vmatprep.mubr.bf16.mxu0 0
        %9151 = vmatmul.mubr.bf16.gmra.mrb[0].mxu0 %v8733
        %v9152 = vpop.f32.mrb[0].mxu0
        %v9153 = vadd.f32 0.0, %v9152
        %v9154 = vpop.f32.mrb[0].mxu0
        %v9155 = vpop.f32.mrb[0].mxu0
        %v9156 = vadd.f32 0.0, %v9155
        %v9157 = vpop.f32.mrb[0].mxu0
        %9158 = vmatprep.mubr.bf16.mxu0 0
        %9159 = vmatmul.mubr.bf16.gmra.mrb[0].mxu0 %v8736
        %v9160 = vpop.f32.mrb[0].mxu0
        %v9161 = vadd.f32 0.0, %v9160
        %v9162 = vpop.f32.mrb[0].mxu0
        %v9163 = vpop.f32.mrb[0].mxu0
        %v9164 = vadd.f32 0.0, %v9163
        %v9165 = vpop.f32.mrb[0].mxu0
        %9166 = vmatprep.mubr.bf16.mxu0 0
        %9167 = vmatmul.mubr.bf16.gmra.mrb[0].mxu0 %v8739
        %v9168 = vpop.f32.mrb[0].mxu0
        %v9169 = vadd.f32 0.0, %v9168
        %v9170 = vpop.f32.mrb[0].mxu0
        %v9171 = vpop.f32.mrb[0].mxu0
        %v9172 = vadd.f32 0.0, %v9171
        %v9173 = vpop.f32.mrb[0].mxu0
        %9174 = vmatprep.mubr.bf16.mxu0 0
        %9175 = vmatmul.mubr.bf16.gmra.mrb[0].mxu0 %v8742
        %v9176 = vpop.f32.mrb[0].mxu0
        %v9177 = vadd.f32 0.0, %v9176
        %v9178 = vpop.f32.mrb[0].mxu0
        %v9179 = vpop.f32.mrb[0].mxu0
        %v9180 = vadd.f32 0.0, %v9179
        %v9181 = vpop.f32.mrb[0].mxu0
        %9182 = vmatprep.mubr.bf16.mxu0 0
        %9183 = vmatmul.mubr.bf16.gmra.mrb[0].mxu0 %v8745
        %v9184 = vpop.f32.mrb[0].mxu0
        %v9185 = vadd.f32 0.0, %v9184
        %v9186 = vpop.f32.mrb[0].mxu0
        %v9187 = vpop.f32.mrb[0].mxu0
        %v9188 = vadd.f32 0.0, %v9187
        %v9189 = vpop.f32.mrb[0].mxu0
        %9190 = vmatprep.mubr.bf16.mxu0 0
        %9191 = vmatmul.mubr.bf16.gmra.mrb[0].mxu0 %v8748
        %v9192 = vpop.f32.mrb[0].mxu0
        %v9193 = vadd.f32 0.0, %v9192
        %v9194 = vpop.f32.mrb[0].mxu0
        %v9195 = vpop.f32.mrb[0].mxu0
        %v9196 = vadd.f32 0.0, %v9195
        %v9197 = vpop.f32.mrb[0].mxu0
        %9198 = vmatprep.mubr.bf16.mxu0 0
        %9199 = vmatmul.mubr.bf16.gmra.mrb[0].mxu0 %v8751
        %v9200 = vpop.f32.mrb[0].mxu0
        %v9201 = vadd.f32 0.0, %v9200
        %v9202 = vpop.f32.mrb[0].mxu0
        %v9203 = vpop.f32.mrb[0].mxu0
        %v9204 = vadd.f32 0.0, %v9203
        %v9205 = vpop.f32.mrb[0].mxu0
        %9206 = vmatprep.mubr.bf16.mxu0 0
        %9207 = vmatmul.mubr.bf16.gmra.mrb[0].mxu0 %v8754
        %v9208 = vpop.f32.mrb[0].mxu0
        %v9209 = vadd.f32 0.0, %v9208
        %v9210 = vpop.f32.mrb[0].mxu0
        %v9211 = vpop.f32.mrb[0].mxu0
        %v9212 = vadd.f32 0.0, %v9211
        %v9213 = vpop.f32.mrb[0].mxu0
        %9214 = vmatprep.mubr.bf16.mxu0 0
        %9215 = vmatmul.mubr.bf16.gmra.mrb[0].mxu0 %v8757
        %v9216 = vpop.f32.mrb[0].mxu0
        %v9217 = vadd.f32 0.0, %v9216
        %v9218 = vpop.f32.mrb[0].mxu0
        %v9219 = vpop.f32.mrb[0].mxu0
        %v9220 = vadd.f32 0.0, %v9219
        %v9221 = vpop.f32.mrb[0].mxu0
        %9222 = vmatprep.mubr.bf16.mxu0 0
        %9223 = vmatmul.mubr.bf16.gmra.mrb[0].mxu0 %v8760
        %v9224 = vpop.f32.mrb[0].mxu0
        %v9225 = vadd.f32 0.0, %v9224
        %v9226 = vpop.f32.mrb[0].mxu0
        %v9227 = vpop.f32.mrb[0].mxu0
        %v9228 = vadd.f32 0.0, %v9227
        %v9229 = vpop.f32.mrb[0].mxu0
        %9230 = vmatprep.mubr.bf16.mxu0 0
        %9231 = vmatmul.mubr.bf16.gmra.mrb[0].mxu0 %v8763
        %v9232 = vpop.f32.mrb[0].mxu0
        %v9233 = vadd.f32 0.0, %v9232
        %v9234 = vpop.f32.mrb[0].mxu0
        %v9235 = vpop.f32.mrb[0].mxu0
        %v9236 = vadd.f32 0.0, %v9235
        %v9237 = vpop.f32.mrb[0].mxu0
        %9238 = vmatprep.mubr.bf16.mxu0 0
        %9239 = vmatmul.mubr.bf16.gmra.mrb[0].mxu0 %v8766
        %v9240 = vpop.f32.mrb[0].mxu0
        %v9241 = vadd.f32 0.0, %v9240
        %v9242 = vpop.f32.mrb[0].mxu0
        %v9243 = vpop.f32.mrb[0].mxu0
        %v9244 = vadd.f32 0.0, %v9243
        %v9245 = vpop.f32.mrb[0].mxu0
        %9246 = vmatprep.mubr.bf16.mxu0 0
        %9247 = vmatmul.mubr.bf16.gmra.mrb[0].mxu0 %v8769
        %v9248 = vpop.f32.mrb[0].mxu0
        %v9249 = vadd.f32 0.0, %v9248
        %v9250 = vpop.f32.mrb[0].mxu0
        %v9251 = vpop.f32.mrb[0].mxu0
        %v9252 = vadd.f32 0.0, %v9251
        %v9253 = vpop.f32.mrb[0].mxu0
        %9254 = vmatprep.mubr.bf16.mxu0 0
        %9255 = vmatmul.mubr.bf16.gmra.mrb[0].mxu0 %v8772
        %v9256 = vpop.f32.mrb[0].mxu0
        %v9257 = vadd.f32 0.0, %v9256
        %v9258 = vpop.f32.mrb[0].mxu0
        %v9259 = vpop.f32.mrb[0].mxu0
        %v9260 = vadd.f32 0.0, %v9259
        %v9261 = vpop.f32.mrb[0].mxu0
        %9262 = vmatprep.mubr.bf16.mxu0 0
        %9263 = vmatmul.mubr.bf16.gmra.mrb[0].mxu0 %v8775
        %v9264 = vpop.f32.mrb[0].mxu0
        %v9265 = vadd.f32 0.0, %v9264
        %v9266 = vpop.f32.mrb[0].mxu0
        %v9267 = vpop.f32.mrb[0].mxu0
        %v9268 = vadd.f32 0.0, %v9267
        %v9269 = vpop.f32.mrb[0].mxu0
        %9270 = vmatprep.mubr.bf16.mxu0 0
        %9271 = vmatmul.mubr.bf16.gmra.mrb[0].mxu0 %v8778
        %v9272 = vpop.f32.mrb[0].mxu0
        %v9273 = vadd.f32 0.0, %v9272
        %v9274 = vpop.f32.mrb[0].mxu0
        %v9275 = vpop.f32.mrb[0].mxu0
        %v9276 = vadd.f32 0.0, %v9275
        %v9277 = vpop.f32.mrb[0].mxu0
        %9278 = vmatprep.mubr.bf16.mxu0 0
        %9279 = vmatmul.mubr.bf16.gmra.mrb[0].mxu0 %v8781
        %v9280 = vpop.f32.mrb[0].mxu0
        %v9281 = vadd.f32 0.0, %v9280
        %v9282 = vpop.f32.mrb[0].mxu0
        %v9283 = vpop.f32.mrb[0].mxu0
        %v9284 = vadd.f32 0.0, %v9283
        %v9285 = vpop.f32.mrb[0].mxu0
        %9286 = vmatprep.mubr.bf16.mxu0 0
        %9287 = vmatmul.mubr.bf16.gmra.mrb[0].mxu0 %v8784
        %v9288 = vpop.f32.mrb[0].mxu0
        %v9289 = vadd.f32 0.0, %v9288
        %v9290 = vpop.f32.mrb[0].mxu0
        %v9291 = vpop.f32.mrb[0].mxu0
        %v9292 = vadd.f32 0.0, %v9291
        %v9293 = vpop.f32.mrb[0].mxu0
        %9294 = vmatprep.mubr.bf16.mxu0 0
        %9295 = vmatmul.mubr.bf16.gmra.mrb[0].mxu0 %v8787
        %v9296 = vpop.f32.mrb[0].mxu0
        %v9297 = vadd.f32 0.0, %v9296
        %v9298 = vpop.f32.mrb[0].mxu0
        %v9299 = vpop.f32.mrb[0].mxu0
        %v9300 = vadd.f32 0.0, %v9299
        %v9301 = vpop.f32.mrb[0].mxu0
        %9302 = vmatprep.mubr.bf16.mxu0 0
        %9303 = vmatmul.mubr.bf16.gmra.mrb[0].mxu0 %v8790
        %v9304 = vpop.f32.mrb[0].mxu0
        %v9305 = vadd.f32 0.0, %v9304
        %v9306 = vpop.f32.mrb[0].mxu0
        %v9307 = vpop.f32.mrb[0].mxu0
        %v9308 = vadd.f32 0.0, %v9307
        %v9309 = vpop.f32.mrb[0].mxu0
        %9310 = vmatprep.mubr.bf16.mxu0 0
        %9311 = vmatmul.mubr.bf16.gmra.mrb[0].mxu0 %v8793
        %v9312 = vpop.f32.mrb[0].mxu0
        %v9313 = vadd.f32 0.0, %v9312
        %v9314 = vpop.f32.mrb[0].mxu0
        %v9315 = vpop.f32.mrb[0].mxu0
        %v9316 = vadd.f32 0.0, %v9315
        %v9317 = vpop.f32.mrb[0].mxu0
        %9318 = vmatprep.mubr.bf16.mxu0 0
        %9319 = vmatmul.mubr.bf16.gmra.mrb[0].mxu0 %v8796
        %v9320 = vpop.f32.mrb[0].mxu0
        %v9321 = vadd.f32 0.0, %v9320
        %v9322 = vpop.f32.mrb[0].mxu0
        %v9323 = vpop.f32.mrb[0].mxu0
        %v9324 = vadd.f32 0.0, %v9323
        %v9325 = vpop.f32.mrb[0].mxu0
        %9326 = vmatprep.mubr.bf16.mxu0 0
        %9327 = vmatmul.mubr.bf16.gmra.mrb[0].mxu0 %v8799
        %v9328 = vpop.f32.mrb[0].mxu0
        %v9329 = vadd.f32 0.0, %v9328
        %v9330 = vpop.f32.mrb[0].mxu0
        %v9331 = vpop.f32.mrb[0].mxu0
        %v9332 = vadd.f32 0.0, %v9331
        %v9333 = vpop.f32.mrb[0].mxu0
        %9334 = vmatprep.mubr.bf16.mxu0 0
        %9335 = vmatmul.mubr.bf16.gmra.mrb[0].mxu0 %v8802
        %v9336 = vpop.f32.mrb[0].mxu0
        %v9337 = vadd.f32 0.0, %v9336
        %v9338 = vpop.f32.mrb[0].mxu0
        %v9339 = vpop.f32.mrb[0].mxu0
        %v9340 = vadd.f32 0.0, %v9339
        %v9341 = vpop.f32.mrb[0].mxu0
        %9342 = vmatprep.mubr.bf16.mxu0 0
        %9343 = vmatmul.mubr.bf16.gmra.mrb[0].mxu0 %v8805
        %v9344 = vpop.f32.mrb[0].mxu0
        %v9345 = vadd.f32 0.0, %v9344
        %v9346 = vpop.f32.mrb[0].mxu0
        %v9347 = vpop.f32.mrb[0].mxu0
        %v9348 = vadd.f32 0.0, %v9347
        %v9349 = vpop.f32.mrb[0].mxu0
        %9350 = vmatprep.mubr.bf16.mxu0 0
        %9351 = vmatmul.mubr.bf16.gmra.mrb[0].mxu0 %v8808
        %v9352 = vpop.f32.mrb[0].mxu0
        %v9353 = vadd.f32 0.0, %v9352
        %v9354 = vpop.f32.mrb[0].mxu0
        %v9355 = vpop.f32.mrb[0].mxu0
        %v9356 = vadd.f32 0.0, %v9355
        %v9357 = vpop.f32.mrb[0].mxu0
        %9358 = vdwg.mxu0
        %v9359 = vunpack.c.l.bf16 %v4772
        %v9360 = vunpack.c.h.bf16 %v4772
        %v9361 = vunpack.c.l.bf16 %v4773
        %v9362 = vunpack.c.h.bf16 %v4773
        %v9363 = vunpack.c.l.bf16 %v4774
        %v9364 = vunpack.c.h.bf16 %v4774
        %v9365 = vunpack.c.l.bf16 %v4775
        %v9366 = vunpack.c.h.bf16 %v4775
        %v9367 = vunpack.c.l.bf16 %v4776
        %v9368 = vunpack.c.h.bf16 %v4776
        %v9369 = vunpack.c.l.bf16 %v4777
        %v9370 = vunpack.c.h.bf16 %v4777
        %v9371 = vunpack.c.l.bf16 %v4778
        %v9372 = vunpack.c.h.bf16 %v4778
        %v9373 = vunpack.c.l.bf16 %v4779
        %v9374 = vunpack.c.h.bf16 %v4779
        %v9375 = vunpack.c.l.bf16 %v4780
        %v9376 = vunpack.c.h.bf16 %v4780
        %v9377 = vunpack.c.l.bf16 %v4781
        %v9378 = vunpack.c.h.bf16 %v4781
        %v9379 = vunpack.c.l.bf16 %v4782
        %v9380 = vunpack.c.h.bf16 %v4782
        %v9381 = vunpack.c.l.bf16 %v4783
        %v9382 = vunpack.c.h.bf16 %v4783
        %v9383 = vunpack.c.l.bf16 %v4784
        %v9384 = vunpack.c.h.bf16 %v4784
        %v9385 = vunpack.c.l.bf16 %v4785
        %v9386 = vunpack.c.h.bf16 %v4785
        %v9387 = vunpack.c.l.bf16 %v4786
        %v9388 = vunpack.c.h.bf16 %v4786
        %v9389 = vunpack.c.l.bf16 %v4787
        %v9390 = vunpack.c.h.bf16 %v4787
        %v9391 = vunpack.c.l.bf16 %v4788
        %v9392 = vunpack.c.h.bf16 %v4788
        %v9393 = vunpack.c.l.bf16 %v4789
        %v9394 = vunpack.c.h.bf16 %v4789
        %v9395 = vunpack.c.l.bf16 %v4790
        %v9396 = vunpack.c.h.bf16 %v4790
        %v9397 = vunpack.c.l.bf16 %v4791
        %v9398 = vunpack.c.h.bf16 %v4791
        %v9399 = vunpack.c.l.bf16 %v4792
        %v9400 = vunpack.c.h.bf16 %v4792
        %v9401 = vunpack.c.l.bf16 %v4793
        %v9402 = vunpack.c.h.bf16 %v4793
        %v9403 = vunpack.c.l.bf16 %v4794
        %v9404 = vunpack.c.h.bf16 %v4794
        %v9405 = vunpack.c.l.bf16 %v4795
        %v9406 = vunpack.c.h.bf16 %v4795
        %v9407 = vunpack.c.l.bf16 %v4796
        %v9408 = vunpack.c.h.bf16 %v4796
        %v9409 = vunpack.c.l.bf16 %v4797
        %v9410 = vunpack.c.h.bf16 %v4797
        %v9411 = vunpack.c.l.bf16 %v4798
        %v9412 = vunpack.c.h.bf16 %v4798
        %v9413 = vunpack.c.l.bf16 %v4799
        %v9414 = vunpack.c.h.bf16 %v4799
        %v9415 = vunpack.c.l.bf16 %v4800
        %v9416 = vunpack.c.h.bf16 %v4800
        %v9417 = vunpack.c.l.bf16 %v4801
        %v9418 = vunpack.c.h.bf16 %v4801
        %v9419 = vunpack.c.l.bf16 %v4802
        %v9420 = vunpack.c.h.bf16 %v4802
        %v9421 = vunpack.c.l.bf16 %v4803
        %v9422 = vunpack.c.h.bf16 %v4803
        %v9423 = vunpack.c.l.bf16 %v4804
        %v9424 = vunpack.c.h.bf16 %v4804
        %v9425 = vunpack.c.l.bf16 %v4805
        %v9426 = vunpack.c.h.bf16 %v4805
        %v9427 = vunpack.c.l.bf16 %v4806
        %v9428 = vunpack.c.h.bf16 %v4806
        %v9429 = vunpack.c.l.bf16 %v4807
        %v9430 = vunpack.c.h.bf16 %v4807
        %v9431 = vunpack.c.l.bf16 %v4808
        %v9432 = vunpack.c.h.bf16 %v4808
        %v9433 = vunpack.c.l.bf16 %v4809
        %v9434 = vunpack.c.h.bf16 %v4809
        %v9435 = vunpack.c.l.bf16 %v4810
        %v9436 = vunpack.c.h.bf16 %v4810
        %v9437 = vunpack.c.l.bf16 %v4811
        %v9438 = vunpack.c.h.bf16 %v4811
        %v9439 = vunpack.c.l.bf16 %v4812
        %v9440 = vunpack.c.h.bf16 %v4812
        %v9441 = vunpack.c.l.bf16 %v4813
        %v9442 = vunpack.c.h.bf16 %v4813
        %v9443 = vunpack.c.l.bf16 %v4814
        %v9444 = vunpack.c.h.bf16 %v4814
        %v9445 = vunpack.c.l.bf16 %v4815
        %v9446 = vunpack.c.h.bf16 %v4815
        %v9447 = vunpack.c.l.bf16 %v4816
        %v9448 = vunpack.c.h.bf16 %v4816
        %v9449 = vunpack.c.l.bf16 %v4817
        %v9450 = vunpack.c.h.bf16 %v4817
        %v9451 = vunpack.c.l.bf16 %v4818
        %v9452 = vunpack.c.h.bf16 %v4818
        %v9453 = vunpack.c.l.bf16 %v4819
        %v9454 = vunpack.c.h.bf16 %v4819
        %v9455 = vunpack.c.l.bf16 %v4820
        %v9456 = vunpack.c.h.bf16 %v4820
        %v9457 = vunpack.c.l.bf16 %v4821
        %v9458 = vunpack.c.h.bf16 %v4821
        %v9459 = vunpack.c.l.bf16 %v4822
        %v9460 = vunpack.c.h.bf16 %v4822
        %v9461 = vunpack.c.l.bf16 %v4823
        %v9462 = vunpack.c.h.bf16 %v4823
        %v9463 = vunpack.c.l.bf16 %v4824
        %v9464 = vunpack.c.h.bf16 %v4824
        %v9465 = vunpack.c.l.bf16 %v4825
        %v9466 = vunpack.c.h.bf16 %v4825
        %v9467 = vunpack.c.l.bf16 %v4826
        %v9468 = vunpack.c.h.bf16 %v4826
        %v9469 = vunpack.c.l.bf16 %v4827
        %v9470 = vunpack.c.h.bf16 %v4827
        %v9471 = vunpack.c.l.bf16 %v4828
        %v9472 = vunpack.c.h.bf16 %v4828
        %v9473 = vunpack.c.l.bf16 %v4829
        %v9474 = vunpack.c.h.bf16 %v4829
        %v9475 = vunpack.c.l.bf16 %v4830
        %v9476 = vunpack.c.h.bf16 %v4830
        %v9477 = vunpack.c.l.bf16 %v4831
        %v9478 = vunpack.c.h.bf16 %v4831
        %v9479 = vunpack.c.l.bf16 %v4832
        %v9480 = vunpack.c.h.bf16 %v4832
        %v9481 = vunpack.c.l.bf16 %v4833
        %v9482 = vunpack.c.h.bf16 %v4833
        %v9483 = vunpack.c.l.bf16 %v4834
        %v9484 = vunpack.c.h.bf16 %v4834
        %v9485 = vunpack.c.l.bf16 %v4835
        %v9486 = vunpack.c.h.bf16 %v4835
        %9615 = vrot.lane.b32.xlu0 %v9359, 64
        %v9616 = vpop.permute.xlu0 %9615
        %9617 = vrot.lane.b32.xlu0 %v9360, 64
        %v9618 = vpop.permute.xlu0 %9617
        %9619 = vrot.lane.b32.xlu0 %v9361, 64
        %v9620 = vpop.permute.xlu0 %9619
        %9621 = vrot.lane.b32.xlu0 %v9362, 64
        %v9622 = vpop.permute.xlu0 %9621
        %9623 = vrot.lane.b32.xlu0 %v9363, 64
        %v9624 = vpop.permute.xlu0 %9623
        %9625 = vrot.lane.b32.xlu0 %v9364, 64
        %v9626 = vpop.permute.xlu0 %9625
        %9627 = vrot.lane.b32.xlu0 %v9365, 64
        %v9628 = vpop.permute.xlu0 %9627
        %9629 = vrot.lane.b32.xlu0 %v9366, 64
        %v9630 = vpop.permute.xlu0 %9629
        %9631 = vrot.lane.b32.xlu0 %v9367, 64
        %v9632 = vpop.permute.xlu0 %9631
        %9633 = vrot.lane.b32.xlu0 %v9368, 64
        %v9634 = vpop.permute.xlu0 %9633
        %9635 = vrot.lane.b32.xlu0 %v9369, 64
        %v9636 = vpop.permute.xlu0 %9635
        %9637 = vrot.lane.b32.xlu0 %v9370, 64
        %v9638 = vpop.permute.xlu0 %9637
        %9639 = vrot.lane.b32.xlu0 %v9371, 64
        %v9640 = vpop.permute.xlu0 %9639
        %9641 = vrot.lane.b32.xlu0 %v9372, 64
        %v9642 = vpop.permute.xlu0 %9641
        %9643 = vrot.lane.b32.xlu0 %v9373, 64
        %v9644 = vpop.permute.xlu0 %9643
        %9645 = vrot.lane.b32.xlu0 %v9374, 64
        %v9646 = vpop.permute.xlu0 %9645
        %9647 = vrot.lane.b32.xlu0 %v9375, 64
        %v9648 = vpop.permute.xlu0 %9647
        %9649 = vrot.lane.b32.xlu0 %v9376, 64
        %v9650 = vpop.permute.xlu0 %9649
        %9651 = vrot.lane.b32.xlu0 %v9377, 64
        %v9652 = vpop.permute.xlu0 %9651
        %9653 = vrot.lane.b32.xlu0 %v9378, 64
        %v9654 = vpop.permute.xlu0 %9653
        %9655 = vrot.lane.b32.xlu0 %v9379, 64
        %v9656 = vpop.permute.xlu0 %9655
        %9657 = vrot.lane.b32.xlu0 %v9380, 64
        %v9658 = vpop.permute.xlu0 %9657
        %9659 = vrot.lane.b32.xlu0 %v9381, 64
        %v9660 = vpop.permute.xlu0 %9659
        %9661 = vrot.lane.b32.xlu0 %v9382, 64
        %v9662 = vpop.permute.xlu0 %9661
        %9663 = vrot.lane.b32.xlu0 %v9383, 64
        %v9664 = vpop.permute.xlu0 %9663
        %9665 = vrot.lane.b32.xlu0 %v9384, 64
        %v9666 = vpop.permute.xlu0 %9665
        %9667 = vrot.lane.b32.xlu0 %v9385, 64
        %v9668 = vpop.permute.xlu0 %9667
        %9669 = vrot.lane.b32.xlu0 %v9386, 64
        %v9670 = vpop.permute.xlu0 %9669
        %9671 = vrot.lane.b32.xlu0 %v9387, 64
        %v9672 = vpop.permute.xlu0 %9671
        %9673 = vrot.lane.b32.xlu0 %v9388, 64
        %v9674 = vpop.permute.xlu0 %9673
        %9675 = vrot.lane.b32.xlu0 %v9389, 64
        %v9676 = vpop.permute.xlu0 %9675
        %9677 = vrot.lane.b32.xlu0 %v9390, 64
        %v9678 = vpop.permute.xlu0 %9677
        %9679 = vrot.lane.b32.xlu0 %v9391, 64
        %v9680 = vpop.permute.xlu0 %9679
        %9681 = vrot.lane.b32.xlu0 %v9392, 64
        %v9682 = vpop.permute.xlu0 %9681
        %9683 = vrot.lane.b32.xlu0 %v9393, 64
        %v9684 = vpop.permute.xlu0 %9683
        %9685 = vrot.lane.b32.xlu0 %v9394, 64
        %v9686 = vpop.permute.xlu0 %9685
        %9687 = vrot.lane.b32.xlu0 %v9395, 64
        %v9688 = vpop.permute.xlu0 %9687
        %9689 = vrot.lane.b32.xlu0 %v9396, 64
        %v9690 = vpop.permute.xlu0 %9689
        %9691 = vrot.lane.b32.xlu0 %v9397, 64
        %v9692 = vpop.permute.xlu0 %9691
        %9693 = vrot.lane.b32.xlu0 %v9398, 64
        %v9694 = vpop.permute.xlu0 %9693
        %9695 = vrot.lane.b32.xlu0 %v9399, 64
        %v9696 = vpop.permute.xlu0 %9695
        %9697 = vrot.lane.b32.xlu0 %v9400, 64
        %v9698 = vpop.permute.xlu0 %9697
        %9699 = vrot.lane.b32.xlu0 %v9401, 64
        %v9700 = vpop.permute.xlu0 %9699
        %9701 = vrot.lane.b32.xlu0 %v9402, 64
        %v9702 = vpop.permute.xlu0 %9701
        %9703 = vrot.lane.b32.xlu0 %v9403, 64
        %v9704 = vpop.permute.xlu0 %9703
        %9705 = vrot.lane.b32.xlu0 %v9404, 64
        %v9706 = vpop.permute.xlu0 %9705
        %9707 = vrot.lane.b32.xlu0 %v9405, 64
        %v9708 = vpop.permute.xlu0 %9707
        %9709 = vrot.lane.b32.xlu0 %v9406, 64
        %v9710 = vpop.permute.xlu0 %9709
        %9711 = vrot.lane.b32.xlu0 %v9407, 64
        %v9712 = vpop.permute.xlu0 %9711
        %9713 = vrot.lane.b32.xlu0 %v9408, 64
        %v9714 = vpop.permute.xlu0 %9713
        %9715 = vrot.lane.b32.xlu0 %v9409, 64
        %v9716 = vpop.permute.xlu0 %9715
        %9717 = vrot.lane.b32.xlu0 %v9410, 64
        %v9718 = vpop.permute.xlu0 %9717
        %9719 = vrot.lane.b32.xlu0 %v9411, 64
        %v9720 = vpop.permute.xlu0 %9719
        %9721 = vrot.lane.b32.xlu0 %v9412, 64
        %v9722 = vpop.permute.xlu0 %9721
        %9723 = vrot.lane.b32.xlu0 %v9413, 64
        %v9724 = vpop.permute.xlu0 %9723
        %9725 = vrot.lane.b32.xlu0 %v9414, 64
        %v9726 = vpop.permute.xlu0 %9725
        %9727 = vrot.lane.b32.xlu0 %v9415, 64
        %v9728 = vpop.permute.xlu0 %9727
        %9729 = vrot.lane.b32.xlu0 %v9416, 64
        %v9730 = vpop.permute.xlu0 %9729
        %9731 = vrot.lane.b32.xlu0 %v9417, 64
        %v9732 = vpop.permute.xlu0 %9731
        %9733 = vrot.lane.b32.xlu0 %v9418, 64
        %v9734 = vpop.permute.xlu0 %9733
        %9735 = vrot.lane.b32.xlu0 %v9419, 64
        %v9736 = vpop.permute.xlu0 %9735
        %9737 = vrot.lane.b32.xlu0 %v9420, 64
        %v9738 = vpop.permute.xlu0 %9737
        %9739 = vrot.lane.b32.xlu0 %v9421, 64
        %v9740 = vpop.permute.xlu0 %9739
        %9741 = vrot.lane.b32.xlu0 %v9422, 64
        %v9742 = vpop.permute.xlu0 %9741
        %9743 = vrot.lane.b32.xlu0 %v9423, 64
        %v9744 = vpop.permute.xlu0 %9743
        %9745 = vrot.lane.b32.xlu0 %v9424, 64
        %v9746 = vpop.permute.xlu0 %9745
        %9747 = vrot.lane.b32.xlu0 %v9425, 64
        %v9748 = vpop.permute.xlu0 %9747
        %9749 = vrot.lane.b32.xlu0 %v9426, 64
        %v9750 = vpop.permute.xlu0 %9749
        %9751 = vrot.lane.b32.xlu0 %v9427, 64
        %v9752 = vpop.permute.xlu0 %9751
        %9753 = vrot.lane.b32.xlu0 %v9428, 64
        %v9754 = vpop.permute.xlu0 %9753
        %9755 = vrot.lane.b32.xlu0 %v9429, 64
        %v9756 = vpop.permute.xlu0 %9755
        %9757 = vrot.lane.b32.xlu0 %v9430, 64
        %v9758 = vpop.permute.xlu0 %9757
        %9759 = vrot.lane.b32.xlu0 %v9431, 64
        %v9760 = vpop.permute.xlu0 %9759
        %9761 = vrot.lane.b32.xlu0 %v9432, 64
        %v9762 = vpop.permute.xlu0 %9761
        %9763 = vrot.lane.b32.xlu0 %v9433, 64
        %v9764 = vpop.permute.xlu0 %9763
        %9765 = vrot.lane.b32.xlu0 %v9434, 64
        %v9766 = vpop.permute.xlu0 %9765
        %9767 = vrot.lane.b32.xlu0 %v9435, 64
        %v9768 = vpop.permute.xlu0 %9767
        %9769 = vrot.lane.b32.xlu0 %v9436, 64
        %v9770 = vpop.permute.xlu0 %9769
        %9771 = vrot.lane.b32.xlu0 %v9437, 64
        %v9772 = vpop.permute.xlu0 %9771
        %9773 = vrot.lane.b32.xlu0 %v9438, 64
        %v9774 = vpop.permute.xlu0 %9773
        %9775 = vrot.lane.b32.xlu0 %v9439, 64
        %v9776 = vpop.permute.xlu0 %9775
        %9777 = vrot.lane.b32.xlu0 %v9440, 64
        %v9778 = vpop.permute.xlu0 %9777
        %9779 = vrot.lane.b32.xlu0 %v9441, 64
        %v9780 = vpop.permute.xlu0 %9779
        %9781 = vrot.lane.b32.xlu0 %v9442, 64
        %v9782 = vpop.permute.xlu0 %9781
        %9783 = vrot.lane.b32.xlu0 %v9443, 64
        %v9784 = vpop.permute.xlu0 %9783
        %9785 = vrot.lane.b32.xlu0 %v9444, 64
        %v9786 = vpop.permute.xlu0 %9785
        %9787 = vrot.lane.b32.xlu0 %v9445, 64
        %v9788 = vpop.permute.xlu0 %9787
        %9789 = vrot.lane.b32.xlu0 %v9446, 64
        %v9790 = vpop.permute.xlu0 %9789
        %9791 = vrot.lane.b32.xlu0 %v9447, 64
        %v9792 = vpop.permute.xlu0 %9791
        %9793 = vrot.lane.b32.xlu0 %v9448, 64
        %v9794 = vpop.permute.xlu0 %9793
        %9795 = vrot.lane.b32.xlu0 %v9449, 64
        %v9796 = vpop.permute.xlu0 %9795
        %9797 = vrot.lane.b32.xlu0 %v9450, 64
        %v9798 = vpop.permute.xlu0 %9797
        %9799 = vrot.lane.b32.xlu0 %v9451, 64
        %v9800 = vpop.permute.xlu0 %9799
        %9801 = vrot.lane.b32.xlu0 %v9452, 64
        %v9802 = vpop.permute.xlu0 %9801
        %9803 = vrot.lane.b32.xlu0 %v9453, 64
        %v9804 = vpop.permute.xlu0 %9803
        %9805 = vrot.lane.b32.xlu0 %v9454, 64
        %v9806 = vpop.permute.xlu0 %9805
        %9807 = vrot.lane.b32.xlu0 %v9455, 64
        %v9808 = vpop.permute.xlu0 %9807
        %9809 = vrot.lane.b32.xlu0 %v9456, 64
        %v9810 = vpop.permute.xlu0 %9809
        %9811 = vrot.lane.b32.xlu0 %v9457, 64
        %v9812 = vpop.permute.xlu0 %9811
        %9813 = vrot.lane.b32.xlu0 %v9458, 64
        %v9814 = vpop.permute.xlu0 %9813
        %9815 = vrot.lane.b32.xlu0 %v9459, 64
        %v9816 = vpop.permute.xlu0 %9815
        %9817 = vrot.lane.b32.xlu0 %v9460, 64
        %v9818 = vpop.permute.xlu0 %9817
        %9819 = vrot.lane.b32.xlu0 %v9461, 64
        %v9820 = vpop.permute.xlu0 %9819
        %9821 = vrot.lane.b32.xlu0 %v9462, 64
        %v9822 = vpop.permute.xlu0 %9821
        %9823 = vrot.lane.b32.xlu0 %v9463, 64
        %v9824 = vpop.permute.xlu0 %9823
        %9825 = vrot.lane.b32.xlu0 %v9464, 64
        %v9826 = vpop.permute.xlu0 %9825
        %9827 = vrot.lane.b32.xlu0 %v9465, 64
        %v9828 = vpop.permute.xlu0 %9827
        %9829 = vrot.lane.b32.xlu0 %v9466, 64
        %v9830 = vpop.permute.xlu0 %9829
        %9831 = vrot.lane.b32.xlu0 %v9467, 64
        %v9832 = vpop.permute.xlu0 %9831
        %9833 = vrot.lane.b32.xlu0 %v9468, 64
        %v9834 = vpop.permute.xlu0 %9833
        %9835 = vrot.lane.b32.xlu0 %v9469, 64
        %v9836 = vpop.permute.xlu0 %9835
        %9837 = vrot.lane.b32.xlu0 %v9470, 64
        %v9838 = vpop.permute.xlu0 %9837
        %9839 = vrot.lane.b32.xlu0 %v9471, 64
        %v9840 = vpop.permute.xlu0 %9839
        %9841 = vrot.lane.b32.xlu0 %v9472, 64
        %v9842 = vpop.permute.xlu0 %9841
        %9843 = vrot.lane.b32.xlu0 %v9473, 64
        %v9844 = vpop.permute.xlu0 %9843
        %9845 = vrot.lane.b32.xlu0 %v9474, 64
        %v9846 = vpop.permute.xlu0 %9845
        %9847 = vrot.lane.b32.xlu0 %v9475, 64
        %v9848 = vpop.permute.xlu0 %9847
        %9849 = vrot.lane.b32.xlu0 %v9476, 64
        %v9850 = vpop.permute.xlu0 %9849
        %9851 = vrot.lane.b32.xlu0 %v9477, 64
        %v9852 = vpop.permute.xlu0 %9851
        %9853 = vrot.lane.b32.xlu0 %v9478, 64
        %v9854 = vpop.permute.xlu0 %9853
        %9855 = vrot.lane.b32.xlu0 %v9479, 64
        %v9856 = vpop.permute.xlu0 %9855
        %9857 = vrot.lane.b32.xlu0 %v9480, 64
        %v9858 = vpop.permute.xlu0 %9857
        %9859 = vrot.lane.b32.xlu0 %v9481, 64
        %v9860 = vpop.permute.xlu0 %9859
        %9861 = vrot.lane.b32.xlu0 %v9482, 64
        %v9862 = vpop.permute.xlu0 %9861
        %9863 = vrot.lane.b32.xlu0 %v9483, 64
        %v9864 = vpop.permute.xlu0 %9863
        %9865 = vrot.lane.b32.xlu0 %v9484, 64
        %v9866 = vpop.permute.xlu0 %9865
        %9867 = vrot.lane.b32.xlu0 %v9485, 64
        %v9868 = vpop.permute.xlu0 %9867
        %9869 = vrot.lane.b32.xlu0 %v9486, 64
        %v9870 = vpop.permute.xlu0 %9869
        %v9999 = vmul.f32 %v8849, %v9616
        %v10000 = vmul.f32 %v8852, %v9618
        %v10001 = vmul.f32 %v8857, %v9620
        %v10002 = vmul.f32 %v8860, %v9622
        %v10003 = vmul.f32 %v8865, %v9624
        %v10004 = vmul.f32 %v8868, %v9626
        %v10005 = vmul.f32 %v8873, %v9628
        %v10006 = vmul.f32 %v8876, %v9630
        %v10007 = vmul.f32 %v8881, %v9632
        %v10008 = vmul.f32 %v8884, %v9634
        %v10009 = vmul.f32 %v8889, %v9636
        %v10010 = vmul.f32 %v8892, %v9638
        %v10011 = vmul.f32 %v8897, %v9640
        %v10012 = vmul.f32 %v8900, %v9642
        %v10013 = vmul.f32 %v8905, %v9644
        %v10014 = vmul.f32 %v8908, %v9646
        %v10015 = vmul.f32 %v8913, %v9648
        %v10016 = vmul.f32 %v8916, %v9650
        %v10017 = vmul.f32 %v8921, %v9652
        %v10018 = vmul.f32 %v8924, %v9654
        %v10019 = vmul.f32 %v8929, %v9656
        %v10020 = vmul.f32 %v8932, %v9658
        %v10021 = vmul.f32 %v8937, %v9660
        %v10022 = vmul.f32 %v8940, %v9662
        %v10023 = vmul.f32 %v8945, %v9664
        %v10024 = vmul.f32 %v8948, %v9666
        %v10025 = vmul.f32 %v8953, %v9668
        %v10026 = vmul.f32 %v8956, %v9670
        %v10027 = vmul.f32 %v8961, %v9672
        %v10028 = vmul.f32 %v8964, %v9674
        %v10029 = vmul.f32 %v8969, %v9676
        %v10030 = vmul.f32 %v8972, %v9678
        %v10031 = vmul.f32 %v8977, %v9680
        %v10032 = vmul.f32 %v8980, %v9682
        %v10033 = vmul.f32 %v8985, %v9684
        %v10034 = vmul.f32 %v8988, %v9686
        %v10035 = vmul.f32 %v8993, %v9688
        %v10036 = vmul.f32 %v8996, %v9690
        %v10037 = vmul.f32 %v9001, %v9692
        %v10038 = vmul.f32 %v9004, %v9694
        %v10039 = vmul.f32 %v9009, %v9696
        %v10040 = vmul.f32 %v9012, %v9698
        %v10041 = vmul.f32 %v9017, %v9700
        %v10042 = vmul.f32 %v9020, %v9702
        %v10043 = vmul.f32 %v9025, %v9704
        %v10044 = vmul.f32 %v9028, %v9706
        %v10045 = vmul.f32 %v9033, %v9708
        %v10046 = vmul.f32 %v9036, %v9710
        %v10047 = vmul.f32 %v9041, %v9712
        %v10048 = vmul.f32 %v9044, %v9714
        %v10049 = vmul.f32 %v9049, %v9716
        %v10050 = vmul.f32 %v9052, %v9718
        %v10051 = vmul.f32 %v9057, %v9720
        %v10052 = vmul.f32 %v9060, %v9722
        %v10053 = vmul.f32 %v9065, %v9724
        %v10054 = vmul.f32 %v9068, %v9726
        %v10055 = vmul.f32 %v9073, %v9728
        %v10056 = vmul.f32 %v9076, %v9730
        %v10057 = vmul.f32 %v9081, %v9732
        %v10058 = vmul.f32 %v9084, %v9734
        %v10059 = vmul.f32 %v9089, %v9736
        %v10060 = vmul.f32 %v9092, %v9738
        %v10061 = vmul.f32 %v9097, %v9740
        %v10062 = vmul.f32 %v9100, %v9742
        %v10063 = vmul.f32 %v9105, %v9744
        %v10064 = vmul.f32 %v9108, %v9746
        %v10065 = vmul.f32 %v9113, %v9748
        %v10066 = vmul.f32 %v9116, %v9750
        %v10067 = vmul.f32 %v9121, %v9752
        %v10068 = vmul.f32 %v9124, %v9754
        %v10069 = vmul.f32 %v9129, %v9756
        %v10070 = vmul.f32 %v9132, %v9758
        %v10071 = vmul.f32 %v9137, %v9760
        %v10072 = vmul.f32 %v9140, %v9762
        %v10073 = vmul.f32 %v9145, %v9764
        %v10074 = vmul.f32 %v9148, %v9766
        %v10075 = vmul.f32 %v9153, %v9768
        %v10076 = vmul.f32 %v9156, %v9770
        %v10077 = vmul.f32 %v9161, %v9772
        %v10078 = vmul.f32 %v9164, %v9774
        %v10079 = vmul.f32 %v9169, %v9776
        %v10080 = vmul.f32 %v9172, %v9778
        %v10081 = vmul.f32 %v9177, %v9780
        %v10082 = vmul.f32 %v9180, %v9782
        %v10083 = vmul.f32 %v9185, %v9784
        %v10084 = vmul.f32 %v9188, %v9786
        %v10085 = vmul.f32 %v9193, %v9788
        %v10086 = vmul.f32 %v9196, %v9790
        %v10087 = vmul.f32 %v9201, %v9792
        %v10088 = vmul.f32 %v9204, %v9794
        %v10089 = vmul.f32 %v9209, %v9796
        %v10090 = vmul.f32 %v9212, %v9798
        %v10091 = vmul.f32 %v9217, %v9800
        %v10092 = vmul.f32 %v9220, %v9802
        %v10093 = vmul.f32 %v9225, %v9804
        %v10094 = vmul.f32 %v9228, %v9806
        %v10095 = vmul.f32 %v9233, %v9808
        %v10096 = vmul.f32 %v9236, %v9810
        %v10097 = vmul.f32 %v9241, %v9812
        %v10098 = vmul.f32 %v9244, %v9814
        %v10099 = vmul.f32 %v9249, %v9816
        %v10100 = vmul.f32 %v9252, %v9818
        %v10101 = vmul.f32 %v9257, %v9820
        %v10102 = vmul.f32 %v9260, %v9822
        %v10103 = vmul.f32 %v9265, %v9824
        %v10104 = vmul.f32 %v9268, %v9826
        %v10105 = vmul.f32 %v9273, %v9828
        %v10106 = vmul.f32 %v9276, %v9830
        %v10107 = vmul.f32 %v9281, %v9832
        %v10108 = vmul.f32 %v9284, %v9834
        %v10109 = vmul.f32 %v9289, %v9836
        %v10110 = vmul.f32 %v9292, %v9838
        %v10111 = vmul.f32 %v9297, %v9840
        %v10112 = vmul.f32 %v9300, %v9842
        %v10113 = vmul.f32 %v9305, %v9844
        %v10114 = vmul.f32 %v9308, %v9846
        %v10115 = vmul.f32 %v9313, %v9848
        %v10116 = vmul.f32 %v9316, %v9850
        %v10117 = vmul.f32 %v9321, %v9852
        %v10118 = vmul.f32 %v9324, %v9854
        %v10119 = vmul.f32 %v9329, %v9856
        %v10120 = vmul.f32 %v9332, %v9858
        %v10121 = vmul.f32 %v9337, %v9860
        %v10122 = vmul.f32 %v9340, %v9862
        %v10123 = vmul.f32 %v9345, %v9864
        %v10124 = vmul.f32 %v9348, %v9866
        %v10125 = vmul.f32 %v9353, %v9868
        %v10126 = vmul.f32 %v9356, %v9870
        %v10127 = vsel %vm1945, %v9999, 0.0
        %v10128 = vsel %vm1945, %v10000, 0.0
        %v10129 = vadd.f32 %v10127, %v10128
        %v10130 = vrot.slane %v10129, 4
        %v10131 = vadd.f32 %v10129, %v10130
        %v10132 = vrot.slane %v10131, 2
        %v10133 = vadd.f32 %v10131, %v10132
        %v10134 = vrot.slane %v10133, 1
        %v10135 = vadd.f32 %v10133, %v10134
        %v10136 = vsel %vm1945, %v10001, 0.0
        %v10137 = vsel %vm1945, %v10002, 0.0
        %v10138 = vadd.f32 %v10136, %v10137
        %v10139 = vrot.slane %v10138, 4
        %v10140 = vadd.f32 %v10138, %v10139
        %v10141 = vrot.slane %v10140, 2
        %v10142 = vadd.f32 %v10140, %v10141
        %v10143 = vrot.slane %v10142, 1
        %v10144 = vadd.f32 %v10142, %v10143
        %v10145 = vsel %vm1945, %v10003, 0.0
        %v10146 = vsel %vm1945, %v10004, 0.0
        %v10147 = vadd.f32 %v10145, %v10146
        %v10148 = vrot.slane %v10147, 4
        %v10149 = vadd.f32 %v10147, %v10148
        %v10150 = vrot.slane %v10149, 2
        %v10151 = vadd.f32 %v10149, %v10150
        %v10152 = vrot.slane %v10151, 1
        %v10153 = vadd.f32 %v10151, %v10152
        %v10154 = vsel %vm1945, %v10005, 0.0
        %v10155 = vsel %vm1945, %v10006, 0.0
        %v10156 = vadd.f32 %v10154, %v10155
        %v10157 = vrot.slane %v10156, 4
        %v10158 = vadd.f32 %v10156, %v10157
        %v10159 = vrot.slane %v10158, 2
        %v10160 = vadd.f32 %v10158, %v10159
        %v10161 = vrot.slane %v10160, 1
        %v10162 = vadd.f32 %v10160, %v10161
        %v10163 = vsel %vm1945, %v10007, 0.0
        %v10164 = vsel %vm1945, %v10008, 0.0
        %v10165 = vadd.f32 %v10163, %v10164
        %v10166 = vrot.slane %v10165, 4
        %v10167 = vadd.f32 %v10165, %v10166
        %v10168 = vrot.slane %v10167, 2
        %v10169 = vadd.f32 %v10167, %v10168
        %v10170 = vrot.slane %v10169, 1
        %v10171 = vadd.f32 %v10169, %v10170
        %v10172 = vsel %vm1945, %v10009, 0.0
        %v10173 = vsel %vm1945, %v10010, 0.0
        %v10174 = vadd.f32 %v10172, %v10173
        %v10175 = vrot.slane %v10174, 4
        %v10176 = vadd.f32 %v10174, %v10175
        %v10177 = vrot.slane %v10176, 2
        %v10178 = vadd.f32 %v10176, %v10177
        %v10179 = vrot.slane %v10178, 1
        %v10180 = vadd.f32 %v10178, %v10179
        %v10181 = vsel %vm1945, %v10011, 0.0
        %v10182 = vsel %vm1945, %v10012, 0.0
        %v10183 = vadd.f32 %v10181, %v10182
        %v10184 = vrot.slane %v10183, 4
        %v10185 = vadd.f32 %v10183, %v10184
        %v10186 = vrot.slane %v10185, 2
        %v10187 = vadd.f32 %v10185, %v10186
        %v10188 = vrot.slane %v10187, 1
        %v10189 = vadd.f32 %v10187, %v10188
        %v10190 = vsel %vm1945, %v10013, 0.0
        %v10191 = vsel %vm1945, %v10014, 0.0
        %v10192 = vadd.f32 %v10190, %v10191
        %v10193 = vrot.slane %v10192, 4
        %v10194 = vadd.f32 %v10192, %v10193
        %v10195 = vrot.slane %v10194, 2
        %v10196 = vadd.f32 %v10194, %v10195
        %v10197 = vrot.slane %v10196, 1
        %v10198 = vadd.f32 %v10196, %v10197
        %v10199 = vsel %vm1945, %v10015, 0.0
        %v10200 = vsel %vm1945, %v10016, 0.0
        %v10201 = vadd.f32 %v10199, %v10200
        %v10202 = vrot.slane %v10201, 4
        %v10203 = vadd.f32 %v10201, %v10202
        %v10204 = vrot.slane %v10203, 2
        %v10205 = vadd.f32 %v10203, %v10204
        %v10206 = vrot.slane %v10205, 1
        %v10207 = vadd.f32 %v10205, %v10206
        %v10208 = vsel %vm1945, %v10017, 0.0
        %v10209 = vsel %vm1945, %v10018, 0.0
        %v10210 = vadd.f32 %v10208, %v10209
        %v10211 = vrot.slane %v10210, 4
        %v10212 = vadd.f32 %v10210, %v10211
        %v10213 = vrot.slane %v10212, 2
        %v10214 = vadd.f32 %v10212, %v10213
        %v10215 = vrot.slane %v10214, 1
        %v10216 = vadd.f32 %v10214, %v10215
        %v10217 = vsel %vm1945, %v10019, 0.0
        %v10218 = vsel %vm1945, %v10020, 0.0
        %v10219 = vadd.f32 %v10217, %v10218
        %v10220 = vrot.slane %v10219, 4
        %v10221 = vadd.f32 %v10219, %v10220
        %v10222 = vrot.slane %v10221, 2
        %v10223 = vadd.f32 %v10221, %v10222
        %v10224 = vrot.slane %v10223, 1
        %v10225 = vadd.f32 %v10223, %v10224
        %v10226 = vsel %vm1945, %v10021, 0.0
        %v10227 = vsel %vm1945, %v10022, 0.0
        %v10228 = vadd.f32 %v10226, %v10227
        %v10229 = vrot.slane %v10228, 4
        %v10230 = vadd.f32 %v10228, %v10229
        %v10231 = vrot.slane %v10230, 2
        %v10232 = vadd.f32 %v10230, %v10231
        %v10233 = vrot.slane %v10232, 1
        %v10234 = vadd.f32 %v10232, %v10233
        %v10235 = vsel %vm1945, %v10023, 0.0
        %v10236 = vsel %vm1945, %v10024, 0.0
        %v10237 = vadd.f32 %v10235, %v10236
        %v10238 = vrot.slane %v10237, 4
        %v10239 = vadd.f32 %v10237, %v10238
        %v10240 = vrot.slane %v10239, 2
        %v10241 = vadd.f32 %v10239, %v10240
        %v10242 = vrot.slane %v10241, 1
        %v10243 = vadd.f32 %v10241, %v10242
        %v10244 = vsel %vm1945, %v10025, 0.0
        %v10245 = vsel %vm1945, %v10026, 0.0
        %v10246 = vadd.f32 %v10244, %v10245
        %v10247 = vrot.slane %v10246, 4
        %v10248 = vadd.f32 %v10246, %v10247
        %v10249 = vrot.slane %v10248, 2
        %v10250 = vadd.f32 %v10248, %v10249
        %v10251 = vrot.slane %v10250, 1
        %v10252 = vadd.f32 %v10250, %v10251
        %v10253 = vsel %vm1945, %v10027, 0.0
        %v10254 = vsel %vm1945, %v10028, 0.0
        %v10255 = vadd.f32 %v10253, %v10254
        %v10256 = vrot.slane %v10255, 4
        %v10257 = vadd.f32 %v10255, %v10256
        %v10258 = vrot.slane %v10257, 2
        %v10259 = vadd.f32 %v10257, %v10258
        %v10260 = vrot.slane %v10259, 1
        %v10261 = vadd.f32 %v10259, %v10260
        %v10262 = vsel %vm1945, %v10029, 0.0
        %v10263 = vsel %vm1945, %v10030, 0.0
        %v10264 = vadd.f32 %v10262, %v10263
        %v10265 = vrot.slane %v10264, 4
        %v10266 = vadd.f32 %v10264, %v10265
        %v10267 = vrot.slane %v10266, 2
        %v10268 = vadd.f32 %v10266, %v10267
        %v10269 = vrot.slane %v10268, 1
        %v10270 = vadd.f32 %v10268, %v10269
        %v10271 = vsel %vm1945, %v10031, 0.0
        %v10272 = vsel %vm1945, %v10032, 0.0
        %v10273 = vadd.f32 %v10271, %v10272
        %v10274 = vrot.slane %v10273, 4
        %v10275 = vadd.f32 %v10273, %v10274
        %v10276 = vrot.slane %v10275, 2
        %v10277 = vadd.f32 %v10275, %v10276
        %v10278 = vrot.slane %v10277, 1
        %v10279 = vadd.f32 %v10277, %v10278
        %v10280 = vsel %vm1945, %v10033, 0.0
        %v10281 = vsel %vm1945, %v10034, 0.0
        %v10282 = vadd.f32 %v10280, %v10281
        %v10283 = vrot.slane %v10282, 4
        %v10284 = vadd.f32 %v10282, %v10283
        %v10285 = vrot.slane %v10284, 2
        %v10286 = vadd.f32 %v10284, %v10285
        %v10287 = vrot.slane %v10286, 1
        %v10288 = vadd.f32 %v10286, %v10287
        %v10289 = vsel %vm1945, %v10035, 0.0
        %v10290 = vsel %vm1945, %v10036, 0.0
        %v10291 = vadd.f32 %v10289, %v10290
        %v10292 = vrot.slane %v10291, 4
        %v10293 = vadd.f32 %v10291, %v10292
        %v10294 = vrot.slane %v10293, 2
        %v10295 = vadd.f32 %v10293, %v10294
        %v10296 = vrot.slane %v10295, 1
        %v10297 = vadd.f32 %v10295, %v10296
        %v10298 = vsel %vm1945, %v10037, 0.0
        %v10299 = vsel %vm1945, %v10038, 0.0
        %v10300 = vadd.f32 %v10298, %v10299
        %v10301 = vrot.slane %v10300, 4
        %v10302 = vadd.f32 %v10300, %v10301
        %v10303 = vrot.slane %v10302, 2
        %v10304 = vadd.f32 %v10302, %v10303
        %v10305 = vrot.slane %v10304, 1
        %v10306 = vadd.f32 %v10304, %v10305
        %v10307 = vsel %vm1945, %v10039, 0.0
        %v10308 = vsel %vm1945, %v10040, 0.0
        %v10309 = vadd.f32 %v10307, %v10308
        %v10310 = vrot.slane %v10309, 4
        %v10311 = vadd.f32 %v10309, %v10310
        %v10312 = vrot.slane %v10311, 2
        %v10313 = vadd.f32 %v10311, %v10312
        %v10314 = vrot.slane %v10313, 1
        %v10315 = vadd.f32 %v10313, %v10314
        %v10316 = vsel %vm1945, %v10041, 0.0
        %v10317 = vsel %vm1945, %v10042, 0.0
        %v10318 = vadd.f32 %v10316, %v10317
        %v10319 = vrot.slane %v10318, 4
        %v10320 = vadd.f32 %v10318, %v10319
        %v10321 = vrot.slane %v10320, 2
        %v10322 = vadd.f32 %v10320, %v10321
        %v10323 = vrot.slane %v10322, 1
        %v10324 = vadd.f32 %v10322, %v10323
        %v10325 = vsel %vm1945, %v10043, 0.0
        %v10326 = vsel %vm1945, %v10044, 0.0
        %v10327 = vadd.f32 %v10325, %v10326
        %v10328 = vrot.slane %v10327, 4
        %v10329 = vadd.f32 %v10327, %v10328
        %v10330 = vrot.slane %v10329, 2
        %v10331 = vadd.f32 %v10329, %v10330
        %v10332 = vrot.slane %v10331, 1
        %v10333 = vadd.f32 %v10331, %v10332
        %v10334 = vsel %vm1945, %v10045, 0.0
        %v10335 = vsel %vm1945, %v10046, 0.0
        %v10336 = vadd.f32 %v10334, %v10335
        %v10337 = vrot.slane %v10336, 4
        %v10338 = vadd.f32 %v10336, %v10337
        %v10339 = vrot.slane %v10338, 2
        %v10340 = vadd.f32 %v10338, %v10339
        %v10341 = vrot.slane %v10340, 1
        %v10342 = vadd.f32 %v10340, %v10341
        %v10343 = vsel %vm1945, %v10047, 0.0
        %v10344 = vsel %vm1945, %v10048, 0.0
        %v10345 = vadd.f32 %v10343, %v10344
        %v10346 = vrot.slane %v10345, 4
        %v10347 = vadd.f32 %v10345, %v10346
        %v10348 = vrot.slane %v10347, 2
        %v10349 = vadd.f32 %v10347, %v10348
        %v10350 = vrot.slane %v10349, 1
        %v10351 = vadd.f32 %v10349, %v10350
        %v10352 = vsel %vm1945, %v10049, 0.0
        %v10353 = vsel %vm1945, %v10050, 0.0
        %v10354 = vadd.f32 %v10352, %v10353
        %v10355 = vrot.slane %v10354, 4
        %v10356 = vadd.f32 %v10354, %v10355
        %v10357 = vrot.slane %v10356, 2
        %v10358 = vadd.f32 %v10356, %v10357
        %v10359 = vrot.slane %v10358, 1
        %v10360 = vadd.f32 %v10358, %v10359
        %v10361 = vsel %vm1945, %v10051, 0.0
        %v10362 = vsel %vm1945, %v10052, 0.0
        %v10363 = vadd.f32 %v10361, %v10362
        %v10364 = vrot.slane %v10363, 4
        %v10365 = vadd.f32 %v10363, %v10364
        %v10366 = vrot.slane %v10365, 2
        %v10367 = vadd.f32 %v10365, %v10366
        %v10368 = vrot.slane %v10367, 1
        %v10369 = vadd.f32 %v10367, %v10368
        %v10370 = vsel %vm1945, %v10053, 0.0
        %v10371 = vsel %vm1945, %v10054, 0.0
        %v10372 = vadd.f32 %v10370, %v10371
        %v10373 = vrot.slane %v10372, 4
        %v10374 = vadd.f32 %v10372, %v10373
        %v10375 = vrot.slane %v10374, 2
        %v10376 = vadd.f32 %v10374, %v10375
        %v10377 = vrot.slane %v10376, 1
        %v10378 = vadd.f32 %v10376, %v10377
        %v10379 = vsel %vm1945, %v10055, 0.0
        %v10380 = vsel %vm1945, %v10056, 0.0
        %v10381 = vadd.f32 %v10379, %v10380
        %v10382 = vrot.slane %v10381, 4
        %v10383 = vadd.f32 %v10381, %v10382
        %v10384 = vrot.slane %v10383, 2
        %v10385 = vadd.f32 %v10383, %v10384
        %v10386 = vrot.slane %v10385, 1
        %v10387 = vadd.f32 %v10385, %v10386
        %v10388 = vsel %vm1945, %v10057, 0.0
        %v10389 = vsel %vm1945, %v10058, 0.0
        %v10390 = vadd.f32 %v10388, %v10389
        %v10391 = vrot.slane %v10390, 4
        %v10392 = vadd.f32 %v10390, %v10391
        %v10393 = vrot.slane %v10392, 2
        %v10394 = vadd.f32 %v10392, %v10393
        %v10395 = vrot.slane %v10394, 1
        %v10396 = vadd.f32 %v10394, %v10395
        %v10397 = vsel %vm1945, %v10059, 0.0
        %v10398 = vsel %vm1945, %v10060, 0.0
        %v10399 = vadd.f32 %v10397, %v10398
        %v10400 = vrot.slane %v10399, 4
        %v10401 = vadd.f32 %v10399, %v10400
        %v10402 = vrot.slane %v10401, 2
        %v10403 = vadd.f32 %v10401, %v10402
        %v10404 = vrot.slane %v10403, 1
        %v10405 = vadd.f32 %v10403, %v10404
        %v10406 = vsel %vm1945, %v10061, 0.0
        %v10407 = vsel %vm1945, %v10062, 0.0
        %v10408 = vadd.f32 %v10406, %v10407
        %v10409 = vrot.slane %v10408, 4
        %v10410 = vadd.f32 %v10408, %v10409
        %v10411 = vrot.slane %v10410, 2
        %v10412 = vadd.f32 %v10410, %v10411
        %v10413 = vrot.slane %v10412, 1
        %v10414 = vadd.f32 %v10412, %v10413
        %v10415 = vsel %vm1945, %v10063, 0.0
        %v10416 = vsel %vm1945, %v10064, 0.0
        %v10417 = vadd.f32 %v10415, %v10416
        %v10418 = vrot.slane %v10417, 4
        %v10419 = vadd.f32 %v10417, %v10418
        %v10420 = vrot.slane %v10419, 2
        %v10421 = vadd.f32 %v10419, %v10420
        %v10422 = vrot.slane %v10421, 1
        %v10423 = vadd.f32 %v10421, %v10422
        %v10424 = vsel %vm1945, %v10065, 0.0
        %v10425 = vsel %vm1945, %v10066, 0.0
        %v10426 = vadd.f32 %v10424, %v10425
        %v10427 = vrot.slane %v10426, 4
        %v10428 = vadd.f32 %v10426, %v10427
        %v10429 = vrot.slane %v10428, 2
        %v10430 = vadd.f32 %v10428, %v10429
        %v10431 = vrot.slane %v10430, 1
        %v10432 = vadd.f32 %v10430, %v10431
        %v10433 = vsel %vm1945, %v10067, 0.0
        %v10434 = vsel %vm1945, %v10068, 0.0
        %v10435 = vadd.f32 %v10433, %v10434
        %v10436 = vrot.slane %v10435, 4
        %v10437 = vadd.f32 %v10435, %v10436
        %v10438 = vrot.slane %v10437, 2
        %v10439 = vadd.f32 %v10437, %v10438
        %v10440 = vrot.slane %v10439, 1
        %v10441 = vadd.f32 %v10439, %v10440
        %v10442 = vsel %vm1945, %v10069, 0.0
        %v10443 = vsel %vm1945, %v10070, 0.0
        %v10444 = vadd.f32 %v10442, %v10443
        %v10445 = vrot.slane %v10444, 4
        %v10446 = vadd.f32 %v10444, %v10445
        %v10447 = vrot.slane %v10446, 2
        %v10448 = vadd.f32 %v10446, %v10447
        %v10449 = vrot.slane %v10448, 1
        %v10450 = vadd.f32 %v10448, %v10449
        %v10451 = vsel %vm1945, %v10071, 0.0
        %v10452 = vsel %vm1945, %v10072, 0.0
        %v10453 = vadd.f32 %v10451, %v10452
        %v10454 = vrot.slane %v10453, 4
        %v10455 = vadd.f32 %v10453, %v10454
        %v10456 = vrot.slane %v10455, 2
        %v10457 = vadd.f32 %v10455, %v10456
        %v10458 = vrot.slane %v10457, 1
        %v10459 = vadd.f32 %v10457, %v10458
        %v10460 = vsel %vm1945, %v10073, 0.0
        %v10461 = vsel %vm1945, %v10074, 0.0
        %v10462 = vadd.f32 %v10460, %v10461
        %v10463 = vrot.slane %v10462, 4
        %v10464 = vadd.f32 %v10462, %v10463
        %v10465 = vrot.slane %v10464, 2
        %v10466 = vadd.f32 %v10464, %v10465
        %v10467 = vrot.slane %v10466, 1
        %v10468 = vadd.f32 %v10466, %v10467
        %v10469 = vsel %vm1945, %v10075, 0.0
        %v10470 = vsel %vm1945, %v10076, 0.0
        %v10471 = vadd.f32 %v10469, %v10470
        %v10472 = vrot.slane %v10471, 4
        %v10473 = vadd.f32 %v10471, %v10472
        %v10474 = vrot.slane %v10473, 2
        %v10475 = vadd.f32 %v10473, %v10474
        %v10476 = vrot.slane %v10475, 1
        %v10477 = vadd.f32 %v10475, %v10476
        %v10478 = vsel %vm1945, %v10077, 0.0
        %v10479 = vsel %vm1945, %v10078, 0.0
        %v10480 = vadd.f32 %v10478, %v10479
        %v10481 = vrot.slane %v10480, 4
        %v10482 = vadd.f32 %v10480, %v10481
        %v10483 = vrot.slane %v10482, 2
        %v10484 = vadd.f32 %v10482, %v10483
        %v10485 = vrot.slane %v10484, 1
        %v10486 = vadd.f32 %v10484, %v10485
        %v10487 = vsel %vm1945, %v10079, 0.0
        %v10488 = vsel %vm1945, %v10080, 0.0
        %v10489 = vadd.f32 %v10487, %v10488
        %v10490 = vrot.slane %v10489, 4
        %v10491 = vadd.f32 %v10489, %v10490
        %v10492 = vrot.slane %v10491, 2
        %v10493 = vadd.f32 %v10491, %v10492
        %v10494 = vrot.slane %v10493, 1
        %v10495 = vadd.f32 %v10493, %v10494
        %v10496 = vsel %vm1945, %v10081, 0.0
        %v10497 = vsel %vm1945, %v10082, 0.0
        %v10498 = vadd.f32 %v10496, %v10497
        %v10499 = vrot.slane %v10498, 4
        %v10500 = vadd.f32 %v10498, %v10499
        %v10501 = vrot.slane %v10500, 2
        %v10502 = vadd.f32 %v10500, %v10501
        %v10503 = vrot.slane %v10502, 1
        %v10504 = vadd.f32 %v10502, %v10503
        %v10505 = vsel %vm1945, %v10083, 0.0
        %v10506 = vsel %vm1945, %v10084, 0.0
        %v10507 = vadd.f32 %v10505, %v10506
        %v10508 = vrot.slane %v10507, 4
        %v10509 = vadd.f32 %v10507, %v10508
        %v10510 = vrot.slane %v10509, 2
        %v10511 = vadd.f32 %v10509, %v10510
        %v10512 = vrot.slane %v10511, 1
        %v10513 = vadd.f32 %v10511, %v10512
        %v10514 = vsel %vm1945, %v10085, 0.0
        %v10515 = vsel %vm1945, %v10086, 0.0
        %v10516 = vadd.f32 %v10514, %v10515
        %v10517 = vrot.slane %v10516, 4
        %v10518 = vadd.f32 %v10516, %v10517
        %v10519 = vrot.slane %v10518, 2
        %v10520 = vadd.f32 %v10518, %v10519
        %v10521 = vrot.slane %v10520, 1
        %v10522 = vadd.f32 %v10520, %v10521
        %v10523 = vsel %vm1945, %v10087, 0.0
        %v10524 = vsel %vm1945, %v10088, 0.0
        %v10525 = vadd.f32 %v10523, %v10524
        %v10526 = vrot.slane %v10525, 4
        %v10527 = vadd.f32 %v10525, %v10526
        %v10528 = vrot.slane %v10527, 2
        %v10529 = vadd.f32 %v10527, %v10528
        %v10530 = vrot.slane %v10529, 1
        %v10531 = vadd.f32 %v10529, %v10530
        %v10532 = vsel %vm1945, %v10089, 0.0
        %v10533 = vsel %vm1945, %v10090, 0.0
        %v10534 = vadd.f32 %v10532, %v10533
        %v10535 = vrot.slane %v10534, 4
        %v10536 = vadd.f32 %v10534, %v10535
        %v10537 = vrot.slane %v10536, 2
        %v10538 = vadd.f32 %v10536, %v10537
        %v10539 = vrot.slane %v10538, 1
        %v10540 = vadd.f32 %v10538, %v10539
        %v10541 = vsel %vm1945, %v10091, 0.0
        %v10542 = vsel %vm1945, %v10092, 0.0
        %v10543 = vadd.f32 %v10541, %v10542
        %v10544 = vrot.slane %v10543, 4
        %v10545 = vadd.f32 %v10543, %v10544
        %v10546 = vrot.slane %v10545, 2
        %v10547 = vadd.f32 %v10545, %v10546
        %v10548 = vrot.slane %v10547, 1
        %v10549 = vadd.f32 %v10547, %v10548
        %v10550 = vsel %vm1945, %v10093, 0.0
        %v10551 = vsel %vm1945, %v10094, 0.0
        %v10552 = vadd.f32 %v10550, %v10551
        %v10553 = vrot.slane %v10552, 4
        %v10554 = vadd.f32 %v10552, %v10553
        %v10555 = vrot.slane %v10554, 2
        %v10556 = vadd.f32 %v10554, %v10555
        %v10557 = vrot.slane %v10556, 1
        %v10558 = vadd.f32 %v10556, %v10557
        %v10559 = vsel %vm1945, %v10095, 0.0
        %v10560 = vsel %vm1945, %v10096, 0.0
        %v10561 = vadd.f32 %v10559, %v10560
        %v10562 = vrot.slane %v10561, 4
        %v10563 = vadd.f32 %v10561, %v10562
        %v10564 = vrot.slane %v10563, 2
        %v10565 = vadd.f32 %v10563, %v10564
        %v10566 = vrot.slane %v10565, 1
        %v10567 = vadd.f32 %v10565, %v10566
        %v10568 = vsel %vm1945, %v10097, 0.0
        %v10569 = vsel %vm1945, %v10098, 0.0
        %v10570 = vadd.f32 %v10568, %v10569
        %v10571 = vrot.slane %v10570, 4
        %v10572 = vadd.f32 %v10570, %v10571
        %v10573 = vrot.slane %v10572, 2
        %v10574 = vadd.f32 %v10572, %v10573
        %v10575 = vrot.slane %v10574, 1
        %v10576 = vadd.f32 %v10574, %v10575
        %v10577 = vsel %vm1945, %v10099, 0.0
        %v10578 = vsel %vm1945, %v10100, 0.0
        %v10579 = vadd.f32 %v10577, %v10578
        %v10580 = vrot.slane %v10579, 4
        %v10581 = vadd.f32 %v10579, %v10580
        %v10582 = vrot.slane %v10581, 2
        %v10583 = vadd.f32 %v10581, %v10582
        %v10584 = vrot.slane %v10583, 1
        %v10585 = vadd.f32 %v10583, %v10584
        %v10586 = vsel %vm1945, %v10101, 0.0
        %v10587 = vsel %vm1945, %v10102, 0.0
        %v10588 = vadd.f32 %v10586, %v10587
        %v10589 = vrot.slane %v10588, 4
        %v10590 = vadd.f32 %v10588, %v10589
        %v10591 = vrot.slane %v10590, 2
        %v10592 = vadd.f32 %v10590, %v10591
        %v10593 = vrot.slane %v10592, 1
        %v10594 = vadd.f32 %v10592, %v10593
        %v10595 = vsel %vm1945, %v10103, 0.0
        %v10596 = vsel %vm1945, %v10104, 0.0
        %v10597 = vadd.f32 %v10595, %v10596
        %v10598 = vrot.slane %v10597, 4
        %v10599 = vadd.f32 %v10597, %v10598
        %v10600 = vrot.slane %v10599, 2
        %v10601 = vadd.f32 %v10599, %v10600
        %v10602 = vrot.slane %v10601, 1
        %v10603 = vadd.f32 %v10601, %v10602
        %v10604 = vsel %vm1945, %v10105, 0.0
        %v10605 = vsel %vm1945, %v10106, 0.0
        %v10606 = vadd.f32 %v10604, %v10605
        %v10607 = vrot.slane %v10606, 4
        %v10608 = vadd.f32 %v10606, %v10607
        %v10609 = vrot.slane %v10608, 2
        %v10610 = vadd.f32 %v10608, %v10609
        %v10611 = vrot.slane %v10610, 1
        %v10612 = vadd.f32 %v10610, %v10611
        %v10613 = vsel %vm1945, %v10107, 0.0
        %v10614 = vsel %vm1945, %v10108, 0.0
        %v10615 = vadd.f32 %v10613, %v10614
        %v10616 = vrot.slane %v10615, 4
        %v10617 = vadd.f32 %v10615, %v10616
        %v10618 = vrot.slane %v10617, 2
        %v10619 = vadd.f32 %v10617, %v10618
        %v10620 = vrot.slane %v10619, 1
        %v10621 = vadd.f32 %v10619, %v10620
        %v10622 = vsel %vm1945, %v10109, 0.0
        %v10623 = vsel %vm1945, %v10110, 0.0
        %v10624 = vadd.f32 %v10622, %v10623
        %v10625 = vrot.slane %v10624, 4
        %v10626 = vadd.f32 %v10624, %v10625
        %v10627 = vrot.slane %v10626, 2
        %v10628 = vadd.f32 %v10626, %v10627
        %v10629 = vrot.slane %v10628, 1
        %v10630 = vadd.f32 %v10628, %v10629
        %v10631 = vsel %vm1945, %v10111, 0.0
        %v10632 = vsel %vm1945, %v10112, 0.0
        %v10633 = vadd.f32 %v10631, %v10632
        %v10634 = vrot.slane %v10633, 4
        %v10635 = vadd.f32 %v10633, %v10634
        %v10636 = vrot.slane %v10635, 2
        %v10637 = vadd.f32 %v10635, %v10636
        %v10638 = vrot.slane %v10637, 1
        %v10639 = vadd.f32 %v10637, %v10638
        %v10640 = vsel %vm1945, %v10113, 0.0
        %v10641 = vsel %vm1945, %v10114, 0.0
        %v10642 = vadd.f32 %v10640, %v10641
        %v10643 = vrot.slane %v10642, 4
        %v10644 = vadd.f32 %v10642, %v10643
        %v10645 = vrot.slane %v10644, 2
        %v10646 = vadd.f32 %v10644, %v10645
        %v10647 = vrot.slane %v10646, 1
        %v10648 = vadd.f32 %v10646, %v10647
        %v10649 = vsel %vm1945, %v10115, 0.0
        %v10650 = vsel %vm1945, %v10116, 0.0
        %v10651 = vadd.f32 %v10649, %v10650
        %v10652 = vrot.slane %v10651, 4
        %v10653 = vadd.f32 %v10651, %v10652
        %v10654 = vrot.slane %v10653, 2
        %v10655 = vadd.f32 %v10653, %v10654
        %v10656 = vrot.slane %v10655, 1
        %v10657 = vadd.f32 %v10655, %v10656
        %v10658 = vsel %vm1945, %v10117, 0.0
        %v10659 = vsel %vm1945, %v10118, 0.0
        %v10660 = vadd.f32 %v10658, %v10659
        %v10661 = vrot.slane %v10660, 4
        %v10662 = vadd.f32 %v10660, %v10661
        %v10663 = vrot.slane %v10662, 2
        %v10664 = vadd.f32 %v10662, %v10663
        %v10665 = vrot.slane %v10664, 1
        %v10666 = vadd.f32 %v10664, %v10665
        %v10667 = vsel %vm1945, %v10119, 0.0
        %v10668 = vsel %vm1945, %v10120, 0.0
        %v10669 = vadd.f32 %v10667, %v10668
        %v10670 = vrot.slane %v10669, 4
        %v10671 = vadd.f32 %v10669, %v10670
        %v10672 = vrot.slane %v10671, 2
        %v10673 = vadd.f32 %v10671, %v10672
        %v10674 = vrot.slane %v10673, 1
        %v10675 = vadd.f32 %v10673, %v10674
        %v10676 = vsel %vm1945, %v10121, 0.0
        %v10677 = vsel %vm1945, %v10122, 0.0
        %v10678 = vadd.f32 %v10676, %v10677
        %v10679 = vrot.slane %v10678, 4
        %v10680 = vadd.f32 %v10678, %v10679
        %v10681 = vrot.slane %v10680, 2
        %v10682 = vadd.f32 %v10680, %v10681
        %v10683 = vrot.slane %v10682, 1
        %v10684 = vadd.f32 %v10682, %v10683
        %v10685 = vsel %vm1945, %v10123, 0.0
        %v10686 = vsel %vm1945, %v10124, 0.0
        %v10687 = vadd.f32 %v10685, %v10686
        %v10688 = vrot.slane %v10687, 4
        %v10689 = vadd.f32 %v10687, %v10688
        %v10690 = vrot.slane %v10689, 2
        %v10691 = vadd.f32 %v10689, %v10690
        %v10692 = vrot.slane %v10691, 1
        %v10693 = vadd.f32 %v10691, %v10692
        %v10694 = vsel %vm1945, %v10125, 0.0
        %v10695 = vsel %vm1945, %v10126, 0.0
        %v10696 = vadd.f32 %v10694, %v10695
        %v10697 = vrot.slane %v10696, 4
        %v10698 = vadd.f32 %v10696, %v10697
        %v10699 = vrot.slane %v10698, 2
        %v10700 = vadd.f32 %v10698, %v10699
        %v10701 = vrot.slane %v10700, 1
        %v10702 = vadd.f32 %v10700, %v10701
        %v10703 = vpack.c.bf16 %v10135, %v10135
        %v10704 = vpack.c.bf16 %v10144, %v10144
        %v10705 = vpack.c.bf16 %v10153, %v10153
        %v10706 = vpack.c.bf16 %v10162, %v10162
        %v10707 = vpack.c.bf16 %v10171, %v10171
        %v10708 = vpack.c.bf16 %v10180, %v10180
        %v10709 = vpack.c.bf16 %v10189, %v10189
        %v10710 = vpack.c.bf16 %v10198, %v10198
        %v10711 = vpack.c.bf16 %v10207, %v10207
        %v10712 = vpack.c.bf16 %v10216, %v10216
        %v10713 = vpack.c.bf16 %v10225, %v10225
        %v10714 = vpack.c.bf16 %v10234, %v10234
        %v10715 = vpack.c.bf16 %v10243, %v10243
        %v10716 = vpack.c.bf16 %v10252, %v10252
        %v10717 = vpack.c.bf16 %v10261, %v10261
        %v10718 = vpack.c.bf16 %v10270, %v10270
        %v10719 = vpack.c.bf16 %v10279, %v10279
        %v10720 = vpack.c.bf16 %v10288, %v10288
        %v10721 = vpack.c.bf16 %v10297, %v10297
        %v10722 = vpack.c.bf16 %v10306, %v10306
        %v10723 = vpack.c.bf16 %v10315, %v10315
        %v10724 = vpack.c.bf16 %v10324, %v10324
        %v10725 = vpack.c.bf16 %v10333, %v10333
        %v10726 = vpack.c.bf16 %v10342, %v10342
        %v10727 = vpack.c.bf16 %v10351, %v10351
        %v10728 = vpack.c.bf16 %v10360, %v10360
        %v10729 = vpack.c.bf16 %v10369, %v10369
        %v10730 = vpack.c.bf16 %v10378, %v10378
        %v10731 = vpack.c.bf16 %v10387, %v10387
        %v10732 = vpack.c.bf16 %v10396, %v10396
        %v10733 = vpack.c.bf16 %v10405, %v10405
        %v10734 = vpack.c.bf16 %v10414, %v10414
        %v10735 = vpack.c.bf16 %v10423, %v10423
        %v10736 = vpack.c.bf16 %v10432, %v10432
        %v10737 = vpack.c.bf16 %v10441, %v10441
        %v10738 = vpack.c.bf16 %v10450, %v10450
        %v10739 = vpack.c.bf16 %v10459, %v10459
        %v10740 = vpack.c.bf16 %v10468, %v10468
        %v10741 = vpack.c.bf16 %v10477, %v10477
        %v10742 = vpack.c.bf16 %v10486, %v10486
        %v10743 = vpack.c.bf16 %v10495, %v10495
        %v10744 = vpack.c.bf16 %v10504, %v10504
        %v10745 = vpack.c.bf16 %v10513, %v10513
        %v10746 = vpack.c.bf16 %v10522, %v10522
        %v10747 = vpack.c.bf16 %v10531, %v10531
        %v10748 = vpack.c.bf16 %v10540, %v10540
        %v10749 = vpack.c.bf16 %v10549, %v10549
        %v10750 = vpack.c.bf16 %v10558, %v10558
        %v10751 = vpack.c.bf16 %v10567, %v10567
        %v10752 = vpack.c.bf16 %v10576, %v10576
        %v10753 = vpack.c.bf16 %v10585, %v10585
        %v10754 = vpack.c.bf16 %v10594, %v10594
        %v10755 = vpack.c.bf16 %v10603, %v10603
        %v10756 = vpack.c.bf16 %v10612, %v10612
        %v10757 = vpack.c.bf16 %v10621, %v10621
        %v10758 = vpack.c.bf16 %v10630, %v10630
        %v10759 = vpack.c.bf16 %v10639, %v10639
        %v10760 = vpack.c.bf16 %v10648, %v10648
        %v10761 = vpack.c.bf16 %v10657, %v10657
        %v10762 = vpack.c.bf16 %v10666, %v10666
        %v10763 = vpack.c.bf16 %v10675, %v10675
        %v10764 = vpack.c.bf16 %v10684, %v10684
        %v10765 = vpack.c.bf16 %v10693, %v10693
        %v10766 = vpack.c.bf16 %v10702, %v10702
        %v10768 = vlaneseq
        %v10769 = vshrl.u32 %v10768, 7
        %v10770 = vsub.s32 0, %v10769
        %v10771 = vrot.slane %v740, %v10770
        %v10837 = vunpack.c.l.b16 %v10703
        %v10838 = vunpack.c.l.b16 %v10704
        %v10839 = vunpack.c.l.b16 %v10705
        %v10840 = vunpack.c.l.b16 %v10706
        %v10841 = vunpack.c.l.b16 %v10707
        %v10842 = vunpack.c.l.b16 %v10708
        %v10843 = vunpack.c.l.b16 %v10709
        %v10844 = vunpack.c.l.b16 %v10710
        %v10845 = vunpack.c.l.b16 %v10711
        %v10846 = vunpack.c.l.b16 %v10712
        %v10847 = vunpack.c.l.b16 %v10713
        %v10848 = vunpack.c.l.b16 %v10714
        %v10849 = vunpack.c.l.b16 %v10715
        %v10850 = vunpack.c.l.b16 %v10716
        %v10851 = vunpack.c.l.b16 %v10717
        %v10852 = vunpack.c.l.b16 %v10718
        %v10853 = vunpack.c.l.b16 %v10719
        %v10854 = vunpack.c.l.b16 %v10720
        %v10855 = vunpack.c.l.b16 %v10721
        %v10856 = vunpack.c.l.b16 %v10722
        %v10857 = vunpack.c.l.b16 %v10723
        %v10858 = vunpack.c.l.b16 %v10724
        %v10859 = vunpack.c.l.b16 %v10725
        %v10860 = vunpack.c.l.b16 %v10726
        %v10861 = vunpack.c.l.b16 %v10727
        %v10862 = vunpack.c.l.b16 %v10728
        %v10863 = vunpack.c.l.b16 %v10729
        %v10864 = vunpack.c.l.b16 %v10730
        %v10865 = vunpack.c.l.b16 %v10731
        %v10866 = vunpack.c.l.b16 %v10732
        %v10867 = vunpack.c.l.b16 %v10733
        %v10868 = vunpack.c.l.b16 %v10734
        %v10869 = vunpack.c.l.b16 %v10735
        %v10870 = vunpack.c.l.b16 %v10736
        %v10871 = vunpack.c.l.b16 %v10737
        %v10872 = vunpack.c.l.b16 %v10738
        %v10873 = vunpack.c.l.b16 %v10739
        %v10874 = vunpack.c.l.b16 %v10740
        %v10875 = vunpack.c.l.b16 %v10741
        %v10876 = vunpack.c.l.b16 %v10742
        %v10877 = vunpack.c.l.b16 %v10743
        %v10878 = vunpack.c.l.b16 %v10744
        %v10879 = vunpack.c.l.b16 %v10745
        %v10880 = vunpack.c.l.b16 %v10746
        %v10881 = vunpack.c.l.b16 %v10747
        %v10882 = vunpack.c.l.b16 %v10748
        %v10883 = vunpack.c.l.b16 %v10749
        %v10884 = vunpack.c.l.b16 %v10750
        %v10885 = vunpack.c.l.b16 %v10751
        %v10886 = vunpack.c.l.b16 %v10752
        %v10887 = vunpack.c.l.b16 %v10753
        %v10888 = vunpack.c.l.b16 %v10754
        %v10889 = vunpack.c.l.b16 %v10755
        %v10890 = vunpack.c.l.b16 %v10756
        %v10891 = vunpack.c.l.b16 %v10757
        %v10892 = vunpack.c.l.b16 %v10758
        %v10893 = vunpack.c.l.b16 %v10759
        %v10894 = vunpack.c.l.b16 %v10760
        %v10895 = vunpack.c.l.b16 %v10761
        %v10896 = vunpack.c.l.b16 %v10762
        %v10897 = vunpack.c.l.b16 %v10763
        %v10898 = vunpack.c.l.b16 %v10764
        %v10899 = vunpack.c.l.b16 %v10765
        %v10900 = vunpack.c.l.b16 %v10766
        %vm10901 = vcmask 1041409
        %v10902 = vsel %vm10901, %v10838, %v10837
        %vm10903 = vcmask 1042434
        %v10904 = vsel %vm10903, %v10839, %v10902
        %vm10905 = vcmask 1043459
        %v10906 = vsel %vm10905, %v10840, %v10904
        %vm10907 = vcmask 1044484
        %v10908 = vsel %vm10907, %v10841, %v10906
        %vm10909 = vcmask 1045509
        %v10910 = vsel %vm10909, %v10842, %v10908
        %vm10911 = vcmask 1046534
        %v10912 = vsel %vm10911, %v10843, %v10910
        %vm10913 = vcmask 1047559
        %v10914 = vsel %vm10913, %v10844, %v10912
        %v10915 = vsel %vm10901, %v10846, %v10845
        %v10916 = vsel %vm10903, %v10847, %v10915
        %v10917 = vsel %vm10905, %v10848, %v10916
        %v10918 = vsel %vm10907, %v10849, %v10917
        %v10919 = vsel %vm10909, %v10850, %v10918
        %v10920 = vsel %vm10911, %v10851, %v10919
        %v10921 = vsel %vm10913, %v10852, %v10920
        %v10922 = vsel %vm10901, %v10854, %v10853
        %v10923 = vsel %vm10903, %v10855, %v10922
        %v10924 = vsel %vm10905, %v10856, %v10923
        %v10925 = vsel %vm10907, %v10857, %v10924
        %v10926 = vsel %vm10909, %v10858, %v10925
        %v10927 = vsel %vm10911, %v10859, %v10926
        %v10928 = vsel %vm10913, %v10860, %v10927
        %v10929 = vsel %vm10901, %v10862, %v10861
        %v10930 = vsel %vm10903, %v10863, %v10929
        %v10931 = vsel %vm10905, %v10864, %v10930
        %v10932 = vsel %vm10907, %v10865, %v10931
        %v10933 = vsel %vm10909, %v10866, %v10932
        %v10934 = vsel %vm10911, %v10867, %v10933
        %v10935 = vsel %vm10913, %v10868, %v10934
        %v10936 = vsel %vm10901, %v10870, %v10869
        %v10937 = vsel %vm10903, %v10871, %v10936
        %v10938 = vsel %vm10905, %v10872, %v10937
        %v10939 = vsel %vm10907, %v10873, %v10938
        %v10940 = vsel %vm10909, %v10874, %v10939
        %v10941 = vsel %vm10911, %v10875, %v10940
        %v10942 = vsel %vm10913, %v10876, %v10941
        %v10943 = vsel %vm10901, %v10878, %v10877
        %v10944 = vsel %vm10903, %v10879, %v10943
        %v10945 = vsel %vm10905, %v10880, %v10944
        %v10946 = vsel %vm10907, %v10881, %v10945
        %v10947 = vsel %vm10909, %v10882, %v10946
        %v10948 = vsel %vm10911, %v10883, %v10947
        %v10949 = vsel %vm10913, %v10884, %v10948
        %v10950 = vsel %vm10901, %v10886, %v10885
        %v10951 = vsel %vm10903, %v10887, %v10950
        %v10952 = vsel %vm10905, %v10888, %v10951
        %v10953 = vsel %vm10907, %v10889, %v10952
        %v10954 = vsel %vm10909, %v10890, %v10953
        %v10955 = vsel %vm10911, %v10891, %v10954
        %v10956 = vsel %vm10913, %v10892, %v10955
        %v10957 = vsel %vm10901, %v10894, %v10893
        %v10958 = vsel %vm10903, %v10895, %v10957
        %v10959 = vsel %vm10905, %v10896, %v10958
        %v10960 = vsel %vm10907, %v10897, %v10959
        %v10961 = vsel %vm10909, %v10898, %v10960
        %v10962 = vsel %vm10911, %v10899, %v10961
        %v10963 = vsel %vm10913, %v10900, %v10962
        %v10964 = vpack.c.b16 %v10921, %v10914
        %v10965 = vpack.c.b16 %v10935, %v10928
        %v10966 = vpack.c.b16 %v10949, %v10942
        %v10967 = vpack.c.b16 %v10963, %v10956
        %v10976 = vunpack.c.l.b16 %v732
        %v10977 = vunpack.c.l.b16 %v733
        %v10978 = vunpack.c.l.b16 %v734
        %v10979 = vunpack.c.l.b16 %v735
        %v10980 = vunpack.c.l.b16 %v736
        %v10981 = vunpack.c.l.b16 %v737
        %v10982 = vunpack.c.l.b16 %v738
        %v10983 = vunpack.c.l.b16 %v739
        %v10984 = vpack.c.b16 %v10977, %v10976
        %v10985 = vpack.c.b16 %v10979, %v10978
        %v10986 = vpack.c.b16 %v10981, %v10980
        %v10987 = vpack.c.b16 %v10983, %v10982
        %v10993 = vsel %vm1945, %v10964, 0
        %v10996 = vsel %vm1945, %v10965, 0
        %v10999 = vsel %vm1945, %v10966, 0
        %v11002 = vsel %vm1945, %v10967, 0
        %11004 = vmatprep.subr.bf16.mxu0 0
        %11005 = vmatpush1.bf16.msra.mxu0 %v10984
        %11006 = vmatprep.subr.bf16.mxu0 0
        %11007 = vmatpush1.bf16.msra.mxu0 %v10985
        %11008 = vmatprep.subr.bf16.mxu0 0
        %11009 = vmatpush1.bf16.msra.mxu0 %v10986
        %11010 = vmatprep.subr.bf16.mxu0 0
        %11011 = vmatpush1.bf16.msra.mxu0 %v10987
        %11012 = vmatprep.subr.bf16.mxu0 0
        %11013 = vmatpush1.bf16.msra.mxu0 0
        %11014 = vmatprep.subr.bf16.mxu0 0
        %11015 = vmatpush1.bf16.msra.mxu0 0
        %11016 = vmatprep.subr.bf16.mxu0 0
        %11017 = vmatpush1.bf16.msra.mxu0 0
        %11018 = vmatprep.subr.bf16.mxu0 0
        %11019 = vmatpush1.bf16.msra.mxu0 0
        %11020 = vmatprep.subr.bf16.mxu0 0
        %11021 = vmatpush1.bf16.msra.mxu0 0
        %11022 = vmatprep.subr.bf16.mxu0 0
        %11023 = vmatpush1.bf16.msra.mxu0 0
        %11024 = vmatprep.subr.bf16.mxu0 0
        %11025 = vmatpush1.bf16.msra.mxu0 0
        %11026 = vmatprep.subr.bf16.mxu0 0
        %11027 = vmatpush1.bf16.msra.mxu0 0
        %11028 = vmatprep.subr.bf16.mxu0 0
        %11029 = vmatpush1.bf16.msra.mxu0 0
        %11030 = vmatprep.subr.bf16.mxu0 0
        %11031 = vmatpush1.bf16.msra.mxu0 0
        %11032 = vmatprep.subr.bf16.mxu0 0
        %11033 = vmatpush1.bf16.msra.mxu0 0
        %11034 = vmatprep.subr.bf16.mxu0 0
        %11035 = vmatpush1.bf16.msra.mxu0 0
        %11036 = vmatprep.mubr.bf16.mxu0 0
        %11037 = vmatmul.mubr.bf16.gmra.mrb[0].mxu0 %v10993
        %v11038 = vpop.f32.mrb[0].mxu0
        %v11039 = vadd.f32 %v10771, %v11038
        %v11040 = vpop.f32.mrb[0].mxu0
        %v11041 = vpop.f32.mrb[0].mxu0
        %v11042 = vadd.f32 %v10771, %v11041
        %v11043 = vpop.f32.mrb[0].mxu0
        %11044 = vmatprep.mubr.bf16.mxu0 0
        %11045 = vmatmul.mubr.bf16.gmra.mrb[0].mxu0 %v10996
        %v11046 = vpop.f32.mrb[0].mxu0
        %v11047 = vadd.f32 %v10771, %v11046
        %v11048 = vpop.f32.mrb[0].mxu0
        %v11049 = vpop.f32.mrb[0].mxu0
        %v11050 = vadd.f32 %v10771, %v11049
        %v11051 = vpop.f32.mrb[0].mxu0
        %11052 = vmatprep.mubr.bf16.mxu0 0
        %11053 = vmatmul.mubr.bf16.gmra.mrb[0].mxu0 %v10999
        %v11054 = vpop.f32.mrb[0].mxu0
        %v11055 = vadd.f32 %v10771, %v11054
        %v11056 = vpop.f32.mrb[0].mxu0
        %v11057 = vpop.f32.mrb[0].mxu0
        %v11058 = vadd.f32 %v10771, %v11057
        %v11059 = vpop.f32.mrb[0].mxu0
        %11060 = vmatprep.mubr.bf16.mxu0 0
        %11061 = vmatmul.mubr.bf16.gmra.mrb[0].mxu0 %v11002
        %v11062 = vpop.f32.mrb[0].mxu0
        %v11063 = vadd.f32 %v10771, %v11062
        %v11064 = vpop.f32.mrb[0].mxu0
        %v11065 = vpop.f32.mrb[0].mxu0
        %v11066 = vadd.f32 %v10771, %v11065
        %v11067 = vpop.f32.mrb[0].mxu0
        %11068 = vdwg.mxu0
        %v11069 = vadd.f32 %v11039, %v771
        %v11070 = vadd.f32 %v11042, %v772
        %v11071 = vadd.f32 %v11047, %v773
        %v11072 = vadd.f32 %v11050, %v774
        %v11073 = vadd.f32 %v11055, %v775
        %v11074 = vadd.f32 %v11058, %v776
        %v11075 = vadd.f32 %v11063, %v777
        %v11076 = vadd.f32 %v11066, %v778
        %v11077 = vsel %vm1945, %v11069, 0.0
        %11078 = vadd.xlane.f32.xlu0 %v11077
        %v11079 = vpop.xlane.xlu0 %11078
        %v11080 = vsel %vm1945, %v11070, 0.0
        %11081 = vadd.xlane.f32.xlu0 %v11080
        %v11082 = vpop.xlane.xlu0 %11081
        %v11083 = vsel %vm1945, %v11071, 0.0
        %11084 = vadd.xlane.f32.xlu0 %v11083
        %v11085 = vpop.xlane.xlu0 %11084
        %v11086 = vsel %vm1945, %v11072, 0.0
        %11087 = vadd.xlane.f32.xlu0 %v11086
        %v11088 = vpop.xlane.xlu0 %11087
        %v11089 = vsel %vm1945, %v11073, 0.0
        %11090 = vadd.xlane.f32.xlu0 %v11089
        %v11091 = vpop.xlane.xlu0 %11090
        %v11092 = vsel %vm1945, %v11074, 0.0
        %11093 = vadd.xlane.f32.xlu0 %v11092
        %v11094 = vpop.xlane.xlu0 %11093
        %v11095 = vsel %vm1945, %v11075, 0.0
        %11096 = vadd.xlane.f32.xlu0 %v11095
        %v11097 = vpop.xlane.xlu0 %11096
        %v11098 = vsel %vm1945, %v11076, 0.0
        %11099 = vadd.xlane.f32.xlu0 %v11098
        %v11100 = vpop.xlane.xlu0 %11099
        %v11101 = vrcp.pop 64.0
        %v11102 = vmul.f32 %v11079, %v11101
        %v11103 = vmul.f32 %v11082, %v11101
        %v11104 = vmul.f32 %v11085, %v11101
        %v11105 = vmul.f32 %v11088, %v11101
        %v11106 = vmul.f32 %v11091, %v11101
        %v11107 = vmul.f32 %v11094, %v11101
        %v11108 = vmul.f32 %v11097, %v11101
        %v11109 = vmul.f32 %v11100, %v11101
        %v11110 = vsub.f32 %v11069, %v11102
        %v11111 = vsub.f32 %v11070, %v11103
        %v11112 = vsub.f32 %v11071, %v11104
        %v11113 = vsub.f32 %v11072, %v11105
        %v11114 = vsub.f32 %v11073, %v11106
        %v11115 = vsub.f32 %v11074, %v11107
        %v11116 = vsub.f32 %v11075, %v11108
        %v11117 = vsub.f32 %v11076, %v11109
        %v11118 = vmul.f32 %v11110, %v11110
        %v11119 = vmul.f32 %v11111, %v11111
        %v11120 = vmul.f32 %v11112, %v11112
        %v11121 = vmul.f32 %v11113, %v11113
        %v11122 = vmul.f32 %v11114, %v11114
        %v11123 = vmul.f32 %v11115, %v11115
        %v11124 = vmul.f32 %v11116, %v11116
        %v11125 = vmul.f32 %v11117, %v11117
        %v11126 = vsel %vm1945, %v11118, 0.0
        %11127 = vadd.xlane.f32.xlu0 %v11126
        %v11128 = vpop.xlane.xlu0 %11127
        %v11129 = vsel %vm1945, %v11119, 0.0
        %11130 = vadd.xlane.f32.xlu0 %v11129
        %v11131 = vpop.xlane.xlu0 %11130
        %v11132 = vsel %vm1945, %v11120, 0.0
        %11133 = vadd.xlane.f32.xlu0 %v11132
        %v11134 = vpop.xlane.xlu0 %11133
        %v11135 = vsel %vm1945, %v11121, 0.0
        %11136 = vadd.xlane.f32.xlu0 %v11135
        %v11137 = vpop.xlane.xlu0 %11136
        %v11138 = vsel %vm1945, %v11122, 0.0
        %11139 = vadd.xlane.f32.xlu0 %v11138
        %v11140 = vpop.xlane.xlu0 %11139
        %v11141 = vsel %vm1945, %v11123, 0.0
        %11142 = vadd.xlane.f32.xlu0 %v11141
        %v11143 = vpop.xlane.xlu0 %11142
        %v11144 = vsel %vm1945, %v11124, 0.0
        %11145 = vadd.xlane.f32.xlu0 %v11144
        %v11146 = vpop.xlane.xlu0 %11145
        %v11147 = vsel %vm1945, %v11125, 0.0
        %11148 = vadd.xlane.f32.xlu0 %v11147
        %v11149 = vpop.xlane.xlu0 %11148
        %v11150 = vmul.f32 %v11128, %v11101
        %v11151 = vmul.f32 %v11131, %v11101
        %v11152 = vmul.f32 %v11134, %v11101
        %v11153 = vmul.f32 %v11137, %v11101
        %v11154 = vmul.f32 %v11140, %v11101
        %v11155 = vmul.f32 %v11143, %v11101
        %v11156 = vmul.f32 %v11146, %v11101
        %v11157 = vmul.f32 %v11149, %v11101
        %v11158 = vadd.f32 %v11150, 1e-05
        %v11159 = vadd.f32 %v11151, 1e-05
        %v11160 = vadd.f32 %v11152, 1e-05
        %v11161 = vadd.f32 %v11153, 1e-05
        %v11162 = vadd.f32 %v11154, 1e-05
        %v11163 = vadd.f32 %v11155, 1e-05
        %v11164 = vadd.f32 %v11156, 1e-05
        %v11165 = vadd.f32 %v11157, 1e-05
        %v11166 = vrsqrt.pop %v11158
        %v11167 = vrsqrt.pop %v11159
        %v11168 = vrsqrt.pop %v11160
        %v11169 = vrsqrt.pop %v11161
        %v11170 = vrsqrt.pop %v11162
        %v11171 = vrsqrt.pop %v11163
        %v11172 = vrsqrt.pop %v11164
        %v11173 = vrsqrt.pop %v11165
        %v11174 = vmul.f32 %v11110, %v11166
        %v11175 = vmul.f32 %v11111, %v11167
        %v11176 = vmul.f32 %v11112, %v11168
        %v11177 = vmul.f32 %v11113, %v11169
        %v11178 = vmul.f32 %v11114, %v11170
        %v11179 = vmul.f32 %v11115, %v11171
        %v11180 = vmul.f32 %v11116, %v11172
        %v11181 = vmul.f32 %v11117, %v11173
        %v11183 = vlaneseq
        %v11184 = vshrl.u32 %v11183, 7
        %v11185 = vsub.s32 0, %v11184
        %v11186 = vrot.slane %v741, %v11185
        %v11188 = vmul.f32 %v11174, %v11186
        %v11189 = vmul.f32 %v11175, %v11186
        %v11190 = vmul.f32 %v11176, %v11186
        %v11191 = vmul.f32 %v11177, %v11186
        %v11192 = vmul.f32 %v11178, %v11186
        %v11193 = vmul.f32 %v11179, %v11186
        %v11194 = vmul.f32 %v11180, %v11186
        %v11195 = vmul.f32 %v11181, %v11186
        %v11197 = vlaneseq
        %v11198 = vshrl.u32 %v11197, 7
        %v11199 = vsub.s32 0, %v11198
        %v11200 = vrot.slane %v742, %v11199
        %v11202 = vadd.f32 %v11188, %v11200
        %v11203 = vadd.f32 %v11189, %v11200
        %v11204 = vadd.f32 %v11190, %v11200
        %v11205 = vadd.f32 %v11191, %v11200
        %v11206 = vadd.f32 %v11192, %v11200
        %v11207 = vadd.f32 %v11193, %v11200
        %v11208 = vadd.f32 %v11194, %v11200
        %v11209 = vadd.f32 %v11195, %v11200
        %v11210 = vpack.c.bf16 %v11203, %v11202
        %v11211 = vpack.c.bf16 %v11205, %v11204
        %v11212 = vpack.c.bf16 %v11207, %v11206
        %v11213 = vpack.c.bf16 %v11209, %v11208
        %v11215 = vlaneseq
        %v11216 = vshrl.u32 %v11215, 7
        %v11217 = vsub.s32 0, %v11216
        %v11218 = vrot.slane %v751, %v11217
        %v11228 = vunpack.c.l.b16 %v743
        %v11229 = vunpack.c.l.b16 %v744
        %v11230 = vunpack.c.l.b16 %v745
        %v11231 = vunpack.c.l.b16 %v746
        %v11232 = vunpack.c.l.b16 %v747
        %v11233 = vunpack.c.l.b16 %v748
        %v11234 = vunpack.c.l.b16 %v749
        %v11235 = vunpack.c.l.b16 %v750
        %v11236 = vpack.c.b16 %v11229, %v11228
        %v11237 = vpack.c.b16 %v11231, %v11230
        %v11238 = vpack.c.b16 %v11233, %v11232
        %v11239 = vpack.c.b16 %v11235, %v11234
        %v11245 = vsel %vm1945, %v11210, 0
        %v11248 = vsel %vm1945, %v11211, 0
        %v11251 = vsel %vm1945, %v11212, 0
        %v11254 = vsel %vm1945, %v11213, 0
        %11256 = vmatprep.subr.bf16.mxu0 0
        %11257 = vmatpush1.bf16.msra.mxu0 %v11236
        %11258 = vmatprep.subr.bf16.mxu0 0
        %11259 = vmatpush1.bf16.msra.mxu0 %v11237
        %11260 = vmatprep.subr.bf16.mxu0 0
        %11261 = vmatpush1.bf16.msra.mxu0 %v11238
        %11262 = vmatprep.subr.bf16.mxu0 0
        %11263 = vmatpush1.bf16.msra.mxu0 %v11239
        %11264 = vmatprep.subr.bf16.mxu0 0
        %11265 = vmatpush1.bf16.msra.mxu0 0
        %11266 = vmatprep.subr.bf16.mxu0 0
        %11267 = vmatpush1.bf16.msra.mxu0 0
        %11268 = vmatprep.subr.bf16.mxu0 0
        %11269 = vmatpush1.bf16.msra.mxu0 0
        %11270 = vmatprep.subr.bf16.mxu0 0
        %11271 = vmatpush1.bf16.msra.mxu0 0
        %11272 = vmatprep.subr.bf16.mxu0 0
        %11273 = vmatpush1.bf16.msra.mxu0 0
        %11274 = vmatprep.subr.bf16.mxu0 0
        %11275 = vmatpush1.bf16.msra.mxu0 0
        %11276 = vmatprep.subr.bf16.mxu0 0
        %11277 = vmatpush1.bf16.msra.mxu0 0
        %11278 = vmatprep.subr.bf16.mxu0 0
        %11279 = vmatpush1.bf16.msra.mxu0 0
        %11280 = vmatprep.subr.bf16.mxu0 0
        %11281 = vmatpush1.bf16.msra.mxu0 0
        %11282 = vmatprep.subr.bf16.mxu0 0
        %11283 = vmatpush1.bf16.msra.mxu0 0
        %11284 = vmatprep.subr.bf16.mxu0 0
        %11285 = vmatpush1.bf16.msra.mxu0 0
        %11286 = vmatprep.subr.bf16.mxu0 0
        %11287 = vmatpush1.bf16.msra.mxu0 0
        %11288 = vmatprep.mubr.bf16.mxu0 0
        %11289 = vmatmul.mubr.bf16.gmra.mrb[0].mxu0 %v11245
        %v11290 = vpop.f32.mrb[0].mxu0
        %v11291 = vadd.f32 %v11218, %v11290
        %v11292 = vpop.f32.mrb[0].mxu0
        %v11293 = vpop.f32.mrb[0].mxu0
        %v11294 = vadd.f32 %v11218, %v11293
        %v11295 = vpop.f32.mrb[0].mxu0
        %11296 = vmatprep.mubr.bf16.mxu0 0
        %11297 = vmatmul.mubr.bf16.gmra.mrb[0].mxu0 %v11248
        %v11298 = vpop.f32.mrb[0].mxu0
        %v11299 = vadd.f32 %v11218, %v11298
        %v11300 = vpop.f32.mrb[0].mxu0
        %v11301 = vpop.f32.mrb[0].mxu0
        %v11302 = vadd.f32 %v11218, %v11301
        %v11303 = vpop.f32.mrb[0].mxu0
        %11304 = vmatprep.mubr.bf16.mxu0 0
        %11305 = vmatmul.mubr.bf16.gmra.mrb[0].mxu0 %v11251
        %v11306 = vpop.f32.mrb[0].mxu0
        %v11307 = vadd.f32 %v11218, %v11306
        %v11308 = vpop.f32.mrb[0].mxu0
        %v11309 = vpop.f32.mrb[0].mxu0
        %v11310 = vadd.f32 %v11218, %v11309
        %v11311 = vpop.f32.mrb[0].mxu0
        %11312 = vmatprep.mubr.bf16.mxu0 0
        %11313 = vmatmul.mubr.bf16.gmra.mrb[0].mxu0 %v11254
        %v11314 = vpop.f32.mrb[0].mxu0
        %v11315 = vadd.f32 %v11218, %v11314
        %v11316 = vpop.f32.mrb[0].mxu0
        %v11317 = vpop.f32.mrb[0].mxu0
        %v11318 = vadd.f32 %v11218, %v11317
        %v11319 = vpop.f32.mrb[0].mxu0
        %11320 = vdwg.mxu0
        %v11321 = vmul.f32 %v11291, %v11291
        %v11322 = vmul.f32 %v11294, %v11294
        %v11323 = vmul.f32 %v11299, %v11299
        %v11324 = vmul.f32 %v11302, %v11302
        %v11325 = vmul.f32 %v11307, %v11307
        %v11326 = vmul.f32 %v11310, %v11310
        %v11327 = vmul.f32 %v11315, %v11315
        %v11328 = vmul.f32 %v11318, %v11318
        %v11329 = vmul.f32 %v11291, %v11321
        %v11330 = vmul.f32 %v11294, %v11322
        %v11331 = vmul.f32 %v11299, %v11323
        %v11332 = vmul.f32 %v11302, %v11324
        %v11333 = vmul.f32 %v11307, %v11325
        %v11334 = vmul.f32 %v11310, %v11326
        %v11335 = vmul.f32 %v11315, %v11327
        %v11336 = vmul.f32 %v11318, %v11328
        %v11337 = vmul.f32 %v11329, 0.044715
        %v11338 = vmul.f32 %v11330, 0.044715
        %v11339 = vmul.f32 %v11331, 0.044715
        %v11340 = vmul.f32 %v11332, 0.044715
        %v11341 = vmul.f32 %v11333, 0.044715
        %v11342 = vmul.f32 %v11334, 0.044715
        %v11343 = vmul.f32 %v11335, 0.044715
        %v11344 = vmul.f32 %v11336, 0.044715
        %v11345 = vadd.f32 %v11291, %v11337
        %v11346 = vadd.f32 %v11294, %v11338
        %v11347 = vadd.f32 %v11299, %v11339
        %v11348 = vadd.f32 %v11302, %v11340
        %v11349 = vadd.f32 %v11307, %v11341
        %v11350 = vadd.f32 %v11310, %v11342
        %v11351 = vadd.f32 %v11315, %v11343
        %v11352 = vadd.f32 %v11318, %v11344
        %v11353 = vmul.f32 %v11345, 0.7978846
        %v11354 = vmul.f32 %v11346, 0.7978846
        %v11355 = vmul.f32 %v11347, 0.7978846
        %v11356 = vmul.f32 %v11348, 0.7978846
        %v11357 = vmul.f32 %v11349, 0.7978846
        %v11358 = vmul.f32 %v11350, 0.7978846
        %v11359 = vmul.f32 %v11351, 0.7978846
        %v11360 = vmul.f32 %v11352, 0.7978846
        %v11361 = vtanh.pop %v11353
        %v11362 = vtanh.pop %v11354
        %v11363 = vtanh.pop %v11355
        %v11364 = vtanh.pop %v11356
        %v11365 = vtanh.pop %v11357
        %v11366 = vtanh.pop %v11358
        %v11367 = vtanh.pop %v11359
        %v11368 = vtanh.pop %v11360
        %v11369 = vadd.f32 %v11361, 1.0
        %v11370 = vadd.f32 %v11362, 1.0
        %v11371 = vadd.f32 %v11363, 1.0
        %v11372 = vadd.f32 %v11364, 1.0
        %v11373 = vadd.f32 %v11365, 1.0
        %v11374 = vadd.f32 %v11366, 1.0
        %v11375 = vadd.f32 %v11367, 1.0
        %v11376 = vadd.f32 %v11368, 1.0
        %v11377 = vmul.f32 %v11369, 0.5
        %v11378 = vmul.f32 %v11370, 0.5
        %v11379 = vmul.f32 %v11371, 0.5
        %v11380 = vmul.f32 %v11372, 0.5
        %v11381 = vmul.f32 %v11373, 0.5
        %v11382 = vmul.f32 %v11374, 0.5
        %v11383 = vmul.f32 %v11375, 0.5
        %v11384 = vmul.f32 %v11376, 0.5
        %v11385 = vmul.f32 %v11291, %v11377
        %v11386 = vmul.f32 %v11294, %v11378
        %v11387 = vmul.f32 %v11299, %v11379
        %v11388 = vmul.f32 %v11302, %v11380
        %v11389 = vmul.f32 %v11307, %v11381
        %v11390 = vmul.f32 %v11310, %v11382
        %v11391 = vmul.f32 %v11315, %v11383
        %v11392 = vmul.f32 %v11318, %v11384
        %v11393 = vpack.c.bf16 %v11386, %v11385
        %v11394 = vpack.c.bf16 %v11388, %v11387
        %v11395 = vpack.c.bf16 %v11390, %v11389
        %v11396 = vpack.c.bf16 %v11392, %v11391
        %v11398 = vlaneseq
        %v11399 = vshrl.u32 %v11398, 7
        %v11400 = vsub.s32 0, %v11399
        %v11401 = vrot.slane %v768, %v11400
        %v11419 = vunpack.c.l.b16 %v752
        %v11420 = vunpack.c.l.b16 %v753
        %v11421 = vunpack.c.l.b16 %v754
        %v11422 = vunpack.c.l.b16 %v755
        %v11423 = vunpack.c.l.b16 %v756
        %v11424 = vunpack.c.l.b16 %v757
        %v11425 = vunpack.c.l.b16 %v758
        %v11426 = vunpack.c.l.b16 %v759
        %v11427 = vunpack.c.l.b16 %v760
        %v11428 = vunpack.c.l.b16 %v761
        %v11429 = vunpack.c.l.b16 %v762
        %v11430 = vunpack.c.l.b16 %v763
        %v11431 = vunpack.c.l.b16 %v764
        %v11432 = vunpack.c.l.b16 %v765
        %v11433 = vunpack.c.l.b16 %v766
        %v11434 = vunpack.c.l.b16 %v767
        %v11435 = vpack.c.b16 %v11420, %v11419
        %v11436 = vpack.c.b16 %v11422, %v11421
        %v11437 = vpack.c.b16 %v11424, %v11423
        %v11438 = vpack.c.b16 %v11426, %v11425
        %v11439 = vpack.c.b16 %v11428, %v11427
        %v11440 = vpack.c.b16 %v11430, %v11429
        %v11441 = vpack.c.b16 %v11432, %v11431
        %v11442 = vpack.c.b16 %v11434, %v11433
        %11451 = vmatprep.subr.bf16.mxu0 0
        %11452 = vmatpush1.bf16.msra.mxu0 %v11435
        %11453 = vmatprep.subr.bf16.mxu0 0
        %11454 = vmatpush1.bf16.msra.mxu0 %v11436
        %11455 = vmatprep.subr.bf16.mxu0 0
        %11456 = vmatpush1.bf16.msra.mxu0 %v11437
        %11457 = vmatprep.subr.bf16.mxu0 0
        %11458 = vmatpush1.bf16.msra.mxu0 %v11438
        %11459 = vmatprep.subr.bf16.mxu0 0
        %11460 = vmatpush1.bf16.msra.mxu0 %v11439
        %11461 = vmatprep.subr.bf16.mxu0 0
        %11462 = vmatpush1.bf16.msra.mxu0 %v11440
        %11463 = vmatprep.subr.bf16.mxu0 0
        %11464 = vmatpush1.bf16.msra.mxu0 %v11441
        %11465 = vmatprep.subr.bf16.mxu0 0
        %11466 = vmatpush1.bf16.msra.mxu0 %v11442
        %11467 = vmatprep.subr.bf16.mxu0 0
        %11468 = vmatpush1.bf16.msra.mxu0 0
        %11469 = vmatprep.subr.bf16.mxu0 0
        %11470 = vmatpush1.bf16.msra.mxu0 0
        %11471 = vmatprep.subr.bf16.mxu0 0
        %11472 = vmatpush1.bf16.msra.mxu0 0
        %11473 = vmatprep.subr.bf16.mxu0 0
        %11474 = vmatpush1.bf16.msra.mxu0 0
        %11475 = vmatprep.subr.bf16.mxu0 0
        %11476 = vmatpush1.bf16.msra.mxu0 0
        %11477 = vmatprep.subr.bf16.mxu0 0
        %11478 = vmatpush1.bf16.msra.mxu0 0
        %11479 = vmatprep.subr.bf16.mxu0 0
        %11480 = vmatpush1.bf16.msra.mxu0 0
        %11481 = vmatprep.subr.bf16.mxu0 0
        %11482 = vmatpush1.bf16.msra.mxu0 0
        %11483 = vmatprep.mubr.bf16.mxu0 0
        %11484 = vmatmul.mubr.bf16.gmra.mrb[0].mxu0 %v11393
        %v11485 = vpop.f32.mrb[0].mxu0
        %v11486 = vadd.f32 %v11401, %v11485
        %v11487 = vpop.f32.mrb[0].mxu0
        %v11488 = vpop.f32.mrb[0].mxu0
        %v11489 = vadd.f32 %v11401, %v11488
        %v11490 = vpop.f32.mrb[0].mxu0
        %11491 = vmatprep.mubr.bf16.mxu0 0
        %11492 = vmatmul.mubr.bf16.gmra.mrb[0].mxu0 %v11394
        %v11493 = vpop.f32.mrb[0].mxu0
        %v11494 = vadd.f32 %v11401, %v11493
        %v11495 = vpop.f32.mrb[0].mxu0
        %v11496 = vpop.f32.mrb[0].mxu0
        %v11497 = vadd.f32 %v11401, %v11496
        %v11498 = vpop.f32.mrb[0].mxu0
        %11499 = vmatprep.mubr.bf16.mxu0 0
        %11500 = vmatmul.mubr.bf16.gmra.mrb[0].mxu0 %v11395
        %v11501 = vpop.f32.mrb[0].mxu0
        %v11502 = vadd.f32 %v11401, %v11501
        %v11503 = vpop.f32.mrb[0].mxu0
        %v11504 = vpop.f32.mrb[0].mxu0
        %v11505 = vadd.f32 %v11401, %v11504
        %v11506 = vpop.f32.mrb[0].mxu0
        %11507 = vmatprep.mubr.bf16.mxu0 0
        %11508 = vmatmul.mubr.bf16.gmra.mrb[0].mxu0 %v11396
        %v11509 = vpop.f32.mrb[0].mxu0
        %v11510 = vadd.f32 %v11401, %v11509
        %v11511 = vpop.f32.mrb[0].mxu0
        %v11512 = vpop.f32.mrb[0].mxu0
        %v11513 = vadd.f32 %v11401, %v11512
        %v11514 = vpop.f32.mrb[0].mxu0
        %11515 = vdwg.mxu0
        %v11516 = vadd.f32 %v11202, %v11486
        %v11517 = vadd.f32 %v11203, %v11489
        %v11518 = vadd.f32 %v11204, %v11494
        %v11519 = vadd.f32 %v11205, %v11497
        %v11520 = vadd.f32 %v11206, %v11502
        %v11521 = vadd.f32 %v11207, %v11505
        %v11522 = vadd.f32 %v11208, %v11510
        %v11523 = vadd.f32 %v11209, %v11513
        %v11524 = vsel %vm1945, %v11516, 0.0
        %11525 = vadd.xlane.f32.xlu0 %v11524
        %v11526 = vpop.xlane.xlu0 %11525
        %v11527 = vsel %vm1945, %v11517, 0.0
        %11528 = vadd.xlane.f32.xlu0 %v11527
        %v11529 = vpop.xlane.xlu0 %11528
        %v11530 = vsel %vm1945, %v11518, 0.0
        %11531 = vadd.xlane.f32.xlu0 %v11530
        %v11532 = vpop.xlane.xlu0 %11531
        %v11533 = vsel %vm1945, %v11519, 0.0
        %11534 = vadd.xlane.f32.xlu0 %v11533
        %v11535 = vpop.xlane.xlu0 %11534
        %v11536 = vsel %vm1945, %v11520, 0.0
        %11537 = vadd.xlane.f32.xlu0 %v11536
        %v11538 = vpop.xlane.xlu0 %11537
        %v11539 = vsel %vm1945, %v11521, 0.0
        %11540 = vadd.xlane.f32.xlu0 %v11539
        %v11541 = vpop.xlane.xlu0 %11540
        %v11542 = vsel %vm1945, %v11522, 0.0
        %11543 = vadd.xlane.f32.xlu0 %v11542
        %v11544 = vpop.xlane.xlu0 %11543
        %v11545 = vsel %vm1945, %v11523, 0.0
        %11546 = vadd.xlane.f32.xlu0 %v11545
        %v11547 = vpop.xlane.xlu0 %11546
        %v11548 = vmul.f32 %v11526, %v11101
        %v11549 = vmul.f32 %v11529, %v11101
        %v11550 = vmul.f32 %v11532, %v11101
        %v11551 = vmul.f32 %v11535, %v11101
        %v11552 = vmul.f32 %v11538, %v11101
        %v11553 = vmul.f32 %v11541, %v11101
        %v11554 = vmul.f32 %v11544, %v11101
        %v11555 = vmul.f32 %v11547, %v11101
        %v11556 = vsub.f32 %v11516, %v11548
        %v11557 = vsub.f32 %v11517, %v11549
        %v11558 = vsub.f32 %v11518, %v11550
        %v11559 = vsub.f32 %v11519, %v11551
        %v11560 = vsub.f32 %v11520, %v11552
        %v11561 = vsub.f32 %v11521, %v11553
        %v11562 = vsub.f32 %v11522, %v11554
        %v11563 = vsub.f32 %v11523, %v11555
        %v11564 = vmul.f32 %v11556, %v11556
        %v11565 = vmul.f32 %v11557, %v11557
        %v11566 = vmul.f32 %v11558, %v11558
        %v11567 = vmul.f32 %v11559, %v11559
        %v11568 = vmul.f32 %v11560, %v11560
        %v11569 = vmul.f32 %v11561, %v11561
        %v11570 = vmul.f32 %v11562, %v11562
        %v11571 = vmul.f32 %v11563, %v11563
        %v11572 = vsel %vm1945, %v11564, 0.0
        %11573 = vadd.xlane.f32.xlu0 %v11572
        %v11574 = vpop.xlane.xlu0 %11573
        %v11575 = vsel %vm1945, %v11565, 0.0
        %11576 = vadd.xlane.f32.xlu0 %v11575
        %v11577 = vpop.xlane.xlu0 %11576
        %v11578 = vsel %vm1945, %v11566, 0.0
        %11579 = vadd.xlane.f32.xlu0 %v11578
        %v11580 = vpop.xlane.xlu0 %11579
        %v11581 = vsel %vm1945, %v11567, 0.0
        %11582 = vadd.xlane.f32.xlu0 %v11581
        %v11583 = vpop.xlane.xlu0 %11582
        %v11584 = vsel %vm1945, %v11568, 0.0
        %11585 = vadd.xlane.f32.xlu0 %v11584
        %v11586 = vpop.xlane.xlu0 %11585
        %v11587 = vsel %vm1945, %v11569, 0.0
        %11588 = vadd.xlane.f32.xlu0 %v11587
        %v11589 = vpop.xlane.xlu0 %11588
        %v11590 = vsel %vm1945, %v11570, 0.0
        %11591 = vadd.xlane.f32.xlu0 %v11590
        %v11592 = vpop.xlane.xlu0 %11591
        %v11593 = vsel %vm1945, %v11571, 0.0
        %11594 = vadd.xlane.f32.xlu0 %v11593
        %v11595 = vpop.xlane.xlu0 %11594
        %v11596 = vmul.f32 %v11574, %v11101
        %v11597 = vmul.f32 %v11577, %v11101
        %v11598 = vmul.f32 %v11580, %v11101
        %v11599 = vmul.f32 %v11583, %v11101
        %v11600 = vmul.f32 %v11586, %v11101
        %v11601 = vmul.f32 %v11589, %v11101
        %v11602 = vmul.f32 %v11592, %v11101
        %v11603 = vmul.f32 %v11595, %v11101
        %v11604 = vadd.f32 %v11596, 1e-05
        %v11605 = vadd.f32 %v11597, 1e-05
        %v11606 = vadd.f32 %v11598, 1e-05
        %v11607 = vadd.f32 %v11599, 1e-05
        %v11608 = vadd.f32 %v11600, 1e-05
        %v11609 = vadd.f32 %v11601, 1e-05
        %v11610 = vadd.f32 %v11602, 1e-05
        %v11611 = vadd.f32 %v11603, 1e-05
        %v11612 = vrsqrt.pop %v11604
        %v11613 = vrsqrt.pop %v11605
        %v11614 = vrsqrt.pop %v11606
        %v11615 = vrsqrt.pop %v11607
        %v11616 = vrsqrt.pop %v11608
        %v11617 = vrsqrt.pop %v11609
        %v11618 = vrsqrt.pop %v11610
        %v11619 = vrsqrt.pop %v11611
        %v11620 = vmul.f32 %v11556, %v11612
        %v11621 = vmul.f32 %v11557, %v11613
        %v11622 = vmul.f32 %v11558, %v11614
        %v11623 = vmul.f32 %v11559, %v11615
        %v11624 = vmul.f32 %v11560, %v11616
        %v11625 = vmul.f32 %v11561, %v11617
        %v11626 = vmul.f32 %v11562, %v11618
        %v11627 = vmul.f32 %v11563, %v11619
        %v11629 = vlaneseq
        %v11630 = vshrl.u32 %v11629, 7
        %v11631 = vsub.s32 0, %v11630
        %v11632 = vrot.slane %v769, %v11631
        %v11634 = vmul.f32 %v11620, %v11632
        %v11635 = vmul.f32 %v11621, %v11632
        %v11636 = vmul.f32 %v11622, %v11632
        %v11637 = vmul.f32 %v11623, %v11632
        %v11638 = vmul.f32 %v11624, %v11632
        %v11639 = vmul.f32 %v11625, %v11632
        %v11640 = vmul.f32 %v11626, %v11632
        %v11641 = vmul.f32 %v11627, %v11632
        %v11643 = vlaneseq
        %v11644 = vshrl.u32 %v11643, 7
        %v11645 = vsub.s32 0, %v11644
        %v11646 = vrot.slane %v770, %v11645
        %v11648 = vadd.f32 %v11634, %v11646
        %v11649 = vadd.f32 %v11635, %v11646
        %v11650 = vadd.f32 %v11636, %v11646
        %v11651 = vadd.f32 %v11637, %v11646
        %v11652 = vadd.f32 %v11638, %v11646
        %v11653 = vadd.f32 %v11639, %v11646
        %v11654 = vadd.f32 %v11640, %v11646
        %v11655 = vadd.f32 %v11641, %v11646
        %11656 = vst.msk [vmem:[%s679] sm:$0xff] %vm1945, %v11648
        %11657 = vst.msk [vmem:[%s679 + $0x8] sm:$0xff] %vm1945, %v11649
        %11658 = vst.msk [vmem:[%s679 + $0x10] sm:$0xff] %vm1945, %v11650
        %11659 = vst.msk [vmem:[%s679 + $0x18] sm:$0xff] %vm1945, %v11651
        %11660 = vst.msk [vmem:[%s679 + $0x20] sm:$0xff] %vm1945, %v11652
        %11661 = vst.msk [vmem:[%s679 + $0x28] sm:$0xff] %vm1945, %v11653
        %11662 = vst.msk [vmem:[%s679 + $0x30] sm:$0xff] %vm1945, %v11654
        %11663 = vst.msk [vmem:[%s679 + $0x38] sm:$0xff] %vm1945, %v11655
        %s11664 = sand.u32 %s499, 1
        %s11665 = scalar_lea.sflag [#allocation3], %s11664
        %s11666 = sand.u32 %s499, 1
        %s11667 = smul.addr %s11666, 64
        %s11668 = scalar_lea.vmem [#allocation2], %s11667
        // Predicated region
        $region105: #{tpu_custom_call.1} parent=103 // pred_check
          %p11669 = pneg %p509
        $region106: #{tpu_custom_call.1} parent=103 // pred_check_branch
          %11671 = sbr.rel (%p11669) target = $region108
        $region107: #{tpu_custom_call.1} parent=103 // pred_region
          %s11673 = ssub.s32 1024, 1024
          %11674 = vsyncadd %s11665, %s11673
          %s11675 = smul.addr %s35, 8
          %s11676 = smul.addr %s11675, 128
          %s11677 = scalar_lea.hbm %s21, %s11676
          %s11678 = sshll.u32 %s11668, 4
          %s11679 = int_to_ptr.vmem [resolvable:$true] %s11678
          %11684 = dma.vmem_to_hbm [thread:$0]  %s11679, 1024, %s11677, %s11665, 128, 128, 8
        $region108: #{tpu_custom_call.1} parent=103 // pred_fallthru
          _
      $region104: #{tpu_custom_call.1} parent=5 // pred_fallthru
        _
      %p11685 = scmp.le.s32.totalorder 2, %s30
      // Predicated region
      $region109: #{tpu_custom_call.1} parent=5 // pred_check
        %p11686 = pneg %p11685
      $region110: #{tpu_custom_call.1} parent=5 // pred_check_branch
        %11688 = sbr.rel (%p11686) target = $region112
      $region111: #{tpu_custom_call.1} parent=5 // pred_region
        %s11689 = ssub.s32 %s30, 2
        // Predicated region
        $region113: #{tpu_custom_call.1} parent=111 // pred_check
          %p11690 = pneg %p515
        $region114: #{tpu_custom_call.1} parent=111 // pred_check_branch
          %11692 = sbr.rel (%p11690) target = $region116
        $region115: #{tpu_custom_call.1} parent=111 // pred_region
          %s11693 = sand.u32 %s500, 1
          %s11694 = scalar_lea.sflag [#allocation3], %s11693
          %s11695 = sand.u32 %s500, 1
          %s11696 = smul.addr %s11695, 64
          %s11697 = scalar_lea.vmem [#allocation2], %s11696
          %11698 = dma.done %s11694, 1024
        $region116: #{tpu_custom_call.1} parent=111 // pred_fallthru
          _
      $region112: #{tpu_custom_call.1} parent=5 // pred_fallthru
        _
    $region6: #{tpu_custom_call.1} parent=1 // loop_footer
      %s34 = sadd.s32 1, %s30
    $region7: #{tpu_custom_call.1} parent=1 // loop_footer_branch
      %29 = sbr.rel target = $region3
    $region8: #{tpu_custom_call.1} parent=1 // loop_exit
      _
    %11699 = vsyncpa [#allocation3], 1
    %s11700 = scalar_lea.sflag [#allocation3], 1
    %11701 = vsyncpa %s11700, 1

</llo_original>
